<compile_context>
chip_gen: v7x
topology: tpu7x:2x2x1
jax: 0.10.0
libtpu: 0.0.40
codegen_flags: <defaults>
</compile_context>

<pallas_src>
import functools

import jax
import jax.numpy as jnp
from jax.experimental import pallas as pl
from jax.experimental.pallas import tpu as pltpu


# --------------------------------------------------------------------------
# The single fused per-sample kernel.
# --------------------------------------------------------------------------
def _iwnet_kernel(xw_ref, wc_ref, s_ref, t_ref, wp_ref, bp_ref,
                  w1_ref, b1_ref, w2_ref, b2_ref, w3_ref, b3_ref,
                  wiw_ref, biw_ref, r_ref, o_ref, *, ho, wo):
    f32 = jnp.float32
    C1 = 64
    hp, wp = ho // 2, wo // 2

    # ---- conv1 (7x7/s2, pad 3) + folded BN + ReLU -------------------------
    # Input is 2x2 space-to-depth'd with the 4 W-axis taps pre-folded into the
    # channel dim (48 = 4*12), so the conv is 4 accumulated K=48 matmuls over
    # the H-axis taps: pure unit-stride sublane slices, no strided access.
    x = xw_ref[0]                                       # (hs, wo, 48) bf16
    acc = jnp.zeros((ho * wo, C1), f32)
    for dh in range(4):
        tap = x[dh:dh + ho].reshape(ho * wo, 48)        # (M, 48) bf16
        acc = acc + jnp.dot(tap, wc_ref[dh], preferred_element_type=f32)
    y = jnp.maximum(acc * s_ref[...] + t_ref[...], 0.0)  # (ho*wo, 64) f32

    # ---- fused 3x3/s2/pad1 maxpool, entirely in f32 ------------------------
    # rows: max over {2i-1, 2i, 2i+1} and keep even rows (leading-dim ops).
    y3 = y.reshape(ho, wo, C1)
    yr = y3.reshape(hp, 2, wo, C1)
    ev, od = yr[:, 0], yr[:, 1]                          # rows 2i, 2i+1
    od_up = jnp.concatenate([jnp.zeros((1, wo, C1), f32), od[:hp - 1]], axis=0)
    rmax = jnp.maximum(jnp.maximum(ev, od), od_up)       # (hp, wo, C1)
    # cols: max over {j-1, j, j+1} at full column resolution (sublane shifts);
    # zero padding is valid because the input is post-ReLU (>= 0).  The
    # even-column (stride-2) selection is folded into the avgpool mask below.
    lft = jnp.concatenate([jnp.zeros((hp, 1, C1), f32), rmax[:, :wo - 1]], axis=1)
    rgt = jnp.concatenate([rmax[:, 1:], jnp.zeros((hp, 1, C1), f32)], axis=1)
    cmax = jnp.maximum(jnp.maximum(rmax, lft), rgt)      # pooled vals at even j
    pooled = cmax.reshape(hp * wo, C1).astype(jnp.bfloat16)   # single downcast

    # ---- stand-in 64->2048 projection + ReLU + global average pool --------
    # TODO(synk): ResNet50 layer1..layer4 (16 pretrained Bottleneck blocks)
    # are not reproducible in-script; this projection preserves the
    # 2048-channel contract of `x_s.view(-1, 2048)`.
    z = jnp.dot(pooled, wp_ref[...], preferred_element_type=f32)
    z = jnp.maximum(z + bp_ref[...], 0.0)                # (hp*wo, 2048) f32
    # keep only even-j positions (the true stride-2 pooled positions); wo is
    # even so flat-row parity == column parity.
    keep = (jax.lax.broadcasted_iota(jnp.int32, (hp * wo, 1), 0) % 2) == 0
    feat = jnp.sum(jnp.where(keep, z, 0.0), axis=0, keepdims=True)
    feat = feat * (1.0 / float(hp * wp))                 # (1, 2048) f32

    # ---- extractor MLP (tanh) + IW head ------------------------------------
    h = jnp.tanh(jnp.dot(feat.astype(jnp.bfloat16), w1_ref[...],
                         preferred_element_type=f32) + b1_ref[...])
    h = jnp.tanh(jnp.dot(h.astype(jnp.bfloat16), w2_ref[...],
                         preferred_element_type=f32) + b2_ref[...])
    h = jnp.tanh(jnp.dot(h.astype(jnp.bfloat16), w3_ref[...],
                         preferred_element_type=f32) + b3_ref[...])
    # TODO(synk): IWLayer is not defined in the provided source; assumed to be
    # Linear(256, n_output) with per-sample scaling by r (y_s unused).
    logits = jnp.dot(h.astype(jnp.bfloat16), wiw_ref[...],
                     preferred_element_type=f32) + biw_ref[...]
    o_ref[0] = r_ref[0] * logits


def iwnet_pallas(xw, w_conv, bn_scale, bn_shift, w_proj, b_proj,
                 w1, b1, w2, b2, w3, b3, w_iw, b_iw, r3, *, ho, wo):
    """One fused pallas_call over the batch; returns (B, n_out) f32."""
    B, hs, _, kc = xw.shape
    n_out = w_iw.shape[1]
    c2 = lambda b: (0, 0)
    c3 = lambda b: (0, 0, 0)
    out = pl.pallas_call(
        functools.partial(_iwnet_kernel, ho=ho, wo=wo),
        out_shape=jax.ShapeDtypeStruct((B, 1, n_out), jnp.float32),
        grid=(B,),
        in_specs=[
            pl.BlockSpec((1, hs, wo, kc), lambda b: (b, 0, 0, 0)),
            pl.BlockSpec(w_conv.shape, c3),     # weights: constant block index
            pl.BlockSpec(bn_scale.shape, c2),   # -> DMA'd once, stay resident
            pl.BlockSpec(bn_shift.shape, c2),
            pl.BlockSpec(w_proj.shape, c2),
            pl.BlockSpec(b_proj.shape, c2),
            pl.BlockSpec(w1.shape, c2),
            pl.BlockSpec(b1.shape, c2),
            pl.BlockSpec(w2.shape, c2),
            pl.BlockSpec(b2.shape, c2),
            pl.BlockSpec(w3.shape, c2),
            pl.BlockSpec(b3.shape, c2),
            pl.BlockSpec(w_iw.shape, c2),
            pl.BlockSpec(b_iw.shape, c2),
            pl.BlockSpec((1, 1, 1), lambda b: (b, 0, 0)),
        ],
        out_specs=pl.BlockSpec((1, 1, n_out), lambda b: (b, 0, 0)),
        compiler_params=pltpu.CompilerParams(
            dimension_semantics=("parallel",),           # batch across v7x TCs
            vmem_limit_bytes=32 * 1024 * 1024),          # usage ~13 MiB
    )(xw, w_conv, bn_scale, bn_shift, w_proj, b_proj,
      w1, b1, w2, b2, w3, b3, w_iw, b_iw, r3)
    return out.reshape(B, n_out)


# ------------------------------ JAX glue ------------------------------
def _prepare_conv_input(x_nhwc):
    """pad=3, 2x2 space-to-depth, then fold the 4 W-axis conv taps into the
    channel dim.  The stride-2 7x7 conv becomes 4 unit-stride K=48 matmuls
    in-kernel; HBM blowup is ~4x of a tiny tensor (no full im2col)."""
    B, H, W, C = x_nhwc.shape
    assert H % 4 == 0 and W % 4 == 0 and 8 <= H <= 64 and 8 <= W <= 64, (
        "fused single-kernel path assumes small images with H, W multiples "
        "of 4; TODO(synk): spatially tiled path for large images")
    xp = jnp.pad(x_nhwc, ((0, 0), (3, 3), (3, 3), (0, 0)))
    hs, ws = H // 2 + 3, W // 2 + 3
    xs = xp.reshape(B, hs, 2, ws, 2, C).transpose(0, 1, 3, 2, 4, 5)
    xs = xs.reshape(B, hs, ws, 4 * C)                    # (B, hs, ws, 12)
    ho, wo = H // 2, W // 2
    xw = jnp.concatenate([xs[:, :, dw:dw + wo, :] for dw in range(4)], axis=-1)
    return xw.astype(jnp.bfloat16), ho, wo               # (B, hs, wo, 48)


def _fold_conv1_weight(w):
    """PyTorch (64, 3, 7, 7) -> (4 H-taps, 48, 64); zero-pads the 7x7 kernel
    to 8x8 so it factors exactly into 4x4 taps over the 12 s2d channels."""
    w = jnp.pad(w, ((0, 0), (0, 0), (0, 1), (0, 1)))     # (64, 3, 8, 8)
    w = jnp.transpose(w, (2, 3, 1, 0))                   # (kh, kw, cin, cout)
    w = w.reshape(4, 2, 4, 2, 3, 64)                     # (dh, ph, dw, pw, c, o)
    w = jnp.transpose(w, (0, 2, 1, 3, 4, 5))             # (dh, dw, ph, pw, c, o)
    return w.reshape(4, 48, 64)                          # 48 = dw*12 + ph*6 + pw*3 + c


def init_params(key, n_output):
    ks = jax.random.split(key, 12)
    p = {}
    # conv1: PyTorch weight layout (Cout=64, Cin=3, 7, 7)
    p["conv1_w"] = 0.05 * jax.random.normal(ks[0], (64, 3, 7, 7), jnp.float32)
    # bn1 (eval-mode running stats)
    p["bn1_gamma"] = 1.0 + 0.01 * jax.random.normal(ks[1], (64,), jnp.float32)
    p["bn1_beta"] = 0.01 * jax.random.normal(ks[2], (64,), jnp.float32)
    p["bn1_mean"] = 0.01 * jax.random.normal(ks[3], (64,), jnp.float32)
    p["bn1_var"] = jnp.abs(1.0 + 0.01 * jax.random.normal(ks[4], (64,), jnp.float32))
    # placeholder projection standing in for ResNet50 layer1..layer4 (64 -> 2048)
    p["proj_w"] = (0.02 * jax.random.normal(ks[5], (64, 2048), jnp.float32)).astype(jnp.bfloat16)
    p["proj_b"] = jnp.zeros((2048,), jnp.float32)
    # extractor MLP (weights stored (in, out), bf16 for MXU; biases f32)
    p["fc1_w"] = (0.02 * jax.random.normal(ks[6], (2048, 1024), jnp.float32)).astype(jnp.bfloat16)
    p["fc1_b"] = jnp.zeros((1024,), jnp.float32)
    p["fc2_w"] = (0.02 * jax.random.normal(ks[7], (1024, 512), jnp.float32)).astype(jnp.bfloat16)
    p["fc2_b"] = jnp.zeros((512,), jnp.float32)
    p["fc3_w"] = (0.02 * jax.random.normal(ks[8], (512, 256), jnp.float32)).astype(jnp.bfloat16)
    p["fc3_b"] = jnp.zeros((256,), jnp.float32)
    # IW head
    p["iw_w"] = (0.05 * jax.random.normal(ks[9], (256, n_output), jnp.float32)).astype(jnp.bfloat16)
    p["iw_b"] = jnp.zeros((n_output,), jnp.float32)
    return p


@jax.jit
def iwnet_forward(params, x_s_nchw, y_s, r):
    B = x_s_nchw.shape[0]
    x = jnp.transpose(x_s_nchw, (0, 2, 3, 1))             # NCHW -> NHWC
    xw, ho, wo = _prepare_conv_input(x)
    w_conv = _fold_conv1_weight(params["conv1_w"]).astype(jnp.bfloat16)
    eps = 1e-5
    scale = params["bn1_gamma"] * jax.lax.rsqrt(params["bn1_var"] + eps)
    shift = params["bn1_beta"] - params["bn1_mean"] * scale
    return iwnet_pallas(
        xw, w_conv, scale.reshape(1, 64), shift.reshape(1, 64),
        params["proj_w"], params["proj_b"].reshape(1, -1),
        params["fc1_w"], params["fc1_b"].reshape(1, -1),
        params["fc2_w"], params["fc2_b"].reshape(1, -1),
        params["fc3_w"], params["fc3_b"].reshape(1, -1),
        params["iw_w"], params["iw_b"].reshape(1, -1),
        r.astype(jnp.float32).reshape(B, 1, 1),
        ho=ho, wo=wo)


if __name__ == "__main__":
    key = jax.random.PRNGKey(0)
    k_param, k_x, k_y, k_r = jax.random.split(key, 4)

    n_output = 4
    B = 2
    params = init_params(k_param, n_output)

    # RGB images, batch=2, 16x16 spatial (NCHW like PyTorch).
    x_s = jax.random.normal(k_x, (B, 3, 16, 16), jnp.float32)
    y_s = jax.random.randint(k_y, (B,), 0, n_output)       # labels (unused)
    r = jax.random.uniform(k_r, (B,), jnp.float32, 0.5, 1.5)

    out = iwnet_forward(params, x_s, y_s, r)
    out = jax.block_until_ready(out)
    assert out.shape == (B, n_output)
    assert bool(jnp.all(jnp.isfinite(out)))
    print("KERNEL_OK")
</pallas_src>

<mosaic_0001>
module attributes {stable_mosaic.version = 11 : i64} {
  func.func @_iwnet_kernel(%arg0: i32, %arg1: memref<1x11x8x48xbf16, #tpu.memory_space<vmem>>, %arg2: memref<4x48x64xbf16, #tpu.memory_space<vmem>>, %arg3: memref<1x64xf32, #tpu.memory_space<vmem>>, %arg4: memref<1x64xf32, #tpu.memory_space<vmem>>, %arg5: memref<64x2048xbf16, #tpu.memory_space<vmem>>, %arg6: memref<1x2048xf32, #tpu.memory_space<vmem>>, %arg7: memref<2048x1024xbf16, #tpu.memory_space<vmem>>, %arg8: memref<1x1024xf32, #tpu.memory_space<vmem>>, %arg9: memref<1024x512xbf16, #tpu.memory_space<vmem>>, %arg10: memref<1x512xf32, #tpu.memory_space<vmem>>, %arg11: memref<512x256xbf16, #tpu.memory_space<vmem>>, %arg12: memref<1x256xf32, #tpu.memory_space<vmem>>, %arg13: memref<256x4xbf16, #tpu.memory_space<vmem>>, %arg14: memref<1x4xf32, #tpu.memory_space<vmem>>, %arg15: memref<1x1x1xf32, #tpu.memory_space<vmem>>, %arg16: memref<1x1x4xf32, #tpu.memory_space<vmem>>) attributes {dimension_semantics = [#tpu.dimension_semantics<parallel>], iteration_bounds = array<i64: 2>, scalar_prefetch = 0 : i64, scratch_operands = 0 : i64, tpu.core_type = #tpu.core_type<tc>, window_params = [{transform_indices = @transform_0, window_bounds = array<i64: 1, 11, 8, 48>}, {pipeline_mode = #tpu.pipeline_mode<synchronous>, transform_indices = @transform_1, window_bounds = array<i64: 4, 48, 64>}, {pipeline_mode = #tpu.pipeline_mode<synchronous>, transform_indices = @transform_2, window_bounds = array<i64: 1, 64>}, {pipeline_mode = #tpu.pipeline_mode<synchronous>, transform_indices = @transform_3, window_bounds = array<i64: 1, 64>}, {pipeline_mode = #tpu.pipeline_mode<synchronous>, transform_indices = @transform_4, window_bounds = array<i64: 64, 2048>}, {pipeline_mode = #tpu.pipeline_mode<synchronous>, transform_indices = @transform_5, window_bounds = array<i64: 1, 2048>}, {pipeline_mode = #tpu.pipeline_mode<synchronous>, transform_indices = @transform_6, window_bounds = array<i64: 2048, 1024>}, {pipeline_mode = #tpu.pipeline_mode<synchronous>, transform_indices = @transform_7, window_bounds = array<i64: 1, 1024>}, {pipeline_mode = #tpu.pipeline_mode<synchronous>, transform_indices = @transform_8, window_bounds = array<i64: 1024, 512>}, {pipeline_mode = #tpu.pipeline_mode<synchronous>, transform_indices = @transform_9, window_bounds = array<i64: 1, 512>}, {pipeline_mode = #tpu.pipeline_mode<synchronous>, transform_indices = @transform_10, window_bounds = array<i64: 512, 256>}, {pipeline_mode = #tpu.pipeline_mode<synchronous>, transform_indices = @transform_11, window_bounds = array<i64: 1, 256>}, {pipeline_mode = #tpu.pipeline_mode<synchronous>, transform_indices = @transform_12, window_bounds = array<i64: 256, 4>}, {pipeline_mode = #tpu.pipeline_mode<synchronous>, transform_indices = @transform_13, window_bounds = array<i64: 1, 4>}, {transform_indices = @transform_14, window_bounds = array<i64: 1, 1, 1>}, {transform_indices = @transform_15, window_bounds = array<i64: 1, 1, 4>}]} {
    %c0 = arith.constant 0 : index
    %c0_0 = arith.constant 0 : index
    %c0_1 = arith.constant 0 : index
    %c0_2 = arith.constant 0 : index
    %0 = vector.load %arg1[%c0, %c0_0, %c0_1, %c0_2] : memref<1x11x8x48xbf16, #tpu.memory_space<vmem>>, vector<1x11x8x48xbf16>
    %1 = vector.shape_cast %0 : vector<1x11x8x48xbf16> to vector<11x8x48xbf16>
    %cst = arith.constant 0.000000e+00 : f32
    %2 = vector.broadcast %cst : f32 to vector<64x64xf32>
    %3 = vector.extract_strided_slice %1 {offsets = [0, 0, 0], sizes = [8, 8, 48], strides = [1, 1, 1]} : vector<11x8x48xbf16> to vector<8x8x48xbf16>
    %4 = vector.shape_cast %3 : vector<8x8x48xbf16> to vector<64x48xbf16>
    %c0_3 = arith.constant 0 : index
    %c0_4 = arith.constant 0 : index
    %c0_5 = arith.constant 0 : index
    %5 = vector.load %arg2[%c0_3, %c0_4, %c0_5] : memref<4x48x64xbf16, #tpu.memory_space<vmem>>, vector<1x48x64xbf16>
    %6 = vector.shape_cast %5 : vector<1x48x64xbf16> to vector<48x64xbf16>
    %cst_6 = arith.constant dense<0.000000e+00> : vector<64x64xf32>
    %7 = tpu.matmul %4, %6, %cst_6 {dimension_numbers = #tpu.dot_dimension_numbers<[1], [0], [0], [1], [0, 0, 1, 1], [], []>} : vector<64x48xbf16>, vector<48x64xbf16>, vector<64x64xf32> -> vector<64x64xf32>
    %8 = arith.addf %2, %7 : vector<64x64xf32>
    %9 = vector.extract_strided_slice %1 {offsets = [1, 0, 0], sizes = [8, 8, 48], strides = [1, 1, 1]} : vector<11x8x48xbf16> to vector<8x8x48xbf16>
    %10 = vector.shape_cast %9 : vector<8x8x48xbf16> to vector<64x48xbf16>
    %c1 = arith.constant 1 : index
    %c0_7 = arith.constant 0 : index
    %c0_8 = arith.constant 0 : index
    %11 = vector.load %arg2[%c1, %c0_7, %c0_8] : memref<4x48x64xbf16, #tpu.memory_space<vmem>>, vector<1x48x64xbf16>
    %12 = vector.shape_cast %11 : vector<1x48x64xbf16> to vector<48x64xbf16>
    %cst_9 = arith.constant dense<0.000000e+00> : vector<64x64xf32>
    %13 = tpu.matmul %10, %12, %cst_9 {dimension_numbers = #tpu.dot_dimension_numbers<[1], [0], [0], [1], [0, 0, 1, 1], [], []>} : vector<64x48xbf16>, vector<48x64xbf16>, vector<64x64xf32> -> vector<64x64xf32>
    %14 = arith.addf %8, %13 : vector<64x64xf32>
    %15 = vector.extract_strided_slice %1 {offsets = [2, 0, 0], sizes = [8, 8, 48], strides = [1, 1, 1]} : vector<11x8x48xbf16> to vector<8x8x48xbf16>
    %16 = vector.shape_cast %15 : vector<8x8x48xbf16> to vector<64x48xbf16>
    %c2 = arith.constant 2 : index
    %c0_10 = arith.constant 0 : index
    %c0_11 = arith.constant 0 : index
    %17 = vector.load %arg2[%c2, %c0_10, %c0_11] : memref<4x48x64xbf16, #tpu.memory_space<vmem>>, vector<1x48x64xbf16>
    %18 = vector.shape_cast %17 : vector<1x48x64xbf16> to vector<48x64xbf16>
    %cst_12 = arith.constant dense<0.000000e+00> : vector<64x64xf32>
    %19 = tpu.matmul %16, %18, %cst_12 {dimension_numbers = #tpu.dot_dimension_numbers<[1], [0], [0], [1], [0, 0, 1, 1], [], []>} : vector<64x48xbf16>, vector<48x64xbf16>, vector<64x64xf32> -> vector<64x64xf32>
    %20 = arith.addf %14, %19 : vector<64x64xf32>
    %21 = vector.extract_strided_slice %1 {offsets = [3, 0, 0], sizes = [8, 8, 48], strides = [1, 1, 1]} : vector<11x8x48xbf16> to vector<8x8x48xbf16>
    %22 = vector.shape_cast %21 : vector<8x8x48xbf16> to vector<64x48xbf16>
    %c3 = arith.constant 3 : index
    %c0_13 = arith.constant 0 : index
    %c0_14 = arith.constant 0 : index
    %23 = vector.load %arg2[%c3, %c0_13, %c0_14] : memref<4x48x64xbf16, #tpu.memory_space<vmem>>, vector<1x48x64xbf16>
    %24 = vector.shape_cast %23 : vector<1x48x64xbf16> to vector<48x64xbf16>
    %cst_15 = arith.constant dense<0.000000e+00> : vector<64x64xf32>
    %25 = tpu.matmul %22, %24, %cst_15 {dimension_numbers = #tpu.dot_dimension_numbers<[1], [0], [0], [1], [0, 0, 1, 1], [], []>} : vector<64x48xbf16>, vector<48x64xbf16>, vector<64x64xf32> -> vector<64x64xf32>
    %26 = arith.addf %20, %25 : vector<64x64xf32>
    %c0_16 = arith.constant 0 : index
    %c0_17 = arith.constant 0 : index
    %27 = vector.load %arg3[%c0_16, %c0_17] : memref<1x64xf32, #tpu.memory_space<vmem>>, vector<1x64xf32>
    %28 = vector.broadcast %27 : vector<1x64xf32> to vector<64x64xf32>
    %29 = arith.mulf %26, %28 : vector<64x64xf32>
    %c0_18 = arith.constant 0 : index
    %c0_19 = arith.constant 0 : index
    %30 = vector.load %arg4[%c0_18, %c0_19] : memref<1x64xf32, #tpu.memory_space<vmem>>, vector<1x64xf32>
    %31 = vector.broadcast %30 : vector<1x64xf32> to vector<64x64xf32>
    %32 = arith.addf %29, %31 : vector<64x64xf32>
    %cst_20 = arith.constant 0.000000e+00 : f32
    %33 = vector.broadcast %cst_20 : f32 to vector<64x64xf32>
    %34 = arith.maximumf %32, %33 : vector<64x64xf32>
    %35 = vector.shape_cast %34 : vector<64x64xf32> to vector<8x8x64xf32>
    %36 = vector.shape_cast %35 : vector<8x8x64xf32> to vector<4x2x8x64xf32>
    %37 = vector.extract_strided_slice %36 {offsets = [0, 0, 0, 0], sizes = [4, 1, 8, 64], strides = [1, 1, 1, 1]} : vector<4x2x8x64xf32> to vector<4x1x8x64xf32>
    %38 = vector.shape_cast %37 : vector<4x1x8x64xf32> to vector<4x8x64xf32>
    %39 = vector.extract_strided_slice %36 {offsets = [0, 1, 0, 0], sizes = [4, 1, 8, 64], strides = [1, 1, 1, 1]} : vector<4x2x8x64xf32> to vector<4x1x8x64xf32>
    %40 = vector.shape_cast %39 : vector<4x1x8x64xf32> to vector<4x8x64xf32>
    %cst_21 = arith.constant 0.000000e+00 : f32
    %41 = vector.broadcast %cst_21 : f32 to vector<1x8x64xf32>
    %42 = vector.extract_strided_slice %40 {offsets = [0, 0, 0], sizes = [3, 8, 64], strides = [1, 1, 1]} : vector<4x8x64xf32> to vector<3x8x64xf32>
    %43 = tpu.concatenate %41, %42 in 0 : vector<1x8x64xf32>, vector<3x8x64xf32> -> vector<4x8x64xf32>
    %44 = arith.maximumf %38, %40 : vector<4x8x64xf32>
    %45 = arith.maximumf %44, %43 : vector<4x8x64xf32>
    %cst_22 = arith.constant 0.000000e+00 : f32
    %46 = vector.broadcast %cst_22 : f32 to vector<4x1x64xf32>
    %47 = vector.extract_strided_slice %45 {offsets = [0, 0, 0], sizes = [4, 7, 64], strides = [1, 1, 1]} : vector<4x8x64xf32> to vector<4x7x64xf32>
    %48 = tpu.concatenate %46, %47 in 1 : vector<4x1x64xf32>, vector<4x7x64xf32> -> vector<4x8x64xf32>
    %49 = vector.extract_strided_slice %45 {offsets = [0, 1, 0], sizes = [4, 7, 64], strides = [1, 1, 1]} : vector<4x8x64xf32> to vector<4x7x64xf32>
    %cst_23 = arith.constant 0.000000e+00 : f32
    %50 = vector.broadcast %cst_23 : f32 to vector<4x1x64xf32>
    %51 = tpu.concatenate %49, %50 in 1 : vector<4x7x64xf32>, vector<4x1x64xf32> -> vector<4x8x64xf32>
    %52 = arith.maximumf %45, %48 : vector<4x8x64xf32>
    %53 = arith.maximumf %52, %51 : vector<4x8x64xf32>
    %54 = vector.shape_cast %53 : vector<4x8x64xf32> to vector<32x64xf32>
    %55 = arith.truncf %54 : vector<32x64xf32> to vector<32x64xbf16>
    %c0_24 = arith.constant 0 : index
    %c0_25 = arith.constant 0 : index
    %56 = vector.load %arg5[%c0_24, %c0_25] : memref<64x2048xbf16, #tpu.memory_space<vmem>>, vector<64x2048xbf16>
    %cst_26 = arith.constant dense<0.000000e+00> : vector<32x2048xf32>
    %57 = tpu.matmul %55, %56, %cst_26 {dimension_numbers = #tpu.dot_dimension_numbers<[1], [0], [0], [1], [0, 0, 1, 1], [], []>} : vector<32x64xbf16>, vector<64x2048xbf16>, vector<32x2048xf32> -> vector<32x2048xf32>
    %c0_27 = arith.constant 0 : index
    %c0_28 = arith.constant 0 : index
    %58 = vector.load %arg6[%c0_27, %c0_28] : memref<1x2048xf32, #tpu.memory_space<vmem>>, vector<1x2048xf32>
    %59 = vector.broadcast %58 : vector<1x2048xf32> to vector<32x2048xf32>
    %60 = arith.addf %57, %59 : vector<32x2048xf32>
    %cst_29 = arith.constant 0.000000e+00 : f32
    %61 = vector.broadcast %cst_29 : f32 to vector<32x2048xf32>
    %62 = arith.maximumf %60, %61 : vector<32x2048xf32>
    %63 = tpu.iota {dimensions = array<i32: 0>} : vector<32x1xi32>
    %c2_i32 = arith.constant 2 : i32
    %c0_i32 = arith.constant 0 : i32
    %64 = arith.cmpi eq, %c2_i32, %c0_i32 : i32
    %c1_i32 = arith.constant 1 : i32
    %65 = arith.select %64, %c1_i32, %c2_i32 : i32
    %66 = vector.broadcast %65 : i32 to vector<32x1xi32>
    %67 = arith.remsi %63, %66 : vector<32x1xi32>
    %c0_i32_30 = arith.constant 0 : i32
    %68 = vector.broadcast %c0_i32_30 : i32 to vector<32x1xi32>
    %69 = arith.cmpi ne, %67, %68 : vector<32x1xi32>
    %c0_i32_31 = arith.constant 0 : i32
    %70 = vector.broadcast %c0_i32_31 : i32 to vector<32x1xi32>
    %71 = arith.cmpi slt, %67, %70 : vector<32x1xi32>
    %c0_i32_32 = arith.constant 0 : i32
    %72 = arith.cmpi slt, %65, %c0_i32_32 : i32
    %73 = vector.broadcast %72 : i1 to vector<32x1xi1>
    %74 = vector.broadcast %73 : vector<32x1xi1> to vector<32x1xi1>
    %75 = arith.xori %71, %74 : vector<32x1xi1>
    %76 = arith.andi %75, %69 : vector<32x1xi1>
    %77 = vector.broadcast %65 : i32 to vector<32x1xi32>
    %78 = arith.addi %67, %77 : vector<32x1xi32>
    %79 = arith.select %76, %78, %67 : vector<32x1xi1>, vector<32x1xi32>
    %c0_i32_33 = arith.constant 0 : i32
    %80 = vector.broadcast %c0_i32_33 : i32 to vector<32x1xi32>
    %81 = arith.cmpi eq, %79, %80 : vector<32x1xi32>
    %cst_34 = arith.constant 0.000000e+00 : f32
    %82 = vector.shape_cast %81 : vector<32x1xi1> to vector<32x1xi1>
    %83 = vector.broadcast %82 : vector<32x1xi1> to vector<32x2048xi1>
    %84 = vector.broadcast %cst_34 : f32 to vector<32x2048xf32>
    %85 = arith.select %83, %62, %84 : vector<32x2048xi1>, vector<32x2048xf32>
    %cst_35 = arith.constant dense<0.000000e+00> : vector<2048xf32>
    %86 = vector.multi_reduction <add>, %85, %cst_35 [0] : vector<32x2048xf32> to vector<2048xf32>
    %87 = vector.shape_cast %86 : vector<2048xf32> to vector<1x2048xf32>
    %cst_36 = arith.constant 6.250000e-02 : f32
    %88 = vector.broadcast %cst_36 : f32 to vector<1x2048xf32>
    %89 = arith.mulf %87, %88 : vector<1x2048xf32>
    %90 = arith.truncf %89 : vector<1x2048xf32> to vector<1x2048xbf16>
    %c0_37 = arith.constant 0 : index
    %c0_38 = arith.constant 0 : index
    %91 = vector.load %arg7[%c0_37, %c0_38] : memref<2048x1024xbf16, #tpu.memory_space<vmem>>, vector<2048x1024xbf16>
    %cst_39 = arith.constant dense<0.000000e+00> : vector<1x1024xf32>
    %92 = tpu.matmul %90, %91, %cst_39 {dimension_numbers = #tpu.dot_dimension_numbers<[1], [0], [0], [1], [0, 0, 1, 1], [], []>} : vector<1x2048xbf16>, vector<2048x1024xbf16>, vector<1x1024xf32> -> vector<1x1024xf32>
    %c0_40 = arith.constant 0 : index
    %c0_41 = arith.constant 0 : index
    %93 = vector.load %arg8[%c0_40, %c0_41] : memref<1x1024xf32, #tpu.memory_space<vmem>>, vector<1x1024xf32>
    %94 = arith.addf %92, %93 : vector<1x1024xf32>
    %95 = math.tanh %94 : vector<1x1024xf32>
    %96 = arith.truncf %95 : vector<1x1024xf32> to vector<1x1024xbf16>
    %c0_42 = arith.constant 0 : index
    %c0_43 = arith.constant 0 : index
    %97 = vector.load %arg9[%c0_42, %c0_43] : memref<1024x512xbf16, #tpu.memory_space<vmem>>, vector<1024x512xbf16>
    %cst_44 = arith.constant dense<0.000000e+00> : vector<1x512xf32>
    %98 = tpu.matmul %96, %97, %cst_44 {dimension_numbers = #tpu.dot_dimension_numbers<[1], [0], [0], [1], [0, 0, 1, 1], [], []>} : vector<1x1024xbf16>, vector<1024x512xbf16>, vector<1x512xf32> -> vector<1x512xf32>
    %c0_45 = arith.constant 0 : index
    %c0_46 = arith.constant 0 : index
    %99 = vector.load %arg10[%c0_45, %c0_46] : memref<1x512xf32, #tpu.memory_space<vmem>>, vector<1x512xf32>
    %100 = arith.addf %98, %99 : vector<1x512xf32>
    %101 = math.tanh %100 : vector<1x512xf32>
    %102 = arith.truncf %101 : vector<1x512xf32> to vector<1x512xbf16>
    %c0_47 = arith.constant 0 : index
    %c0_48 = arith.constant 0 : index
    %103 = vector.load %arg11[%c0_47, %c0_48] : memref<512x256xbf16, #tpu.memory_space<vmem>>, vector<512x256xbf16>
    %cst_49 = arith.constant dense<0.000000e+00> : vector<1x256xf32>
    %104 = tpu.matmul %102, %103, %cst_49 {dimension_numbers = #tpu.dot_dimension_numbers<[1], [0], [0], [1], [0, 0, 1, 1], [], []>} : vector<1x512xbf16>, vector<512x256xbf16>, vector<1x256xf32> -> vector<1x256xf32>
    %c0_50 = arith.constant 0 : index
    %c0_51 = arith.constant 0 : index
    %105 = vector.load %arg12[%c0_50, %c0_51] : memref<1x256xf32, #tpu.memory_space<vmem>>, vector<1x256xf32>
    %106 = arith.addf %104, %105 : vector<1x256xf32>
    %107 = math.tanh %106 : vector<1x256xf32>
    %108 = arith.truncf %107 : vector<1x256xf32> to vector<1x256xbf16>
    %c0_52 = arith.constant 0 : index
    %c0_53 = arith.constant 0 : index
    %109 = vector.load %arg13[%c0_52, %c0_53] : memref<256x4xbf16, #tpu.memory_space<vmem>>, vector<256x4xbf16>
    %cst_54 = arith.constant dense<0.000000e+00> : vector<1x4xf32>
    %110 = tpu.matmul %108, %109, %cst_54 {dimension_numbers = #tpu.dot_dimension_numbers<[1], [0], [0], [1], [0, 0, 1, 1], [], []>} : vector<1x256xbf16>, vector<256x4xbf16>, vector<1x4xf32> -> vector<1x4xf32>
    %c0_55 = arith.constant 0 : index
    %c0_56 = arith.constant 0 : index
    %111 = vector.load %arg14[%c0_55, %c0_56] : memref<1x4xf32, #tpu.memory_space<vmem>>, vector<1x4xf32>
    %112 = arith.addf %110, %111 : vector<1x4xf32>
    %c0_57 = arith.constant 0 : index
    %c0_58 = arith.constant 0 : index
    %c0_59 = arith.constant 0 : index
    %113 = vector.load %arg15[%c0_57, %c0_58, %c0_59] : memref<1x1x1xf32, #tpu.memory_space<vmem>>, vector<1x1x1xf32>
    %114 = vector.shape_cast %113 : vector<1x1x1xf32> to vector<1x1xf32>
    %115 = vector.broadcast %114 : vector<1x1xf32> to vector<1x4xf32>
    %116 = arith.mulf %115, %112 : vector<1x4xf32>
    %c0_60 = arith.constant 0 : index
    %c0_61 = arith.constant 0 : index
    %c0_62 = arith.constant 0 : index
    %117 = vector.load %arg16[%c0_60, %c0_61, %c0_62] : memref<1x1x4xf32, #tpu.memory_space<vmem>>, vector<1x1x4xf32>
    %118 = vector.shape_cast %117 : vector<1x1x4xf32> to vector<1x4xf32>
    %119 = vector.shape_cast %116 : vector<1x4xf32> to vector<1x1x4xf32>
    tpu.vector_store %arg16[%c0_60, %c0_61, %c0_62], %119 {strides = array<i32>} : memref<1x1x4xf32, #tpu.memory_space<vmem>>, vector<1x1x4xf32>,
    return
  }
  func.func @transform_0(%arg0: i32) -> (i32, i32, i32, i32) {
    %c0_i32 = arith.constant 0 : i32
    %c0_i32_0 = arith.constant 0 : i32
    %c0_i32_1 = arith.constant 0 : i32
    %c0_i32_2 = arith.constant 0 : i32
    return %arg0, %c0_i32, %c0_i32_0, %c0_i32_1 : i32, i32, i32, i32
  }
  func.func @transform_1(%arg0: i32) -> (i32, i32, i32) {
    %c0_i32 = arith.constant 0 : i32
    %c0_i32_0 = arith.constant 0 : i32
    %c0_i32_1 = arith.constant 0 : i32
    %c0_i32_2 = arith.constant 0 : i32
    return %c0_i32, %c0_i32_0, %c0_i32_1 : i32, i32, i32
  }
  func.func @transform_2(%arg0: i32) -> (i32, i32) {
    %c0_i32 = arith.constant 0 : i32
    %c0_i32_0 = arith.constant 0 : i32
    %c0_i32_1 = arith.constant 0 : i32
    return %c0_i32, %c0_i32_0 : i32, i32
  }
  func.func @transform_3(%arg0: i32) -> (i32, i32) {
    %c0_i32 = arith.constant 0 : i32
    %c0_i32_0 = arith.constant 0 : i32
    %c0_i32_1 = arith.constant 0 : i32
    return %c0_i32, %c0_i32_0 : i32, i32
  }
  func.func @transform_4(%arg0: i32) -> (i32, i32) {
    %c0_i32 = arith.constant 0 : i32
    %c0_i32_0 = arith.constant 0 : i32
    %c0_i32_1 = arith.constant 0 : i32
    return %c0_i32, %c0_i32_0 : i32, i32
  }
  func.func @transform_5(%arg0: i32) -> (i32, i32) {
    %c0_i32 = arith.constant 0 : i32
    %c0_i32_0 = arith.constant 0 : i32
    %c0_i32_1 = arith.constant 0 : i32
    return %c0_i32, %c0_i32_0 : i32, i32
  }
  func.func @transform_6(%arg0: i32) -> (i32, i32) {
    %c0_i32 = arith.constant 0 : i32
    %c0_i32_0 = arith.constant 0 : i32
    %c0_i32_1 = arith.constant 0 : i32
    return %c0_i32, %c0_i32_0 : i32, i32
  }
  func.func @transform_7(%arg0: i32) -> (i32, i32) {
    %c0_i32 = arith.constant 0 : i32
    %c0_i32_0 = arith.constant 0 : i32
    %c0_i32_1 = arith.constant 0 : i32
    return %c0_i32, %c0_i32_0 : i32, i32
  }
  func.func @transform_8(%arg0: i32) -> (i32, i32) {
    %c0_i32 = arith.constant 0 : i32
    %c0_i32_0 = arith.constant 0 : i32
    %c0_i32_1 = arith.constant 0 : i32
    return %c0_i32, %c0_i32_0 : i32, i32
  }
  func.func @transform_9(%arg0: i32) -> (i32, i32) {
    %c0_i32 = arith.constant 0 : i32
    %c0_i32_0 = arith.constant 0 : i32
    %c0_i32_1 = arith.constant 0 : i32
    return %c0_i32, %c0_i32_0 : i32, i32
  }
  func.func @transform_10(%arg0: i32) -> (i32, i32) {
    %c0_i32 = arith.constant 0 : i32
    %c0_i32_0 = arith.constant 0 : i32
    %c0_i32_1 = arith.constant 0 : i32
    return %c0_i32, %c0_i32_0 : i32, i32
  }
  func.func @transform_11(%arg0: i32) -> (i32, i32) {
    %c0_i32 = arith.constant 0 : i32
    %c0_i32_0 = arith.constant 0 : i32
    %c0_i32_1 = arith.constant 0 : i32
    return %c0_i32, %c0_i32_0 : i32, i32
  }
  func.func @transform_12(%arg0: i32) -> (i32, i32) {
    %c0_i32 = arith.constant 0 : i32
    %c0_i32_0 = arith.constant 0 : i32
    %c0_i32_1 = arith.constant 0 : i32
    return %c0_i32, %c0_i32_0 : i32, i32
  }
  func.func @transform_13(%arg0: i32) -> (i32, i32) {
    %c0_i32 = arith.constant 0 : i32
    %c0_i32_0 = arith.constant 0 : i32
    %c0_i32_1 = arith.constant 0 : i32
    return %c0_i32, %c0_i32_0 : i32, i32
  }
  func.func @transform_14(%arg0: i32) -> (i32, i32, i32) {
    %c0_i32 = arith.constant 0 : i32
    %c0_i32_0 = arith.constant 0 : i32
    %c0_i32_1 = arith.constant 0 : i32
    return %arg0, %c0_i32, %c0_i32_0 : i32, i32, i32
  }
  func.func @transform_15(%arg0: i32) -> (i32, i32, i32) {
    %c0_i32 = arith.constant 0 : i32
    %c0_i32_0 = arith.constant 0 : i32
    %c0_i32_1 = arith.constant 0 : i32
    return %arg0, %c0_i32, %c0_i32_0 : i32, i32, i32
  }
}

</mosaic_0001>

<llo_original>
// kernel: iwnet_forward.1
$region0: #{iwnet_forward.1}
  #allocation0 [shape = 'u32[]', space=smem, size = 0x4, offset = 0x4, fixed_abs, tag = 'smem constant byte address 0x4 - core index']
  #allocation1 [shape = 'u32[144,128]{1,0:T(1,128)}', space=vmem, size = 0x12000, scoped, tag = 'internal scratch']
  %s0 = inlined_call_operand.vmem [shape: bf16[2,11,8,48], index: 0, kind: input, shape index: {}]
  %s1 = inlined_call_operand.vmem [shape: bf16[4,48,64], index: 1, kind: input, shape index: {}]
  %s2 = inlined_call_operand.vmem [shape: f32[1,64], index: 2, kind: input, shape index: {}]
  %s3 = inlined_call_operand.vmem [shape: f32[1,64], index: 3, kind: input, shape index: {}]
  %s4 = inlined_call_operand.hbm [shape: bf16[64,2048], index: 4, kind: input, shape index: {}]
  %s5 = inlined_call_operand.hbm [shape: f32[1,2048], index: 5, kind: input, shape index: {}]
  %s6 = inlined_call_operand.hbm [shape: bf16[2048,1024], index: 6, kind: input, shape index: {}]
  %s7 = inlined_call_operand.hbm [shape: f32[1,1024], index: 7, kind: input, shape index: {}]
  %s8 = inlined_call_operand.hbm [shape: bf16[1024,512], index: 8, kind: input, shape index: {}]
  %s9 = inlined_call_operand.hbm [shape: f32[1,512], index: 9, kind: input, shape index: {}]
  %s10 = inlined_call_operand.hbm [shape: bf16[512,256], index: 10, kind: input, shape index: {}]
  %s11 = inlined_call_operand.hbm [shape: f32[1,256], index: 11, kind: input, shape index: {}]
  %s12 = inlined_call_operand.vmem [shape: bf16[256,4], index: 12, kind: input, shape index: {}]
  %s13 = inlined_call_operand.hbm [shape: f32[1,4], index: 13, kind: input, shape index: {}]
  %s14 = inlined_call_operand.vmem [shape: f32[2,1,1], index: 14, kind: input, shape index: {}]
  %s15 = inlined_call_operand.hbm [shape: f32[2,1,4], index: 15, kind: output, shape index: {}]
  %s16 = sld [smem:[#allocation0]]
  $region129: #{iwnet_forward.1} parent=0
    _
  %s18 = ssub.s32 1, %s16
  %s19 = scalar_select 0, %s18, %s16
  $region1: #{iwnet_forward.1} parent=0
    #allocation2 [shape = 'u8[262144]{0}', space=vmem, size = 0x40000, scoped, tag = 'input window, operand 4, single buffered']
    #allocation3 [shape = 's32[2]{0}', space=sflag, size = 0x8, scoped, tag = 'scoped memory for iwnet_forward.1']
    #allocation4 [shape = 's32[2]{0}', space=sflag, size = 0x8, scoped, tag = 'scoped memory for iwnet_forward.1']
    #allocation5 [shape = 'u8[8192]{0}', space=vmem, size = 0x2000, scoped, tag = 'input window, operand 5, single buffered']
    #allocation6 [shape = 's32[1]{0}', space=sflag, size = 0x4, scoped, tag = 'scoped memory for iwnet_forward.1']
    #allocation7 [shape = 'u8[4194304]{0}', space=vmem, size = 0x400000, scoped, tag = 'input window, operand 6, single buffered']
    #allocation8 [shape = 'u8[4096]{0}', space=vmem, size = 0x1000, scoped, tag = 'input window, operand 7, single buffered']
    #allocation9 [shape = 's32[1]{0}', space=sflag, size = 0x4, scoped, tag = 'scoped memory for iwnet_forward.1']
    #allocation10 [shape = 'u8[1048576]{0}', space=vmem, size = 0x100000, scoped, tag = 'input window, operand 8, single buffered']
    #allocation11 [shape = 'u8[2048]{0}', space=vmem, size = 0x800, scoped, tag = 'input window, operand 9, single buffered']
    #allocation12 [shape = 's32[1]{0}', space=sflag, size = 0x4, scoped, tag = 'scoped memory for iwnet_forward.1']
    #allocation13 [shape = 'u8[262144]{0}', space=vmem, size = 0x40000, scoped, tag = 'input window, operand 10, single buffered']
    #allocation14 [shape = 'u8[1024]{0}', space=vmem, size = 0x400, scoped, tag = 'input window, operand 11, single buffered']
    #allocation15 [shape = 's32[1]{0}', space=sflag, size = 0x4, scoped, tag = 'scoped memory for iwnet_forward.1']
    #allocation16 [shape = 'u8[512]{0}', space=vmem, size = 0x400, scoped, tag = 'input window, operand 13, single buffered']
    #allocation17 [shape = 'u8[1024]{0}', space=vmem, size = 0x400, scoped, tag = 'output window, operand 0']
    %20 = vsyncpa [#allocation3], 0
    %21 = vsyncpa [#allocation6], 0
    %22 = vsyncpa [#allocation9], 0
    %23 = vsyncpa [#allocation12], 0
    %24 = vsyncpa [#allocation15], 0
    %25 = vsyncpa [#allocation4], 0
    %s26 = scalar_lea.sflag [#allocation4], 1
    %27 = vsyncpa %s26, 0
    loop: start=0, step=1, limit=4
    $region2: #{iwnet_forward.1} parent=1 // loop_pre_header
      _
    $region3: #{iwnet_forward.1} parent=1 // loop_header
      %s29 = sphi 0, %s33
      %p30 = scmp.ge.s32.totalorder %s29, 4
      %s39 = sphi 0, %s41
      %s42 = sphi 0, %s39
      %s43 = sphi 0, %s42
      %s59 = sphi 0, %s43
      %s63 = sphi 0, %s63
      %s65 = sphi 0, %s63
      %s66 = sphi 0, %s65
      %s80 = sphi 0, %s66
      %s84 = sphi 0, %s84
      %s86 = sphi 0, %s84
      %s87 = sphi 0, %s86
      %s101 = sphi 0, %s87
      %s105 = sphi 0, %s105
      %s107 = sphi 0, %s105
      %s108 = sphi 0, %s107
      %s122 = sphi 0, %s108
      %s126 = sphi 0, %s126
      %s128 = sphi 0, %s126
      %s129 = sphi 0, %s128
      %s143 = sphi 0, %s129
      %s147 = sphi 0, %s147
      %s149 = sphi 0, %s147
      %s150 = sphi 0, %s149
      %s164 = sphi 0, %s150
      %s168 = sphi 0, %s168
      %s170 = sphi 0, %s168
      %s171 = sphi 0, %s170
      %s185 = sphi 0, %s171
      %s189 = sphi 0, %s189
      %s191 = sphi 0, %s189
      %s192 = sphi 0, %s191
      %s206 = sphi 0, %s192
      %s210 = sphi 0, %s210
      %s212 = sphi 0, %s210
      %s213 = sphi 0, %s212
      %s227 = sphi 0, %s213
      %s231 = sphi 0, %s231
      %s233 = sphi 0, %s231
      %s234 = sphi 0, %s233
      %s248 = sphi 0, %s234
      %s252 = sphi 0, %s252
      %s254 = sphi 0, %s252
      %s255 = sphi 0, %s254
      %s269 = sphi 0, %s255
      %s273 = sphi 0, %s273
      %s275 = sphi 0, %s273
      %s276 = sphi 0, %s275
      %s290 = sphi 0, %s276
      %s294 = sphi 0, %s294
      %s296 = sphi 0, %s294
      %s297 = sphi 0, %s296
      %s311 = sphi 0, %s297
      %s315 = sphi 0, %s315
      %s317 = sphi 0, %s315
      %s318 = sphi 0, %s317
      %s332 = sphi 0, %s318
      %s338 = sphi 0, %s340
      %s341 = sphi 0, %s338
      %s342 = sphi 0, %s341
      %s358 = sphi 0, %s342
      %s364 = sphi 0, %s366
      %s367 = sphi 0, %s364
      %s368 = sphi 0, %s367
      %s384 = sphi 0, %s368
    $region4: #{iwnet_forward.1} parent=1 // loop_header_branch
      %32 = sbr.rel (%p30) target = $region8
    $region5: #{iwnet_forward.1} parent=1 // loop_body
      %s34 = ssub.s32 %s29, 1
      %s35 = ssub.s32 %s29, 2
      %s36 = sadd.s32 %s29, 1
      %s37 = ssub.s32 %s29, %s36
      %p38 = scmp.eq.s32.totalorder %s37, 0
      %s40 = sadd.s32 %s39, 1
      %s41 = scalar_select %p38, %s39, %s40
      %p44 = pneg %p38
      %p45 = scmp.eq.s32.totalorder %s29, 1
      %p46 = por %p44, %p45
      %p47 = scmp.ne.s32.totalorder %s39, %s42
      %p48 = scmp.eq.s32.totalorder %s29, 0
      %p49 = por %p47, %p48
      %p50 = scmp.ne.s32.totalorder %s39, %s42
      %p51 = scmp.eq.s32.totalorder %s34, 1
      %p52 = por %p50, %p51
      %p53 = scmp.ne.s32.totalorder %s42, %s43
      %p54 = scmp.eq.s32.totalorder %s34, 0
      %p55 = por %p53, %p54
      %p56 = scmp.ne.s32.totalorder %s42, %s43
      %p57 = scmp.eq.s32.totalorder %s35, 1
      %p58 = por %p56, %p57
      %p60 = scmp.ne.s32.totalorder %s43, %s59
      %p61 = scmp.eq.s32.totalorder %s35, 0
      %p62 = por %p60, %p61
      %s64 = sadd.s32 %s63, 1
      %p67 = scmp.eq.s32.totalorder %s29, 1
      %p68 = scmp.ne.s32.totalorder %s63, %s65
      %p69 = scmp.eq.s32.totalorder %s29, 0
      %p70 = por %p68, %p69
      %p71 = scmp.ne.s32.totalorder %s63, %s65
      %p72 = scmp.eq.s32.totalorder %s34, 1
      %p73 = por %p71, %p72
      %p74 = scmp.ne.s32.totalorder %s65, %s66
      %p75 = scmp.eq.s32.totalorder %s34, 0
      %p76 = por %p74, %p75
      %p77 = scmp.ne.s32.totalorder %s65, %s66
      %p78 = scmp.eq.s32.totalorder %s35, 1
      %p79 = por %p77, %p78
      %p81 = scmp.ne.s32.totalorder %s66, %s80
      %p82 = scmp.eq.s32.totalorder %s35, 0
      %p83 = por %p81, %p82
      %s85 = sadd.s32 %s84, 1
      %p88 = scmp.eq.s32.totalorder %s29, 1
      %p89 = scmp.ne.s32.totalorder %s84, %s86
      %p90 = scmp.eq.s32.totalorder %s29, 0
      %p91 = por %p89, %p90
      %p92 = scmp.ne.s32.totalorder %s84, %s86
      %p93 = scmp.eq.s32.totalorder %s34, 1
      %p94 = por %p92, %p93
      %p95 = scmp.ne.s32.totalorder %s86, %s87
      %p96 = scmp.eq.s32.totalorder %s34, 0
      %p97 = por %p95, %p96
      %p98 = scmp.ne.s32.totalorder %s86, %s87
      %p99 = scmp.eq.s32.totalorder %s35, 1
      %p100 = por %p98, %p99
      %p102 = scmp.ne.s32.totalorder %s87, %s101
      %p103 = scmp.eq.s32.totalorder %s35, 0
      %p104 = por %p102, %p103
      %s106 = sadd.s32 %s105, 1
      %p109 = scmp.eq.s32.totalorder %s29, 1
      %p110 = scmp.ne.s32.totalorder %s105, %s107
      %p111 = scmp.eq.s32.totalorder %s29, 0
      %p112 = por %p110, %p111
      %p113 = scmp.ne.s32.totalorder %s105, %s107
      %p114 = scmp.eq.s32.totalorder %s34, 1
      %p115 = por %p113, %p114
      %p116 = scmp.ne.s32.totalorder %s107, %s108
      %p117 = scmp.eq.s32.totalorder %s34, 0
      %p118 = por %p116, %p117
      %p119 = scmp.ne.s32.totalorder %s107, %s108
      %p120 = scmp.eq.s32.totalorder %s35, 1
      %p121 = por %p119, %p120
      %p123 = scmp.ne.s32.totalorder %s108, %s122
      %p124 = scmp.eq.s32.totalorder %s35, 0
      %p125 = por %p123, %p124
      %s127 = sadd.s32 %s126, 1
      %p130 = scmp.eq.s32.totalorder %s29, 1
      %p131 = scmp.ne.s32.totalorder %s126, %s128
      %p132 = scmp.eq.s32.totalorder %s29, 0
      %p133 = por %p131, %p132
      %p134 = scmp.ne.s32.totalorder %s126, %s128
      %p135 = scmp.eq.s32.totalorder %s34, 1
      %p136 = por %p134, %p135
      %p137 = scmp.ne.s32.totalorder %s128, %s129
      %p138 = scmp.eq.s32.totalorder %s34, 0
      %p139 = por %p137, %p138
      %p140 = scmp.ne.s32.totalorder %s128, %s129
      %p141 = scmp.eq.s32.totalorder %s35, 1
      %p142 = por %p140, %p141
      %p144 = scmp.ne.s32.totalorder %s129, %s143
      %p145 = scmp.eq.s32.totalorder %s35, 0
      %p146 = por %p144, %p145
      %s148 = sadd.s32 %s147, 1
      %p151 = scmp.eq.s32.totalorder %s29, 1
      %p152 = scmp.ne.s32.totalorder %s147, %s149
      %p153 = scmp.eq.s32.totalorder %s29, 0
      %p154 = por %p152, %p153
      %p155 = scmp.ne.s32.totalorder %s147, %s149
      %p156 = scmp.eq.s32.totalorder %s34, 1
      %p157 = por %p155, %p156
      %p158 = scmp.ne.s32.totalorder %s149, %s150
      %p159 = scmp.eq.s32.totalorder %s34, 0
      %p160 = por %p158, %p159
      %p161 = scmp.ne.s32.totalorder %s149, %s150
      %p162 = scmp.eq.s32.totalorder %s35, 1
      %p163 = por %p161, %p162
      %p165 = scmp.ne.s32.totalorder %s150, %s164
      %p166 = scmp.eq.s32.totalorder %s35, 0
      %p167 = por %p165, %p166
      %s169 = sadd.s32 %s168, 1
      %p172 = scmp.eq.s32.totalorder %s29, 1
      %p173 = scmp.ne.s32.totalorder %s168, %s170
      %p174 = scmp.eq.s32.totalorder %s29, 0
      %p175 = por %p173, %p174
      %p176 = scmp.ne.s32.totalorder %s168, %s170
      %p177 = scmp.eq.s32.totalorder %s34, 1
      %p178 = por %p176, %p177
      %p179 = scmp.ne.s32.totalorder %s170, %s171
      %p180 = scmp.eq.s32.totalorder %s34, 0
      %p181 = por %p179, %p180
      %p182 = scmp.ne.s32.totalorder %s170, %s171
      %p183 = scmp.eq.s32.totalorder %s35, 1
      %p184 = por %p182, %p183
      %p186 = scmp.ne.s32.totalorder %s171, %s185
      %p187 = scmp.eq.s32.totalorder %s35, 0
      %p188 = por %p186, %p187
      %s190 = sadd.s32 %s189, 1
      %p193 = scmp.eq.s32.totalorder %s29, 1
      %p194 = scmp.ne.s32.totalorder %s189, %s191
      %p195 = scmp.eq.s32.totalorder %s29, 0
      %p196 = por %p194, %p195
      %p197 = scmp.ne.s32.totalorder %s189, %s191
      %p198 = scmp.eq.s32.totalorder %s34, 1
      %p199 = por %p197, %p198
      %p200 = scmp.ne.s32.totalorder %s191, %s192
      %p201 = scmp.eq.s32.totalorder %s34, 0
      %p202 = por %p200, %p201
      %p203 = scmp.ne.s32.totalorder %s191, %s192
      %p204 = scmp.eq.s32.totalorder %s35, 1
      %p205 = por %p203, %p204
      %p207 = scmp.ne.s32.totalorder %s192, %s206
      %p208 = scmp.eq.s32.totalorder %s35, 0
      %p209 = por %p207, %p208
      %s211 = sadd.s32 %s210, 1
      %p214 = scmp.eq.s32.totalorder %s29, 1
      %p215 = scmp.ne.s32.totalorder %s210, %s212
      %p216 = scmp.eq.s32.totalorder %s29, 0
      %p217 = por %p215, %p216
      %p218 = scmp.ne.s32.totalorder %s210, %s212
      %p219 = scmp.eq.s32.totalorder %s34, 1
      %p220 = por %p218, %p219
      %p221 = scmp.ne.s32.totalorder %s212, %s213
      %p222 = scmp.eq.s32.totalorder %s34, 0
      %p223 = por %p221, %p222
      %p224 = scmp.ne.s32.totalorder %s212, %s213
      %p225 = scmp.eq.s32.totalorder %s35, 1
      %p226 = por %p224, %p225
      %p228 = scmp.ne.s32.totalorder %s213, %s227
      %p229 = scmp.eq.s32.totalorder %s35, 0
      %p230 = por %p228, %p229
      %s232 = sadd.s32 %s231, 1
      %p235 = scmp.eq.s32.totalorder %s29, 1
      %p236 = scmp.ne.s32.totalorder %s231, %s233
      %p237 = scmp.eq.s32.totalorder %s29, 0
      %p238 = por %p236, %p237
      %p239 = scmp.ne.s32.totalorder %s231, %s233
      %p240 = scmp.eq.s32.totalorder %s34, 1
      %p241 = por %p239, %p240
      %p242 = scmp.ne.s32.totalorder %s233, %s234
      %p243 = scmp.eq.s32.totalorder %s34, 0
      %p244 = por %p242, %p243
      %p245 = scmp.ne.s32.totalorder %s233, %s234
      %p246 = scmp.eq.s32.totalorder %s35, 1
      %p247 = por %p245, %p246
      %p249 = scmp.ne.s32.totalorder %s234, %s248
      %p250 = scmp.eq.s32.totalorder %s35, 0
      %p251 = por %p249, %p250
      %s253 = sadd.s32 %s252, 1
      %p256 = scmp.eq.s32.totalorder %s29, 1
      %p257 = scmp.ne.s32.totalorder %s252, %s254
      %p258 = scmp.eq.s32.totalorder %s29, 0
      %p259 = por %p257, %p258
      %p260 = scmp.ne.s32.totalorder %s252, %s254
      %p261 = scmp.eq.s32.totalorder %s34, 1
      %p262 = por %p260, %p261
      %p263 = scmp.ne.s32.totalorder %s254, %s255
      %p264 = scmp.eq.s32.totalorder %s34, 0
      %p265 = por %p263, %p264
      %p266 = scmp.ne.s32.totalorder %s254, %s255
      %p267 = scmp.eq.s32.totalorder %s35, 1
      %p268 = por %p266, %p267
      %p270 = scmp.ne.s32.totalorder %s255, %s269
      %p271 = scmp.eq.s32.totalorder %s35, 0
      %p272 = por %p270, %p271
      %s274 = sadd.s32 %s273, 1
      %p277 = scmp.eq.s32.totalorder %s29, 1
      %p278 = scmp.ne.s32.totalorder %s273, %s275
      %p279 = scmp.eq.s32.totalorder %s29, 0
      %p280 = por %p278, %p279
      %p281 = scmp.ne.s32.totalorder %s273, %s275
      %p282 = scmp.eq.s32.totalorder %s34, 1
      %p283 = por %p281, %p282
      %p284 = scmp.ne.s32.totalorder %s275, %s276
      %p285 = scmp.eq.s32.totalorder %s34, 0
      %p286 = por %p284, %p285
      %p287 = scmp.ne.s32.totalorder %s275, %s276
      %p288 = scmp.eq.s32.totalorder %s35, 1
      %p289 = por %p287, %p288
      %p291 = scmp.ne.s32.totalorder %s276, %s290
      %p292 = scmp.eq.s32.totalorder %s35, 0
      %p293 = por %p291, %p292
      %s295 = sadd.s32 %s294, 1
      %p298 = scmp.eq.s32.totalorder %s29, 1
      %p299 = scmp.ne.s32.totalorder %s294, %s296
      %p300 = scmp.eq.s32.totalorder %s29, 0
      %p301 = por %p299, %p300
      %p302 = scmp.ne.s32.totalorder %s294, %s296
      %p303 = scmp.eq.s32.totalorder %s34, 1
      %p304 = por %p302, %p303
      %p305 = scmp.ne.s32.totalorder %s296, %s297
      %p306 = scmp.eq.s32.totalorder %s34, 0
      %p307 = por %p305, %p306
      %p308 = scmp.ne.s32.totalorder %s296, %s297
      %p309 = scmp.eq.s32.totalorder %s35, 1
      %p310 = por %p308, %p309
      %p312 = scmp.ne.s32.totalorder %s297, %s311
      %p313 = scmp.eq.s32.totalorder %s35, 0
      %p314 = por %p312, %p313
      %s316 = sadd.s32 %s315, 1
      %p319 = scmp.eq.s32.totalorder %s29, 1
      %p320 = scmp.ne.s32.totalorder %s315, %s317
      %p321 = scmp.eq.s32.totalorder %s29, 0
      %p322 = por %p320, %p321
      %p323 = scmp.ne.s32.totalorder %s315, %s317
      %p324 = scmp.eq.s32.totalorder %s34, 1
      %p325 = por %p323, %p324
      %p326 = scmp.ne.s32.totalorder %s317, %s318
      %p327 = scmp.eq.s32.totalorder %s34, 0
      %p328 = por %p326, %p327
      %p329 = scmp.ne.s32.totalorder %s317, %s318
      %p330 = scmp.eq.s32.totalorder %s35, 1
      %p331 = por %p329, %p330
      %p333 = scmp.ne.s32.totalorder %s318, %s332
      %p334 = scmp.eq.s32.totalorder %s35, 0
      %p335 = por %p333, %p334
      %s336 = ssub.s32 %s29, %s36
      %p337 = scmp.eq.s32.totalorder %s336, 0
      %s339 = sadd.s32 %s338, 1
      %s340 = scalar_select %p337, %s338, %s339
      %p343 = pneg %p337
      %p344 = scmp.eq.s32.totalorder %s29, 1
      %p345 = por %p343, %p344
      %p346 = scmp.ne.s32.totalorder %s338, %s341
      %p347 = scmp.eq.s32.totalorder %s29, 0
      %p348 = por %p346, %p347
      %p349 = scmp.ne.s32.totalorder %s338, %s341
      %p350 = scmp.eq.s32.totalorder %s34, 1
      %p351 = por %p349, %p350
      %p352 = scmp.ne.s32.totalorder %s341, %s342
      %p353 = scmp.eq.s32.totalorder %s34, 0
      %p354 = por %p352, %p353
      %p355 = scmp.ne.s32.totalorder %s341, %s342
      %p356 = scmp.eq.s32.totalorder %s35, 1
      %p357 = por %p355, %p356
      %p359 = scmp.ne.s32.totalorder %s342, %s358
      %p360 = scmp.eq.s32.totalorder %s35, 0
      %p361 = por %p359, %p360
      %s362 = ssub.s32 %s29, %s36
      %p363 = scmp.eq.s32.totalorder %s362, 0
      %s365 = sadd.s32 %s364, 1
      %s366 = scalar_select %p363, %s364, %s365
      %p369 = pneg %p363
      %p370 = scmp.eq.s32.totalorder %s29, 1
      %p371 = por %p369, %p370
      %p372 = scmp.ne.s32.totalorder %s364, %s367
      %p373 = scmp.eq.s32.totalorder %s29, 0
      %p374 = por %p372, %p373
      %p375 = scmp.ne.s32.totalorder %s364, %s367
      %p376 = scmp.eq.s32.totalorder %s34, 1
      %p377 = por %p375, %p376
      %p378 = scmp.ne.s32.totalorder %s367, %s368
      %p379 = scmp.eq.s32.totalorder %s34, 0
      %p380 = por %p378, %p379
      %p381 = scmp.ne.s32.totalorder %s367, %s368
      %p382 = scmp.eq.s32.totalorder %s35, 1
      %p383 = por %p381, %p382
      %p385 = scmp.ne.s32.totalorder %s368, %s384
      %p386 = scmp.eq.s32.totalorder %s35, 0
      %p387 = por %p385, %p386
      %p388 = scmp.le.s32.totalorder 1, %s29
      %p389 = scmp.lt.s32.totalorder %s29, 3
      %p390 = pnand %p388, %p389
      %p391 = pneg %p390
      // Predicated region
      $region9: #{iwnet_forward.1} parent=5 // pred_check
        _
      $region10: #{iwnet_forward.1} parent=5 // pred_check_branch
        %393 = sbr.rel (%p390) target = $region12
      $region11: #{iwnet_forward.1} parent=5 // pred_region
        %s394 = ssub.s32 %s29, 1
        // Predicated region
        $region13: #{iwnet_forward.1} parent=11 // pred_check
          %p395 = pneg %p76
        $region14: #{iwnet_forward.1} parent=11 // pred_check_branch
          %397 = sbr.rel (%p395) target = $region16
        $region15: #{iwnet_forward.1} parent=11 // pred_region
          _
        $region16: #{iwnet_forward.1} parent=11 // pred_fallthru
          _
        // Predicated region
        $region17: #{iwnet_forward.1} parent=11 // pred_check
          %p398 = pneg %p97
        $region18: #{iwnet_forward.1} parent=11 // pred_check_branch
          %400 = sbr.rel (%p398) target = $region20
        $region19: #{iwnet_forward.1} parent=11 // pred_region
          _
        $region20: #{iwnet_forward.1} parent=11 // pred_fallthru
          _
        // Predicated region
        $region21: #{iwnet_forward.1} parent=11 // pred_check
          %p401 = pneg %p118
        $region22: #{iwnet_forward.1} parent=11 // pred_check_branch
          %403 = sbr.rel (%p401) target = $region24
        $region23: #{iwnet_forward.1} parent=11 // pred_region
          _
        $region24: #{iwnet_forward.1} parent=11 // pred_fallthru
          _
        // Predicated region
        $region25: #{iwnet_forward.1} parent=11 // pred_check
          %p404 = pneg %p139
        $region26: #{iwnet_forward.1} parent=11 // pred_check_branch
          %406 = sbr.rel (%p404) target = $region28
        $region27: #{iwnet_forward.1} parent=11 // pred_region
          %s408 = ssub.s32 8192, 8192
          %409 = vsyncadd [#allocation3], %s408
          %s410 = sshll.u32 [#allocation2], 4
          %s411 = int_to_ptr.vmem [resolvable:$true] %s410
          %416 = dma.hbm_to_vmem [thread:$0]  %s4, 8192, %s411, [#allocation3], 1024, 1024, 64
        $region28: #{iwnet_forward.1} parent=11 // pred_fallthru
          _
        // Predicated region
        $region29: #{iwnet_forward.1} parent=11 // pred_check
          %p417 = pneg %p160
        $region30: #{iwnet_forward.1} parent=11 // pred_check_branch
          %419 = sbr.rel (%p417) target = $region32
        $region31: #{iwnet_forward.1} parent=11 // pred_region
          %s421 = ssub.s32 256, 256
          %422 = vsyncadd [#allocation6], %s421
          %s424 = sshll.u32 [#allocation5], 4
          %s425 = int_to_ptr.vmem [resolvable:$true] %s424
          %427 = dma.hbm_to_vmem [thread:$0]  %s5, 256, %s425, [#allocation6]
        $region32: #{iwnet_forward.1} parent=11 // pred_fallthru
          _
        // Predicated region
        $region33: #{iwnet_forward.1} parent=11 // pred_check
          %p428 = pneg %p181
        $region34: #{iwnet_forward.1} parent=11 // pred_check_branch
          %430 = sbr.rel (%p428) target = $region36
        $region35: #{iwnet_forward.1} parent=11 // pred_region
          %s432 = ssub.s32 131072, 131072
          %433 = vsyncadd [#allocation6], %s432
          %s434 = sshll.u32 [#allocation7], 4
          %s435 = int_to_ptr.vmem [resolvable:$true] %s434
          %440 = dma.hbm_to_vmem [thread:$0]  %s6, 131072, %s435, [#allocation6], 512, 512, 32
        $region36: #{iwnet_forward.1} parent=11 // pred_fallthru
          _
        // Predicated region
        $region37: #{iwnet_forward.1} parent=11 // pred_check
          %p441 = pneg %p202
        $region38: #{iwnet_forward.1} parent=11 // pred_check_branch
          %443 = sbr.rel (%p441) target = $region40
        $region39: #{iwnet_forward.1} parent=11 // pred_region
          %s445 = ssub.s32 128, 128
          %446 = vsyncadd [#allocation9], %s445
          %s448 = sshll.u32 [#allocation8], 4
          %s449 = int_to_ptr.vmem [resolvable:$true] %s448
          %451 = dma.hbm_to_vmem [thread:$0]  %s7, 128, %s449, [#allocation9]
        $region40: #{iwnet_forward.1} parent=11 // pred_fallthru
          _
        // Predicated region
        $region41: #{iwnet_forward.1} parent=11 // pred_check
          %p452 = pneg %p223
        $region42: #{iwnet_forward.1} parent=11 // pred_check_branch
          %454 = sbr.rel (%p452) target = $region44
        $region43: #{iwnet_forward.1} parent=11 // pred_region
          %s456 = ssub.s32 32768, 32768
          %457 = vsyncadd [#allocation9], %s456
          %s458 = sshll.u32 [#allocation10], 4
          %s459 = int_to_ptr.vmem [resolvable:$true] %s458
          %464 = dma.hbm_to_vmem [thread:$0]  %s8, 32768, %s459, [#allocation9], 256, 256, 16
        $region44: #{iwnet_forward.1} parent=11 // pred_fallthru
          _
        // Predicated region
        $region45: #{iwnet_forward.1} parent=11 // pred_check
          %p465 = pneg %p244
        $region46: #{iwnet_forward.1} parent=11 // pred_check_branch
          %467 = sbr.rel (%p465) target = $region48
        $region47: #{iwnet_forward.1} parent=11 // pred_region
          %s469 = ssub.s32 64, 64
          %470 = vsyncadd [#allocation12], %s469
          %s472 = sshll.u32 [#allocation11], 4
          %s473 = int_to_ptr.vmem [resolvable:$true] %s472
          %475 = dma.hbm_to_vmem [thread:$0]  %s9, 64, %s473, [#allocation12]
        $region48: #{iwnet_forward.1} parent=11 // pred_fallthru
          _
        // Predicated region
        $region49: #{iwnet_forward.1} parent=11 // pred_check
          %p476 = pneg %p265
        $region50: #{iwnet_forward.1} parent=11 // pred_check_branch
          %478 = sbr.rel (%p476) target = $region52
        $region51: #{iwnet_forward.1} parent=11 // pred_region
          %s480 = ssub.s32 8192, 8192
          %481 = vsyncadd [#allocation12], %s480
          %s482 = sshll.u32 [#allocation13], 4
          %s483 = int_to_ptr.vmem [resolvable:$true] %s482
          %488 = dma.hbm_to_vmem [thread:$0]  %s10, 8192, %s483, [#allocation12], 128, 128, 8
        $region52: #{iwnet_forward.1} parent=11 // pred_fallthru
          _
        // Predicated region
        $region53: #{iwnet_forward.1} parent=11 // pred_check
          %p489 = pneg %p286
        $region54: #{iwnet_forward.1} parent=11 // pred_check_branch
          %491 = sbr.rel (%p489) target = $region56
        $region55: #{iwnet_forward.1} parent=11 // pred_region
          %s493 = ssub.s32 32, 32
          %494 = vsyncadd [#allocation15], %s493
          %s496 = sshll.u32 [#allocation14], 4
          %s497 = int_to_ptr.vmem [resolvable:$true] %s496
          %499 = dma.hbm_to_vmem [thread:$0]  %s11, 32, %s497, [#allocation15]
        $region56: #{iwnet_forward.1} parent=11 // pred_fallthru
          _
        // Predicated region
        $region57: #{iwnet_forward.1} parent=11 // pred_check
          %p500 = pneg %p307
        $region58: #{iwnet_forward.1} parent=11 // pred_check_branch
          %502 = sbr.rel (%p500) target = $region60
        $region59: #{iwnet_forward.1} parent=11 // pred_region
          _
        $region60: #{iwnet_forward.1} parent=11 // pred_fallthru
          _
        // Predicated region
        $region61: #{iwnet_forward.1} parent=11 // pred_check
          %p503 = pneg %p328
        $region62: #{iwnet_forward.1} parent=11 // pred_check_branch
          %505 = sbr.rel (%p503) target = $region64
        $region63: #{iwnet_forward.1} parent=11 // pred_region
          %s507 = ssub.s32 16, 16
          %508 = vsyncadd [#allocation15], %s507
          %s510 = sshll.u32 [#allocation16], 4
          %s511 = int_to_ptr.vmem [resolvable:$true] %s510
          %513 = dma.hbm_to_vmem [thread:$0]  %s13, 16, %s511, [#allocation15]
        $region64: #{iwnet_forward.1} parent=11 // pred_fallthru
          _
      $region12: #{iwnet_forward.1} parent=5 // pred_fallthru
        _
      %p514 = scmp.lt.s32.totalorder %s29, 2
      // Predicated region
      $region65: #{iwnet_forward.1} parent=5 // pred_check
        %p515 = pneg %p514
      $region66: #{iwnet_forward.1} parent=5 // pred_check_branch
        %517 = sbr.rel (%p515) target = $region68
      $region67: #{iwnet_forward.1} parent=5 // pred_region
        // Predicated region
        $region69: #{iwnet_forward.1} parent=67 // pred_check
          %p518 = pneg %p49
        $region70: #{iwnet_forward.1} parent=67 // pred_check_branch
          %520 = sbr.rel (%p518) target = $region72
        $region71: #{iwnet_forward.1} parent=67 // pred_region
          %p521 = scmp.lt.s32.totalorder %s29, 1
          %s522 = scalar_select %p521, %s29, 1
          %s523 = smul.addr %s522, 11
          %s524 = smul.addr %s523, 4
          %s525 = scalar_lea.vmem %s0, %s524
        $region72: #{iwnet_forward.1} parent=67 // pred_fallthru
          _
        // Predicated region
        $region73: #{iwnet_forward.1} parent=67 // pred_check
          %p526 = pneg %p348
        $region74: #{iwnet_forward.1} parent=67 // pred_check_branch
          %528 = sbr.rel (%p526) target = $region76
        $region75: #{iwnet_forward.1} parent=67 // pred_region
          %p529 = scmp.lt.s32.totalorder %s29, 1
          %s530 = scalar_select %p529, %s29, 1
          %s531 = scalar_lea.vmem %s14, %s530
        $region76: #{iwnet_forward.1} parent=67 // pred_fallthru
          _
      $region68: #{iwnet_forward.1} parent=5 // pred_fallthru
        _
      %p532 = scmp.le.s32.totalorder 1, %s29
      %p533 = scmp.lt.s32.totalorder %s29, 3
      %p534 = pnand %p532, %p533
      %p535 = pneg %p534
      // Predicated region
      $region77: #{iwnet_forward.1} parent=5 // pred_check
        _
      $region78: #{iwnet_forward.1} parent=5 // pred_check_branch
        %537 = sbr.rel (%p534) target = $region80
      $region79: #{iwnet_forward.1} parent=5 // pred_region
        %s538 = ssub.s32 %s29, 1
        // Predicated region
        $region81: #{iwnet_forward.1} parent=79 // pred_check
          %p539 = pneg %p139
        $region82: #{iwnet_forward.1} parent=79 // pred_check_branch
          %541 = sbr.rel (%p539) target = $region84
        $region83: #{iwnet_forward.1} parent=79 // pred_region
          %542 = dma.done [#allocation3], 8192
        $region84: #{iwnet_forward.1} parent=79 // pred_fallthru
          _
        // Predicated region
        $region85: #{iwnet_forward.1} parent=79 // pred_check
          %p543 = pneg %p160
        $region86: #{iwnet_forward.1} parent=79 // pred_check_branch
          %545 = sbr.rel (%p543) target = $region88
        $region87: #{iwnet_forward.1} parent=79 // pred_region
          %546 = dma.done [#allocation6], 256
        $region88: #{iwnet_forward.1} parent=79 // pred_fallthru
          _
        // Predicated region
        $region89: #{iwnet_forward.1} parent=79 // pred_check
          %p547 = pneg %p181
        $region90: #{iwnet_forward.1} parent=79 // pred_check_branch
          %549 = sbr.rel (%p547) target = $region92
        $region91: #{iwnet_forward.1} parent=79 // pred_region
          %550 = dma.done [#allocation6], 131072
        $region92: #{iwnet_forward.1} parent=79 // pred_fallthru
          _
        // Predicated region
        $region93: #{iwnet_forward.1} parent=79 // pred_check
          %p551 = pneg %p202
        $region94: #{iwnet_forward.1} parent=79 // pred_check_branch
          %553 = sbr.rel (%p551) target = $region96
        $region95: #{iwnet_forward.1} parent=79 // pred_region
          %554 = dma.done [#allocation9], 128
        $region96: #{iwnet_forward.1} parent=79 // pred_fallthru
          _
        // Predicated region
        $region97: #{iwnet_forward.1} parent=79 // pred_check
          %p555 = pneg %p223
        $region98: #{iwnet_forward.1} parent=79 // pred_check_branch
          %557 = sbr.rel (%p555) target = $region100
        $region99: #{iwnet_forward.1} parent=79 // pred_region
          %558 = dma.done [#allocation9], 32768
        $region100: #{iwnet_forward.1} parent=79 // pred_fallthru
          _
        // Predicated region
        $region101: #{iwnet_forward.1} parent=79 // pred_check
          %p559 = pneg %p244
        $region102: #{iwnet_forward.1} parent=79 // pred_check_branch
          %561 = sbr.rel (%p559) target = $region104
        $region103: #{iwnet_forward.1} parent=79 // pred_region
          %562 = dma.done [#allocation12], 64
        $region104: #{iwnet_forward.1} parent=79 // pred_fallthru
          _
        // Predicated region
        $region105: #{iwnet_forward.1} parent=79 // pred_check
          %p563 = pneg %p265
        $region106: #{iwnet_forward.1} parent=79 // pred_check_branch
          %565 = sbr.rel (%p563) target = $region108
        $region107: #{iwnet_forward.1} parent=79 // pred_region
          %566 = dma.done [#allocation12], 8192
        $region108: #{iwnet_forward.1} parent=79 // pred_fallthru
          _
        // Predicated region
        $region109: #{iwnet_forward.1} parent=79 // pred_check
          %p567 = pneg %p286
        $region110: #{iwnet_forward.1} parent=79 // pred_check_branch
          %569 = sbr.rel (%p567) target = $region112
        $region111: #{iwnet_forward.1} parent=79 // pred_region
          %570 = dma.done [#allocation15], 32
        $region112: #{iwnet_forward.1} parent=79 // pred_fallthru
          _
        // Predicated region
        $region113: #{iwnet_forward.1} parent=79 // pred_check
          %p571 = pneg %p328
        $region114: #{iwnet_forward.1} parent=79 // pred_check_branch
          %573 = sbr.rel (%p571) target = $region116
        $region115: #{iwnet_forward.1} parent=79 // pred_region
          %574 = dma.done [#allocation15], 16
        $region116: #{iwnet_forward.1} parent=79 // pred_fallthru
          _
        %p575 = scmp.lt.s32.totalorder %s34, 1
        %s576 = scalar_select %p575, %s34, 1
        %s577 = smul.addr %s576, 11
        %s578 = smul.addr %s577, 4
        %s579 = scalar_lea.vmem %s0, %s578
        %p580 = pneg %p55
        %p581 = pneg %p52
        %p582 = pneg %p76
        %p583 = pneg %p73
        %p584 = pneg %p97
        %p585 = pneg %p94
        %p586 = pneg %p118
        %p587 = pneg %p115
        %p588 = pneg %p139
        %p589 = pneg %p136
        %p590 = pneg %p160
        %p591 = pneg %p157
        %p592 = pneg %p181
        %p593 = pneg %p178
        %p594 = pneg %p202
        %p595 = pneg %p199
        %p596 = pneg %p223
        %p597 = pneg %p220
        %p598 = pneg %p244
        %p599 = pneg %p241
        %p600 = pneg %p265
        %p601 = pneg %p262
        %p602 = pneg %p286
        %p603 = pneg %p283
        %p604 = pneg %p307
        %p605 = pneg %p304
        %p606 = pneg %p328
        %p607 = pneg %p325
        %p608 = scmp.lt.s32.totalorder %s34, 1
        %s609 = scalar_select %p608, %s34, 1
        %s610 = scalar_lea.vmem %s14, %s609
        %p611 = pneg %p354
        %p612 = pneg %p351
        %p613 = pneg %p380
        %p614 = pneg %p377
        %s615 = sand.u32 %s367, 1
        %s616 = scalar_lea.sflag [#allocation4], %s615
        %s617 = sand.u32 %s367, 1
        %s618 = scalar_lea.vmem [#allocation17], %s617
        %p619 = scmp.lt.s32.totalorder %s34, 1
        %s620 = scalar_select %p619, %s34, 1
        %s621 = smul.addr %s620, 11
        %s622 = smul.addr %s621, 4
        %s623 = scalar_lea.vmem %s0, %s622
        %p624 = scmp.lt.s32.totalorder %s34, 1
        %s625 = scalar_select %p624, %s34, 1
        %s626 = scalar_lea.vmem %s14, %s625
        %v628 = vld [vmem:[%s623] sm:$0xf]
        %v629 = vld [vmem:[%s623 + $0x4] sm:$0xf]
        %v630 = vld [vmem:[%s623 + $0x8] sm:$0xf]
        %v631 = vld [vmem:[%s623 + $0xc] sm:$0xf]
        %v632 = vld [vmem:[%s623 + $0x10] sm:$0xf]
        %v633 = vld [vmem:[%s623 + $0x14] sm:$0xf]
        %v634 = vld [vmem:[%s623 + $0x18] sm:$0xf]
        %v635 = vld [vmem:[%s623 + $0x1c] sm:$0xf]
        %v636 = vld [vmem:[%s623 + $0x20] sm:$0xf]
        %v637 = vld [vmem:[%s623 + $0x24] sm:$0xf]
        %v638 = vld [vmem:[%s623 + $0x28] sm:$0xf]
        %v639 = vld [vmem:[%s1] sm:$0xf]
        %v640 = vld [vmem:[%s1 + $0x4] sm:$0xf]
        %v641 = vld [vmem:[%s1 + $0x8] sm:$0xf]
        %v642 = vld [vmem:[%s1 + $0xc] sm:$0xf]
        %v643 = vld [vmem:[%s1 + $0x10] sm:$0xf]
        %v644 = vld [vmem:[%s1 + $0x14] sm:$0xf]
        %s645 = scalar_lea.vmem %s1, 24
        %v646 = vld [vmem:[%s645] sm:$0xf]
        %v647 = vld [vmem:[%s645 + $0x4] sm:$0xf]
        %v648 = vld [vmem:[%s645 + $0x8] sm:$0xf]
        %v649 = vld [vmem:[%s645 + $0xc] sm:$0xf]
        %v650 = vld [vmem:[%s645 + $0x10] sm:$0xf]
        %v651 = vld [vmem:[%s645 + $0x14] sm:$0xf]
        %v660 = vunpack.c.l.b16 %v629
        %v661 = vunpack.c.l.b16 %v630
        %v662 = vunpack.c.l.b16 %v631
        %v663 = vunpack.c.l.b16 %v632
        %v664 = vunpack.c.l.b16 %v633
        %v665 = vunpack.c.l.b16 %v634
        %v666 = vunpack.c.l.b16 %v635
        %v667 = vunpack.c.l.b16 %v636
        %v668 = vpack.c.b16 %v661, %v660
        %v669 = vpack.c.b16 %v663, %v662
        %v670 = vpack.c.b16 %v665, %v664
        %v671 = vpack.c.b16 %v667, %v666
        %v678 = vunpack.c.l.b16 %v646
        %v679 = vunpack.c.l.b16 %v647
        %v680 = vunpack.c.l.b16 %v648
        %v681 = vunpack.c.l.b16 %v649
        %v682 = vunpack.c.l.b16 %v650
        %v683 = vunpack.c.l.b16 %v651
        %v684 = vpack.c.b16 %v679, %v678
        %v685 = vpack.c.b16 %v681, %v680
        %v686 = vpack.c.b16 %v683, %v682
        %vm690 = vcmask 392192
        %v692 = vsel %vm690, %v668, 0
        %v695 = vsel %vm690, %v669, 0
        %v698 = vsel %vm690, %v670, 0
        %v701 = vsel %vm690, %v671, 0
        %703 = vmatprep.subr.bf16.mxu0 0
        %704 = vmatpush1.bf16.msra.mxu0 %v684
        %705 = vmatprep.subr.bf16.mxu0 0
        %706 = vmatpush1.bf16.msra.mxu0 %v685
        %707 = vmatprep.subr.bf16.mxu0 0
        %708 = vmatpush1.bf16.msra.mxu0 %v686
        %709 = vmatprep.subr.bf16.mxu0 0
        %710 = vmatpush1.bf16.msra.mxu0 0
        %711 = vmatprep.subr.bf16.mxu0 0
        %712 = vmatpush1.bf16.msra.mxu0 0
        %713 = vmatprep.subr.bf16.mxu0 0
        %714 = vmatpush1.bf16.msra.mxu0 0
        %715 = vmatprep.subr.bf16.mxu0 0
        %716 = vmatpush1.bf16.msra.mxu0 0
        %717 = vmatprep.subr.bf16.mxu0 0
        %718 = vmatpush1.bf16.msra.mxu0 0
        %719 = vmatprep.subr.bf16.mxu0 0
        %720 = vmatpush1.bf16.msra.mxu0 0
        %721 = vmatprep.subr.bf16.mxu0 0
        %722 = vmatpush1.bf16.msra.mxu0 0
        %723 = vmatprep.subr.bf16.mxu0 0
        %724 = vmatpush1.bf16.msra.mxu0 0
        %725 = vmatprep.subr.bf16.mxu0 0
        %726 = vmatpush1.bf16.msra.mxu0 0
        %727 = vmatprep.subr.bf16.mxu0 0
        %728 = vmatpush1.bf16.msra.mxu0 0
        %729 = vmatprep.subr.bf16.mxu0 0
        %730 = vmatpush1.bf16.msra.mxu0 0
        %731 = vmatprep.subr.bf16.mxu0 0
        %732 = vmatpush1.bf16.msra.mxu0 0
        %733 = vmatprep.subr.bf16.mxu0 0
        %734 = vmatpush1.bf16.msra.mxu0 0
        %735 = vmatprep.mubr.bf16.mxu0 0
        %736 = vmatmul.mubr.bf16.gmra.mrb[0].mxu0 %v692
        %v737 = vpop.f32.mrb[0].mxu0
        %v738 = vadd.f32 0.0, %v737
        %v739 = vpop.f32.mrb[0].mxu0
        %v740 = vpop.f32.mrb[0].mxu0
        %v741 = vadd.f32 0.0, %v740
        %v742 = vpop.f32.mrb[0].mxu0
        %743 = vmatprep.mubr.bf16.mxu0 0
        %744 = vmatmul.mubr.bf16.gmra.mrb[0].mxu0 %v695
        %v745 = vpop.f32.mrb[0].mxu0
        %v746 = vadd.f32 0.0, %v745
        %v747 = vpop.f32.mrb[0].mxu0
        %v748 = vpop.f32.mrb[0].mxu0
        %v749 = vadd.f32 0.0, %v748
        %v750 = vpop.f32.mrb[0].mxu0
        %751 = vmatprep.mubr.bf16.mxu0 0
        %752 = vmatmul.mubr.bf16.gmra.mrb[0].mxu0 %v698
        %v753 = vpop.f32.mrb[0].mxu0
        %v754 = vadd.f32 0.0, %v753
        %v755 = vpop.f32.mrb[0].mxu0
        %v756 = vpop.f32.mrb[0].mxu0
        %v757 = vadd.f32 0.0, %v756
        %v758 = vpop.f32.mrb[0].mxu0
        %759 = vmatprep.mubr.bf16.mxu0 0
        %760 = vmatmul.mubr.bf16.gmra.mrb[0].mxu0 %v701
        %v761 = vpop.f32.mrb[0].mxu0
        %v762 = vadd.f32 0.0, %v761
        %v763 = vpop.f32.mrb[0].mxu0
        %v764 = vpop.f32.mrb[0].mxu0
        %v765 = vadd.f32 0.0, %v764
        %v766 = vpop.f32.mrb[0].mxu0
        %767 = vdwg.mxu0
        %v769 = vunpack.c.l.b16 %v628
        %v770 = vpack.c.b16 %v660, %v769
        %v771 = vpack.c.b16 %v662, %v661
        %v772 = vpack.c.b16 %v664, %v663
        %v773 = vpack.c.b16 %v666, %v665
        %v780 = vunpack.c.l.b16 %v639
        %v781 = vunpack.c.l.b16 %v640
        %v782 = vunpack.c.l.b16 %v641
        %v783 = vunpack.c.l.b16 %v642
        %v784 = vunpack.c.l.b16 %v643
        %v785 = vunpack.c.l.b16 %v644
        %v786 = vpack.c.b16 %v781, %v780
        %v787 = vpack.c.b16 %v783, %v782
        %v788 = vpack.c.b16 %v785, %v784
        %v793 = vsel %vm690, %v770, 0
        %v796 = vsel %vm690, %v771, 0
        %v799 = vsel %vm690, %v772, 0
        %v802 = vsel %vm690, %v773, 0
        %804 = vmatprep.subr.bf16.mxu0 0
        %805 = vmatpush1.bf16.msra.mxu0 %v786
        %806 = vmatprep.subr.bf16.mxu0 0
        %807 = vmatpush1.bf16.msra.mxu0 %v787
        %808 = vmatprep.subr.bf16.mxu0 0
        %809 = vmatpush1.bf16.msra.mxu0 %v788
        %810 = vmatprep.subr.bf16.mxu0 0
        %811 = vmatpush1.bf16.msra.mxu0 0
        %812 = vmatprep.subr.bf16.mxu0 0
        %813 = vmatpush1.bf16.msra.mxu0 0
        %814 = vmatprep.subr.bf16.mxu0 0
        %815 = vmatpush1.bf16.msra.mxu0 0
        %816 = vmatprep.subr.bf16.mxu0 0
        %817 = vmatpush1.bf16.msra.mxu0 0
        %818 = vmatprep.subr.bf16.mxu0 0
        %819 = vmatpush1.bf16.msra.mxu0 0
        %820 = vmatprep.subr.bf16.mxu0 0
        %821 = vmatpush1.bf16.msra.mxu0 0
        %822 = vmatprep.subr.bf16.mxu0 0
        %823 = vmatpush1.bf16.msra.mxu0 0
        %824 = vmatprep.subr.bf16.mxu0 0
        %825 = vmatpush1.bf16.msra.mxu0 0
        %826 = vmatprep.subr.bf16.mxu0 0
        %827 = vmatpush1.bf16.msra.mxu0 0
        %828 = vmatprep.subr.bf16.mxu0 0
        %829 = vmatpush1.bf16.msra.mxu0 0
        %830 = vmatprep.subr.bf16.mxu0 0
        %831 = vmatpush1.bf16.msra.mxu0 0
        %832 = vmatprep.subr.bf16.mxu0 0
        %833 = vmatpush1.bf16.msra.mxu0 0
        %834 = vmatprep.subr.bf16.mxu0 0
        %835 = vmatpush1.bf16.msra.mxu0 0
        %836 = vmatprep.mubr.bf16.mxu0 0
        %837 = vmatmul.mubr.bf16.gmra.mrb[0].mxu0 %v793
        %v838 = vpop.f32.mrb[0].mxu0
        %v839 = vadd.f32 %v738, %v838
        %v840 = vpop.f32.mrb[0].mxu0
        %v841 = vpop.f32.mrb[0].mxu0
        %v842 = vadd.f32 %v741, %v841
        %v843 = vpop.f32.mrb[0].mxu0
        %844 = vmatprep.mubr.bf16.mxu0 0
        %845 = vmatmul.mubr.bf16.gmra.mrb[0].mxu0 %v796
        %v846 = vpop.f32.mrb[0].mxu0
        %v847 = vadd.f32 %v746, %v846
        %v848 = vpop.f32.mrb[0].mxu0
        %v849 = vpop.f32.mrb[0].mxu0
        %v850 = vadd.f32 %v749, %v849
        %v851 = vpop.f32.mrb[0].mxu0
        %852 = vmatprep.mubr.bf16.mxu0 0
        %853 = vmatmul.mubr.bf16.gmra.mrb[0].mxu0 %v799
        %v854 = vpop.f32.mrb[0].mxu0
        %v855 = vadd.f32 %v754, %v854
        %v856 = vpop.f32.mrb[0].mxu0
        %v857 = vpop.f32.mrb[0].mxu0
        %v858 = vadd.f32 %v757, %v857
        %v859 = vpop.f32.mrb[0].mxu0
        %860 = vmatprep.mubr.bf16.mxu0 0
        %861 = vmatmul.mubr.bf16.gmra.mrb[0].mxu0 %v802
        %v862 = vpop.f32.mrb[0].mxu0
        %v863 = vadd.f32 %v762, %v862
        %v864 = vpop.f32.mrb[0].mxu0
        %v865 = vpop.f32.mrb[0].mxu0
        %v866 = vadd.f32 %v765, %v865
        %v867 = vpop.f32.mrb[0].mxu0
        %868 = vdwg.mxu0
        %s869 = scalar_lea.vmem %s1, 48
        %v870 = vld [vmem:[%s869] sm:$0xf]
        %v871 = vld [vmem:[%s869 + $0x4] sm:$0xf]
        %v872 = vld [vmem:[%s869 + $0x8] sm:$0xf]
        %v873 = vld [vmem:[%s869 + $0xc] sm:$0xf]
        %v874 = vld [vmem:[%s869 + $0x10] sm:$0xf]
        %v875 = vld [vmem:[%s869 + $0x14] sm:$0xf]
        %v877 = vunpack.c.l.b16 %v637
        %v878 = vpack.c.b16 %v877, %v667
        %v885 = vunpack.c.l.b16 %v870
        %v886 = vunpack.c.l.b16 %v871
        %v887 = vunpack.c.l.b16 %v872
        %v888 = vunpack.c.l.b16 %v873
        %v889 = vunpack.c.l.b16 %v874
        %v890 = vunpack.c.l.b16 %v875
        %v891 = vpack.c.b16 %v886, %v885
        %v892 = vpack.c.b16 %v888, %v887
        %v893 = vpack.c.b16 %v890, %v889
        %v898 = vsel %vm690, %v878, 0
        %900 = vmatprep.subr.bf16.mxu0 0
        %901 = vmatpush1.bf16.msra.mxu0 %v891
        %902 = vmatprep.subr.bf16.mxu0 0
        %903 = vmatpush1.bf16.msra.mxu0 %v892
        %904 = vmatprep.subr.bf16.mxu0 0
        %905 = vmatpush1.bf16.msra.mxu0 %v893
        %906 = vmatprep.subr.bf16.mxu0 0
        %907 = vmatpush1.bf16.msra.mxu0 0
        %908 = vmatprep.subr.bf16.mxu0 0
        %909 = vmatpush1.bf16.msra.mxu0 0
        %910 = vmatprep.subr.bf16.mxu0 0
        %911 = vmatpush1.bf16.msra.mxu0 0
        %912 = vmatprep.subr.bf16.mxu0 0
        %913 = vmatpush1.bf16.msra.mxu0 0
        %914 = vmatprep.subr.bf16.mxu0 0
        %915 = vmatpush1.bf16.msra.mxu0 0
        %916 = vmatprep.subr.bf16.mxu0 0
        %917 = vmatpush1.bf16.msra.mxu0 0
        %918 = vmatprep.subr.bf16.mxu0 0
        %919 = vmatpush1.bf16.msra.mxu0 0
        %920 = vmatprep.subr.bf16.mxu0 0
        %921 = vmatpush1.bf16.msra.mxu0 0
        %922 = vmatprep.subr.bf16.mxu0 0
        %923 = vmatpush1.bf16.msra.mxu0 0
        %924 = vmatprep.subr.bf16.mxu0 0
        %925 = vmatpush1.bf16.msra.mxu0 0
        %926 = vmatprep.subr.bf16.mxu0 0
        %927 = vmatpush1.bf16.msra.mxu0 0
        %928 = vmatprep.subr.bf16.mxu0 0
        %929 = vmatpush1.bf16.msra.mxu0 0
        %930 = vmatprep.subr.bf16.mxu0 0
        %931 = vmatpush1.bf16.msra.mxu0 0
        %932 = vmatprep.mubr.bf16.mxu0 0
        %933 = vmatmul.mubr.bf16.gmra.mrb[0].mxu0 %v796
        %v934 = vpop.f32.mrb[0].mxu0
        %v935 = vadd.f32 0.0, %v934
        %v936 = vpop.f32.mrb[0].mxu0
        %v937 = vpop.f32.mrb[0].mxu0
        %v938 = vadd.f32 0.0, %v937
        %v939 = vpop.f32.mrb[0].mxu0
        %940 = vmatprep.mubr.bf16.mxu0 0
        %941 = vmatmul.mubr.bf16.gmra.mrb[0].mxu0 %v799
        %v942 = vpop.f32.mrb[0].mxu0
        %v943 = vadd.f32 0.0, %v942
        %v944 = vpop.f32.mrb[0].mxu0
        %v945 = vpop.f32.mrb[0].mxu0
        %v946 = vadd.f32 0.0, %v945
        %v947 = vpop.f32.mrb[0].mxu0
        %948 = vmatprep.mubr.bf16.mxu0 0
        %949 = vmatmul.mubr.bf16.gmra.mrb[0].mxu0 %v802
        %v950 = vpop.f32.mrb[0].mxu0
        %v951 = vadd.f32 0.0, %v950
        %v952 = vpop.f32.mrb[0].mxu0
        %v953 = vpop.f32.mrb[0].mxu0
        %v954 = vadd.f32 0.0, %v953
        %v955 = vpop.f32.mrb[0].mxu0
        %956 = vmatprep.mubr.bf16.mxu0 0
        %957 = vmatmul.mubr.bf16.gmra.mrb[0].mxu0 %v898
        %v958 = vpop.f32.mrb[0].mxu0
        %v959 = vadd.f32 0.0, %v958
        %v960 = vpop.f32.mrb[0].mxu0
        %v961 = vpop.f32.mrb[0].mxu0
        %v962 = vadd.f32 0.0, %v961
        %v963 = vpop.f32.mrb[0].mxu0
        %964 = vdwg.mxu0
        %v965 = vadd.f32 %v839, %v935
        %v966 = vadd.f32 %v842, %v938
        %v967 = vadd.f32 %v847, %v943
        %v968 = vadd.f32 %v850, %v946
        %v969 = vadd.f32 %v855, %v951
        %v970 = vadd.f32 %v858, %v954
        %v971 = vadd.f32 %v863, %v959
        %v972 = vadd.f32 %v866, %v962
        %s973 = scalar_lea.vmem %s1, 72
        %v974 = vld [vmem:[%s973] sm:$0xf]
        %v975 = vld [vmem:[%s973 + $0x4] sm:$0xf]
        %v976 = vld [vmem:[%s973 + $0x8] sm:$0xf]
        %v977 = vld [vmem:[%s973 + $0xc] sm:$0xf]
        %v978 = vld [vmem:[%s973 + $0x10] sm:$0xf]
        %v979 = vld [vmem:[%s973 + $0x14] sm:$0xf]
        %v981 = vunpack.c.l.b16 %v638
        %v982 = vpack.c.b16 %v981, %v877
        %v989 = vunpack.c.l.b16 %v974
        %v990 = vunpack.c.l.b16 %v975
        %v991 = vunpack.c.l.b16 %v976
        %v992 = vunpack.c.l.b16 %v977
        %v993 = vunpack.c.l.b16 %v978
        %v994 = vunpack.c.l.b16 %v979
        %v995 = vpack.c.b16 %v990, %v989
        %v996 = vpack.c.b16 %v992, %v991
        %v997 = vpack.c.b16 %v994, %v993
        %v1002 = vsel %vm690, %v982, 0
        %1004 = vmatprep.subr.bf16.mxu0 0
        %1005 = vmatpush1.bf16.msra.mxu0 %v995
        %1006 = vmatprep.subr.bf16.mxu0 0
        %1007 = vmatpush1.bf16.msra.mxu0 %v996
        %1008 = vmatprep.subr.bf16.mxu0 0
        %1009 = vmatpush1.bf16.msra.mxu0 %v997
        %1010 = vmatprep.subr.bf16.mxu0 0
        %1011 = vmatpush1.bf16.msra.mxu0 0
        %1012 = vmatprep.subr.bf16.mxu0 0
        %1013 = vmatpush1.bf16.msra.mxu0 0
        %1014 = vmatprep.subr.bf16.mxu0 0
        %1015 = vmatpush1.bf16.msra.mxu0 0
        %1016 = vmatprep.subr.bf16.mxu0 0
        %1017 = vmatpush1.bf16.msra.mxu0 0
        %1018 = vmatprep.subr.bf16.mxu0 0
        %1019 = vmatpush1.bf16.msra.mxu0 0
        %1020 = vmatprep.subr.bf16.mxu0 0
        %1021 = vmatpush1.bf16.msra.mxu0 0
        %1022 = vmatprep.subr.bf16.mxu0 0
        %1023 = vmatpush1.bf16.msra.mxu0 0
        %1024 = vmatprep.subr.bf16.mxu0 0
        %1025 = vmatpush1.bf16.msra.mxu0 0
        %1026 = vmatprep.subr.bf16.mxu0 0
        %1027 = vmatpush1.bf16.msra.mxu0 0
        %1028 = vmatprep.subr.bf16.mxu0 0
        %1029 = vmatpush1.bf16.msra.mxu0 0
        %1030 = vmatprep.subr.bf16.mxu0 0
        %1031 = vmatpush1.bf16.msra.mxu0 0
        %1032 = vmatprep.subr.bf16.mxu0 0
        %1033 = vmatpush1.bf16.msra.mxu0 0
        %1034 = vmatprep.subr.bf16.mxu0 0
        %1035 = vmatpush1.bf16.msra.mxu0 0
        %1036 = vmatprep.mubr.bf16.mxu0 0
        %1037 = vmatmul.mubr.bf16.gmra.mrb[0].mxu0 %v695
        %v1038 = vpop.f32.mrb[0].mxu0
        %v1039 = vadd.f32 0.0, %v1038
        %v1040 = vpop.f32.mrb[0].mxu0
        %v1041 = vpop.f32.mrb[0].mxu0
        %v1042 = vadd.f32 0.0, %v1041
        %v1043 = vpop.f32.mrb[0].mxu0
        %1044 = vmatprep.mubr.bf16.mxu0 0
        %1045 = vmatmul.mubr.bf16.gmra.mrb[0].mxu0 %v698
        %v1046 = vpop.f32.mrb[0].mxu0
        %v1047 = vadd.f32 0.0, %v1046
        %v1048 = vpop.f32.mrb[0].mxu0
        %v1049 = vpop.f32.mrb[0].mxu0
        %v1050 = vadd.f32 0.0, %v1049
        %v1051 = vpop.f32.mrb[0].mxu0
        %1052 = vmatprep.mubr.bf16.mxu0 0
        %1053 = vmatmul.mubr.bf16.gmra.mrb[0].mxu0 %v701
        %v1054 = vpop.f32.mrb[0].mxu0
        %v1055 = vadd.f32 0.0, %v1054
        %v1056 = vpop.f32.mrb[0].mxu0
        %v1057 = vpop.f32.mrb[0].mxu0
        %v1058 = vadd.f32 0.0, %v1057
        %v1059 = vpop.f32.mrb[0].mxu0
        %1060 = vmatprep.mubr.bf16.mxu0 0
        %1061 = vmatmul.mubr.bf16.gmra.mrb[0].mxu0 %v1002
        %v1062 = vpop.f32.mrb[0].mxu0
        %v1063 = vadd.f32 0.0, %v1062
        %v1064 = vpop.f32.mrb[0].mxu0
        %v1065 = vpop.f32.mrb[0].mxu0
        %v1066 = vadd.f32 0.0, %v1065
        %v1067 = vpop.f32.mrb[0].mxu0
        %1068 = vdwg.mxu0
        %v1069 = vadd.f32 %v965, %v1039
        %v1070 = vadd.f32 %v966, %v1042
        %v1071 = vadd.f32 %v967, %v1047
        %v1072 = vadd.f32 %v968, %v1050
        %v1073 = vadd.f32 %v969, %v1055
        %v1074 = vadd.f32 %v970, %v1058
        %v1075 = vadd.f32 %v971, %v1063
        %v1076 = vadd.f32 %v972, %v1066
        %v1077 = vld [vmem:[%s2] sm:$0x1]
        %v1079 = vlaneseq
        %v1080 = vshrl.u32 %v1079, 7
        %v1081 = vsub.s32 0, %v1080
        %v1082 = vrot.slane %v1077, %v1081
        %v1084 = vmul.f32 %v1069, %v1082
        %v1085 = vmul.f32 %v1070, %v1082
        %v1086 = vmul.f32 %v1071, %v1082
        %v1087 = vmul.f32 %v1072, %v1082
        %v1088 = vmul.f32 %v1073, %v1082
        %v1089 = vmul.f32 %v1074, %v1082
        %v1090 = vmul.f32 %v1075, %v1082
        %v1091 = vmul.f32 %v1076, %v1082
        %v1092 = vld [vmem:[%s3] sm:$0x1]
        %v1094 = vlaneseq
        %v1095 = vshrl.u32 %v1094, 7
        %v1096 = vsub.s32 0, %v1095
        %v1097 = vrot.slane %v1092, %v1096
        %v1099 = vadd.f32 %v1084, %v1097
        %v1100 = vadd.f32 %v1085, %v1097
        %v1101 = vadd.f32 %v1086, %v1097
        %v1102 = vadd.f32 %v1087, %v1097
        %v1103 = vadd.f32 %v1088, %v1097
        %v1104 = vadd.f32 %v1089, %v1097
        %v1105 = vadd.f32 %v1090, %v1097
        %v1106 = vadd.f32 %v1091, %v1097
        %v1107 = vmax.f32 %v1099, 0.0
        %v1108 = vmax.f32 %v1100, 0.0
        %v1109 = vmax.f32 %v1101, 0.0
        %v1110 = vmax.f32 %v1102, 0.0
        %v1111 = vmax.f32 %v1103, 0.0
        %v1112 = vmax.f32 %v1104, 0.0
        %v1113 = vmax.f32 %v1105, 0.0
        %v1114 = vmax.f32 %v1106, 0.0
        %v1115 = vmax.f32 %v1107, %v1108
        %v1116 = vmax.f32 %v1109, %v1110
        %v1117 = vmax.f32 %v1111, %v1112
        %v1118 = vmax.f32 %v1113, %v1114
        %v1119 = vmax.f32 %v1115, 0.0
        %v1120 = vmax.f32 %v1116, %v1108
        %v1121 = vmax.f32 %v1117, %v1110
        %v1122 = vmax.f32 %v1118, %v1112
        %v1127 = vrot.slane %v1119, 7
        %v1128 = vrot.slane %v1120, 7
        %v1129 = vrot.slane %v1121, 7
        %v1130 = vrot.slane %v1122, 7
        %vm1135 = vcmask 1040384
        %v1136 = vsel %vm1135, 0.0, %v1127
        %v1137 = vsel %vm1135, 0.0, %v1128
        %v1138 = vsel %vm1135, 0.0, %v1129
        %v1139 = vsel %vm1135, 0.0, %v1130
        %v1140 = vrot.slane %v1119, 1
        %v1141 = vrot.slane %v1120, 1
        %v1142 = vrot.slane %v1121, 1
        %v1143 = vrot.slane %v1122, 1
        %vm1148 = vcmask 1046528
        %v1149 = vsel %vm1148, %v1140, 0.0
        %v1150 = vsel %vm1148, %v1141, 0.0
        %v1151 = vsel %vm1148, %v1142, 0.0
        %v1152 = vsel %vm1148, %v1143, 0.0
        %v1153 = vmax.f32 %v1119, %v1136
        %v1154 = vmax.f32 %v1120, %v1137
        %v1155 = vmax.f32 %v1121, %v1138
        %v1156 = vmax.f32 %v1122, %v1139
        %v1157 = vmax.f32 %v1153, %v1149
        %v1158 = vmax.f32 %v1154, %v1150
        %v1159 = vmax.f32 %v1155, %v1151
        %v1160 = vmax.f32 %v1156, %v1152
        %v1161 = vpack.c.bf16 %v1158, %v1157
        %v1162 = vpack.c.bf16 %v1160, %v1159
        %v1163 = vld [vmem:[#allocation2] sm:$0xff]
        %v1164 = vld [vmem:[#allocation2 + $0x8] sm:$0xff]
        %v1165 = vld [vmem:[#allocation2 + $0x10] sm:$0xff]
        %v1166 = vld [vmem:[#allocation2 + $0x18] sm:$0xff]
        %v1167 = vld [vmem:[#allocation2 + $0x20] sm:$0xff]
        %v1168 = vld [vmem:[#allocation2 + $0x28] sm:$0xff]
        %v1169 = vld [vmem:[#allocation2 + $0x30] sm:$0xff]
        %v1170 = vld [vmem:[#allocation2 + $0x38] sm:$0xff]
        %v1171 = vld [vmem:[#allocation2 + $0x40] sm:$0xff]
        %v1172 = vld [vmem:[#allocation2 + $0x48] sm:$0xff]
        %v1173 = vld [vmem:[#allocation2 + $0x50] sm:$0xff]
        %v1174 = vld [vmem:[#allocation2 + $0x58] sm:$0xff]
        %v1175 = vld [vmem:[#allocation2 + $0x60] sm:$0xff]
        %v1176 = vld [vmem:[#allocation2 + $0x68] sm:$0xff]
        %v1177 = vld [vmem:[#allocation2 + $0x70] sm:$0xff]
        %v1178 = vld [vmem:[#allocation2 + $0x78] sm:$0xff]
        %v1179 = vld [vmem:[#allocation2 + $0x80] sm:$0xff]
        %v1180 = vld [vmem:[#allocation2 + $0x88] sm:$0xff]
        %v1181 = vld [vmem:[#allocation2 + $0x90] sm:$0xff]
        %v1182 = vld [vmem:[#allocation2 + $0x98] sm:$0xff]
        %v1183 = vld [vmem:[#allocation2 + $0xa0] sm:$0xff]
        %v1184 = vld [vmem:[#allocation2 + $0xa8] sm:$0xff]
        %v1185 = vld [vmem:[#allocation2 + $0xb0] sm:$0xff]
        %v1186 = vld [vmem:[#allocation2 + $0xb8] sm:$0xff]
        %v1187 = vld [vmem:[#allocation2 + $0xc0] sm:$0xff]
        %v1188 = vld [vmem:[#allocation2 + $0xc8] sm:$0xff]
        %v1189 = vld [vmem:[#allocation2 + $0xd0] sm:$0xff]
        %v1190 = vld [vmem:[#allocation2 + $0xd8] sm:$0xff]
        %v1191 = vld [vmem:[#allocation2 + $0xe0] sm:$0xff]
        %v1192 = vld [vmem:[#allocation2 + $0xe8] sm:$0xff]
        %v1193 = vld [vmem:[#allocation2 + $0xf0] sm:$0xff]
        %v1194 = vld [vmem:[#allocation2 + $0xf8] sm:$0xff]
        %v1195 = vld [vmem:[#allocation2 + $0x100] sm:$0xff]
        %v1196 = vld [vmem:[#allocation2 + $0x108] sm:$0xff]
        %v1197 = vld [vmem:[#allocation2 + $0x110] sm:$0xff]
        %v1198 = vld [vmem:[#allocation2 + $0x118] sm:$0xff]
        %v1199 = vld [vmem:[#allocation2 + $0x120] sm:$0xff]
        %v1200 = vld [vmem:[#allocation2 + $0x128] sm:$0xff]
        %v1201 = vld [vmem:[#allocation2 + $0x130] sm:$0xff]
        %v1202 = vld [vmem:[#allocation2 + $0x138] sm:$0xff]
        %v1203 = vld [vmem:[#allocation2 + $0x140] sm:$0xff]
        %v1204 = vld [vmem:[#allocation2 + $0x148] sm:$0xff]
        %v1205 = vld [vmem:[#allocation2 + $0x150] sm:$0xff]
        %v1206 = vld [vmem:[#allocation2 + $0x158] sm:$0xff]
        %v1207 = vld [vmem:[#allocation2 + $0x160] sm:$0xff]
        %v1208 = vld [vmem:[#allocation2 + $0x168] sm:$0xff]
        %v1209 = vld [vmem:[#allocation2 + $0x170] sm:$0xff]
        %v1210 = vld [vmem:[#allocation2 + $0x178] sm:$0xff]
        %v1211 = vld [vmem:[#allocation2 + $0x180] sm:$0xff]
        %v1212 = vld [vmem:[#allocation2 + $0x188] sm:$0xff]
        %v1213 = vld [vmem:[#allocation2 + $0x190] sm:$0xff]
        %v1214 = vld [vmem:[#allocation2 + $0x198] sm:$0xff]
        %v1215 = vld [vmem:[#allocation2 + $0x1a0] sm:$0xff]
        %v1216 = vld [vmem:[#allocation2 + $0x1a8] sm:$0xff]
        %v1217 = vld [vmem:[#allocation2 + $0x1b0] sm:$0xff]
        %v1218 = vld [vmem:[#allocation2 + $0x1b8] sm:$0xff]
        %v1219 = vld [vmem:[#allocation2 + $0x1c0] sm:$0xff]
        %v1220 = vld [vmem:[#allocation2 + $0x1c8] sm:$0xff]
        %v1221 = vld [vmem:[#allocation2 + $0x1d0] sm:$0xff]
        %v1222 = vld [vmem:[#allocation2 + $0x1d8] sm:$0xff]
        %v1223 = vld [vmem:[#allocation2 + $0x1e0] sm:$0xff]
        %v1224 = vld [vmem:[#allocation2 + $0x1e8] sm:$0xff]
        %v1225 = vld [vmem:[#allocation2 + $0x1f0] sm:$0xff]
        %v1226 = vld [vmem:[#allocation2 + $0x1f8] sm:$0xff]
        %v1227 = vld [vmem:[#allocation5] sm:$0xff]
        %v1228 = vld [vmem:[#allocation5 + $0x8] sm:$0xff]
        %v1231 = vlaneseq
        %v1232 = vshrl.u32 %v1231, 7
        %v1233 = vsub.s32 0, %v1232
        %v1234 = vrot.slane %v1227, %v1233
        %v1235 = vlaneseq
        %v1236 = vshrl.u32 %v1235, 7
        %v1237 = vsub.s32 1, %v1236
        %v1238 = vrot.slane %v1227, %v1237
        %v1239 = vlaneseq
        %v1240 = vshrl.u32 %v1239, 7
        %v1241 = vsub.s32 2, %v1240
        %v1242 = vrot.slane %v1227, %v1241
        %v1243 = vlaneseq
        %v1244 = vshrl.u32 %v1243, 7
        %v1245 = vsub.s32 3, %v1244
        %v1246 = vrot.slane %v1227, %v1245
        %v1247 = vlaneseq
        %v1248 = vshrl.u32 %v1247, 7
        %v1249 = vsub.s32 4, %v1248
        %v1250 = vrot.slane %v1227, %v1249
        %v1251 = vlaneseq
        %v1252 = vshrl.u32 %v1251, 7
        %v1253 = vsub.s32 5, %v1252
        %v1254 = vrot.slane %v1227, %v1253
        %v1255 = vlaneseq
        %v1256 = vshrl.u32 %v1255, 7
        %v1257 = vsub.s32 6, %v1256
        %v1258 = vrot.slane %v1227, %v1257
        %v1259 = vlaneseq
        %v1260 = vshrl.u32 %v1259, 7
        %v1261 = vsub.s32 7, %v1260
        %v1262 = vrot.slane %v1227, %v1261
        %v1263 = vlaneseq
        %v1264 = vshrl.u32 %v1263, 7
        %v1265 = vsub.s32 0, %v1264
        %v1266 = vrot.slane %v1228, %v1265
        %v1267 = vlaneseq
        %v1268 = vshrl.u32 %v1267, 7
        %v1269 = vsub.s32 1, %v1268
        %v1270 = vrot.slane %v1228, %v1269
        %v1271 = vlaneseq
        %v1272 = vshrl.u32 %v1271, 7
        %v1273 = vsub.s32 2, %v1272
        %v1274 = vrot.slane %v1228, %v1273
        %v1275 = vlaneseq
        %v1276 = vshrl.u32 %v1275, 7
        %v1277 = vsub.s32 3, %v1276
        %v1278 = vrot.slane %v1228, %v1277
        %v1279 = vlaneseq
        %v1280 = vshrl.u32 %v1279, 7
        %v1281 = vsub.s32 4, %v1280
        %v1282 = vrot.slane %v1228, %v1281
        %v1283 = vlaneseq
        %v1284 = vshrl.u32 %v1283, 7
        %v1285 = vsub.s32 5, %v1284
        %v1286 = vrot.slane %v1228, %v1285
        %v1287 = vlaneseq
        %v1288 = vshrl.u32 %v1287, 7
        %v1289 = vsub.s32 6, %v1288
        %v1290 = vrot.slane %v1228, %v1289
        %v1291 = vlaneseq
        %v1292 = vshrl.u32 %v1291, 7
        %v1293 = vsub.s32 7, %v1292
        %v1294 = vrot.slane %v1228, %v1293
        %v1375 = vunpack.c.l.b16 %v1163
        %v1376 = vunpack.c.h.b16 %v1163
        %v1377 = vunpack.c.l.b16 %v1164
        %v1378 = vunpack.c.h.b16 %v1164
        %v1379 = vunpack.c.l.b16 %v1165
        %v1380 = vunpack.c.h.b16 %v1165
        %v1381 = vunpack.c.l.b16 %v1166
        %v1382 = vunpack.c.h.b16 %v1166
        %v1383 = vunpack.c.l.b16 %v1167
        %v1384 = vunpack.c.h.b16 %v1167
        %v1385 = vunpack.c.l.b16 %v1168
        %v1386 = vunpack.c.h.b16 %v1168
        %v1387 = vunpack.c.l.b16 %v1169
        %v1388 = vunpack.c.h.b16 %v1169
        %v1389 = vunpack.c.l.b16 %v1170
        %v1390 = vunpack.c.h.b16 %v1170
        %v1391 = vunpack.c.l.b16 %v1171
        %v1392 = vunpack.c.h.b16 %v1171
        %v1393 = vunpack.c.l.b16 %v1172
        %v1394 = vunpack.c.h.b16 %v1172
        %v1395 = vunpack.c.l.b16 %v1173
        %v1396 = vunpack.c.h.b16 %v1173
        %v1397 = vunpack.c.l.b16 %v1174
        %v1398 = vunpack.c.h.b16 %v1174
        %v1399 = vunpack.c.l.b16 %v1175
        %v1400 = vunpack.c.h.b16 %v1175
        %v1401 = vunpack.c.l.b16 %v1176
        %v1402 = vunpack.c.h.b16 %v1176
        %v1403 = vunpack.c.l.b16 %v1177
        %v1404 = vunpack.c.h.b16 %v1177
        %v1405 = vunpack.c.l.b16 %v1178
        %v1406 = vunpack.c.h.b16 %v1178
        %v1407 = vunpack.c.l.b16 %v1179
        %v1408 = vunpack.c.h.b16 %v1179
        %v1409 = vunpack.c.l.b16 %v1180
        %v1410 = vunpack.c.h.b16 %v1180
        %v1411 = vunpack.c.l.b16 %v1181
        %v1412 = vunpack.c.h.b16 %v1181
        %v1413 = vunpack.c.l.b16 %v1182
        %v1414 = vunpack.c.h.b16 %v1182
        %v1415 = vunpack.c.l.b16 %v1183
        %v1416 = vunpack.c.h.b16 %v1183
        %v1417 = vunpack.c.l.b16 %v1184
        %v1418 = vunpack.c.h.b16 %v1184
        %v1419 = vunpack.c.l.b16 %v1185
        %v1420 = vunpack.c.h.b16 %v1185
        %v1421 = vunpack.c.l.b16 %v1186
        %v1422 = vunpack.c.h.b16 %v1186
        %v1423 = vunpack.c.l.b16 %v1187
        %v1424 = vunpack.c.h.b16 %v1187
        %v1425 = vunpack.c.l.b16 %v1188
        %v1426 = vunpack.c.h.b16 %v1188
        %v1427 = vunpack.c.l.b16 %v1189
        %v1428 = vunpack.c.h.b16 %v1189
        %v1429 = vunpack.c.l.b16 %v1190
        %v1430 = vunpack.c.h.b16 %v1190
        %v1431 = vunpack.c.l.b16 %v1191
        %v1432 = vunpack.c.h.b16 %v1191
        %v1433 = vunpack.c.l.b16 %v1192
        %v1434 = vunpack.c.h.b16 %v1192
        %v1435 = vunpack.c.l.b16 %v1193
        %v1436 = vunpack.c.h.b16 %v1193
        %v1437 = vunpack.c.l.b16 %v1194
        %v1438 = vunpack.c.h.b16 %v1194
        %v1439 = vunpack.c.l.b16 %v1195
        %v1440 = vunpack.c.h.b16 %v1195
        %v1441 = vunpack.c.l.b16 %v1196
        %v1442 = vunpack.c.h.b16 %v1196
        %v1443 = vunpack.c.l.b16 %v1197
        %v1444 = vunpack.c.h.b16 %v1197
        %v1445 = vunpack.c.l.b16 %v1198
        %v1446 = vunpack.c.h.b16 %v1198
        %v1447 = vunpack.c.l.b16 %v1199
        %v1448 = vunpack.c.h.b16 %v1199
        %v1449 = vunpack.c.l.b16 %v1200
        %v1450 = vunpack.c.h.b16 %v1200
        %v1451 = vunpack.c.l.b16 %v1201
        %v1452 = vunpack.c.h.b16 %v1201
        %v1453 = vunpack.c.l.b16 %v1202
        %v1454 = vunpack.c.h.b16 %v1202
        %v1455 = vunpack.c.l.b16 %v1203
        %v1456 = vunpack.c.h.b16 %v1203
        %v1457 = vunpack.c.l.b16 %v1204
        %v1458 = vunpack.c.h.b16 %v1204
        %v1459 = vunpack.c.l.b16 %v1205
        %v1460 = vunpack.c.h.b16 %v1205
        %v1461 = vunpack.c.l.b16 %v1206
        %v1462 = vunpack.c.h.b16 %v1206
        %v1463 = vunpack.c.l.b16 %v1207
        %v1464 = vunpack.c.h.b16 %v1207
        %v1465 = vunpack.c.l.b16 %v1208
        %v1466 = vunpack.c.h.b16 %v1208
        %v1467 = vunpack.c.l.b16 %v1209
        %v1468 = vunpack.c.h.b16 %v1209
        %v1469 = vunpack.c.l.b16 %v1210
        %v1470 = vunpack.c.h.b16 %v1210
        %v1471 = vunpack.c.l.b16 %v1211
        %v1472 = vunpack.c.h.b16 %v1211
        %v1473 = vunpack.c.l.b16 %v1212
        %v1474 = vunpack.c.h.b16 %v1212
        %v1475 = vunpack.c.l.b16 %v1213
        %v1476 = vunpack.c.h.b16 %v1213
        %v1477 = vunpack.c.l.b16 %v1214
        %v1478 = vunpack.c.h.b16 %v1214
        %v1479 = vunpack.c.l.b16 %v1215
        %v1480 = vunpack.c.h.b16 %v1215
        %v1481 = vunpack.c.l.b16 %v1216
        %v1482 = vunpack.c.h.b16 %v1216
        %v1483 = vunpack.c.l.b16 %v1217
        %v1484 = vunpack.c.h.b16 %v1217
        %v1485 = vunpack.c.l.b16 %v1218
        %v1486 = vunpack.c.h.b16 %v1218
        %v1487 = vunpack.c.l.b16 %v1219
        %v1488 = vunpack.c.h.b16 %v1219
        %v1489 = vunpack.c.l.b16 %v1220
        %v1490 = vunpack.c.h.b16 %v1220
        %v1491 = vunpack.c.l.b16 %v1221
        %v1492 = vunpack.c.h.b16 %v1221
        %v1493 = vunpack.c.l.b16 %v1222
        %v1494 = vunpack.c.h.b16 %v1222
        %v1495 = vunpack.c.l.b16 %v1223
        %v1496 = vunpack.c.h.b16 %v1223
        %v1497 = vunpack.c.l.b16 %v1224
        %v1498 = vunpack.c.h.b16 %v1224
        %v1499 = vunpack.c.l.b16 %v1225
        %v1500 = vunpack.c.h.b16 %v1225
        %v1501 = vunpack.c.l.b16 %v1226
        %v1502 = vunpack.c.h.b16 %v1226
        %v1503 = vpack.c.b16 %v1391, %v1375
        %v1504 = vpack.c.b16 %v1392, %v1376
        %v1505 = vpack.c.b16 %v1393, %v1377
        %v1506 = vpack.c.b16 %v1394, %v1378
        %v1507 = vpack.c.b16 %v1395, %v1379
        %v1508 = vpack.c.b16 %v1396, %v1380
        %v1509 = vpack.c.b16 %v1397, %v1381
        %v1510 = vpack.c.b16 %v1398, %v1382
        %v1511 = vpack.c.b16 %v1399, %v1383
        %v1512 = vpack.c.b16 %v1400, %v1384
        %v1513 = vpack.c.b16 %v1401, %v1385
        %v1514 = vpack.c.b16 %v1402, %v1386
        %v1515 = vpack.c.b16 %v1403, %v1387
        %v1516 = vpack.c.b16 %v1404, %v1388
        %v1517 = vpack.c.b16 %v1405, %v1389
        %v1518 = vpack.c.b16 %v1406, %v1390
        %v1519 = vpack.c.b16 %v1423, %v1407
        %v1520 = vpack.c.b16 %v1424, %v1408
        %v1521 = vpack.c.b16 %v1425, %v1409
        %v1522 = vpack.c.b16 %v1426, %v1410
        %v1523 = vpack.c.b16 %v1427, %v1411
        %v1524 = vpack.c.b16 %v1428, %v1412
        %v1525 = vpack.c.b16 %v1429, %v1413
        %v1526 = vpack.c.b16 %v1430, %v1414
        %v1527 = vpack.c.b16 %v1431, %v1415
        %v1528 = vpack.c.b16 %v1432, %v1416
        %v1529 = vpack.c.b16 %v1433, %v1417
        %v1530 = vpack.c.b16 %v1434, %v1418
        %v1531 = vpack.c.b16 %v1435, %v1419
        %v1532 = vpack.c.b16 %v1436, %v1420
        %v1533 = vpack.c.b16 %v1437, %v1421
        %v1534 = vpack.c.b16 %v1438, %v1422
        %v1535 = vpack.c.b16 %v1455, %v1439
        %v1536 = vpack.c.b16 %v1456, %v1440
        %v1537 = vpack.c.b16 %v1457, %v1441
        %v1538 = vpack.c.b16 %v1458, %v1442
        %v1539 = vpack.c.b16 %v1459, %v1443
        %v1540 = vpack.c.b16 %v1460, %v1444
        %v1541 = vpack.c.b16 %v1461, %v1445
        %v1542 = vpack.c.b16 %v1462, %v1446
        %v1543 = vpack.c.b16 %v1463, %v1447
        %v1544 = vpack.c.b16 %v1464, %v1448
        %v1545 = vpack.c.b16 %v1465, %v1449
        %v1546 = vpack.c.b16 %v1466, %v1450
        %v1547 = vpack.c.b16 %v1467, %v1451
        %v1548 = vpack.c.b16 %v1468, %v1452
        %v1549 = vpack.c.b16 %v1469, %v1453
        %v1550 = vpack.c.b16 %v1470, %v1454
        %v1551 = vpack.c.b16 %v1487, %v1471
        %v1552 = vpack.c.b16 %v1488, %v1472
        %v1553 = vpack.c.b16 %v1489, %v1473
        %v1554 = vpack.c.b16 %v1490, %v1474
        %v1555 = vpack.c.b16 %v1491, %v1475
        %v1556 = vpack.c.b16 %v1492, %v1476
        %v1557 = vpack.c.b16 %v1493, %v1477
        %v1558 = vpack.c.b16 %v1494, %v1478
        %v1559 = vpack.c.b16 %v1495, %v1479
        %v1560 = vpack.c.b16 %v1496, %v1480
        %v1561 = vpack.c.b16 %v1497, %v1481
        %v1562 = vpack.c.b16 %v1498, %v1482
        %v1563 = vpack.c.b16 %v1499, %v1483
        %v1564 = vpack.c.b16 %v1500, %v1484
        %v1565 = vpack.c.b16 %v1501, %v1485
        %v1566 = vpack.c.b16 %v1502, %v1486
        %vm1631 = vcmask 523264
        %v1633 = vsel %vm1631, %v1161, 0
        %v1636 = vsel %vm1631, %v1162, 0
        %1638 = vmatprep.subr.bf16.mxu0 %v1504
        %1639 = vmatpush1.bf16.msra.mxu0 %v1503
        %1640 = vmatprep.subr.bf16.mxu0 %v1520
        %1641 = vmatpush1.bf16.msra.mxu0 %v1519
        %1642 = vmatprep.subr.bf16.mxu0 %v1536
        %1643 = vmatpush1.bf16.msra.mxu0 %v1535
        %1644 = vmatprep.subr.bf16.mxu0 %v1552
        %1645 = vmatpush1.bf16.msra.mxu0 %v1551
        %1646 = vmatprep.subr.bf16.mxu0 0
        %1647 = vmatpush1.bf16.msra.mxu0 0
        %1648 = vmatprep.subr.bf16.mxu0 0
        %1649 = vmatpush1.bf16.msra.mxu0 0
        %1650 = vmatprep.subr.bf16.mxu0 0
        %1651 = vmatpush1.bf16.msra.mxu0 0
        %1652 = vmatprep.subr.bf16.mxu0 0
        %1653 = vmatpush1.bf16.msra.mxu0 0
        %1654 = vmatprep.subr.bf16.mxu0 0
        %1655 = vmatpush1.bf16.msra.mxu0 0
        %1656 = vmatprep.subr.bf16.mxu0 0
        %1657 = vmatpush1.bf16.msra.mxu0 0
        %1658 = vmatprep.subr.bf16.mxu0 0
        %1659 = vmatpush1.bf16.msra.mxu0 0
        %1660 = vmatprep.subr.bf16.mxu0 0
        %1661 = vmatpush1.bf16.msra.mxu0 0
        %1662 = vmatprep.subr.bf16.mxu0 0
        %1663 = vmatpush1.bf16.msra.mxu0 0
        %1664 = vmatprep.subr.bf16.mxu0 0
        %1665 = vmatpush1.bf16.msra.mxu0 0
        %1666 = vmatprep.subr.bf16.mxu0 0
        %1667 = vmatpush1.bf16.msra.mxu0 0
        %1668 = vmatprep.subr.bf16.mxu0 0
        %1669 = vmatpush1.bf16.msra.mxu0 0
        %1670 = vmatprep.mubr.bf16.mxu0 0
        %1671 = vmatmul.mubr.bf16.gmra.mrb[0].mxu0 %v1633
        %v1672 = vpop.f32.mrb[0].mxu0
        %v1673 = vadd.f32 %v1234, %v1672
        %v1674 = vpop.f32.mrb[0].mxu0
        %v1675 = vadd.f32 %v1238, %v1674
        %v1676 = vpop.f32.mrb[0].mxu0
        %v1677 = vadd.f32 %v1234, %v1676
        %v1678 = vpop.f32.mrb[0].mxu0
        %v1679 = vadd.f32 %v1238, %v1678
        %1680 = vmatprep.mubr.bf16.mxu0 0
        %1681 = vmatmul.mubr.bf16.gmra.mrb[0].mxu0 %v1636
        %v1682 = vpop.f32.mrb[0].mxu0
        %v1683 = vadd.f32 %v1234, %v1682
        %v1684 = vpop.f32.mrb[0].mxu0
        %v1685 = vadd.f32 %v1238, %v1684
        %v1686 = vpop.f32.mrb[0].mxu0
        %v1687 = vadd.f32 %v1234, %v1686
        %v1688 = vpop.f32.mrb[0].mxu0
        %v1689 = vadd.f32 %v1238, %v1688
        %1690 = vdwg.mxu0
        %1691 = vmatprep.subr.bf16.mxu0 %v1506
        %1692 = vmatpush1.bf16.msra.mxu0 %v1505
        %1693 = vmatprep.subr.bf16.mxu0 %v1522
        %1694 = vmatpush1.bf16.msra.mxu0 %v1521
        %1695 = vmatprep.subr.bf16.mxu0 %v1538
        %1696 = vmatpush1.bf16.msra.mxu0 %v1537
        %1697 = vmatprep.subr.bf16.mxu0 %v1554
        %1698 = vmatpush1.bf16.msra.mxu0 %v1553
        %1699 = vmatprep.subr.bf16.mxu0 0
        %1700 = vmatpush1.bf16.msra.mxu0 0
        %1701 = vmatprep.subr.bf16.mxu0 0
        %1702 = vmatpush1.bf16.msra.mxu0 0
        %1703 = vmatprep.subr.bf16.mxu0 0
        %1704 = vmatpush1.bf16.msra.mxu0 0
        %1705 = vmatprep.subr.bf16.mxu0 0
        %1706 = vmatpush1.bf16.msra.mxu0 0
        %1707 = vmatprep.subr.bf16.mxu0 0
        %1708 = vmatpush1.bf16.msra.mxu0 0
        %1709 = vmatprep.subr.bf16.mxu0 0
        %1710 = vmatpush1.bf16.msra.mxu0 0
        %1711 = vmatprep.subr.bf16.mxu0 0
        %1712 = vmatpush1.bf16.msra.mxu0 0
        %1713 = vmatprep.subr.bf16.mxu0 0
        %1714 = vmatpush1.bf16.msra.mxu0 0
        %1715 = vmatprep.subr.bf16.mxu0 0
        %1716 = vmatpush1.bf16.msra.mxu0 0
        %1717 = vmatprep.subr.bf16.mxu0 0
        %1718 = vmatpush1.bf16.msra.mxu0 0
        %1719 = vmatprep.subr.bf16.mxu0 0
        %1720 = vmatpush1.bf16.msra.mxu0 0
        %1721 = vmatprep.subr.bf16.mxu0 0
        %1722 = vmatpush1.bf16.msra.mxu0 0
        %1723 = vmatprep.mubr.bf16.mxu0 0
        %1724 = vmatmul.mubr.bf16.gmra.mrb[0].mxu0 %v1633
        %v1725 = vpop.f32.mrb[0].mxu0
        %v1726 = vadd.f32 %v1242, %v1725
        %v1727 = vpop.f32.mrb[0].mxu0
        %v1728 = vadd.f32 %v1246, %v1727
        %v1729 = vpop.f32.mrb[0].mxu0
        %v1730 = vadd.f32 %v1242, %v1729
        %v1731 = vpop.f32.mrb[0].mxu0
        %v1732 = vadd.f32 %v1246, %v1731
        %1733 = vmatprep.mubr.bf16.mxu0 0
        %1734 = vmatmul.mubr.bf16.gmra.mrb[0].mxu0 %v1636
        %v1735 = vpop.f32.mrb[0].mxu0
        %v1736 = vadd.f32 %v1242, %v1735
        %v1737 = vpop.f32.mrb[0].mxu0
        %v1738 = vadd.f32 %v1246, %v1737
        %v1739 = vpop.f32.mrb[0].mxu0
        %v1740 = vadd.f32 %v1242, %v1739
        %v1741 = vpop.f32.mrb[0].mxu0
        %v1742 = vadd.f32 %v1246, %v1741
        %1743 = vdwg.mxu0
        %1744 = vmatprep.subr.bf16.mxu0 %v1508
        %1745 = vmatpush1.bf16.msra.mxu0 %v1507
        %1746 = vmatprep.subr.bf16.mxu0 %v1524
        %1747 = vmatpush1.bf16.msra.mxu0 %v1523
        %1748 = vmatprep.subr.bf16.mxu0 %v1540
        %1749 = vmatpush1.bf16.msra.mxu0 %v1539
        %1750 = vmatprep.subr.bf16.mxu0 %v1556
        %1751 = vmatpush1.bf16.msra.mxu0 %v1555
        %1752 = vmatprep.subr.bf16.mxu0 0
        %1753 = vmatpush1.bf16.msra.mxu0 0
        %1754 = vmatprep.subr.bf16.mxu0 0
        %1755 = vmatpush1.bf16.msra.mxu0 0
        %1756 = vmatprep.subr.bf16.mxu0 0
        %1757 = vmatpush1.bf16.msra.mxu0 0
        %1758 = vmatprep.subr.bf16.mxu0 0
        %1759 = vmatpush1.bf16.msra.mxu0 0
        %1760 = vmatprep.subr.bf16.mxu0 0
        %1761 = vmatpush1.bf16.msra.mxu0 0
        %1762 = vmatprep.subr.bf16.mxu0 0
        %1763 = vmatpush1.bf16.msra.mxu0 0
        %1764 = vmatprep.subr.bf16.mxu0 0
        %1765 = vmatpush1.bf16.msra.mxu0 0
        %1766 = vmatprep.subr.bf16.mxu0 0
        %1767 = vmatpush1.bf16.msra.mxu0 0
        %1768 = vmatprep.subr.bf16.mxu0 0
        %1769 = vmatpush1.bf16.msra.mxu0 0
        %1770 = vmatprep.subr.bf16.mxu0 0
        %1771 = vmatpush1.bf16.msra.mxu0 0
        %1772 = vmatprep.subr.bf16.mxu0 0
        %1773 = vmatpush1.bf16.msra.mxu0 0
        %1774 = vmatprep.subr.bf16.mxu0 0
        %1775 = vmatpush1.bf16.msra.mxu0 0
        %1776 = vmatprep.mubr.bf16.mxu0 0
        %1777 = vmatmul.mubr.bf16.gmra.mrb[0].mxu0 %v1633
        %v1778 = vpop.f32.mrb[0].mxu0
        %v1779 = vadd.f32 %v1250, %v1778
        %v1780 = vpop.f32.mrb[0].mxu0
        %v1781 = vadd.f32 %v1254, %v1780
        %v1782 = vpop.f32.mrb[0].mxu0
        %v1783 = vadd.f32 %v1250, %v1782
        %v1784 = vpop.f32.mrb[0].mxu0
        %v1785 = vadd.f32 %v1254, %v1784
        %1786 = vmatprep.mubr.bf16.mxu0 0
        %1787 = vmatmul.mubr.bf16.gmra.mrb[0].mxu0 %v1636
        %v1788 = vpop.f32.mrb[0].mxu0
        %v1789 = vadd.f32 %v1250, %v1788
        %v1790 = vpop.f32.mrb[0].mxu0
        %v1791 = vadd.f32 %v1254, %v1790
        %v1792 = vpop.f32.mrb[0].mxu0
        %v1793 = vadd.f32 %v1250, %v1792
        %v1794 = vpop.f32.mrb[0].mxu0
        %v1795 = vadd.f32 %v1254, %v1794
        %1796 = vdwg.mxu0
        %1797 = vmatprep.subr.bf16.mxu0 %v1510
        %1798 = vmatpush1.bf16.msra.mxu0 %v1509
        %1799 = vmatprep.subr.bf16.mxu0 %v1526
        %1800 = vmatpush1.bf16.msra.mxu0 %v1525
        %1801 = vmatprep.subr.bf16.mxu0 %v1542
        %1802 = vmatpush1.bf16.msra.mxu0 %v1541
        %1803 = vmatprep.subr.bf16.mxu0 %v1558
        %1804 = vmatpush1.bf16.msra.mxu0 %v1557
        %1805 = vmatprep.subr.bf16.mxu0 0
        %1806 = vmatpush1.bf16.msra.mxu0 0
        %1807 = vmatprep.subr.bf16.mxu0 0
        %1808 = vmatpush1.bf16.msra.mxu0 0
        %1809 = vmatprep.subr.bf16.mxu0 0
        %1810 = vmatpush1.bf16.msra.mxu0 0
        %1811 = vmatprep.subr.bf16.mxu0 0
        %1812 = vmatpush1.bf16.msra.mxu0 0
        %1813 = vmatprep.subr.bf16.mxu0 0
        %1814 = vmatpush1.bf16.msra.mxu0 0
        %1815 = vmatprep.subr.bf16.mxu0 0
        %1816 = vmatpush1.bf16.msra.mxu0 0
        %1817 = vmatprep.subr.bf16.mxu0 0
        %1818 = vmatpush1.bf16.msra.mxu0 0
        %1819 = vmatprep.subr.bf16.mxu0 0
        %1820 = vmatpush1.bf16.msra.mxu0 0
        %1821 = vmatprep.subr.bf16.mxu0 0
        %1822 = vmatpush1.bf16.msra.mxu0 0
        %1823 = vmatprep.subr.bf16.mxu0 0
        %1824 = vmatpush1.bf16.msra.mxu0 0
        %1825 = vmatprep.subr.bf16.mxu0 0
        %1826 = vmatpush1.bf16.msra.mxu0 0
        %1827 = vmatprep.subr.bf16.mxu0 0
        %1828 = vmatpush1.bf16.msra.mxu0 0
        %1829 = vmatprep.mubr.bf16.mxu0 0
        %1830 = vmatmul.mubr.bf16.gmra.mrb[0].mxu0 %v1633
        %v1831 = vpop.f32.mrb[0].mxu0
        %v1832 = vadd.f32 %v1258, %v1831
        %v1833 = vpop.f32.mrb[0].mxu0
        %v1834 = vadd.f32 %v1262, %v1833
        %v1835 = vpop.f32.mrb[0].mxu0
        %v1836 = vadd.f32 %v1258, %v1835
        %v1837 = vpop.f32.mrb[0].mxu0
        %v1838 = vadd.f32 %v1262, %v1837
        %1839 = vmatprep.mubr.bf16.mxu0 0
        %1840 = vmatmul.mubr.bf16.gmra.mrb[0].mxu0 %v1636
        %v1841 = vpop.f32.mrb[0].mxu0
        %v1842 = vadd.f32 %v1258, %v1841
        %v1843 = vpop.f32.mrb[0].mxu0
        %v1844 = vadd.f32 %v1262, %v1843
        %v1845 = vpop.f32.mrb[0].mxu0
        %v1846 = vadd.f32 %v1258, %v1845
        %v1847 = vpop.f32.mrb[0].mxu0
        %v1848 = vadd.f32 %v1262, %v1847
        %1849 = vdwg.mxu0
        %1850 = vmatprep.subr.bf16.mxu0 %v1512
        %1851 = vmatpush1.bf16.msra.mxu0 %v1511
        %1852 = vmatprep.subr.bf16.mxu0 %v1528
        %1853 = vmatpush1.bf16.msra.mxu0 %v1527
        %1854 = vmatprep.subr.bf16.mxu0 %v1544
        %1855 = vmatpush1.bf16.msra.mxu0 %v1543
        %1856 = vmatprep.subr.bf16.mxu0 %v1560
        %1857 = vmatpush1.bf16.msra.mxu0 %v1559
        %1858 = vmatprep.subr.bf16.mxu0 0
        %1859 = vmatpush1.bf16.msra.mxu0 0
        %1860 = vmatprep.subr.bf16.mxu0 0
        %1861 = vmatpush1.bf16.msra.mxu0 0
        %1862 = vmatprep.subr.bf16.mxu0 0
        %1863 = vmatpush1.bf16.msra.mxu0 0
        %1864 = vmatprep.subr.bf16.mxu0 0
        %1865 = vmatpush1.bf16.msra.mxu0 0
        %1866 = vmatprep.subr.bf16.mxu0 0
        %1867 = vmatpush1.bf16.msra.mxu0 0
        %1868 = vmatprep.subr.bf16.mxu0 0
        %1869 = vmatpush1.bf16.msra.mxu0 0
        %1870 = vmatprep.subr.bf16.mxu0 0
        %1871 = vmatpush1.bf16.msra.mxu0 0
        %1872 = vmatprep.subr.bf16.mxu0 0
        %1873 = vmatpush1.bf16.msra.mxu0 0
        %1874 = vmatprep.subr.bf16.mxu0 0
        %1875 = vmatpush1.bf16.msra.mxu0 0
        %1876 = vmatprep.subr.bf16.mxu0 0
        %1877 = vmatpush1.bf16.msra.mxu0 0
        %1878 = vmatprep.subr.bf16.mxu0 0
        %1879 = vmatpush1.bf16.msra.mxu0 0
        %1880 = vmatprep.subr.bf16.mxu0 0
        %1881 = vmatpush1.bf16.msra.mxu0 0
        %1882 = vmatprep.mubr.bf16.mxu0 0
        %1883 = vmatmul.mubr.bf16.gmra.mrb[0].mxu0 %v1633
        %v1884 = vpop.f32.mrb[0].mxu0
        %v1885 = vadd.f32 %v1266, %v1884
        %v1886 = vpop.f32.mrb[0].mxu0
        %v1887 = vadd.f32 %v1270, %v1886
        %v1888 = vpop.f32.mrb[0].mxu0
        %v1889 = vadd.f32 %v1266, %v1888
        %v1890 = vpop.f32.mrb[0].mxu0
        %v1891 = vadd.f32 %v1270, %v1890
        %1892 = vmatprep.mubr.bf16.mxu0 0
        %1893 = vmatmul.mubr.bf16.gmra.mrb[0].mxu0 %v1636
        %v1894 = vpop.f32.mrb[0].mxu0
        %v1895 = vadd.f32 %v1266, %v1894
        %v1896 = vpop.f32.mrb[0].mxu0
        %v1897 = vadd.f32 %v1270, %v1896
        %v1898 = vpop.f32.mrb[0].mxu0
        %v1899 = vadd.f32 %v1266, %v1898
        %v1900 = vpop.f32.mrb[0].mxu0
        %v1901 = vadd.f32 %v1270, %v1900
        %1902 = vdwg.mxu0
        %1903 = vmatprep.subr.bf16.mxu0 %v1514
        %1904 = vmatpush1.bf16.msra.mxu0 %v1513
        %1905 = vmatprep.subr.bf16.mxu0 %v1530
        %1906 = vmatpush1.bf16.msra.mxu0 %v1529
        %1907 = vmatprep.subr.bf16.mxu0 %v1546
        %1908 = vmatpush1.bf16.msra.mxu0 %v1545
        %1909 = vmatprep.subr.bf16.mxu0 %v1562
        %1910 = vmatpush1.bf16.msra.mxu0 %v1561
        %1911 = vmatprep.subr.bf16.mxu0 0
        %1912 = vmatpush1.bf16.msra.mxu0 0
        %1913 = vmatprep.subr.bf16.mxu0 0
        %1914 = vmatpush1.bf16.msra.mxu0 0
        %1915 = vmatprep.subr.bf16.mxu0 0
        %1916 = vmatpush1.bf16.msra.mxu0 0
        %1917 = vmatprep.subr.bf16.mxu0 0
        %1918 = vmatpush1.bf16.msra.mxu0 0
        %1919 = vmatprep.subr.bf16.mxu0 0
        %1920 = vmatpush1.bf16.msra.mxu0 0
        %1921 = vmatprep.subr.bf16.mxu0 0
        %1922 = vmatpush1.bf16.msra.mxu0 0
        %1923 = vmatprep.subr.bf16.mxu0 0
        %1924 = vmatpush1.bf16.msra.mxu0 0
        %1925 = vmatprep.subr.bf16.mxu0 0
        %1926 = vmatpush1.bf16.msra.mxu0 0
        %1927 = vmatprep.subr.bf16.mxu0 0
        %1928 = vmatpush1.bf16.msra.mxu0 0
        %1929 = vmatprep.subr.bf16.mxu0 0
        %1930 = vmatpush1.bf16.msra.mxu0 0
        %1931 = vmatprep.subr.bf16.mxu0 0
        %1932 = vmatpush1.bf16.msra.mxu0 0
        %1933 = vmatprep.subr.bf16.mxu0 0
        %1934 = vmatpush1.bf16.msra.mxu0 0
        %1935 = vmatprep.mubr.bf16.mxu0 0
        %1936 = vmatmul.mubr.bf16.gmra.mrb[0].mxu0 %v1633
        %v1937 = vpop.f32.mrb[0].mxu0
        %v1938 = vadd.f32 %v1274, %v1937
        %v1939 = vpop.f32.mrb[0].mxu0
        %v1940 = vadd.f32 %v1278, %v1939
        %v1941 = vpop.f32.mrb[0].mxu0
        %v1942 = vadd.f32 %v1274, %v1941
        %v1943 = vpop.f32.mrb[0].mxu0
        %v1944 = vadd.f32 %v1278, %v1943
        %1945 = vmatprep.mubr.bf16.mxu0 0
        %1946 = vmatmul.mubr.bf16.gmra.mrb[0].mxu0 %v1636
        %v1947 = vpop.f32.mrb[0].mxu0
        %v1948 = vadd.f32 %v1274, %v1947
        %v1949 = vpop.f32.mrb[0].mxu0
        %v1950 = vadd.f32 %v1278, %v1949
        %v1951 = vpop.f32.mrb[0].mxu0
        %v1952 = vadd.f32 %v1274, %v1951
        %v1953 = vpop.f32.mrb[0].mxu0
        %v1954 = vadd.f32 %v1278, %v1953
        %1955 = vdwg.mxu0
        %1956 = vmatprep.subr.bf16.mxu0 %v1516
        %1957 = vmatpush1.bf16.msra.mxu0 %v1515
        %1958 = vmatprep.subr.bf16.mxu0 %v1532
        %1959 = vmatpush1.bf16.msra.mxu0 %v1531
        %1960 = vmatprep.subr.bf16.mxu0 %v1548
        %1961 = vmatpush1.bf16.msra.mxu0 %v1547
        %1962 = vmatprep.subr.bf16.mxu0 %v1564
        %1963 = vmatpush1.bf16.msra.mxu0 %v1563
        %1964 = vmatprep.subr.bf16.mxu0 0
        %1965 = vmatpush1.bf16.msra.mxu0 0
        %1966 = vmatprep.subr.bf16.mxu0 0
        %1967 = vmatpush1.bf16.msra.mxu0 0
        %1968 = vmatprep.subr.bf16.mxu0 0
        %1969 = vmatpush1.bf16.msra.mxu0 0
        %1970 = vmatprep.subr.bf16.mxu0 0
        %1971 = vmatpush1.bf16.msra.mxu0 0
        %1972 = vmatprep.subr.bf16.mxu0 0
        %1973 = vmatpush1.bf16.msra.mxu0 0
        %1974 = vmatprep.subr.bf16.mxu0 0
        %1975 = vmatpush1.bf16.msra.mxu0 0
        %1976 = vmatprep.subr.bf16.mxu0 0
        %1977 = vmatpush1.bf16.msra.mxu0 0
        %1978 = vmatprep.subr.bf16.mxu0 0
        %1979 = vmatpush1.bf16.msra.mxu0 0
        %1980 = vmatprep.subr.bf16.mxu0 0
        %1981 = vmatpush1.bf16.msra.mxu0 0
        %1982 = vmatprep.subr.bf16.mxu0 0
        %1983 = vmatpush1.bf16.msra.mxu0 0
        %1984 = vmatprep.subr.bf16.mxu0 0
        %1985 = vmatpush1.bf16.msra.mxu0 0
        %1986 = vmatprep.subr.bf16.mxu0 0
        %1987 = vmatpush1.bf16.msra.mxu0 0
        %1988 = vmatprep.mubr.bf16.mxu0 0
        %1989 = vmatmul.mubr.bf16.gmra.mrb[0].mxu0 %v1633
        %v1990 = vpop.f32.mrb[0].mxu0
        %v1991 = vadd.f32 %v1282, %v1990
        %v1992 = vpop.f32.mrb[0].mxu0
        %v1993 = vadd.f32 %v1286, %v1992
        %v1994 = vpop.f32.mrb[0].mxu0
        %v1995 = vadd.f32 %v1282, %v1994
        %v1996 = vpop.f32.mrb[0].mxu0
        %v1997 = vadd.f32 %v1286, %v1996
        %1998 = vmatprep.mubr.bf16.mxu0 0
        %1999 = vmatmul.mubr.bf16.gmra.mrb[0].mxu0 %v1636
        %v2000 = vpop.f32.mrb[0].mxu0
        %v2001 = vadd.f32 %v1282, %v2000
        %v2002 = vpop.f32.mrb[0].mxu0
        %v2003 = vadd.f32 %v1286, %v2002
        %v2004 = vpop.f32.mrb[0].mxu0
        %v2005 = vadd.f32 %v1282, %v2004
        %v2006 = vpop.f32.mrb[0].mxu0
        %v2007 = vadd.f32 %v1286, %v2006
        %2008 = vdwg.mxu0
        %2009 = vmatprep.subr.bf16.mxu0 %v1518
        %2010 = vmatpush1.bf16.msra.mxu0 %v1517
        %2011 = vmatprep.subr.bf16.mxu0 %v1534
        %2012 = vmatpush1.bf16.msra.mxu0 %v1533
        %2013 = vmatprep.subr.bf16.mxu0 %v1550
        %2014 = vmatpush1.bf16.msra.mxu0 %v1549
        %2015 = vmatprep.subr.bf16.mxu0 %v1566
        %2016 = vmatpush1.bf16.msra.mxu0 %v1565
        %2017 = vmatprep.subr.bf16.mxu0 0
        %2018 = vmatpush1.bf16.msra.mxu0 0
        %2019 = vmatprep.subr.bf16.mxu0 0
        %2020 = vmatpush1.bf16.msra.mxu0 0
        %2021 = vmatprep.subr.bf16.mxu0 0
        %2022 = vmatpush1.bf16.msra.mxu0 0
        %2023 = vmatprep.subr.bf16.mxu0 0
        %2024 = vmatpush1.bf16.msra.mxu0 0
        %2025 = vmatprep.subr.bf16.mxu0 0
        %2026 = vmatpush1.bf16.msra.mxu0 0
        %2027 = vmatprep.subr.bf16.mxu0 0
        %2028 = vmatpush1.bf16.msra.mxu0 0
        %2029 = vmatprep.subr.bf16.mxu0 0
        %2030 = vmatpush1.bf16.msra.mxu0 0
        %2031 = vmatprep.subr.bf16.mxu0 0
        %2032 = vmatpush1.bf16.msra.mxu0 0
        %2033 = vmatprep.subr.bf16.mxu0 0
        %2034 = vmatpush1.bf16.msra.mxu0 0
        %2035 = vmatprep.subr.bf16.mxu0 0
        %2036 = vmatpush1.bf16.msra.mxu0 0
        %2037 = vmatprep.subr.bf16.mxu0 0
        %2038 = vmatpush1.bf16.msra.mxu0 0
        %2039 = vmatprep.subr.bf16.mxu0 0
        %2040 = vmatpush1.bf16.msra.mxu0 0
        %2041 = vmatprep.mubr.bf16.mxu0 0
        %2042 = vmatmul.mubr.bf16.gmra.mrb[0].mxu0 %v1633
        %v2043 = vpop.f32.mrb[0].mxu0
        %v2044 = vadd.f32 %v1290, %v2043
        %v2045 = vpop.f32.mrb[0].mxu0
        %v2046 = vadd.f32 %v1294, %v2045
        %v2047 = vpop.f32.mrb[0].mxu0
        %v2048 = vadd.f32 %v1290, %v2047
        %v2049 = vpop.f32.mrb[0].mxu0
        %v2050 = vadd.f32 %v1294, %v2049
        %2051 = vmatprep.mubr.bf16.mxu0 0
        %2052 = vmatmul.mubr.bf16.gmra.mrb[0].mxu0 %v1636
        %v2053 = vpop.f32.mrb[0].mxu0
        %v2054 = vadd.f32 %v1290, %v2053
        %v2055 = vpop.f32.mrb[0].mxu0
        %v2056 = vadd.f32 %v1294, %v2055
        %v2057 = vpop.f32.mrb[0].mxu0
        %v2058 = vadd.f32 %v1290, %v2057
        %v2059 = vpop.f32.mrb[0].mxu0
        %v2060 = vadd.f32 %v1294, %v2059
        %2061 = vdwg.mxu0
        %v2062 = vmax.f32 %v1673, 0.0
        %v2063 = vmax.f32 %v1675, 0.0
        %v2064 = vmax.f32 %v1726, 0.0
        %v2065 = vmax.f32 %v1728, 0.0
        %v2066 = vmax.f32 %v1779, 0.0
        %v2067 = vmax.f32 %v1781, 0.0
        %v2068 = vmax.f32 %v1832, 0.0
        %v2069 = vmax.f32 %v1834, 0.0
        %v2070 = vmax.f32 %v1885, 0.0
        %v2071 = vmax.f32 %v1887, 0.0
        %v2072 = vmax.f32 %v1938, 0.0
        %v2073 = vmax.f32 %v1940, 0.0
        %v2074 = vmax.f32 %v1991, 0.0
        %v2075 = vmax.f32 %v1993, 0.0
        %v2076 = vmax.f32 %v2044, 0.0
        %v2077 = vmax.f32 %v2046, 0.0
        %v2078 = vmax.f32 %v1677, 0.0
        %v2079 = vmax.f32 %v1679, 0.0
        %v2080 = vmax.f32 %v1730, 0.0
        %v2081 = vmax.f32 %v1732, 0.0
        %v2082 = vmax.f32 %v1783, 0.0
        %v2083 = vmax.f32 %v1785, 0.0
        %v2084 = vmax.f32 %v1836, 0.0
        %v2085 = vmax.f32 %v1838, 0.0
        %v2086 = vmax.f32 %v1889, 0.0
        %v2087 = vmax.f32 %v1891, 0.0
        %v2088 = vmax.f32 %v1942, 0.0
        %v2089 = vmax.f32 %v1944, 0.0
        %v2090 = vmax.f32 %v1995, 0.0
        %v2091 = vmax.f32 %v1997, 0.0
        %v2092 = vmax.f32 %v2048, 0.0
        %v2093 = vmax.f32 %v2050, 0.0
        %v2094 = vmax.f32 %v1683, 0.0
        %v2095 = vmax.f32 %v1685, 0.0
        %v2096 = vmax.f32 %v1736, 0.0
        %v2097 = vmax.f32 %v1738, 0.0
        %v2098 = vmax.f32 %v1789, 0.0
        %v2099 = vmax.f32 %v1791, 0.0
        %v2100 = vmax.f32 %v1842, 0.0
        %v2101 = vmax.f32 %v1844, 0.0
        %v2102 = vmax.f32 %v1895, 0.0
        %v2103 = vmax.f32 %v1897, 0.0
        %v2104 = vmax.f32 %v1948, 0.0
        %v2105 = vmax.f32 %v1950, 0.0
        %v2106 = vmax.f32 %v2001, 0.0
        %v2107 = vmax.f32 %v2003, 0.0
        %v2108 = vmax.f32 %v2054, 0.0
        %v2109 = vmax.f32 %v2056, 0.0
        %v2110 = vmax.f32 %v1687, 0.0
        %v2111 = vmax.f32 %v1689, 0.0
        %v2112 = vmax.f32 %v1740, 0.0
        %v2113 = vmax.f32 %v1742, 0.0
        %v2114 = vmax.f32 %v1793, 0.0
        %v2115 = vmax.f32 %v1795, 0.0
        %v2116 = vmax.f32 %v1846, 0.0
        %v2117 = vmax.f32 %v1848, 0.0
        %v2118 = vmax.f32 %v1899, 0.0
        %v2119 = vmax.f32 %v1901, 0.0
        %v2120 = vmax.f32 %v1952, 0.0
        %v2121 = vmax.f32 %v1954, 0.0
        %v2122 = vmax.f32 %v2005, 0.0
        %v2123 = vmax.f32 %v2007, 0.0
        %v2124 = vmax.f32 %v2058, 0.0
        %v2125 = vmax.f32 %v2060, 0.0
        %v2126 = vlaneseq
        %v2127 = vshrl.u32 %v2126, 7
        %v2128 = vadd.s32 %v2127, 8
        %v2129 = vadd.s32 %v2127, 16
        %v2130 = vadd.s32 %v2127, 24
        %vm2131 = vcmp.lt.s32.totalorder %v2127, 0
        %v2132 = vsub.s32 0, %v2127
        %v2133 = vsel %vm2131, %v2132, %v2127
        %v2134 = vshrl.u32 %v2133, 1
        %v2135 = vand.u32 %v2133, 1
        %v2136 = vsub.s32 0, %v2135
        %v2137 = vsel %vm2131, %v2136, %v2135
        %vm2138 = vcmp.lt.s32.totalorder %v2128, 0
        %v2139 = vsub.s32 0, %v2128
        %v2140 = vsel %vm2138, %v2139, %v2128
        %v2141 = vshrl.u32 %v2140, 1
        %v2142 = vand.u32 %v2140, 1
        %v2143 = vsub.s32 0, %v2142
        %v2144 = vsel %vm2138, %v2143, %v2142
        %vm2145 = vcmp.lt.s32.totalorder %v2129, 0
        %v2146 = vsub.s32 0, %v2129
        %v2147 = vsel %vm2145, %v2146, %v2129
        %v2148 = vshrl.u32 %v2147, 1
        %v2149 = vand.u32 %v2147, 1
        %v2150 = vsub.s32 0, %v2149
        %v2151 = vsel %vm2145, %v2150, %v2149
        %vm2152 = vcmp.lt.s32.totalorder %v2130, 0
        %v2153 = vsub.s32 0, %v2130
        %v2154 = vsel %vm2152, %v2153, %v2130
        %v2155 = vshrl.u32 %v2154, 1
        %v2156 = vand.u32 %v2154, 1
        %v2157 = vsub.s32 0, %v2156
        %v2158 = vsel %vm2152, %v2157, %v2156
        %vm2159 = vcmp.ne.s32.totalorder %v2137, 0
        %vm2160 = vcmp.ne.s32.totalorder %v2144, 0
        %vm2161 = vcmp.ne.s32.totalorder %v2151, 0
        %vm2162 = vcmp.ne.s32.totalorder %v2158, 0
        %vm2163 = vcmp.lt.s32.totalorder %v2137, 0
        %vm2164 = vcmp.lt.s32.totalorder %v2144, 0
        %vm2165 = vcmp.lt.s32.totalorder %v2151, 0
        %vm2166 = vcmp.lt.s32.totalorder %v2158, 0
        %vm2167 = vmand %vm2163, %vm2159
        %vm2168 = vmand %vm2164, %vm2160
        %vm2169 = vmand %vm2165, %vm2161
        %vm2170 = vmand %vm2166, %vm2162
        %v2171 = vadd.s32 %v2137, 2
        %v2172 = vadd.s32 %v2144, 2
        %v2173 = vadd.s32 %v2151, 2
        %v2174 = vadd.s32 %v2158, 2
        %v2175 = vsel %vm2167, %v2171, %v2137
        %v2176 = vsel %vm2168, %v2172, %v2144
        %v2177 = vsel %vm2169, %v2173, %v2151
        %v2178 = vsel %vm2170, %v2174, %v2158
        %vm2179 = vcmp.eq.s32.totalorder %v2175, 0
        %vm2180 = vcmp.eq.s32.totalorder %v2176, 0
        %vm2181 = vcmp.eq.s32.totalorder %v2177, 0
        %vm2182 = vcmp.eq.s32.totalorder %v2178, 0
        %v2183 = vsel %vm2179, 1, 0
        %v2184 = vsel %vm2180, 1, 0
        %v2185 = vsel %vm2181, 1, 0
        %v2186 = vsel %vm2182, 1, 0
        %vm2187 = vcmp.eq.s32.totalorder %v2183, 1
        %vm2188 = vcmp.eq.s32.totalorder %v2184, 1
        %vm2189 = vcmp.eq.s32.totalorder %v2185, 1
        %vm2190 = vcmp.eq.s32.totalorder %v2186, 1
        %v2191 = vsel %vm2187, %v2062, 0.0
        %v2192 = vsel %vm2187, %v2063, 0.0
        %v2193 = vsel %vm2187, %v2064, 0.0
        %v2194 = vsel %vm2187, %v2065, 0.0
        %v2195 = vsel %vm2187, %v2066, 0.0
        %v2196 = vsel %vm2187, %v2067, 0.0
        %v2197 = vsel %vm2187, %v2068, 0.0
        %v2198 = vsel %vm2187, %v2069, 0.0
        %v2199 = vsel %vm2187, %v2070, 0.0
        %v2200 = vsel %vm2187, %v2071, 0.0
        %v2201 = vsel %vm2187, %v2072, 0.0
        %v2202 = vsel %vm2187, %v2073, 0.0
        %v2203 = vsel %vm2187, %v2074, 0.0
        %v2204 = vsel %vm2187, %v2075, 0.0
        %v2205 = vsel %vm2187, %v2076, 0.0
        %v2206 = vsel %vm2187, %v2077, 0.0
        %v2207 = vsel %vm2188, %v2078, 0.0
        %v2208 = vsel %vm2188, %v2079, 0.0
        %v2209 = vsel %vm2188, %v2080, 0.0
        %v2210 = vsel %vm2188, %v2081, 0.0
        %v2211 = vsel %vm2188, %v2082, 0.0
        %v2212 = vsel %vm2188, %v2083, 0.0
        %v2213 = vsel %vm2188, %v2084, 0.0
        %v2214 = vsel %vm2188, %v2085, 0.0
        %v2215 = vsel %vm2188, %v2086, 0.0
        %v2216 = vsel %vm2188, %v2087, 0.0
        %v2217 = vsel %vm2188, %v2088, 0.0
        %v2218 = vsel %vm2188, %v2089, 0.0
        %v2219 = vsel %vm2188, %v2090, 0.0
        %v2220 = vsel %vm2188, %v2091, 0.0
        %v2221 = vsel %vm2188, %v2092, 0.0
        %v2222 = vsel %vm2188, %v2093, 0.0
        %v2223 = vsel %vm2189, %v2094, 0.0
        %v2224 = vsel %vm2189, %v2095, 0.0
        %v2225 = vsel %vm2189, %v2096, 0.0
        %v2226 = vsel %vm2189, %v2097, 0.0
        %v2227 = vsel %vm2189, %v2098, 0.0
        %v2228 = vsel %vm2189, %v2099, 0.0
        %v2229 = vsel %vm2189, %v2100, 0.0
        %v2230 = vsel %vm2189, %v2101, 0.0
        %v2231 = vsel %vm2189, %v2102, 0.0
        %v2232 = vsel %vm2189, %v2103, 0.0
        %v2233 = vsel %vm2189, %v2104, 0.0
        %v2234 = vsel %vm2189, %v2105, 0.0
        %v2235 = vsel %vm2189, %v2106, 0.0
        %v2236 = vsel %vm2189, %v2107, 0.0
        %v2237 = vsel %vm2189, %v2108, 0.0
        %v2238 = vsel %vm2189, %v2109, 0.0
        %v2239 = vsel %vm2190, %v2110, 0.0
        %v2240 = vsel %vm2190, %v2111, 0.0
        %v2241 = vsel %vm2190, %v2112, 0.0
        %v2242 = vsel %vm2190, %v2113, 0.0
        %v2243 = vsel %vm2190, %v2114, 0.0
        %v2244 = vsel %vm2190, %v2115, 0.0
        %v2245 = vsel %vm2190, %v2116, 0.0
        %v2246 = vsel %vm2190, %v2117, 0.0
        %v2247 = vsel %vm2190, %v2118, 0.0
        %v2248 = vsel %vm2190, %v2119, 0.0
        %v2249 = vsel %vm2190, %v2120, 0.0
        %v2250 = vsel %vm2190, %v2121, 0.0
        %v2251 = vsel %vm2190, %v2122, 0.0
        %v2252 = vsel %vm2190, %v2123, 0.0
        %v2253 = vsel %vm2190, %v2124, 0.0
        %v2254 = vsel %vm2190, %v2125, 0.0
        %v2255 = vadd.f32 %v2191, %v2207
        %v2256 = vadd.f32 %v2255, %v2223
        %v2257 = vadd.f32 %v2256, %v2239
        %v2258 = vrot.slane %v2257, 4
        %v2259 = vadd.f32 %v2257, %v2258
        %v2260 = vrot.slane %v2259, 2
        %v2261 = vadd.f32 %v2259, %v2260
        %v2262 = vrot.slane %v2261, 1
        %v2263 = vadd.f32 %v2261, %v2262
        %v2264 = vadd.f32 %v2192, %v2208
        %v2265 = vadd.f32 %v2264, %v2224
        %v2266 = vadd.f32 %v2265, %v2240
        %v2267 = vrot.slane %v2266, 4
        %v2268 = vadd.f32 %v2266, %v2267
        %v2269 = vrot.slane %v2268, 2
        %v2270 = vadd.f32 %v2268, %v2269
        %v2271 = vrot.slane %v2270, 1
        %v2272 = vadd.f32 %v2270, %v2271
        %v2273 = vadd.f32 %v2193, %v2209
        %v2274 = vadd.f32 %v2273, %v2225
        %v2275 = vadd.f32 %v2274, %v2241
        %v2276 = vrot.slane %v2275, 4
        %v2277 = vadd.f32 %v2275, %v2276
        %v2278 = vrot.slane %v2277, 2
        %v2279 = vadd.f32 %v2277, %v2278
        %v2280 = vrot.slane %v2279, 1
        %v2281 = vadd.f32 %v2279, %v2280
        %v2282 = vadd.f32 %v2194, %v2210
        %v2283 = vadd.f32 %v2282, %v2226
        %v2284 = vadd.f32 %v2283, %v2242
        %v2285 = vrot.slane %v2284, 4
        %v2286 = vadd.f32 %v2284, %v2285
        %v2287 = vrot.slane %v2286, 2
        %v2288 = vadd.f32 %v2286, %v2287
        %v2289 = vrot.slane %v2288, 1
        %v2290 = vadd.f32 %v2288, %v2289
        %v2291 = vadd.f32 %v2195, %v2211
        %v2292 = vadd.f32 %v2291, %v2227
        %v2293 = vadd.f32 %v2292, %v2243
        %v2294 = vrot.slane %v2293, 4
        %v2295 = vadd.f32 %v2293, %v2294
        %v2296 = vrot.slane %v2295, 2
        %v2297 = vadd.f32 %v2295, %v2296
        %v2298 = vrot.slane %v2297, 1
        %v2299 = vadd.f32 %v2297, %v2298
        %v2300 = vadd.f32 %v2196, %v2212
        %v2301 = vadd.f32 %v2300, %v2228
        %v2302 = vadd.f32 %v2301, %v2244
        %v2303 = vrot.slane %v2302, 4
        %v2304 = vadd.f32 %v2302, %v2303
        %v2305 = vrot.slane %v2304, 2
        %v2306 = vadd.f32 %v2304, %v2305
        %v2307 = vrot.slane %v2306, 1
        %v2308 = vadd.f32 %v2306, %v2307
        %v2309 = vadd.f32 %v2197, %v2213
        %v2310 = vadd.f32 %v2309, %v2229
        %v2311 = vadd.f32 %v2310, %v2245
        %v2312 = vrot.slane %v2311, 4
        %v2313 = vadd.f32 %v2311, %v2312
        %v2314 = vrot.slane %v2313, 2
        %v2315 = vadd.f32 %v2313, %v2314
        %v2316 = vrot.slane %v2315, 1
        %v2317 = vadd.f32 %v2315, %v2316
        %v2318 = vadd.f32 %v2198, %v2214
        %v2319 = vadd.f32 %v2318, %v2230
        %v2320 = vadd.f32 %v2319, %v2246
        %v2321 = vrot.slane %v2320, 4
        %v2322 = vadd.f32 %v2320, %v2321
        %v2323 = vrot.slane %v2322, 2
        %v2324 = vadd.f32 %v2322, %v2323
        %v2325 = vrot.slane %v2324, 1
        %v2326 = vadd.f32 %v2324, %v2325
        %v2327 = vadd.f32 %v2199, %v2215
        %v2328 = vadd.f32 %v2327, %v2231
        %v2329 = vadd.f32 %v2328, %v2247
        %v2330 = vrot.slane %v2329, 4
        %v2331 = vadd.f32 %v2329, %v2330
        %v2332 = vrot.slane %v2331, 2
        %v2333 = vadd.f32 %v2331, %v2332
        %v2334 = vrot.slane %v2333, 1
        %v2335 = vadd.f32 %v2333, %v2334
        %v2336 = vadd.f32 %v2200, %v2216
        %v2337 = vadd.f32 %v2336, %v2232
        %v2338 = vadd.f32 %v2337, %v2248
        %v2339 = vrot.slane %v2338, 4
        %v2340 = vadd.f32 %v2338, %v2339
        %v2341 = vrot.slane %v2340, 2
        %v2342 = vadd.f32 %v2340, %v2341
        %v2343 = vrot.slane %v2342, 1
        %v2344 = vadd.f32 %v2342, %v2343
        %v2345 = vadd.f32 %v2201, %v2217
        %v2346 = vadd.f32 %v2345, %v2233
        %v2347 = vadd.f32 %v2346, %v2249
        %v2348 = vrot.slane %v2347, 4
        %v2349 = vadd.f32 %v2347, %v2348
        %v2350 = vrot.slane %v2349, 2
        %v2351 = vadd.f32 %v2349, %v2350
        %v2352 = vrot.slane %v2351, 1
        %v2353 = vadd.f32 %v2351, %v2352
        %v2354 = vadd.f32 %v2202, %v2218
        %v2355 = vadd.f32 %v2354, %v2234
        %v2356 = vadd.f32 %v2355, %v2250
        %v2357 = vrot.slane %v2356, 4
        %v2358 = vadd.f32 %v2356, %v2357
        %v2359 = vrot.slane %v2358, 2
        %v2360 = vadd.f32 %v2358, %v2359
        %v2361 = vrot.slane %v2360, 1
        %v2362 = vadd.f32 %v2360, %v2361
        %v2363 = vadd.f32 %v2203, %v2219
        %v2364 = vadd.f32 %v2363, %v2235
        %v2365 = vadd.f32 %v2364, %v2251
        %v2366 = vrot.slane %v2365, 4
        %v2367 = vadd.f32 %v2365, %v2366
        %v2368 = vrot.slane %v2367, 2
        %v2369 = vadd.f32 %v2367, %v2368
        %v2370 = vrot.slane %v2369, 1
        %v2371 = vadd.f32 %v2369, %v2370
        %v2372 = vadd.f32 %v2204, %v2220
        %v2373 = vadd.f32 %v2372, %v2236
        %v2374 = vadd.f32 %v2373, %v2252
        %v2375 = vrot.slane %v2374, 4
        %v2376 = vadd.f32 %v2374, %v2375
        %v2377 = vrot.slane %v2376, 2
        %v2378 = vadd.f32 %v2376, %v2377
        %v2379 = vrot.slane %v2378, 1
        %v2380 = vadd.f32 %v2378, %v2379
        %v2381 = vadd.f32 %v2205, %v2221
        %v2382 = vadd.f32 %v2381, %v2237
        %v2383 = vadd.f32 %v2382, %v2253
        %v2384 = vrot.slane %v2383, 4
        %v2385 = vadd.f32 %v2383, %v2384
        %v2386 = vrot.slane %v2385, 2
        %v2387 = vadd.f32 %v2385, %v2386
        %v2388 = vrot.slane %v2387, 1
        %v2389 = vadd.f32 %v2387, %v2388
        %v2390 = vadd.f32 %v2206, %v2222
        %v2391 = vadd.f32 %v2390, %v2238
        %v2392 = vadd.f32 %v2391, %v2254
        %v2393 = vrot.slane %v2392, 4
        %v2394 = vadd.f32 %v2392, %v2393
        %v2395 = vrot.slane %v2394, 2
        %v2396 = vadd.f32 %v2394, %v2395
        %v2397 = vrot.slane %v2396, 1
        %v2398 = vadd.f32 %v2396, %v2397
        %v2399 = vmul.f32 %v2263, 0.0625
        %v2400 = vmul.f32 %v2272, 0.0625
        %v2401 = vmul.f32 %v2281, 0.0625
        %v2402 = vmul.f32 %v2290, 0.0625
        %v2403 = vmul.f32 %v2299, 0.0625
        %v2404 = vmul.f32 %v2308, 0.0625
        %v2405 = vmul.f32 %v2317, 0.0625
        %v2406 = vmul.f32 %v2326, 0.0625
        %v2407 = vmul.f32 %v2335, 0.0625
        %v2408 = vmul.f32 %v2344, 0.0625
        %v2409 = vmul.f32 %v2353, 0.0625
        %v2410 = vmul.f32 %v2362, 0.0625
        %v2411 = vmul.f32 %v2371, 0.0625
        %v2412 = vmul.f32 %v2380, 0.0625
        %v2413 = vmul.f32 %v2389, 0.0625
        %v2414 = vmul.f32 %v2398, 0.0625
        %v2415 = vpack.c.bf16 %v2399, %v2399
        %v2416 = vpack.c.bf16 %v2400, %v2400
        %v2417 = vpack.c.bf16 %v2401, %v2401
        %v2418 = vpack.c.bf16 %v2402, %v2402
        %v2419 = vpack.c.bf16 %v2403, %v2403
        %v2420 = vpack.c.bf16 %v2404, %v2404
        %v2421 = vpack.c.bf16 %v2405, %v2405
        %v2422 = vpack.c.bf16 %v2406, %v2406
        %v2423 = vpack.c.bf16 %v2407, %v2407
        %v2424 = vpack.c.bf16 %v2408, %v2408
        %v2425 = vpack.c.bf16 %v2409, %v2409
        %v2426 = vpack.c.bf16 %v2410, %v2410
        %v2427 = vpack.c.bf16 %v2411, %v2411
        %v2428 = vpack.c.bf16 %v2412, %v2412
        %v2429 = vpack.c.bf16 %v2413, %v2413
        %v2430 = vpack.c.bf16 %v2414, %v2414
        %v2431 = vld [vmem:[#allocation7] sm:$0xff]
        %v2432 = vld [vmem:[#allocation7 + $0x8] sm:$0xff]
        %v2433 = vld [vmem:[#allocation7 + $0x10] sm:$0xff]
        %v2434 = vld [vmem:[#allocation7 + $0x18] sm:$0xff]
        %v2435 = vld [vmem:[#allocation7 + $0x20] sm:$0xff]
        %v2436 = vld [vmem:[#allocation7 + $0x28] sm:$0xff]
        %v2437 = vld [vmem:[#allocation7 + $0x30] sm:$0xff]
        %v2438 = vld [vmem:[#allocation7 + $0x38] sm:$0xff]
        %v2439 = vld [vmem:[#allocation7 + $0x40] sm:$0xff]
        %v2440 = vld [vmem:[#allocation7 + $0x48] sm:$0xff]
        %v2441 = vld [vmem:[#allocation7 + $0x50] sm:$0xff]
        %v2442 = vld [vmem:[#allocation7 + $0x58] sm:$0xff]
        %v2443 = vld [vmem:[#allocation7 + $0x60] sm:$0xff]
        %v2444 = vld [vmem:[#allocation7 + $0x68] sm:$0xff]
        %v2445 = vld [vmem:[#allocation7 + $0x70] sm:$0xff]
        %v2446 = vld [vmem:[#allocation7 + $0x78] sm:$0xff]
        %v2447 = vld [vmem:[#allocation7 + $0x80] sm:$0xff]
        %v2448 = vld [vmem:[#allocation7 + $0x88] sm:$0xff]
        %v2449 = vld [vmem:[#allocation7 + $0x90] sm:$0xff]
        %v2450 = vld [vmem:[#allocation7 + $0x98] sm:$0xff]
        %v2451 = vld [vmem:[#allocation7 + $0xa0] sm:$0xff]
        %v2452 = vld [vmem:[#allocation7 + $0xa8] sm:$0xff]
        %v2453 = vld [vmem:[#allocation7 + $0xb0] sm:$0xff]
        %v2454 = vld [vmem:[#allocation7 + $0xb8] sm:$0xff]
        %v2455 = vld [vmem:[#allocation7 + $0xc0] sm:$0xff]
        %v2456 = vld [vmem:[#allocation7 + $0xc8] sm:$0xff]
        %v2457 = vld [vmem:[#allocation7 + $0xd0] sm:$0xff]
        %v2458 = vld [vmem:[#allocation7 + $0xd8] sm:$0xff]
        %v2459 = vld [vmem:[#allocation7 + $0xe0] sm:$0xff]
        %v2460 = vld [vmem:[#allocation7 + $0xe8] sm:$0xff]
        %v2461 = vld [vmem:[#allocation7 + $0xf0] sm:$0xff]
        %v2462 = vld [vmem:[#allocation7 + $0xf8] sm:$0xff]
        %v2463 = vld [vmem:[#allocation7 + $0x100] sm:$0xff]
        %v2464 = vld [vmem:[#allocation7 + $0x108] sm:$0xff]
        %v2465 = vld [vmem:[#allocation7 + $0x110] sm:$0xff]
        %v2466 = vld [vmem:[#allocation7 + $0x118] sm:$0xff]
        %v2467 = vld [vmem:[#allocation7 + $0x120] sm:$0xff]
        %v2468 = vld [vmem:[#allocation7 + $0x128] sm:$0xff]
        %v2469 = vld [vmem:[#allocation7 + $0x130] sm:$0xff]
        %v2470 = vld [vmem:[#allocation7 + $0x138] sm:$0xff]
        %v2471 = vld [vmem:[#allocation7 + $0x140] sm:$0xff]
        %v2472 = vld [vmem:[#allocation7 + $0x148] sm:$0xff]
        %v2473 = vld [vmem:[#allocation7 + $0x150] sm:$0xff]
        %v2474 = vld [vmem:[#allocation7 + $0x158] sm:$0xff]
        %v2475 = vld [vmem:[#allocation7 + $0x160] sm:$0xff]
        %v2476 = vld [vmem:[#allocation7 + $0x168] sm:$0xff]
        %v2477 = vld [vmem:[#allocation7 + $0x170] sm:$0xff]
        %v2478 = vld [vmem:[#allocation7 + $0x178] sm:$0xff]
        %v2479 = vld [vmem:[#allocation7 + $0x180] sm:$0xff]
        %v2480 = vld [vmem:[#allocation7 + $0x188] sm:$0xff]
        %v2481 = vld [vmem:[#allocation7 + $0x190] sm:$0xff]
        %v2482 = vld [vmem:[#allocation7 + $0x198] sm:$0xff]
        %v2483 = vld [vmem:[#allocation7 + $0x1a0] sm:$0xff]
        %v2484 = vld [vmem:[#allocation7 + $0x1a8] sm:$0xff]
        %v2485 = vld [vmem:[#allocation7 + $0x1b0] sm:$0xff]
        %v2486 = vld [vmem:[#allocation7 + $0x1b8] sm:$0xff]
        %v2487 = vld [vmem:[#allocation7 + $0x1c0] sm:$0xff]
        %v2488 = vld [vmem:[#allocation7 + $0x1c8] sm:$0xff]
        %v2489 = vld [vmem:[#allocation7 + $0x1d0] sm:$0xff]
        %v2490 = vld [vmem:[#allocation7 + $0x1d8] sm:$0xff]
        %v2491 = vld [vmem:[#allocation7 + $0x1e0] sm:$0xff]
        %v2492 = vld [vmem:[#allocation7 + $0x1e8] sm:$0xff]
        %v2493 = vld [vmem:[#allocation7 + $0x1f0] sm:$0xff]
        %v2494 = vld [vmem:[#allocation7 + $0x1f8] sm:$0xff]
        %v2495 = vld [vmem:[#allocation7 + $0x200] sm:$0xff]
        %v2496 = vld [vmem:[#allocation7 + $0x208] sm:$0xff]
        %v2497 = vld [vmem:[#allocation7 + $0x210] sm:$0xff]
        %v2498 = vld [vmem:[#allocation7 + $0x218] sm:$0xff]
        %v2499 = vld [vmem:[#allocation7 + $0x220] sm:$0xff]
        %v2500 = vld [vmem:[#allocation7 + $0x228] sm:$0xff]
        %v2501 = vld [vmem:[#allocation7 + $0x230] sm:$0xff]
        %v2502 = vld [vmem:[#allocation7 + $0x238] sm:$0xff]
        %v2503 = vld [vmem:[#allocation7 + $0x240] sm:$0xff]
        %v2504 = vld [vmem:[#allocation7 + $0x248] sm:$0xff]
        %v2505 = vld [vmem:[#allocation7 + $0x250] sm:$0xff]
        %v2506 = vld [vmem:[#allocation7 + $0x258] sm:$0xff]
        %v2507 = vld [vmem:[#allocation7 + $0x260] sm:$0xff]
        %v2508 = vld [vmem:[#allocation7 + $0x268] sm:$0xff]
        %v2509 = vld [vmem:[#allocation7 + $0x270] sm:$0xff]
        %v2510 = vld [vmem:[#allocation7 + $0x278] sm:$0xff]
        %v2511 = vld [vmem:[#allocation7 + $0x280] sm:$0xff]
        %v2512 = vld [vmem:[#allocation7 + $0x288] sm:$0xff]
        %v2513 = vld [vmem:[#allocation7 + $0x290] sm:$0xff]
        %v2514 = vld [vmem:[#allocation7 + $0x298] sm:$0xff]
        %v2515 = vld [vmem:[#allocation7 + $0x2a0] sm:$0xff]
        %v2516 = vld [vmem:[#allocation7 + $0x2a8] sm:$0xff]
        %v2517 = vld [vmem:[#allocation7 + $0x2b0] sm:$0xff]
        %v2518 = vld [vmem:[#allocation7 + $0x2b8] sm:$0xff]
        %v2519 = vld [vmem:[#allocation7 + $0x2c0] sm:$0xff]
        %v2520 = vld [vmem:[#allocation7 + $0x2c8] sm:$0xff]
        %v2521 = vld [vmem:[#allocation7 + $0x2d0] sm:$0xff]
        %v2522 = vld [vmem:[#allocation7 + $0x2d8] sm:$0xff]
        %v2523 = vld [vmem:[#allocation7 + $0x2e0] sm:$0xff]
        %v2524 = vld [vmem:[#allocation7 + $0x2e8] sm:$0xff]
        %v2525 = vld [vmem:[#allocation7 + $0x2f0] sm:$0xff]
        %v2526 = vld [vmem:[#allocation7 + $0x2f8] sm:$0xff]
        %v2527 = vld [vmem:[#allocation7 + $0x300] sm:$0xff]
        %v2528 = vld [vmem:[#allocation7 + $0x308] sm:$0xff]
        %v2529 = vld [vmem:[#allocation7 + $0x310] sm:$0xff]
        %v2530 = vld [vmem:[#allocation7 + $0x318] sm:$0xff]
        %v2531 = vld [vmem:[#allocation7 + $0x320] sm:$0xff]
        %v2532 = vld [vmem:[#allocation7 + $0x328] sm:$0xff]
        %v2533 = vld [vmem:[#allocation7 + $0x330] sm:$0xff]
        %v2534 = vld [vmem:[#allocation7 + $0x338] sm:$0xff]
        %v2535 = vld [vmem:[#allocation7 + $0x340] sm:$0xff]
        %v2536 = vld [vmem:[#allocation7 + $0x348] sm:$0xff]
        %v2537 = vld [vmem:[#allocation7 + $0x350] sm:$0xff]
        %v2538 = vld [vmem:[#allocation7 + $0x358] sm:$0xff]
        %v2539 = vld [vmem:[#allocation7 + $0x360] sm:$0xff]
        %v2540 = vld [vmem:[#allocation7 + $0x368] sm:$0xff]
        %v2541 = vld [vmem:[#allocation7 + $0x370] sm:$0xff]
        %v2542 = vld [vmem:[#allocation7 + $0x378] sm:$0xff]
        %v2543 = vld [vmem:[#allocation7 + $0x380] sm:$0xff]
        %v2544 = vld [vmem:[#allocation7 + $0x388] sm:$0xff]
        %v2545 = vld [vmem:[#allocation7 + $0x390] sm:$0xff]
        %v2546 = vld [vmem:[#allocation7 + $0x398] sm:$0xff]
        %v2547 = vld [vmem:[#allocation7 + $0x3a0] sm:$0xff]
        %v2548 = vld [vmem:[#allocation7 + $0x3a8] sm:$0xff]
        %v2549 = vld [vmem:[#allocation7 + $0x3b0] sm:$0xff]
        %v2550 = vld [vmem:[#allocation7 + $0x3b8] sm:$0xff]
        %v2551 = vld [vmem:[#allocation7 + $0x3c0] sm:$0xff]
        %v2552 = vld [vmem:[#allocation7 + $0x3c8] sm:$0xff]
        %v2553 = vld [vmem:[#allocation7 + $0x3d0] sm:$0xff]
        %v2554 = vld [vmem:[#allocation7 + $0x3d8] sm:$0xff]
        %v2555 = vld [vmem:[#allocation7 + $0x3e0] sm:$0xff]
        %v2556 = vld [vmem:[#allocation7 + $0x3e8] sm:$0xff]
        %v2557 = vld [vmem:[#allocation7 + $0x3f0] sm:$0xff]
        %v2558 = vld [vmem:[#allocation7 + $0x3f8] sm:$0xff]
        %v2559 = vld [vmem:[#allocation7 + $0x400] sm:$0xff]
        %v2560 = vld [vmem:[#allocation7 + $0x408] sm:$0xff]
        %v2561 = vld [vmem:[#allocation7 + $0x410] sm:$0xff]
        %v2562 = vld [vmem:[#allocation7 + $0x418] sm:$0xff]
        %v2563 = vld [vmem:[#allocation7 + $0x420] sm:$0xff]
        %v2564 = vld [vmem:[#allocation7 + $0x428] sm:$0xff]
        %v2565 = vld [vmem:[#allocation7 + $0x430] sm:$0xff]
        %v2566 = vld [vmem:[#allocation7 + $0x438] sm:$0xff]
        %v2567 = vld [vmem:[#allocation7 + $0x440] sm:$0xff]
        %v2568 = vld [vmem:[#allocation7 + $0x448] sm:$0xff]
        %v2569 = vld [vmem:[#allocation7 + $0x450] sm:$0xff]
        %v2570 = vld [vmem:[#allocation7 + $0x458] sm:$0xff]
        %v2571 = vld [vmem:[#allocation7 + $0x460] sm:$0xff]
        %v2572 = vld [vmem:[#allocation7 + $0x468] sm:$0xff]
        %v2573 = vld [vmem:[#allocation7 + $0x470] sm:$0xff]
        %v2574 = vld [vmem:[#allocation7 + $0x478] sm:$0xff]
        %v2575 = vld [vmem:[#allocation7 + $0x480] sm:$0xff]
        %v2576 = vld [vmem:[#allocation7 + $0x488] sm:$0xff]
        %v2577 = vld [vmem:[#allocation7 + $0x490] sm:$0xff]
        %v2578 = vld [vmem:[#allocation7 + $0x498] sm:$0xff]
        %v2579 = vld [vmem:[#allocation7 + $0x4a0] sm:$0xff]
        %v2580 = vld [vmem:[#allocation7 + $0x4a8] sm:$0xff]
        %v2581 = vld [vmem:[#allocation7 + $0x4b0] sm:$0xff]
        %v2582 = vld [vmem:[#allocation7 + $0x4b8] sm:$0xff]
        %v2583 = vld [vmem:[#allocation7 + $0x4c0] sm:$0xff]
        %v2584 = vld [vmem:[#allocation7 + $0x4c8] sm:$0xff]
        %v2585 = vld [vmem:[#allocation7 + $0x4d0] sm:$0xff]
        %v2586 = vld [vmem:[#allocation7 + $0x4d8] sm:$0xff]
        %v2587 = vld [vmem:[#allocation7 + $0x4e0] sm:$0xff]
        %v2588 = vld [vmem:[#allocation7 + $0x4e8] sm:$0xff]
        %v2589 = vld [vmem:[#allocation7 + $0x4f0] sm:$0xff]
        %v2590 = vld [vmem:[#allocation7 + $0x4f8] sm:$0xff]
        %v2591 = vld [vmem:[#allocation7 + $0x500] sm:$0xff]
        %v2592 = vld [vmem:[#allocation7 + $0x508] sm:$0xff]
        %v2593 = vld [vmem:[#allocation7 + $0x510] sm:$0xff]
        %v2594 = vld [vmem:[#allocation7 + $0x518] sm:$0xff]
        %v2595 = vld [vmem:[#allocation7 + $0x520] sm:$0xff]
        %v2596 = vld [vmem:[#allocation7 + $0x528] sm:$0xff]
        %v2597 = vld [vmem:[#allocation7 + $0x530] sm:$0xff]
        %v2598 = vld [vmem:[#allocation7 + $0x538] sm:$0xff]
        %v2599 = vld [vmem:[#allocation7 + $0x540] sm:$0xff]
        %v2600 = vld [vmem:[#allocation7 + $0x548] sm:$0xff]
        %v2601 = vld [vmem:[#allocation7 + $0x550] sm:$0xff]
        %v2602 = vld [vmem:[#allocation7 + $0x558] sm:$0xff]
        %v2603 = vld [vmem:[#allocation7 + $0x560] sm:$0xff]
        %v2604 = vld [vmem:[#allocation7 + $0x568] sm:$0xff]
        %v2605 = vld [vmem:[#allocation7 + $0x570] sm:$0xff]
        %v2606 = vld [vmem:[#allocation7 + $0x578] sm:$0xff]
        %v2607 = vld [vmem:[#allocation7 + $0x580] sm:$0xff]
        %v2608 = vld [vmem:[#allocation7 + $0x588] sm:$0xff]
        %v2609 = vld [vmem:[#allocation7 + $0x590] sm:$0xff]
        %v2610 = vld [vmem:[#allocation7 + $0x598] sm:$0xff]
        %v2611 = vld [vmem:[#allocation7 + $0x5a0] sm:$0xff]
        %v2612 = vld [vmem:[#allocation7 + $0x5a8] sm:$0xff]
        %v2613 = vld [vmem:[#allocation7 + $0x5b0] sm:$0xff]
        %v2614 = vld [vmem:[#allocation7 + $0x5b8] sm:$0xff]
        %v2615 = vld [vmem:[#allocation7 + $0x5c0] sm:$0xff]
        %v2616 = vld [vmem:[#allocation7 + $0x5c8] sm:$0xff]
        %v2617 = vld [vmem:[#allocation7 + $0x5d0] sm:$0xff]
        %v2618 = vld [vmem:[#allocation7 + $0x5d8] sm:$0xff]
        %v2619 = vld [vmem:[#allocation7 + $0x5e0] sm:$0xff]
        %v2620 = vld [vmem:[#allocation7 + $0x5e8] sm:$0xff]
        %v2621 = vld [vmem:[#allocation7 + $0x5f0] sm:$0xff]
        %v2622 = vld [vmem:[#allocation7 + $0x5f8] sm:$0xff]
        %v2623 = vld [vmem:[#allocation7 + $0x600] sm:$0xff]
        %v2624 = vld [vmem:[#allocation7 + $0x608] sm:$0xff]
        %v2625 = vld [vmem:[#allocation7 + $0x610] sm:$0xff]
        %v2626 = vld [vmem:[#allocation7 + $0x618] sm:$0xff]
        %v2627 = vld [vmem:[#allocation7 + $0x620] sm:$0xff]
        %v2628 = vld [vmem:[#allocation7 + $0x628] sm:$0xff]
        %v2629 = vld [vmem:[#allocation7 + $0x630] sm:$0xff]
        %v2630 = vld [vmem:[#allocation7 + $0x638] sm:$0xff]
        %v2631 = vld [vmem:[#allocation7 + $0x640] sm:$0xff]
        %v2632 = vld [vmem:[#allocation7 + $0x648] sm:$0xff]
        %v2633 = vld [vmem:[#allocation7 + $0x650] sm:$0xff]
        %v2634 = vld [vmem:[#allocation7 + $0x658] sm:$0xff]
        %v2635 = vld [vmem:[#allocation7 + $0x660] sm:$0xff]
        %v2636 = vld [vmem:[#allocation7 + $0x668] sm:$0xff]
        %v2637 = vld [vmem:[#allocation7 + $0x670] sm:$0xff]
        %v2638 = vld [vmem:[#allocation7 + $0x678] sm:$0xff]
        %v2639 = vld [vmem:[#allocation7 + $0x680] sm:$0xff]
        %v2640 = vld [vmem:[#allocation7 + $0x688] sm:$0xff]
        %v2641 = vld [vmem:[#allocation7 + $0x690] sm:$0xff]
        %v2642 = vld [vmem:[#allocation7 + $0x698] sm:$0xff]
        %v2643 = vld [vmem:[#allocation7 + $0x6a0] sm:$0xff]
        %v2644 = vld [vmem:[#allocation7 + $0x6a8] sm:$0xff]
        %v2645 = vld [vmem:[#allocation7 + $0x6b0] sm:$0xff]
        %v2646 = vld [vmem:[#allocation7 + $0x6b8] sm:$0xff]
        %v2647 = vld [vmem:[#allocation7 + $0x6c0] sm:$0xff]
        %v2648 = vld [vmem:[#allocation7 + $0x6c8] sm:$0xff]
        %v2649 = vld [vmem:[#allocation7 + $0x6d0] sm:$0xff]
        %v2650 = vld [vmem:[#allocation7 + $0x6d8] sm:$0xff]
        %v2651 = vld [vmem:[#allocation7 + $0x6e0] sm:$0xff]
        %v2652 = vld [vmem:[#allocation7 + $0x6e8] sm:$0xff]
        %v2653 = vld [vmem:[#allocation7 + $0x6f0] sm:$0xff]
        %v2654 = vld [vmem:[#allocation7 + $0x6f8] sm:$0xff]
        %v2655 = vld [vmem:[#allocation7 + $0x700] sm:$0xff]
        %v2656 = vld [vmem:[#allocation7 + $0x708] sm:$0xff]
        %v2657 = vld [vmem:[#allocation7 + $0x710] sm:$0xff]
        %v2658 = vld [vmem:[#allocation7 + $0x718] sm:$0xff]
        %v2659 = vld [vmem:[#allocation7 + $0x720] sm:$0xff]
        %v2660 = vld [vmem:[#allocation7 + $0x728] sm:$0xff]
        %v2661 = vld [vmem:[#allocation7 + $0x730] sm:$0xff]
        %v2662 = vld [vmem:[#allocation7 + $0x738] sm:$0xff]
        %v2663 = vld [vmem:[#allocation7 + $0x740] sm:$0xff]
        %v2664 = vld [vmem:[#allocation7 + $0x748] sm:$0xff]
        %v2665 = vld [vmem:[#allocation7 + $0x750] sm:$0xff]
        %v2666 = vld [vmem:[#allocation7 + $0x758] sm:$0xff]
        %v2667 = vld [vmem:[#allocation7 + $0x760] sm:$0xff]
        %v2668 = vld [vmem:[#allocation7 + $0x768] sm:$0xff]
        %v2669 = vld [vmem:[#allocation7 + $0x770] sm:$0xff]
        %v2670 = vld [vmem:[#allocation7 + $0x778] sm:$0xff]
        %v2671 = vld [vmem:[#allocation7 + $0x780] sm:$0xff]
        %v2672 = vld [vmem:[#allocation7 + $0x788] sm:$0xff]
        %v2673 = vld [vmem:[#allocation7 + $0x790] sm:$0xff]
        %v2674 = vld [vmem:[#allocation7 + $0x798] sm:$0xff]
        %v2675 = vld [vmem:[#allocation7 + $0x7a0] sm:$0xff]
        %v2676 = vld [vmem:[#allocation7 + $0x7a8] sm:$0xff]
        %v2677 = vld [vmem:[#allocation7 + $0x7b0] sm:$0xff]
        %v2678 = vld [vmem:[#allocation7 + $0x7b8] sm:$0xff]
        %v2679 = vld [vmem:[#allocation7 + $0x7c0] sm:$0xff]
        %v2680 = vld [vmem:[#allocation7 + $0x7c8] sm:$0xff]
        %v2681 = vld [vmem:[#allocation7 + $0x7d0] sm:$0xff]
        %v2682 = vld [vmem:[#allocation7 + $0x7d8] sm:$0xff]
        %v2683 = vld [vmem:[#allocation7 + $0x7e0] sm:$0xff]
        %v2684 = vld [vmem:[#allocation7 + $0x7e8] sm:$0xff]
        %v2685 = vld [vmem:[#allocation7 + $0x7f0] sm:$0xff]
        %v2686 = vld [vmem:[#allocation7 + $0x7f8] sm:$0xff]
        %v2687 = vld [vmem:[#allocation7 + $0x800] sm:$0xff]
        %v2688 = vld [vmem:[#allocation7 + $0x808] sm:$0xff]
        %v2689 = vld [vmem:[#allocation7 + $0x810] sm:$0xff]
        %v2690 = vld [vmem:[#allocation7 + $0x818] sm:$0xff]
        %v2691 = vld [vmem:[#allocation7 + $0x820] sm:$0xff]
        %v2692 = vld [vmem:[#allocation7 + $0x828] sm:$0xff]
        %v2693 = vld [vmem:[#allocation7 + $0x830] sm:$0xff]
        %v2694 = vld [vmem:[#allocation7 + $0x838] sm:$0xff]
        %v2695 = vld [vmem:[#allocation7 + $0x840] sm:$0xff]
        %v2696 = vld [vmem:[#allocation7 + $0x848] sm:$0xff]
        %v2697 = vld [vmem:[#allocation7 + $0x850] sm:$0xff]
        %v2698 = vld [vmem:[#allocation7 + $0x858] sm:$0xff]
        %v2699 = vld [vmem:[#allocation7 + $0x860] sm:$0xff]
        %v2700 = vld [vmem:[#allocation7 + $0x868] sm:$0xff]
        %v2701 = vld [vmem:[#allocation7 + $0x870] sm:$0xff]
        %v2702 = vld [vmem:[#allocation7 + $0x878] sm:$0xff]
        %v2703 = vld [vmem:[#allocation7 + $0x880] sm:$0xff]
        %v2704 = vld [vmem:[#allocation7 + $0x888] sm:$0xff]
        %v2705 = vld [vmem:[#allocation7 + $0x890] sm:$0xff]
        %v2706 = vld [vmem:[#allocation7 + $0x898] sm:$0xff]
        %v2707 = vld [vmem:[#allocation7 + $0x8a0] sm:$0xff]
        %v2708 = vld [vmem:[#allocation7 + $0x8a8] sm:$0xff]
        %v2709 = vld [vmem:[#allocation7 + $0x8b0] sm:$0xff]
        %v2710 = vld [vmem:[#allocation7 + $0x8b8] sm:$0xff]
        %v2711 = vld [vmem:[#allocation7 + $0x8c0] sm:$0xff]
        %v2712 = vld [vmem:[#allocation7 + $0x8c8] sm:$0xff]
        %v2713 = vld [vmem:[#allocation7 + $0x8d0] sm:$0xff]
        %v2714 = vld [vmem:[#allocation7 + $0x8d8] sm:$0xff]
        %v2715 = vld [vmem:[#allocation7 + $0x8e0] sm:$0xff]
        %v2716 = vld [vmem:[#allocation7 + $0x8e8] sm:$0xff]
        %v2717 = vld [vmem:[#allocation7 + $0x8f0] sm:$0xff]
        %v2718 = vld [vmem:[#allocation7 + $0x8f8] sm:$0xff]
        %v2719 = vld [vmem:[#allocation7 + $0x900] sm:$0xff]
        %v2720 = vld [vmem:[#allocation7 + $0x908] sm:$0xff]
        %v2721 = vld [vmem:[#allocation7 + $0x910] sm:$0xff]
        %v2722 = vld [vmem:[#allocation7 + $0x918] sm:$0xff]
        %v2723 = vld [vmem:[#allocation7 + $0x920] sm:$0xff]
        %v2724 = vld [vmem:[#allocation7 + $0x928] sm:$0xff]
        %v2725 = vld [vmem:[#allocation7 + $0x930] sm:$0xff]
        %v2726 = vld [vmem:[#allocation7 + $0x938] sm:$0xff]
        %v2727 = vld [vmem:[#allocation7 + $0x940] sm:$0xff]
        %v2728 = vld [vmem:[#allocation7 + $0x948] sm:$0xff]
        %v2729 = vld [vmem:[#allocation7 + $0x950] sm:$0xff]
        %v2730 = vld [vmem:[#allocation7 + $0x958] sm:$0xff]
        %v2731 = vld [vmem:[#allocation7 + $0x960] sm:$0xff]
        %v2732 = vld [vmem:[#allocation7 + $0x968] sm:$0xff]
        %v2733 = vld [vmem:[#allocation7 + $0x970] sm:$0xff]
        %v2734 = vld [vmem:[#allocation7 + $0x978] sm:$0xff]
        %v2735 = vld [vmem:[#allocation7 + $0x980] sm:$0xff]
        %v2736 = vld [vmem:[#allocation7 + $0x988] sm:$0xff]
        %v2737 = vld [vmem:[#allocation7 + $0x990] sm:$0xff]
        %v2738 = vld [vmem:[#allocation7 + $0x998] sm:$0xff]
        %v2739 = vld [vmem:[#allocation7 + $0x9a0] sm:$0xff]
        %v2740 = vld [vmem:[#allocation7 + $0x9a8] sm:$0xff]
        %v2741 = vld [vmem:[#allocation7 + $0x9b0] sm:$0xff]
        %v2742 = vld [vmem:[#allocation7 + $0x9b8] sm:$0xff]
        %v2743 = vld [vmem:[#allocation7 + $0x9c0] sm:$0xff]
        %v2744 = vld [vmem:[#allocation7 + $0x9c8] sm:$0xff]
        %v2745 = vld [vmem:[#allocation7 + $0x9d0] sm:$0xff]
        %v2746 = vld [vmem:[#allocation7 + $0x9d8] sm:$0xff]
        %v2747 = vld [vmem:[#allocation7 + $0x9e0] sm:$0xff]
        %v2748 = vld [vmem:[#allocation7 + $0x9e8] sm:$0xff]
        %v2749 = vld [vmem:[#allocation7 + $0x9f0] sm:$0xff]
        %v2750 = vld [vmem:[#allocation7 + $0x9f8] sm:$0xff]
        %v2751 = vld [vmem:[#allocation7 + $0xa00] sm:$0xff]
        %v2752 = vld [vmem:[#allocation7 + $0xa08] sm:$0xff]
        %v2753 = vld [vmem:[#allocation7 + $0xa10] sm:$0xff]
        %v2754 = vld [vmem:[#allocation7 + $0xa18] sm:$0xff]
        %v2755 = vld [vmem:[#allocation7 + $0xa20] sm:$0xff]
        %v2756 = vld [vmem:[#allocation7 + $0xa28] sm:$0xff]
        %v2757 = vld [vmem:[#allocation7 + $0xa30] sm:$0xff]
        %v2758 = vld [vmem:[#allocation7 + $0xa38] sm:$0xff]
        %v2759 = vld [vmem:[#allocation7 + $0xa40] sm:$0xff]
        %v2760 = vld [vmem:[#allocation7 + $0xa48] sm:$0xff]
        %v2761 = vld [vmem:[#allocation7 + $0xa50] sm:$0xff]
        %v2762 = vld [vmem:[#allocation7 + $0xa58] sm:$0xff]
        %v2763 = vld [vmem:[#allocation7 + $0xa60] sm:$0xff]
        %v2764 = vld [vmem:[#allocation7 + $0xa68] sm:$0xff]
        %v2765 = vld [vmem:[#allocation7 + $0xa70] sm:$0xff]
        %v2766 = vld [vmem:[#allocation7 + $0xa78] sm:$0xff]
        %v2767 = vld [vmem:[#allocation7 + $0xa80] sm:$0xff]
        %v2768 = vld [vmem:[#allocation7 + $0xa88] sm:$0xff]
        %v2769 = vld [vmem:[#allocation7 + $0xa90] sm:$0xff]
        %v2770 = vld [vmem:[#allocation7 + $0xa98] sm:$0xff]
        %v2771 = vld [vmem:[#allocation7 + $0xaa0] sm:$0xff]
        %v2772 = vld [vmem:[#allocation7 + $0xaa8] sm:$0xff]
        %v2773 = vld [vmem:[#allocation7 + $0xab0] sm:$0xff]
        %v2774 = vld [vmem:[#allocation7 + $0xab8] sm:$0xff]
        %v2775 = vld [vmem:[#allocation7 + $0xac0] sm:$0xff]
        %v2776 = vld [vmem:[#allocation7 + $0xac8] sm:$0xff]
        %v2777 = vld [vmem:[#allocation7 + $0xad0] sm:$0xff]
        %v2778 = vld [vmem:[#allocation7 + $0xad8] sm:$0xff]
        %v2779 = vld [vmem:[#allocation7 + $0xae0] sm:$0xff]
        %v2780 = vld [vmem:[#allocation7 + $0xae8] sm:$0xff]
        %v2781 = vld [vmem:[#allocation7 + $0xaf0] sm:$0xff]
        %v2782 = vld [vmem:[#allocation7 + $0xaf8] sm:$0xff]
        %v2783 = vld [vmem:[#allocation7 + $0xb00] sm:$0xff]
        %v2784 = vld [vmem:[#allocation7 + $0xb08] sm:$0xff]
        %v2785 = vld [vmem:[#allocation7 + $0xb10] sm:$0xff]
        %v2786 = vld [vmem:[#allocation7 + $0xb18] sm:$0xff]
        %v2787 = vld [vmem:[#allocation7 + $0xb20] sm:$0xff]
        %v2788 = vld [vmem:[#allocation7 + $0xb28] sm:$0xff]
        %v2789 = vld [vmem:[#allocation7 + $0xb30] sm:$0xff]
        %v2790 = vld [vmem:[#allocation7 + $0xb38] sm:$0xff]
        %v2791 = vld [vmem:[#allocation7 + $0xb40] sm:$0xff]
        %v2792 = vld [vmem:[#allocation7 + $0xb48] sm:$0xff]
        %v2793 = vld [vmem:[#allocation7 + $0xb50] sm:$0xff]
        %v2794 = vld [vmem:[#allocation7 + $0xb58] sm:$0xff]
        %v2795 = vld [vmem:[#allocation7 + $0xb60] sm:$0xff]
        %v2796 = vld [vmem:[#allocation7 + $0xb68] sm:$0xff]
        %v2797 = vld [vmem:[#allocation7 + $0xb70] sm:$0xff]
        %v2798 = vld [vmem:[#allocation7 + $0xb78] sm:$0xff]
        %v2799 = vld [vmem:[#allocation7 + $0xb80] sm:$0xff]
        %v2800 = vld [vmem:[#allocation7 + $0xb88] sm:$0xff]
        %v2801 = vld [vmem:[#allocation7 + $0xb90] sm:$0xff]
        %v2802 = vld [vmem:[#allocation7 + $0xb98] sm:$0xff]
        %v2803 = vld [vmem:[#allocation7 + $0xba0] sm:$0xff]
        %v2804 = vld [vmem:[#allocation7 + $0xba8] sm:$0xff]
        %v2805 = vld [vmem:[#allocation7 + $0xbb0] sm:$0xff]
        %v2806 = vld [vmem:[#allocation7 + $0xbb8] sm:$0xff]
        %v2807 = vld [vmem:[#allocation7 + $0xbc0] sm:$0xff]
        %v2808 = vld [vmem:[#allocation7 + $0xbc8] sm:$0xff]
        %v2809 = vld [vmem:[#allocation7 + $0xbd0] sm:$0xff]
        %v2810 = vld [vmem:[#allocation7 + $0xbd8] sm:$0xff]
        %v2811 = vld [vmem:[#allocation7 + $0xbe0] sm:$0xff]
        %v2812 = vld [vmem:[#allocation7 + $0xbe8] sm:$0xff]
        %v2813 = vld [vmem:[#allocation7 + $0xbf0] sm:$0xff]
        %v2814 = vld [vmem:[#allocation7 + $0xbf8] sm:$0xff]
        %v2815 = vld [vmem:[#allocation7 + $0xc00] sm:$0xff]
        %v2816 = vld [vmem:[#allocation7 + $0xc08] sm:$0xff]
        %v2817 = vld [vmem:[#allocation7 + $0xc10] sm:$0xff]
        %v2818 = vld [vmem:[#allocation7 + $0xc18] sm:$0xff]
        %v2819 = vld [vmem:[#allocation7 + $0xc20] sm:$0xff]
        %v2820 = vld [vmem:[#allocation7 + $0xc28] sm:$0xff]
        %v2821 = vld [vmem:[#allocation7 + $0xc30] sm:$0xff]
        %v2822 = vld [vmem:[#allocation7 + $0xc38] sm:$0xff]
        %v2823 = vld [vmem:[#allocation7 + $0xc40] sm:$0xff]
        %v2824 = vld [vmem:[#allocation7 + $0xc48] sm:$0xff]
        %v2825 = vld [vmem:[#allocation7 + $0xc50] sm:$0xff]
        %v2826 = vld [vmem:[#allocation7 + $0xc58] sm:$0xff]
        %v2827 = vld [vmem:[#allocation7 + $0xc60] sm:$0xff]
        %v2828 = vld [vmem:[#allocation7 + $0xc68] sm:$0xff]
        %v2829 = vld [vmem:[#allocation7 + $0xc70] sm:$0xff]
        %v2830 = vld [vmem:[#allocation7 + $0xc78] sm:$0xff]
        %v2831 = vld [vmem:[#allocation7 + $0xc80] sm:$0xff]
        %v2832 = vld [vmem:[#allocation7 + $0xc88] sm:$0xff]
        %v2833 = vld [vmem:[#allocation7 + $0xc90] sm:$0xff]
        %v2834 = vld [vmem:[#allocation7 + $0xc98] sm:$0xff]
        %v2835 = vld [vmem:[#allocation7 + $0xca0] sm:$0xff]
        %v2836 = vld [vmem:[#allocation7 + $0xca8] sm:$0xff]
        %v2837 = vld [vmem:[#allocation7 + $0xcb0] sm:$0xff]
        %v2838 = vld [vmem:[#allocation7 + $0xcb8] sm:$0xff]
        %v2839 = vld [vmem:[#allocation7 + $0xcc0] sm:$0xff]
        %v2840 = vld [vmem:[#allocation7 + $0xcc8] sm:$0xff]
        %v2841 = vld [vmem:[#allocation7 + $0xcd0] sm:$0xff]
        %v2842 = vld [vmem:[#allocation7 + $0xcd8] sm:$0xff]
        %v2843 = vld [vmem:[#allocation7 + $0xce0] sm:$0xff]
        %v2844 = vld [vmem:[#allocation7 + $0xce8] sm:$0xff]
        %v2845 = vld [vmem:[#allocation7 + $0xcf0] sm:$0xff]
        %v2846 = vld [vmem:[#allocation7 + $0xcf8] sm:$0xff]
        %v2847 = vld [vmem:[#allocation7 + $0xd00] sm:$0xff]
        %v2848 = vld [vmem:[#allocation7 + $0xd08] sm:$0xff]
        %v2849 = vld [vmem:[#allocation7 + $0xd10] sm:$0xff]
        %v2850 = vld [vmem:[#allocation7 + $0xd18] sm:$0xff]
        %v2851 = vld [vmem:[#allocation7 + $0xd20] sm:$0xff]
        %v2852 = vld [vmem:[#allocation7 + $0xd28] sm:$0xff]
        %v2853 = vld [vmem:[#allocation7 + $0xd30] sm:$0xff]
        %v2854 = vld [vmem:[#allocation7 + $0xd38] sm:$0xff]
        %v2855 = vld [vmem:[#allocation7 + $0xd40] sm:$0xff]
        %v2856 = vld [vmem:[#allocation7 + $0xd48] sm:$0xff]
        %v2857 = vld [vmem:[#allocation7 + $0xd50] sm:$0xff]
        %v2858 = vld [vmem:[#allocation7 + $0xd58] sm:$0xff]
        %v2859 = vld [vmem:[#allocation7 + $0xd60] sm:$0xff]
        %v2860 = vld [vmem:[#allocation7 + $0xd68] sm:$0xff]
        %v2861 = vld [vmem:[#allocation7 + $0xd70] sm:$0xff]
        %v2862 = vld [vmem:[#allocation7 + $0xd78] sm:$0xff]
        %v2863 = vld [vmem:[#allocation7 + $0xd80] sm:$0xff]
        %v2864 = vld [vmem:[#allocation7 + $0xd88] sm:$0xff]
        %v2865 = vld [vmem:[#allocation7 + $0xd90] sm:$0xff]
        %v2866 = vld [vmem:[#allocation7 + $0xd98] sm:$0xff]
        %v2867 = vld [vmem:[#allocation7 + $0xda0] sm:$0xff]
        %v2868 = vld [vmem:[#allocation7 + $0xda8] sm:$0xff]
        %v2869 = vld [vmem:[#allocation7 + $0xdb0] sm:$0xff]
        %v2870 = vld [vmem:[#allocation7 + $0xdb8] sm:$0xff]
        %v2871 = vld [vmem:[#allocation7 + $0xdc0] sm:$0xff]
        %v2872 = vld [vmem:[#allocation7 + $0xdc8] sm:$0xff]
        %v2873 = vld [vmem:[#allocation7 + $0xdd0] sm:$0xff]
        %v2874 = vld [vmem:[#allocation7 + $0xdd8] sm:$0xff]
        %v2875 = vld [vmem:[#allocation7 + $0xde0] sm:$0xff]
        %v2876 = vld [vmem:[#allocation7 + $0xde8] sm:$0xff]
        %v2877 = vld [vmem:[#allocation7 + $0xdf0] sm:$0xff]
        %v2878 = vld [vmem:[#allocation7 + $0xdf8] sm:$0xff]
        %v2879 = vld [vmem:[#allocation7 + $0xe00] sm:$0xff]
        %v2880 = vld [vmem:[#allocation7 + $0xe08] sm:$0xff]
        %v2881 = vld [vmem:[#allocation7 + $0xe10] sm:$0xff]
        %v2882 = vld [vmem:[#allocation7 + $0xe18] sm:$0xff]
        %v2883 = vld [vmem:[#allocation7 + $0xe20] sm:$0xff]
        %v2884 = vld [vmem:[#allocation7 + $0xe28] sm:$0xff]
        %v2885 = vld [vmem:[#allocation7 + $0xe30] sm:$0xff]
        %v2886 = vld [vmem:[#allocation7 + $0xe38] sm:$0xff]
        %v2887 = vld [vmem:[#allocation7 + $0xe40] sm:$0xff]
        %v2888 = vld [vmem:[#allocation7 + $0xe48] sm:$0xff]
        %v2889 = vld [vmem:[#allocation7 + $0xe50] sm:$0xff]
        %v2890 = vld [vmem:[#allocation7 + $0xe58] sm:$0xff]
        %v2891 = vld [vmem:[#allocation7 + $0xe60] sm:$0xff]
        %v2892 = vld [vmem:[#allocation7 + $0xe68] sm:$0xff]
        %v2893 = vld [vmem:[#allocation7 + $0xe70] sm:$0xff]
        %v2894 = vld [vmem:[#allocation7 + $0xe78] sm:$0xff]
        %v2895 = vld [vmem:[#allocation7 + $0xe80] sm:$0xff]
        %v2896 = vld [vmem:[#allocation7 + $0xe88] sm:$0xff]
        %v2897 = vld [vmem:[#allocation7 + $0xe90] sm:$0xff]
        %v2898 = vld [vmem:[#allocation7 + $0xe98] sm:$0xff]
        %v2899 = vld [vmem:[#allocation7 + $0xea0] sm:$0xff]
        %v2900 = vld [vmem:[#allocation7 + $0xea8] sm:$0xff]
        %v2901 = vld [vmem:[#allocation7 + $0xeb0] sm:$0xff]
        %v2902 = vld [vmem:[#allocation7 + $0xeb8] sm:$0xff]
        %v2903 = vld [vmem:[#allocation7 + $0xec0] sm:$0xff]
        %v2904 = vld [vmem:[#allocation7 + $0xec8] sm:$0xff]
        %v2905 = vld [vmem:[#allocation7 + $0xed0] sm:$0xff]
        %v2906 = vld [vmem:[#allocation7 + $0xed8] sm:$0xff]
        %v2907 = vld [vmem:[#allocation7 + $0xee0] sm:$0xff]
        %v2908 = vld [vmem:[#allocation7 + $0xee8] sm:$0xff]
        %v2909 = vld [vmem:[#allocation7 + $0xef0] sm:$0xff]
        %v2910 = vld [vmem:[#allocation7 + $0xef8] sm:$0xff]
        %v2911 = vld [vmem:[#allocation7 + $0xf00] sm:$0xff]
        %v2912 = vld [vmem:[#allocation7 + $0xf08] sm:$0xff]
        %v2913 = vld [vmem:[#allocation7 + $0xf10] sm:$0xff]
        %v2914 = vld [vmem:[#allocation7 + $0xf18] sm:$0xff]
        %v2915 = vld [vmem:[#allocation7 + $0xf20] sm:$0xff]
        %v2916 = vld [vmem:[#allocation7 + $0xf28] sm:$0xff]
        %v2917 = vld [vmem:[#allocation7 + $0xf30] sm:$0xff]
        %v2918 = vld [vmem:[#allocation7 + $0xf38] sm:$0xff]
        %v2919 = vld [vmem:[#allocation7 + $0xf40] sm:$0xff]
        %v2920 = vld [vmem:[#allocation7 + $0xf48] sm:$0xff]
        %v2921 = vld [vmem:[#allocation7 + $0xf50] sm:$0xff]
        %v2922 = vld [vmem:[#allocation7 + $0xf58] sm:$0xff]
        %v2923 = vld [vmem:[#allocation7 + $0xf60] sm:$0xff]
        %v2924 = vld [vmem:[#allocation7 + $0xf68] sm:$0xff]
        %v2925 = vld [vmem:[#allocation7 + $0xf70] sm:$0xff]
        %v2926 = vld [vmem:[#allocation7 + $0xf78] sm:$0xff]
        %v2927 = vld [vmem:[#allocation7 + $0xf80] sm:$0xff]
        %v2928 = vld [vmem:[#allocation7 + $0xf88] sm:$0xff]
        %v2929 = vld [vmem:[#allocation7 + $0xf90] sm:$0xff]
        %v2930 = vld [vmem:[#allocation7 + $0xf98] sm:$0xff]
        %v2931 = vld [vmem:[#allocation7 + $0xfa0] sm:$0xff]
        %v2932 = vld [vmem:[#allocation7 + $0xfa8] sm:$0xff]
        %v2933 = vld [vmem:[#allocation7 + $0xfb0] sm:$0xff]
        %v2934 = vld [vmem:[#allocation7 + $0xfb8] sm:$0xff]
        %v2935 = vld [vmem:[#allocation7 + $0xfc0] sm:$0xff]
        %v2936 = vld [vmem:[#allocation7 + $0xfc8] sm:$0xff]
        %v2937 = vld [vmem:[#allocation7 + $0xfd0] sm:$0xff]
        %v2938 = vld [vmem:[#allocation7 + $0xfd8] sm:$0xff]
        %v2939 = vld [vmem:[#allocation7 + $0xfe0] sm:$0xff]
        %v2940 = vld [vmem:[#allocation7 + $0xfe8] sm:$0xff]
        %v2941 = vld [vmem:[#allocation7 + $0xff0] sm:$0xff]
        %v2942 = vld [vmem:[#allocation7 + $0xff8] sm:$0xff]
        %v2943 = vld [vmem:[#allocation7 + $0x1000] sm:$0xff]
        %v2944 = vld [vmem:[#allocation7 + $0x1008] sm:$0xff]
        %v2945 = vld [vmem:[#allocation7 + $0x1010] sm:$0xff]
        %v2946 = vld [vmem:[#allocation7 + $0x1018] sm:$0xff]
        %v2947 = vld [vmem:[#allocation7 + $0x1020] sm:$0xff]
        %v2948 = vld [vmem:[#allocation7 + $0x1028] sm:$0xff]
        %v2949 = vld [vmem:[#allocation7 + $0x1030] sm:$0xff]
        %v2950 = vld [vmem:[#allocation7 + $0x1038] sm:$0xff]
        %v2951 = vld [vmem:[#allocation7 + $0x1040] sm:$0xff]
        %v2952 = vld [vmem:[#allocation7 + $0x1048] sm:$0xff]
        %v2953 = vld [vmem:[#allocation7 + $0x1050] sm:$0xff]
        %v2954 = vld [vmem:[#allocation7 + $0x1058] sm:$0xff]
        %v2955 = vld [vmem:[#allocation7 + $0x1060] sm:$0xff]
        %v2956 = vld [vmem:[#allocation7 + $0x1068] sm:$0xff]
        %v2957 = vld [vmem:[#allocation7 + $0x1070] sm:$0xff]
        %v2958 = vld [vmem:[#allocation7 + $0x1078] sm:$0xff]
        %v2959 = vld [vmem:[#allocation7 + $0x1080] sm:$0xff]
        %v2960 = vld [vmem:[#allocation7 + $0x1088] sm:$0xff]
        %v2961 = vld [vmem:[#allocation7 + $0x1090] sm:$0xff]
        %v2962 = vld [vmem:[#allocation7 + $0x1098] sm:$0xff]
        %v2963 = vld [vmem:[#allocation7 + $0x10a0] sm:$0xff]
        %v2964 = vld [vmem:[#allocation7 + $0x10a8] sm:$0xff]
        %v2965 = vld [vmem:[#allocation7 + $0x10b0] sm:$0xff]
        %v2966 = vld [vmem:[#allocation7 + $0x10b8] sm:$0xff]
        %v2967 = vld [vmem:[#allocation7 + $0x10c0] sm:$0xff]
        %v2968 = vld [vmem:[#allocation7 + $0x10c8] sm:$0xff]
        %v2969 = vld [vmem:[#allocation7 + $0x10d0] sm:$0xff]
        %v2970 = vld [vmem:[#allocation7 + $0x10d8] sm:$0xff]
        %v2971 = vld [vmem:[#allocation7 + $0x10e0] sm:$0xff]
        %v2972 = vld [vmem:[#allocation7 + $0x10e8] sm:$0xff]
        %v2973 = vld [vmem:[#allocation7 + $0x10f0] sm:$0xff]
        %v2974 = vld [vmem:[#allocation7 + $0x10f8] sm:$0xff]
        %v2975 = vld [vmem:[#allocation7 + $0x1100] sm:$0xff]
        %v2976 = vld [vmem:[#allocation7 + $0x1108] sm:$0xff]
        %v2977 = vld [vmem:[#allocation7 + $0x1110] sm:$0xff]
        %v2978 = vld [vmem:[#allocation7 + $0x1118] sm:$0xff]
        %v2979 = vld [vmem:[#allocation7 + $0x1120] sm:$0xff]
        %v2980 = vld [vmem:[#allocation7 + $0x1128] sm:$0xff]
        %v2981 = vld [vmem:[#allocation7 + $0x1130] sm:$0xff]
        %v2982 = vld [vmem:[#allocation7 + $0x1138] sm:$0xff]
        %v2983 = vld [vmem:[#allocation7 + $0x1140] sm:$0xff]
        %v2984 = vld [vmem:[#allocation7 + $0x1148] sm:$0xff]
        %v2985 = vld [vmem:[#allocation7 + $0x1150] sm:$0xff]
        %v2986 = vld [vmem:[#allocation7 + $0x1158] sm:$0xff]
        %v2987 = vld [vmem:[#allocation7 + $0x1160] sm:$0xff]
        %v2988 = vld [vmem:[#allocation7 + $0x1168] sm:$0xff]
        %v2989 = vld [vmem:[#allocation7 + $0x1170] sm:$0xff]
        %v2990 = vld [vmem:[#allocation7 + $0x1178] sm:$0xff]
        %v2991 = vld [vmem:[#allocation7 + $0x1180] sm:$0xff]
        %v2992 = vld [vmem:[#allocation7 + $0x1188] sm:$0xff]
        %v2993 = vld [vmem:[#allocation7 + $0x1190] sm:$0xff]
        %v2994 = vld [vmem:[#allocation7 + $0x1198] sm:$0xff]
        %v2995 = vld [vmem:[#allocation7 + $0x11a0] sm:$0xff]
        %v2996 = vld [vmem:[#allocation7 + $0x11a8] sm:$0xff]
        %v2997 = vld [vmem:[#allocation7 + $0x11b0] sm:$0xff]
        %v2998 = vld [vmem:[#allocation7 + $0x11b8] sm:$0xff]
        %v2999 = vld [vmem:[#allocation7 + $0x11c0] sm:$0xff]
        %v3000 = vld [vmem:[#allocation7 + $0x11c8] sm:$0xff]
        %v3001 = vld [vmem:[#allocation7 + $0x11d0] sm:$0xff]
        %v3002 = vld [vmem:[#allocation7 + $0x11d8] sm:$0xff]
        %v3003 = vld [vmem:[#allocation7 + $0x11e0] sm:$0xff]
        %v3004 = vld [vmem:[#allocation7 + $0x11e8] sm:$0xff]
        %v3005 = vld [vmem:[#allocation7 + $0x11f0] sm:$0xff]
        %v3006 = vld [vmem:[#allocation7 + $0x11f8] sm:$0xff]
        %v3007 = vld [vmem:[#allocation7 + $0x1200] sm:$0xff]
        %v3008 = vld [vmem:[#allocation7 + $0x1208] sm:$0xff]
        %v3009 = vld [vmem:[#allocation7 + $0x1210] sm:$0xff]
        %v3010 = vld [vmem:[#allocation7 + $0x1218] sm:$0xff]
        %v3011 = vld [vmem:[#allocation7 + $0x1220] sm:$0xff]
        %v3012 = vld [vmem:[#allocation7 + $0x1228] sm:$0xff]
        %v3013 = vld [vmem:[#allocation7 + $0x1230] sm:$0xff]
        %v3014 = vld [vmem:[#allocation7 + $0x1238] sm:$0xff]
        %v3015 = vld [vmem:[#allocation7 + $0x1240] sm:$0xff]
        %v3016 = vld [vmem:[#allocation7 + $0x1248] sm:$0xff]
        %v3017 = vld [vmem:[#allocation7 + $0x1250] sm:$0xff]
        %v3018 = vld [vmem:[#allocation7 + $0x1258] sm:$0xff]
        %v3019 = vld [vmem:[#allocation7 + $0x1260] sm:$0xff]
        %v3020 = vld [vmem:[#allocation7 + $0x1268] sm:$0xff]
        %v3021 = vld [vmem:[#allocation7 + $0x1270] sm:$0xff]
        %v3022 = vld [vmem:[#allocation7 + $0x1278] sm:$0xff]
        %v3023 = vld [vmem:[#allocation7 + $0x1280] sm:$0xff]
        %v3024 = vld [vmem:[#allocation7 + $0x1288] sm:$0xff]
        %v3025 = vld [vmem:[#allocation7 + $0x1290] sm:$0xff]
        %v3026 = vld [vmem:[#allocation7 + $0x1298] sm:$0xff]
        %v3027 = vld [vmem:[#allocation7 + $0x12a0] sm:$0xff]
        %v3028 = vld [vmem:[#allocation7 + $0x12a8] sm:$0xff]
        %v3029 = vld [vmem:[#allocation7 + $0x12b0] sm:$0xff]
        %v3030 = vld [vmem:[#allocation7 + $0x12b8] sm:$0xff]
        %v3031 = vld [vmem:[#allocation7 + $0x12c0] sm:$0xff]
        %v3032 = vld [vmem:[#allocation7 + $0x12c8] sm:$0xff]
        %v3033 = vld [vmem:[#allocation7 + $0x12d0] sm:$0xff]
        %v3034 = vld [vmem:[#allocation7 + $0x12d8] sm:$0xff]
        %v3035 = vld [vmem:[#allocation7 + $0x12e0] sm:$0xff]
        %v3036 = vld [vmem:[#allocation7 + $0x12e8] sm:$0xff]
        %v3037 = vld [vmem:[#allocation7 + $0x12f0] sm:$0xff]
        %v3038 = vld [vmem:[#allocation7 + $0x12f8] sm:$0xff]
        %v3039 = vld [vmem:[#allocation7 + $0x1300] sm:$0xff]
        %v3040 = vld [vmem:[#allocation7 + $0x1308] sm:$0xff]
        %v3041 = vld [vmem:[#allocation7 + $0x1310] sm:$0xff]
        %v3042 = vld [vmem:[#allocation7 + $0x1318] sm:$0xff]
        %v3043 = vld [vmem:[#allocation7 + $0x1320] sm:$0xff]
        %v3044 = vld [vmem:[#allocation7 + $0x1328] sm:$0xff]
        %v3045 = vld [vmem:[#allocation7 + $0x1330] sm:$0xff]
        %v3046 = vld [vmem:[#allocation7 + $0x1338] sm:$0xff]
        %v3047 = vld [vmem:[#allocation7 + $0x1340] sm:$0xff]
        %v3048 = vld [vmem:[#allocation7 + $0x1348] sm:$0xff]
        %v3049 = vld [vmem:[#allocation7 + $0x1350] sm:$0xff]
        %v3050 = vld [vmem:[#allocation7 + $0x1358] sm:$0xff]
        %v3051 = vld [vmem:[#allocation7 + $0x1360] sm:$0xff]
        %v3052 = vld [vmem:[#allocation7 + $0x1368] sm:$0xff]
        %v3053 = vld [vmem:[#allocation7 + $0x1370] sm:$0xff]
        %v3054 = vld [vmem:[#allocation7 + $0x1378] sm:$0xff]
        %v3055 = vld [vmem:[#allocation7 + $0x1380] sm:$0xff]
        %v3056 = vld [vmem:[#allocation7 + $0x1388] sm:$0xff]
        %v3057 = vld [vmem:[#allocation7 + $0x1390] sm:$0xff]
        %v3058 = vld [vmem:[#allocation7 + $0x1398] sm:$0xff]
        %v3059 = vld [vmem:[#allocation7 + $0x13a0] sm:$0xff]
        %v3060 = vld [vmem:[#allocation7 + $0x13a8] sm:$0xff]
        %v3061 = vld [vmem:[#allocation7 + $0x13b0] sm:$0xff]
        %v3062 = vld [vmem:[#allocation7 + $0x13b8] sm:$0xff]
        %v3063 = vld [vmem:[#allocation7 + $0x13c0] sm:$0xff]
        %v3064 = vld [vmem:[#allocation7 + $0x13c8] sm:$0xff]
        %v3065 = vld [vmem:[#allocation7 + $0x13d0] sm:$0xff]
        %v3066 = vld [vmem:[#allocation7 + $0x13d8] sm:$0xff]
        %v3067 = vld [vmem:[#allocation7 + $0x13e0] sm:$0xff]
        %v3068 = vld [vmem:[#allocation7 + $0x13e8] sm:$0xff]
        %v3069 = vld [vmem:[#allocation7 + $0x13f0] sm:$0xff]
        %v3070 = vld [vmem:[#allocation7 + $0x13f8] sm:$0xff]
        %v3071 = vld [vmem:[#allocation7 + $0x1400] sm:$0xff]
        %v3072 = vld [vmem:[#allocation7 + $0x1408] sm:$0xff]
        %v3073 = vld [vmem:[#allocation7 + $0x1410] sm:$0xff]
        %v3074 = vld [vmem:[#allocation7 + $0x1418] sm:$0xff]
        %v3075 = vld [vmem:[#allocation7 + $0x1420] sm:$0xff]
        %v3076 = vld [vmem:[#allocation7 + $0x1428] sm:$0xff]
        %v3077 = vld [vmem:[#allocation7 + $0x1430] sm:$0xff]
        %v3078 = vld [vmem:[#allocation7 + $0x1438] sm:$0xff]
        %v3079 = vld [vmem:[#allocation7 + $0x1440] sm:$0xff]
        %v3080 = vld [vmem:[#allocation7 + $0x1448] sm:$0xff]
        %v3081 = vld [vmem:[#allocation7 + $0x1450] sm:$0xff]
        %v3082 = vld [vmem:[#allocation7 + $0x1458] sm:$0xff]
        %v3083 = vld [vmem:[#allocation7 + $0x1460] sm:$0xff]
        %v3084 = vld [vmem:[#allocation7 + $0x1468] sm:$0xff]
        %v3085 = vld [vmem:[#allocation7 + $0x1470] sm:$0xff]
        %v3086 = vld [vmem:[#allocation7 + $0x1478] sm:$0xff]
        %v3087 = vld [vmem:[#allocation7 + $0x1480] sm:$0xff]
        %v3088 = vld [vmem:[#allocation7 + $0x1488] sm:$0xff]
        %v3089 = vld [vmem:[#allocation7 + $0x1490] sm:$0xff]
        %v3090 = vld [vmem:[#allocation7 + $0x1498] sm:$0xff]
        %v3091 = vld [vmem:[#allocation7 + $0x14a0] sm:$0xff]
        %v3092 = vld [vmem:[#allocation7 + $0x14a8] sm:$0xff]
        %v3093 = vld [vmem:[#allocation7 + $0x14b0] sm:$0xff]
        %v3094 = vld [vmem:[#allocation7 + $0x14b8] sm:$0xff]
        %v3095 = vld [vmem:[#allocation7 + $0x14c0] sm:$0xff]
        %v3096 = vld [vmem:[#allocation7 + $0x14c8] sm:$0xff]
        %v3097 = vld [vmem:[#allocation7 + $0x14d0] sm:$0xff]
        %v3098 = vld [vmem:[#allocation7 + $0x14d8] sm:$0xff]
        %v3099 = vld [vmem:[#allocation7 + $0x14e0] sm:$0xff]
        %v3100 = vld [vmem:[#allocation7 + $0x14e8] sm:$0xff]
        %v3101 = vld [vmem:[#allocation7 + $0x14f0] sm:$0xff]
        %v3102 = vld [vmem:[#allocation7 + $0x14f8] sm:$0xff]
        %v3103 = vld [vmem:[#allocation7 + $0x1500] sm:$0xff]
        %v3104 = vld [vmem:[#allocation7 + $0x1508] sm:$0xff]
        %v3105 = vld [vmem:[#allocation7 + $0x1510] sm:$0xff]
        %v3106 = vld [vmem:[#allocation7 + $0x1518] sm:$0xff]
        %v3107 = vld [vmem:[#allocation7 + $0x1520] sm:$0xff]
        %v3108 = vld [vmem:[#allocation7 + $0x1528] sm:$0xff]
        %v3109 = vld [vmem:[#allocation7 + $0x1530] sm:$0xff]
        %v3110 = vld [vmem:[#allocation7 + $0x1538] sm:$0xff]
        %v3111 = vld [vmem:[#allocation7 + $0x1540] sm:$0xff]
        %v3112 = vld [vmem:[#allocation7 + $0x1548] sm:$0xff]
        %v3113 = vld [vmem:[#allocation7 + $0x1550] sm:$0xff]
        %v3114 = vld [vmem:[#allocation7 + $0x1558] sm:$0xff]
        %v3115 = vld [vmem:[#allocation7 + $0x1560] sm:$0xff]
        %v3116 = vld [vmem:[#allocation7 + $0x1568] sm:$0xff]
        %v3117 = vld [vmem:[#allocation7 + $0x1570] sm:$0xff]
        %v3118 = vld [vmem:[#allocation7 + $0x1578] sm:$0xff]
        %v3119 = vld [vmem:[#allocation7 + $0x1580] sm:$0xff]
        %v3120 = vld [vmem:[#allocation7 + $0x1588] sm:$0xff]
        %v3121 = vld [vmem:[#allocation7 + $0x1590] sm:$0xff]
        %v3122 = vld [vmem:[#allocation7 + $0x1598] sm:$0xff]
        %v3123 = vld [vmem:[#allocation7 + $0x15a0] sm:$0xff]
        %v3124 = vld [vmem:[#allocation7 + $0x15a8] sm:$0xff]
        %v3125 = vld [vmem:[#allocation7 + $0x15b0] sm:$0xff]
        %v3126 = vld [vmem:[#allocation7 + $0x15b8] sm:$0xff]
        %v3127 = vld [vmem:[#allocation7 + $0x15c0] sm:$0xff]
        %v3128 = vld [vmem:[#allocation7 + $0x15c8] sm:$0xff]
        %v3129 = vld [vmem:[#allocation7 + $0x15d0] sm:$0xff]
        %v3130 = vld [vmem:[#allocation7 + $0x15d8] sm:$0xff]
        %v3131 = vld [vmem:[#allocation7 + $0x15e0] sm:$0xff]
        %v3132 = vld [vmem:[#allocation7 + $0x15e8] sm:$0xff]
        %v3133 = vld [vmem:[#allocation7 + $0x15f0] sm:$0xff]
        %v3134 = vld [vmem:[#allocation7 + $0x15f8] sm:$0xff]
        %v3135 = vld [vmem:[#allocation7 + $0x1600] sm:$0xff]
        %v3136 = vld [vmem:[#allocation7 + $0x1608] sm:$0xff]
        %v3137 = vld [vmem:[#allocation7 + $0x1610] sm:$0xff]
        %v3138 = vld [vmem:[#allocation7 + $0x1618] sm:$0xff]
        %v3139 = vld [vmem:[#allocation7 + $0x1620] sm:$0xff]
        %v3140 = vld [vmem:[#allocation7 + $0x1628] sm:$0xff]
        %v3141 = vld [vmem:[#allocation7 + $0x1630] sm:$0xff]
        %v3142 = vld [vmem:[#allocation7 + $0x1638] sm:$0xff]
        %v3143 = vld [vmem:[#allocation7 + $0x1640] sm:$0xff]
        %v3144 = vld [vmem:[#allocation7 + $0x1648] sm:$0xff]
        %v3145 = vld [vmem:[#allocation7 + $0x1650] sm:$0xff]
        %v3146 = vld [vmem:[#allocation7 + $0x1658] sm:$0xff]
        %v3147 = vld [vmem:[#allocation7 + $0x1660] sm:$0xff]
        %v3148 = vld [vmem:[#allocation7 + $0x1668] sm:$0xff]
        %v3149 = vld [vmem:[#allocation7 + $0x1670] sm:$0xff]
        %v3150 = vld [vmem:[#allocation7 + $0x1678] sm:$0xff]
        %v3151 = vld [vmem:[#allocation7 + $0x1680] sm:$0xff]
        %v3152 = vld [vmem:[#allocation7 + $0x1688] sm:$0xff]
        %v3153 = vld [vmem:[#allocation7 + $0x1690] sm:$0xff]
        %v3154 = vld [vmem:[#allocation7 + $0x1698] sm:$0xff]
        %v3155 = vld [vmem:[#allocation7 + $0x16a0] sm:$0xff]
        %v3156 = vld [vmem:[#allocation7 + $0x16a8] sm:$0xff]
        %v3157 = vld [vmem:[#allocation7 + $0x16b0] sm:$0xff]
        %v3158 = vld [vmem:[#allocation7 + $0x16b8] sm:$0xff]
        %v3159 = vld [vmem:[#allocation7 + $0x16c0] sm:$0xff]
        %v3160 = vld [vmem:[#allocation7 + $0x16c8] sm:$0xff]
        %v3161 = vld [vmem:[#allocation7 + $0x16d0] sm:$0xff]
        %v3162 = vld [vmem:[#allocation7 + $0x16d8] sm:$0xff]
        %v3163 = vld [vmem:[#allocation7 + $0x16e0] sm:$0xff]
        %v3164 = vld [vmem:[#allocation7 + $0x16e8] sm:$0xff]
        %v3165 = vld [vmem:[#allocation7 + $0x16f0] sm:$0xff]
        %v3166 = vld [vmem:[#allocation7 + $0x16f8] sm:$0xff]
        %v3167 = vld [vmem:[#allocation7 + $0x1700] sm:$0xff]
        %v3168 = vld [vmem:[#allocation7 + $0x1708] sm:$0xff]
        %v3169 = vld [vmem:[#allocation7 + $0x1710] sm:$0xff]
        %v3170 = vld [vmem:[#allocation7 + $0x1718] sm:$0xff]
        %v3171 = vld [vmem:[#allocation7 + $0x1720] sm:$0xff]
        %v3172 = vld [vmem:[#allocation7 + $0x1728] sm:$0xff]
        %v3173 = vld [vmem:[#allocation7 + $0x1730] sm:$0xff]
        %v3174 = vld [vmem:[#allocation7 + $0x1738] sm:$0xff]
        %v3175 = vld [vmem:[#allocation7 + $0x1740] sm:$0xff]
        %v3176 = vld [vmem:[#allocation7 + $0x1748] sm:$0xff]
        %v3177 = vld [vmem:[#allocation7 + $0x1750] sm:$0xff]
        %v3178 = vld [vmem:[#allocation7 + $0x1758] sm:$0xff]
        %v3179 = vld [vmem:[#allocation7 + $0x1760] sm:$0xff]
        %v3180 = vld [vmem:[#allocation7 + $0x1768] sm:$0xff]
        %v3181 = vld [vmem:[#allocation7 + $0x1770] sm:$0xff]
        %v3182 = vld [vmem:[#allocation7 + $0x1778] sm:$0xff]
        %v3183 = vld [vmem:[#allocation7 + $0x1780] sm:$0xff]
        %v3184 = vld [vmem:[#allocation7 + $0x1788] sm:$0xff]
        %v3185 = vld [vmem:[#allocation7 + $0x1790] sm:$0xff]
        %v3186 = vld [vmem:[#allocation7 + $0x1798] sm:$0xff]
        %v3187 = vld [vmem:[#allocation7 + $0x17a0] sm:$0xff]
        %v3188 = vld [vmem:[#allocation7 + $0x17a8] sm:$0xff]
        %v3189 = vld [vmem:[#allocation7 + $0x17b0] sm:$0xff]
        %v3190 = vld [vmem:[#allocation7 + $0x17b8] sm:$0xff]
        %v3191 = vld [vmem:[#allocation7 + $0x17c0] sm:$0xff]
        %v3192 = vld [vmem:[#allocation7 + $0x17c8] sm:$0xff]
        %v3193 = vld [vmem:[#allocation7 + $0x17d0] sm:$0xff]
        %v3194 = vld [vmem:[#allocation7 + $0x17d8] sm:$0xff]
        %v3195 = vld [vmem:[#allocation7 + $0x17e0] sm:$0xff]
        %v3196 = vld [vmem:[#allocation7 + $0x17e8] sm:$0xff]
        %v3197 = vld [vmem:[#allocation7 + $0x17f0] sm:$0xff]
        %v3198 = vld [vmem:[#allocation7 + $0x17f8] sm:$0xff]
        %v3199 = vld [vmem:[#allocation7 + $0x1800] sm:$0xff]
        %v3200 = vld [vmem:[#allocation7 + $0x1808] sm:$0xff]
        %v3201 = vld [vmem:[#allocation7 + $0x1810] sm:$0xff]
        %v3202 = vld [vmem:[#allocation7 + $0x1818] sm:$0xff]
        %v3203 = vld [vmem:[#allocation7 + $0x1820] sm:$0xff]
        %v3204 = vld [vmem:[#allocation7 + $0x1828] sm:$0xff]
        %v3205 = vld [vmem:[#allocation7 + $0x1830] sm:$0xff]
        %v3206 = vld [vmem:[#allocation7 + $0x1838] sm:$0xff]
        %v3207 = vld [vmem:[#allocation7 + $0x1840] sm:$0xff]
        %v3208 = vld [vmem:[#allocation7 + $0x1848] sm:$0xff]
        %v3209 = vld [vmem:[#allocation7 + $0x1850] sm:$0xff]
        %v3210 = vld [vmem:[#allocation7 + $0x1858] sm:$0xff]
        %v3211 = vld [vmem:[#allocation7 + $0x1860] sm:$0xff]
        %v3212 = vld [vmem:[#allocation7 + $0x1868] sm:$0xff]
        %v3213 = vld [vmem:[#allocation7 + $0x1870] sm:$0xff]
        %v3214 = vld [vmem:[#allocation7 + $0x1878] sm:$0xff]
        %v3215 = vld [vmem:[#allocation7 + $0x1880] sm:$0xff]
        %v3216 = vld [vmem:[#allocation7 + $0x1888] sm:$0xff]
        %v3217 = vld [vmem:[#allocation7 + $0x1890] sm:$0xff]
        %v3218 = vld [vmem:[#allocation7 + $0x1898] sm:$0xff]
        %v3219 = vld [vmem:[#allocation7 + $0x18a0] sm:$0xff]
        %v3220 = vld [vmem:[#allocation7 + $0x18a8] sm:$0xff]
        %v3221 = vld [vmem:[#allocation7 + $0x18b0] sm:$0xff]
        %v3222 = vld [vmem:[#allocation7 + $0x18b8] sm:$0xff]
        %v3223 = vld [vmem:[#allocation7 + $0x18c0] sm:$0xff]
        %v3224 = vld [vmem:[#allocation7 + $0x18c8] sm:$0xff]
        %v3225 = vld [vmem:[#allocation7 + $0x18d0] sm:$0xff]
        %v3226 = vld [vmem:[#allocation7 + $0x18d8] sm:$0xff]
        %v3227 = vld [vmem:[#allocation7 + $0x18e0] sm:$0xff]
        %v3228 = vld [vmem:[#allocation7 + $0x18e8] sm:$0xff]
        %v3229 = vld [vmem:[#allocation7 + $0x18f0] sm:$0xff]
        %v3230 = vld [vmem:[#allocation7 + $0x18f8] sm:$0xff]
        %v3231 = vld [vmem:[#allocation7 + $0x1900] sm:$0xff]
        %v3232 = vld [vmem:[#allocation7 + $0x1908] sm:$0xff]
        %v3233 = vld [vmem:[#allocation7 + $0x1910] sm:$0xff]
        %v3234 = vld [vmem:[#allocation7 + $0x1918] sm:$0xff]
        %v3235 = vld [vmem:[#allocation7 + $0x1920] sm:$0xff]
        %v3236 = vld [vmem:[#allocation7 + $0x1928] sm:$0xff]
        %v3237 = vld [vmem:[#allocation7 + $0x1930] sm:$0xff]
        %v3238 = vld [vmem:[#allocation7 + $0x1938] sm:$0xff]
        %v3239 = vld [vmem:[#allocation7 + $0x1940] sm:$0xff]
        %v3240 = vld [vmem:[#allocation7 + $0x1948] sm:$0xff]
        %v3241 = vld [vmem:[#allocation7 + $0x1950] sm:$0xff]
        %v3242 = vld [vmem:[#allocation7 + $0x1958] sm:$0xff]
        %v3243 = vld [vmem:[#allocation7 + $0x1960] sm:$0xff]
        %v3244 = vld [vmem:[#allocation7 + $0x1968] sm:$0xff]
        %v3245 = vld [vmem:[#allocation7 + $0x1970] sm:$0xff]
        %v3246 = vld [vmem:[#allocation7 + $0x1978] sm:$0xff]
        %v3247 = vld [vmem:[#allocation7 + $0x1980] sm:$0xff]
        %v3248 = vld [vmem:[#allocation7 + $0x1988] sm:$0xff]
        %v3249 = vld [vmem:[#allocation7 + $0x1990] sm:$0xff]
        %v3250 = vld [vmem:[#allocation7 + $0x1998] sm:$0xff]
        %v3251 = vld [vmem:[#allocation7 + $0x19a0] sm:$0xff]
        %v3252 = vld [vmem:[#allocation7 + $0x19a8] sm:$0xff]
        %v3253 = vld [vmem:[#allocation7 + $0x19b0] sm:$0xff]
        %v3254 = vld [vmem:[#allocation7 + $0x19b8] sm:$0xff]
        %v3255 = vld [vmem:[#allocation7 + $0x19c0] sm:$0xff]
        %v3256 = vld [vmem:[#allocation7 + $0x19c8] sm:$0xff]
        %v3257 = vld [vmem:[#allocation7 + $0x19d0] sm:$0xff]
        %v3258 = vld [vmem:[#allocation7 + $0x19d8] sm:$0xff]
        %v3259 = vld [vmem:[#allocation7 + $0x19e0] sm:$0xff]
        %v3260 = vld [vmem:[#allocation7 + $0x19e8] sm:$0xff]
        %v3261 = vld [vmem:[#allocation7 + $0x19f0] sm:$0xff]
        %v3262 = vld [vmem:[#allocation7 + $0x19f8] sm:$0xff]
        %v3263 = vld [vmem:[#allocation7 + $0x1a00] sm:$0xff]
        %v3264 = vld [vmem:[#allocation7 + $0x1a08] sm:$0xff]
        %v3265 = vld [vmem:[#allocation7 + $0x1a10] sm:$0xff]
        %v3266 = vld [vmem:[#allocation7 + $0x1a18] sm:$0xff]
        %v3267 = vld [vmem:[#allocation7 + $0x1a20] sm:$0xff]
        %v3268 = vld [vmem:[#allocation7 + $0x1a28] sm:$0xff]
        %v3269 = vld [vmem:[#allocation7 + $0x1a30] sm:$0xff]
        %v3270 = vld [vmem:[#allocation7 + $0x1a38] sm:$0xff]
        %v3271 = vld [vmem:[#allocation7 + $0x1a40] sm:$0xff]
        %v3272 = vld [vmem:[#allocation7 + $0x1a48] sm:$0xff]
        %v3273 = vld [vmem:[#allocation7 + $0x1a50] sm:$0xff]
        %v3274 = vld [vmem:[#allocation7 + $0x1a58] sm:$0xff]
        %v3275 = vld [vmem:[#allocation7 + $0x1a60] sm:$0xff]
        %v3276 = vld [vmem:[#allocation7 + $0x1a68] sm:$0xff]
        %v3277 = vld [vmem:[#allocation7 + $0x1a70] sm:$0xff]
        %v3278 = vld [vmem:[#allocation7 + $0x1a78] sm:$0xff]
        %v3279 = vld [vmem:[#allocation7 + $0x1a80] sm:$0xff]
        %v3280 = vld [vmem:[#allocation7 + $0x1a88] sm:$0xff]
        %v3281 = vld [vmem:[#allocation7 + $0x1a90] sm:$0xff]
        %v3282 = vld [vmem:[#allocation7 + $0x1a98] sm:$0xff]
        %v3283 = vld [vmem:[#allocation7 + $0x1aa0] sm:$0xff]
        %v3284 = vld [vmem:[#allocation7 + $0x1aa8] sm:$0xff]
        %v3285 = vld [vmem:[#allocation7 + $0x1ab0] sm:$0xff]
        %v3286 = vld [vmem:[#allocation7 + $0x1ab8] sm:$0xff]
        %v3287 = vld [vmem:[#allocation7 + $0x1ac0] sm:$0xff]
        %v3288 = vld [vmem:[#allocation7 + $0x1ac8] sm:$0xff]
        %v3289 = vld [vmem:[#allocation7 + $0x1ad0] sm:$0xff]
        %v3290 = vld [vmem:[#allocation7 + $0x1ad8] sm:$0xff]
        %v3291 = vld [vmem:[#allocation7 + $0x1ae0] sm:$0xff]
        %v3292 = vld [vmem:[#allocation7 + $0x1ae8] sm:$0xff]
        %v3293 = vld [vmem:[#allocation7 + $0x1af0] sm:$0xff]
        %v3294 = vld [vmem:[#allocation7 + $0x1af8] sm:$0xff]
        %v3295 = vld [vmem:[#allocation7 + $0x1b00] sm:$0xff]
        %v3296 = vld [vmem:[#allocation7 + $0x1b08] sm:$0xff]
        %v3297 = vld [vmem:[#allocation7 + $0x1b10] sm:$0xff]
        %v3298 = vld [vmem:[#allocation7 + $0x1b18] sm:$0xff]
        %v3299 = vld [vmem:[#allocation7 + $0x1b20] sm:$0xff]
        %v3300 = vld [vmem:[#allocation7 + $0x1b28] sm:$0xff]
        %v3301 = vld [vmem:[#allocation7 + $0x1b30] sm:$0xff]
        %v3302 = vld [vmem:[#allocation7 + $0x1b38] sm:$0xff]
        %v3303 = vld [vmem:[#allocation7 + $0x1b40] sm:$0xff]
        %v3304 = vld [vmem:[#allocation7 + $0x1b48] sm:$0xff]
        %v3305 = vld [vmem:[#allocation7 + $0x1b50] sm:$0xff]
        %v3306 = vld [vmem:[#allocation7 + $0x1b58] sm:$0xff]
        %v3307 = vld [vmem:[#allocation7 + $0x1b60] sm:$0xff]
        %v3308 = vld [vmem:[#allocation7 + $0x1b68] sm:$0xff]
        %v3309 = vld [vmem:[#allocation7 + $0x1b70] sm:$0xff]
        %v3310 = vld [vmem:[#allocation7 + $0x1b78] sm:$0xff]
        %v3311 = vld [vmem:[#allocation7 + $0x1b80] sm:$0xff]
        %v3312 = vld [vmem:[#allocation7 + $0x1b88] sm:$0xff]
        %v3313 = vld [vmem:[#allocation7 + $0x1b90] sm:$0xff]
        %v3314 = vld [vmem:[#allocation7 + $0x1b98] sm:$0xff]
        %v3315 = vld [vmem:[#allocation7 + $0x1ba0] sm:$0xff]
        %v3316 = vld [vmem:[#allocation7 + $0x1ba8] sm:$0xff]
        %v3317 = vld [vmem:[#allocation7 + $0x1bb0] sm:$0xff]
        %v3318 = vld [vmem:[#allocation7 + $0x1bb8] sm:$0xff]
        %v3319 = vld [vmem:[#allocation7 + $0x1bc0] sm:$0xff]
        %v3320 = vld [vmem:[#allocation7 + $0x1bc8] sm:$0xff]
        %v3321 = vld [vmem:[#allocation7 + $0x1bd0] sm:$0xff]
        %v3322 = vld [vmem:[#allocation7 + $0x1bd8] sm:$0xff]
        %v3323 = vld [vmem:[#allocation7 + $0x1be0] sm:$0xff]
        %v3324 = vld [vmem:[#allocation7 + $0x1be8] sm:$0xff]
        %v3325 = vld [vmem:[#allocation7 + $0x1bf0] sm:$0xff]
        %v3326 = vld [vmem:[#allocation7 + $0x1bf8] sm:$0xff]
        %v3327 = vld [vmem:[#allocation7 + $0x1c00] sm:$0xff]
        %v3328 = vld [vmem:[#allocation7 + $0x1c08] sm:$0xff]
        %v3329 = vld [vmem:[#allocation7 + $0x1c10] sm:$0xff]
        %v3330 = vld [vmem:[#allocation7 + $0x1c18] sm:$0xff]
        %v3331 = vld [vmem:[#allocation7 + $0x1c20] sm:$0xff]
        %v3332 = vld [vmem:[#allocation7 + $0x1c28] sm:$0xff]
        %v3333 = vld [vmem:[#allocation7 + $0x1c30] sm:$0xff]
        %v3334 = vld [vmem:[#allocation7 + $0x1c38] sm:$0xff]
        %v3335 = vld [vmem:[#allocation7 + $0x1c40] sm:$0xff]
        %v3336 = vld [vmem:[#allocation7 + $0x1c48] sm:$0xff]
        %v3337 = vld [vmem:[#allocation7 + $0x1c50] sm:$0xff]
        %v3338 = vld [vmem:[#allocation7 + $0x1c58] sm:$0xff]
        %v3339 = vld [vmem:[#allocation7 + $0x1c60] sm:$0xff]
        %v3340 = vld [vmem:[#allocation7 + $0x1c68] sm:$0xff]
        %v3341 = vld [vmem:[#allocation7 + $0x1c70] sm:$0xff]
        %v3342 = vld [vmem:[#allocation7 + $0x1c78] sm:$0xff]
        %v3343 = vld [vmem:[#allocation7 + $0x1c80] sm:$0xff]
        %v3344 = vld [vmem:[#allocation7 + $0x1c88] sm:$0xff]
        %v3345 = vld [vmem:[#allocation7 + $0x1c90] sm:$0xff]
        %v3346 = vld [vmem:[#allocation7 + $0x1c98] sm:$0xff]
        %v3347 = vld [vmem:[#allocation7 + $0x1ca0] sm:$0xff]
        %v3348 = vld [vmem:[#allocation7 + $0x1ca8] sm:$0xff]
        %v3349 = vld [vmem:[#allocation7 + $0x1cb0] sm:$0xff]
        %v3350 = vld [vmem:[#allocation7 + $0x1cb8] sm:$0xff]
        %v3351 = vld [vmem:[#allocation7 + $0x1cc0] sm:$0xff]
        %v3352 = vld [vmem:[#allocation7 + $0x1cc8] sm:$0xff]
        %v3353 = vld [vmem:[#allocation7 + $0x1cd0] sm:$0xff]
        %v3354 = vld [vmem:[#allocation7 + $0x1cd8] sm:$0xff]
        %v3355 = vld [vmem:[#allocation7 + $0x1ce0] sm:$0xff]
        %v3356 = vld [vmem:[#allocation7 + $0x1ce8] sm:$0xff]
        %v3357 = vld [vmem:[#allocation7 + $0x1cf0] sm:$0xff]
        %v3358 = vld [vmem:[#allocation7 + $0x1cf8] sm:$0xff]
        %v3359 = vld [vmem:[#allocation7 + $0x1d00] sm:$0xff]
        %v3360 = vld [vmem:[#allocation7 + $0x1d08] sm:$0xff]
        %v3361 = vld [vmem:[#allocation7 + $0x1d10] sm:$0xff]
        %v3362 = vld [vmem:[#allocation7 + $0x1d18] sm:$0xff]
        %v3363 = vld [vmem:[#allocation7 + $0x1d20] sm:$0xff]
        %v3364 = vld [vmem:[#allocation7 + $0x1d28] sm:$0xff]
        %v3365 = vld [vmem:[#allocation7 + $0x1d30] sm:$0xff]
        %v3366 = vld [vmem:[#allocation7 + $0x1d38] sm:$0xff]
        %v3367 = vld [vmem:[#allocation7 + $0x1d40] sm:$0xff]
        %v3368 = vld [vmem:[#allocation7 + $0x1d48] sm:$0xff]
        %v3369 = vld [vmem:[#allocation7 + $0x1d50] sm:$0xff]
        %v3370 = vld [vmem:[#allocation7 + $0x1d58] sm:$0xff]
        %v3371 = vld [vmem:[#allocation7 + $0x1d60] sm:$0xff]
        %v3372 = vld [vmem:[#allocation7 + $0x1d68] sm:$0xff]
        %v3373 = vld [vmem:[#allocation7 + $0x1d70] sm:$0xff]
        %v3374 = vld [vmem:[#allocation7 + $0x1d78] sm:$0xff]
        %v3375 = vld [vmem:[#allocation7 + $0x1d80] sm:$0xff]
        %v3376 = vld [vmem:[#allocation7 + $0x1d88] sm:$0xff]
        %v3377 = vld [vmem:[#allocation7 + $0x1d90] sm:$0xff]
        %v3378 = vld [vmem:[#allocation7 + $0x1d98] sm:$0xff]
        %v3379 = vld [vmem:[#allocation7 + $0x1da0] sm:$0xff]
        %v3380 = vld [vmem:[#allocation7 + $0x1da8] sm:$0xff]
        %v3381 = vld [vmem:[#allocation7 + $0x1db0] sm:$0xff]
        %v3382 = vld [vmem:[#allocation7 + $0x1db8] sm:$0xff]
        %v3383 = vld [vmem:[#allocation7 + $0x1dc0] sm:$0xff]
        %v3384 = vld [vmem:[#allocation7 + $0x1dc8] sm:$0xff]
        %v3385 = vld [vmem:[#allocation7 + $0x1dd0] sm:$0xff]
        %v3386 = vld [vmem:[#allocation7 + $0x1dd8] sm:$0xff]
        %v3387 = vld [vmem:[#allocation7 + $0x1de0] sm:$0xff]
        %v3388 = vld [vmem:[#allocation7 + $0x1de8] sm:$0xff]
        %v3389 = vld [vmem:[#allocation7 + $0x1df0] sm:$0xff]
        %v3390 = vld [vmem:[#allocation7 + $0x1df8] sm:$0xff]
        %v3391 = vld [vmem:[#allocation7 + $0x1e00] sm:$0xff]
        %v3392 = vld [vmem:[#allocation7 + $0x1e08] sm:$0xff]
        %v3393 = vld [vmem:[#allocation7 + $0x1e10] sm:$0xff]
        %v3394 = vld [vmem:[#allocation7 + $0x1e18] sm:$0xff]
        %v3395 = vld [vmem:[#allocation7 + $0x1e20] sm:$0xff]
        %v3396 = vld [vmem:[#allocation7 + $0x1e28] sm:$0xff]
        %v3397 = vld [vmem:[#allocation7 + $0x1e30] sm:$0xff]
        %v3398 = vld [vmem:[#allocation7 + $0x1e38] sm:$0xff]
        %v3399 = vld [vmem:[#allocation7 + $0x1e40] sm:$0xff]
        %v3400 = vld [vmem:[#allocation7 + $0x1e48] sm:$0xff]
        %v3401 = vld [vmem:[#allocation7 + $0x1e50] sm:$0xff]
        %v3402 = vld [vmem:[#allocation7 + $0x1e58] sm:$0xff]
        %v3403 = vld [vmem:[#allocation7 + $0x1e60] sm:$0xff]
        %v3404 = vld [vmem:[#allocation7 + $0x1e68] sm:$0xff]
        %v3405 = vld [vmem:[#allocation7 + $0x1e70] sm:$0xff]
        %v3406 = vld [vmem:[#allocation7 + $0x1e78] sm:$0xff]
        %v3407 = vld [vmem:[#allocation7 + $0x1e80] sm:$0xff]
        %v3408 = vld [vmem:[#allocation7 + $0x1e88] sm:$0xff]
        %v3409 = vld [vmem:[#allocation7 + $0x1e90] sm:$0xff]
        %v3410 = vld [vmem:[#allocation7 + $0x1e98] sm:$0xff]
        %v3411 = vld [vmem:[#allocation7 + $0x1ea0] sm:$0xff]
        %v3412 = vld [vmem:[#allocation7 + $0x1ea8] sm:$0xff]
        %v3413 = vld [vmem:[#allocation7 + $0x1eb0] sm:$0xff]
        %v3414 = vld [vmem:[#allocation7 + $0x1eb8] sm:$0xff]
        %v3415 = vld [vmem:[#allocation7 + $0x1ec0] sm:$0xff]
        %v3416 = vld [vmem:[#allocation7 + $0x1ec8] sm:$0xff]
        %v3417 = vld [vmem:[#allocation7 + $0x1ed0] sm:$0xff]
        %v3418 = vld [vmem:[#allocation7 + $0x1ed8] sm:$0xff]
        %v3419 = vld [vmem:[#allocation7 + $0x1ee0] sm:$0xff]
        %v3420 = vld [vmem:[#allocation7 + $0x1ee8] sm:$0xff]
        %v3421 = vld [vmem:[#allocation7 + $0x1ef0] sm:$0xff]
        %v3422 = vld [vmem:[#allocation7 + $0x1ef8] sm:$0xff]
        %v3423 = vld [vmem:[#allocation7 + $0x1f00] sm:$0xff]
        %v3424 = vld [vmem:[#allocation7 + $0x1f08] sm:$0xff]
        %v3425 = vld [vmem:[#allocation7 + $0x1f10] sm:$0xff]
        %v3426 = vld [vmem:[#allocation7 + $0x1f18] sm:$0xff]
        %v3427 = vld [vmem:[#allocation7 + $0x1f20] sm:$0xff]
        %v3428 = vld [vmem:[#allocation7 + $0x1f28] sm:$0xff]
        %v3429 = vld [vmem:[#allocation7 + $0x1f30] sm:$0xff]
        %v3430 = vld [vmem:[#allocation7 + $0x1f38] sm:$0xff]
        %v3431 = vld [vmem:[#allocation7 + $0x1f40] sm:$0xff]
        %v3432 = vld [vmem:[#allocation7 + $0x1f48] sm:$0xff]
        %v3433 = vld [vmem:[#allocation7 + $0x1f50] sm:$0xff]
        %v3434 = vld [vmem:[#allocation7 + $0x1f58] sm:$0xff]
        %v3435 = vld [vmem:[#allocation7 + $0x1f60] sm:$0xff]
        %v3436 = vld [vmem:[#allocation7 + $0x1f68] sm:$0xff]
        %v3437 = vld [vmem:[#allocation7 + $0x1f70] sm:$0xff]
        %v3438 = vld [vmem:[#allocation7 + $0x1f78] sm:$0xff]
        %v3439 = vld [vmem:[#allocation7 + $0x1f80] sm:$0xff]
        %v3440 = vld [vmem:[#allocation7 + $0x1f88] sm:$0xff]
        %v3441 = vld [vmem:[#allocation7 + $0x1f90] sm:$0xff]
        %v3442 = vld [vmem:[#allocation7 + $0x1f98] sm:$0xff]
        %v3443 = vld [vmem:[#allocation7 + $0x1fa0] sm:$0xff]
        %v3444 = vld [vmem:[#allocation7 + $0x1fa8] sm:$0xff]
        %v3445 = vld [vmem:[#allocation7 + $0x1fb0] sm:$0xff]
        %v3446 = vld [vmem:[#allocation7 + $0x1fb8] sm:$0xff]
        %v3447 = vld [vmem:[#allocation7 + $0x1fc0] sm:$0xff]
        %v3448 = vld [vmem:[#allocation7 + $0x1fc8] sm:$0xff]
        %v3449 = vld [vmem:[#allocation7 + $0x1fd0] sm:$0xff]
        %v3450 = vld [vmem:[#allocation7 + $0x1fd8] sm:$0xff]
        %v3451 = vld [vmem:[#allocation7 + $0x1fe0] sm:$0xff]
        %v3452 = vld [vmem:[#allocation7 + $0x1fe8] sm:$0xff]
        %v3453 = vld [vmem:[#allocation7 + $0x1ff0] sm:$0xff]
        %v3454 = vld [vmem:[#allocation7 + $0x1ff8] sm:$0xff]
        %v3455 = vld [vmem:[#allocation8] sm:$0xff]
        %v4480 = vunpack.c.l.b16 %v2431
        %v4481 = vunpack.c.h.b16 %v2431
        %v4482 = vunpack.c.l.b16 %v2432
        %v4483 = vunpack.c.h.b16 %v2432
        %v4484 = vunpack.c.l.b16 %v2433
        %v4485 = vunpack.c.h.b16 %v2433
        %v4486 = vunpack.c.l.b16 %v2434
        %v4487 = vunpack.c.h.b16 %v2434
        %v4488 = vunpack.c.l.b16 %v2435
        %v4489 = vunpack.c.h.b16 %v2435
        %v4490 = vunpack.c.l.b16 %v2436
        %v4491 = vunpack.c.h.b16 %v2436
        %v4492 = vunpack.c.l.b16 %v2437
        %v4493 = vunpack.c.h.b16 %v2437
        %v4494 = vunpack.c.l.b16 %v2438
        %v4495 = vunpack.c.h.b16 %v2438
        %v4496 = vunpack.c.l.b16 %v2439
        %v4497 = vunpack.c.h.b16 %v2439
        %v4498 = vunpack.c.l.b16 %v2440
        %v4499 = vunpack.c.h.b16 %v2440
        %v4500 = vunpack.c.l.b16 %v2441
        %v4501 = vunpack.c.h.b16 %v2441
        %v4502 = vunpack.c.l.b16 %v2442
        %v4503 = vunpack.c.h.b16 %v2442
        %v4504 = vunpack.c.l.b16 %v2443
        %v4505 = vunpack.c.h.b16 %v2443
        %v4506 = vunpack.c.l.b16 %v2444
        %v4507 = vunpack.c.h.b16 %v2444
        %v4508 = vunpack.c.l.b16 %v2445
        %v4509 = vunpack.c.h.b16 %v2445
        %v4510 = vunpack.c.l.b16 %v2446
        %v4511 = vunpack.c.h.b16 %v2446
        %v4512 = vunpack.c.l.b16 %v2447
        %v4513 = vunpack.c.h.b16 %v2447
        %v4514 = vunpack.c.l.b16 %v2448
        %v4515 = vunpack.c.h.b16 %v2448
        %v4516 = vunpack.c.l.b16 %v2449
        %v4517 = vunpack.c.h.b16 %v2449
        %v4518 = vunpack.c.l.b16 %v2450
        %v4519 = vunpack.c.h.b16 %v2450
        %v4520 = vunpack.c.l.b16 %v2451
        %v4521 = vunpack.c.h.b16 %v2451
        %v4522 = vunpack.c.l.b16 %v2452
        %v4523 = vunpack.c.h.b16 %v2452
        %v4524 = vunpack.c.l.b16 %v2453
        %v4525 = vunpack.c.h.b16 %v2453
        %v4526 = vunpack.c.l.b16 %v2454
        %v4527 = vunpack.c.h.b16 %v2454
        %v4528 = vunpack.c.l.b16 %v2455
        %v4529 = vunpack.c.h.b16 %v2455
        %v4530 = vunpack.c.l.b16 %v2456
        %v4531 = vunpack.c.h.b16 %v2456
        %v4532 = vunpack.c.l.b16 %v2457
        %v4533 = vunpack.c.h.b16 %v2457
        %v4534 = vunpack.c.l.b16 %v2458
        %v4535 = vunpack.c.h.b16 %v2458
        %v4536 = vunpack.c.l.b16 %v2459
        %v4537 = vunpack.c.h.b16 %v2459
        %v4538 = vunpack.c.l.b16 %v2460
        %v4539 = vunpack.c.h.b16 %v2460
        %v4540 = vunpack.c.l.b16 %v2461
        %v4541 = vunpack.c.h.b16 %v2461
        %v4542 = vunpack.c.l.b16 %v2462
        %v4543 = vunpack.c.h.b16 %v2462
        %v4544 = vunpack.c.l.b16 %v2463
        %v4545 = vunpack.c.h.b16 %v2463
        %v4546 = vunpack.c.l.b16 %v2464
        %v4547 = vunpack.c.h.b16 %v2464
        %v4548 = vunpack.c.l.b16 %v2465
        %v4549 = vunpack.c.h.b16 %v2465
        %v4550 = vunpack.c.l.b16 %v2466
        %v4551 = vunpack.c.h.b16 %v2466
        %v4552 = vunpack.c.l.b16 %v2467
        %v4553 = vunpack.c.h.b16 %v2467
        %v4554 = vunpack.c.l.b16 %v2468
        %v4555 = vunpack.c.h.b16 %v2468
        %v4556 = vunpack.c.l.b16 %v2469
        %v4557 = vunpack.c.h.b16 %v2469
        %v4558 = vunpack.c.l.b16 %v2470
        %v4559 = vunpack.c.h.b16 %v2470
        %v4560 = vunpack.c.l.b16 %v2471
        %v4561 = vunpack.c.h.b16 %v2471
        %v4562 = vunpack.c.l.b16 %v2472
        %v4563 = vunpack.c.h.b16 %v2472
        %v4564 = vunpack.c.l.b16 %v2473
        %v4565 = vunpack.c.h.b16 %v2473
        %v4566 = vunpack.c.l.b16 %v2474
        %v4567 = vunpack.c.h.b16 %v2474
        %v4568 = vunpack.c.l.b16 %v2475
        %v4569 = vunpack.c.h.b16 %v2475
        %v4570 = vunpack.c.l.b16 %v2476
        %v4571 = vunpack.c.h.b16 %v2476
        %v4572 = vunpack.c.l.b16 %v2477
        %v4573 = vunpack.c.h.b16 %v2477
        %v4574 = vunpack.c.l.b16 %v2478
        %v4575 = vunpack.c.h.b16 %v2478
        %v4576 = vunpack.c.l.b16 %v2479
        %v4577 = vunpack.c.h.b16 %v2479
        %v4578 = vunpack.c.l.b16 %v2480
        %v4579 = vunpack.c.h.b16 %v2480
        %v4580 = vunpack.c.l.b16 %v2481
        %v4581 = vunpack.c.h.b16 %v2481
        %v4582 = vunpack.c.l.b16 %v2482
        %v4583 = vunpack.c.h.b16 %v2482
        %v4584 = vunpack.c.l.b16 %v2483
        %v4585 = vunpack.c.h.b16 %v2483
        %v4586 = vunpack.c.l.b16 %v2484
        %v4587 = vunpack.c.h.b16 %v2484
        %v4588 = vunpack.c.l.b16 %v2485
        %v4589 = vunpack.c.h.b16 %v2485
        %v4590 = vunpack.c.l.b16 %v2486
        %v4591 = vunpack.c.h.b16 %v2486
        %v4592 = vunpack.c.l.b16 %v2487
        %v4593 = vunpack.c.h.b16 %v2487
        %v4594 = vunpack.c.l.b16 %v2488
        %v4595 = vunpack.c.h.b16 %v2488
        %v4596 = vunpack.c.l.b16 %v2489
        %v4597 = vunpack.c.h.b16 %v2489
        %v4598 = vunpack.c.l.b16 %v2490
        %v4599 = vunpack.c.h.b16 %v2490
        %v4600 = vunpack.c.l.b16 %v2491
        %v4601 = vunpack.c.h.b16 %v2491
        %v4602 = vunpack.c.l.b16 %v2492
        %v4603 = vunpack.c.h.b16 %v2492
        %v4604 = vunpack.c.l.b16 %v2493
        %v4605 = vunpack.c.h.b16 %v2493
        %v4606 = vunpack.c.l.b16 %v2494
        %v4607 = vunpack.c.h.b16 %v2494
        %v4608 = vunpack.c.l.b16 %v2495
        %v4609 = vunpack.c.h.b16 %v2495
        %v4610 = vunpack.c.l.b16 %v2496
        %v4611 = vunpack.c.h.b16 %v2496
        %v4612 = vunpack.c.l.b16 %v2497
        %v4613 = vunpack.c.h.b16 %v2497
        %v4614 = vunpack.c.l.b16 %v2498
        %v4615 = vunpack.c.h.b16 %v2498
        %v4616 = vunpack.c.l.b16 %v2499
        %v4617 = vunpack.c.h.b16 %v2499
        %v4618 = vunpack.c.l.b16 %v2500
        %v4619 = vunpack.c.h.b16 %v2500
        %v4620 = vunpack.c.l.b16 %v2501
        %v4621 = vunpack.c.h.b16 %v2501
        %v4622 = vunpack.c.l.b16 %v2502
        %v4623 = vunpack.c.h.b16 %v2502
        %v4624 = vunpack.c.l.b16 %v2503
        %v4625 = vunpack.c.h.b16 %v2503
        %v4626 = vunpack.c.l.b16 %v2504
        %v4627 = vunpack.c.h.b16 %v2504
        %v4628 = vunpack.c.l.b16 %v2505
        %v4629 = vunpack.c.h.b16 %v2505
        %v4630 = vunpack.c.l.b16 %v2506
        %v4631 = vunpack.c.h.b16 %v2506
        %v4632 = vunpack.c.l.b16 %v2507
        %v4633 = vunpack.c.h.b16 %v2507
        %v4634 = vunpack.c.l.b16 %v2508
        %v4635 = vunpack.c.h.b16 %v2508
        %v4636 = vunpack.c.l.b16 %v2509
        %v4637 = vunpack.c.h.b16 %v2509
        %v4638 = vunpack.c.l.b16 %v2510
        %v4639 = vunpack.c.h.b16 %v2510
        %v4640 = vunpack.c.l.b16 %v2511
        %v4641 = vunpack.c.h.b16 %v2511
        %v4642 = vunpack.c.l.b16 %v2512
        %v4643 = vunpack.c.h.b16 %v2512
        %v4644 = vunpack.c.l.b16 %v2513
        %v4645 = vunpack.c.h.b16 %v2513
        %v4646 = vunpack.c.l.b16 %v2514
        %v4647 = vunpack.c.h.b16 %v2514
        %v4648 = vunpack.c.l.b16 %v2515
        %v4649 = vunpack.c.h.b16 %v2515
        %v4650 = vunpack.c.l.b16 %v2516
        %v4651 = vunpack.c.h.b16 %v2516
        %v4652 = vunpack.c.l.b16 %v2517
        %v4653 = vunpack.c.h.b16 %v2517
        %v4654 = vunpack.c.l.b16 %v2518
        %v4655 = vunpack.c.h.b16 %v2518
        %v4656 = vunpack.c.l.b16 %v2519
        %v4657 = vunpack.c.h.b16 %v2519
        %v4658 = vunpack.c.l.b16 %v2520
        %v4659 = vunpack.c.h.b16 %v2520
        %v4660 = vunpack.c.l.b16 %v2521
        %v4661 = vunpack.c.h.b16 %v2521
        %v4662 = vunpack.c.l.b16 %v2522
        %v4663 = vunpack.c.h.b16 %v2522
        %v4664 = vunpack.c.l.b16 %v2523
        %v4665 = vunpack.c.h.b16 %v2523
        %v4666 = vunpack.c.l.b16 %v2524
        %v4667 = vunpack.c.h.b16 %v2524
        %v4668 = vunpack.c.l.b16 %v2525
        %v4669 = vunpack.c.h.b16 %v2525
        %v4670 = vunpack.c.l.b16 %v2526
        %v4671 = vunpack.c.h.b16 %v2526
        %v4672 = vunpack.c.l.b16 %v2527
        %v4673 = vunpack.c.h.b16 %v2527
        %v4674 = vunpack.c.l.b16 %v2528
        %v4675 = vunpack.c.h.b16 %v2528
        %v4676 = vunpack.c.l.b16 %v2529
        %v4677 = vunpack.c.h.b16 %v2529
        %v4678 = vunpack.c.l.b16 %v2530
        %v4679 = vunpack.c.h.b16 %v2530
        %v4680 = vunpack.c.l.b16 %v2531
        %v4681 = vunpack.c.h.b16 %v2531
        %v4682 = vunpack.c.l.b16 %v2532
        %v4683 = vunpack.c.h.b16 %v2532
        %v4684 = vunpack.c.l.b16 %v2533
        %v4685 = vunpack.c.h.b16 %v2533
        %v4686 = vunpack.c.l.b16 %v2534
        %v4687 = vunpack.c.h.b16 %v2534
        %v4688 = vunpack.c.l.b16 %v2535
        %v4689 = vunpack.c.h.b16 %v2535
        %v4690 = vunpack.c.l.b16 %v2536
        %v4691 = vunpack.c.h.b16 %v2536
        %v4692 = vunpack.c.l.b16 %v2537
        %v4693 = vunpack.c.h.b16 %v2537
        %v4694 = vunpack.c.l.b16 %v2538
        %v4695 = vunpack.c.h.b16 %v2538
        %v4696 = vunpack.c.l.b16 %v2539
        %v4697 = vunpack.c.h.b16 %v2539
        %v4698 = vunpack.c.l.b16 %v2540
        %v4699 = vunpack.c.h.b16 %v2540
        %v4700 = vunpack.c.l.b16 %v2541
        %v4701 = vunpack.c.h.b16 %v2541
        %v4702 = vunpack.c.l.b16 %v2542
        %v4703 = vunpack.c.h.b16 %v2542
        %v4704 = vunpack.c.l.b16 %v2543
        %v4705 = vunpack.c.h.b16 %v2543
        %v4706 = vunpack.c.l.b16 %v2544
        %v4707 = vunpack.c.h.b16 %v2544
        %v4708 = vunpack.c.l.b16 %v2545
        %v4709 = vunpack.c.h.b16 %v2545
        %v4710 = vunpack.c.l.b16 %v2546
        %v4711 = vunpack.c.h.b16 %v2546
        %v4712 = vunpack.c.l.b16 %v2547
        %v4713 = vunpack.c.h.b16 %v2547
        %v4714 = vunpack.c.l.b16 %v2548
        %v4715 = vunpack.c.h.b16 %v2548
        %v4716 = vunpack.c.l.b16 %v2549
        %v4717 = vunpack.c.h.b16 %v2549
        %v4718 = vunpack.c.l.b16 %v2550
        %v4719 = vunpack.c.h.b16 %v2550
        %v4720 = vunpack.c.l.b16 %v2551
        %v4721 = vunpack.c.h.b16 %v2551
        %v4722 = vunpack.c.l.b16 %v2552
        %v4723 = vunpack.c.h.b16 %v2552
        %v4724 = vunpack.c.l.b16 %v2553
        %v4725 = vunpack.c.h.b16 %v2553
        %v4726 = vunpack.c.l.b16 %v2554
        %v4727 = vunpack.c.h.b16 %v2554
        %v4728 = vunpack.c.l.b16 %v2555
        %v4729 = vunpack.c.h.b16 %v2555
        %v4730 = vunpack.c.l.b16 %v2556
        %v4731 = vunpack.c.h.b16 %v2556
        %v4732 = vunpack.c.l.b16 %v2557
        %v4733 = vunpack.c.h.b16 %v2557
        %v4734 = vunpack.c.l.b16 %v2558
        %v4735 = vunpack.c.h.b16 %v2558
        %v4736 = vunpack.c.l.b16 %v2559
        %v4737 = vunpack.c.h.b16 %v2559
        %v4738 = vunpack.c.l.b16 %v2560
        %v4739 = vunpack.c.h.b16 %v2560
        %v4740 = vunpack.c.l.b16 %v2561
        %v4741 = vunpack.c.h.b16 %v2561
        %v4742 = vunpack.c.l.b16 %v2562
        %v4743 = vunpack.c.h.b16 %v2562
        %v4744 = vunpack.c.l.b16 %v2563
        %v4745 = vunpack.c.h.b16 %v2563
        %v4746 = vunpack.c.l.b16 %v2564
        %v4747 = vunpack.c.h.b16 %v2564
        %v4748 = vunpack.c.l.b16 %v2565
        %v4749 = vunpack.c.h.b16 %v2565
        %v4750 = vunpack.c.l.b16 %v2566
        %v4751 = vunpack.c.h.b16 %v2566
        %v4752 = vunpack.c.l.b16 %v2567
        %v4753 = vunpack.c.h.b16 %v2567
        %v4754 = vunpack.c.l.b16 %v2568
        %v4755 = vunpack.c.h.b16 %v2568
        %v4756 = vunpack.c.l.b16 %v2569
        %v4757 = vunpack.c.h.b16 %v2569
        %v4758 = vunpack.c.l.b16 %v2570
        %v4759 = vunpack.c.h.b16 %v2570
        %v4760 = vunpack.c.l.b16 %v2571
        %v4761 = vunpack.c.h.b16 %v2571
        %v4762 = vunpack.c.l.b16 %v2572
        %v4763 = vunpack.c.h.b16 %v2572
        %v4764 = vunpack.c.l.b16 %v2573
        %v4765 = vunpack.c.h.b16 %v2573
        %v4766 = vunpack.c.l.b16 %v2574
        %v4767 = vunpack.c.h.b16 %v2574
        %v4768 = vunpack.c.l.b16 %v2575
        %v4769 = vunpack.c.h.b16 %v2575
        %v4770 = vunpack.c.l.b16 %v2576
        %v4771 = vunpack.c.h.b16 %v2576
        %v4772 = vunpack.c.l.b16 %v2577
        %v4773 = vunpack.c.h.b16 %v2577
        %v4774 = vunpack.c.l.b16 %v2578
        %v4775 = vunpack.c.h.b16 %v2578
        %v4776 = vunpack.c.l.b16 %v2579
        %v4777 = vunpack.c.h.b16 %v2579
        %v4778 = vunpack.c.l.b16 %v2580
        %v4779 = vunpack.c.h.b16 %v2580
        %v4780 = vunpack.c.l.b16 %v2581
        %v4781 = vunpack.c.h.b16 %v2581
        %v4782 = vunpack.c.l.b16 %v2582
        %v4783 = vunpack.c.h.b16 %v2582
        %v4784 = vunpack.c.l.b16 %v2583
        %v4785 = vunpack.c.h.b16 %v2583
        %v4786 = vunpack.c.l.b16 %v2584
        %v4787 = vunpack.c.h.b16 %v2584
        %v4788 = vunpack.c.l.b16 %v2585
        %v4789 = vunpack.c.h.b16 %v2585
        %v4790 = vunpack.c.l.b16 %v2586
        %v4791 = vunpack.c.h.b16 %v2586
        %v4792 = vunpack.c.l.b16 %v2587
        %v4793 = vunpack.c.h.b16 %v2587
        %v4794 = vunpack.c.l.b16 %v2588
        %v4795 = vunpack.c.h.b16 %v2588
        %v4796 = vunpack.c.l.b16 %v2589
        %v4797 = vunpack.c.h.b16 %v2589
        %v4798 = vunpack.c.l.b16 %v2590
        %v4799 = vunpack.c.h.b16 %v2590
        %v4800 = vunpack.c.l.b16 %v2591
        %v4801 = vunpack.c.h.b16 %v2591
        %v4802 = vunpack.c.l.b16 %v2592
        %v4803 = vunpack.c.h.b16 %v2592
        %v4804 = vunpack.c.l.b16 %v2593
        %v4805 = vunpack.c.h.b16 %v2593
        %v4806 = vunpack.c.l.b16 %v2594
        %v4807 = vunpack.c.h.b16 %v2594
        %v4808 = vunpack.c.l.b16 %v2595
        %v4809 = vunpack.c.h.b16 %v2595
        %v4810 = vunpack.c.l.b16 %v2596
        %v4811 = vunpack.c.h.b16 %v2596
        %v4812 = vunpack.c.l.b16 %v2597
        %v4813 = vunpack.c.h.b16 %v2597
        %v4814 = vunpack.c.l.b16 %v2598
        %v4815 = vunpack.c.h.b16 %v2598
        %v4816 = vunpack.c.l.b16 %v2599
        %v4817 = vunpack.c.h.b16 %v2599
        %v4818 = vunpack.c.l.b16 %v2600
        %v4819 = vunpack.c.h.b16 %v2600
        %v4820 = vunpack.c.l.b16 %v2601
        %v4821 = vunpack.c.h.b16 %v2601
        %v4822 = vunpack.c.l.b16 %v2602
        %v4823 = vunpack.c.h.b16 %v2602
        %v4824 = vunpack.c.l.b16 %v2603
        %v4825 = vunpack.c.h.b16 %v2603
        %v4826 = vunpack.c.l.b16 %v2604
        %v4827 = vunpack.c.h.b16 %v2604
        %v4828 = vunpack.c.l.b16 %v2605
        %v4829 = vunpack.c.h.b16 %v2605
        %v4830 = vunpack.c.l.b16 %v2606
        %v4831 = vunpack.c.h.b16 %v2606
        %v4832 = vunpack.c.l.b16 %v2607
        %v4833 = vunpack.c.h.b16 %v2607
        %v4834 = vunpack.c.l.b16 %v2608
        %v4835 = vunpack.c.h.b16 %v2608
        %v4836 = vunpack.c.l.b16 %v2609
        %v4837 = vunpack.c.h.b16 %v2609
        %v4838 = vunpack.c.l.b16 %v2610
        %v4839 = vunpack.c.h.b16 %v2610
        %v4840 = vunpack.c.l.b16 %v2611
        %v4841 = vunpack.c.h.b16 %v2611
        %v4842 = vunpack.c.l.b16 %v2612
        %v4843 = vunpack.c.h.b16 %v2612
        %v4844 = vunpack.c.l.b16 %v2613
        %v4845 = vunpack.c.h.b16 %v2613
        %v4846 = vunpack.c.l.b16 %v2614
        %v4847 = vunpack.c.h.b16 %v2614
        %v4848 = vunpack.c.l.b16 %v2615
        %v4849 = vunpack.c.h.b16 %v2615
        %v4850 = vunpack.c.l.b16 %v2616
        %v4851 = vunpack.c.h.b16 %v2616
        %v4852 = vunpack.c.l.b16 %v2617
        %v4853 = vunpack.c.h.b16 %v2617
        %v4854 = vunpack.c.l.b16 %v2618
        %v4855 = vunpack.c.h.b16 %v2618
        %v4856 = vunpack.c.l.b16 %v2619
        %v4857 = vunpack.c.h.b16 %v2619
        %v4858 = vunpack.c.l.b16 %v2620
        %v4859 = vunpack.c.h.b16 %v2620
        %v4860 = vunpack.c.l.b16 %v2621
        %v4861 = vunpack.c.h.b16 %v2621
        %v4862 = vunpack.c.l.b16 %v2622
        %v4863 = vunpack.c.h.b16 %v2622
        %v4864 = vunpack.c.l.b16 %v2623
        %v4865 = vunpack.c.h.b16 %v2623
        %v4866 = vunpack.c.l.b16 %v2624
        %v4867 = vunpack.c.h.b16 %v2624
        %v4868 = vunpack.c.l.b16 %v2625
        %v4869 = vunpack.c.h.b16 %v2625
        %v4870 = vunpack.c.l.b16 %v2626
        %v4871 = vunpack.c.h.b16 %v2626
        %v4872 = vunpack.c.l.b16 %v2627
        %v4873 = vunpack.c.h.b16 %v2627
        %v4874 = vunpack.c.l.b16 %v2628
        %v4875 = vunpack.c.h.b16 %v2628
        %v4876 = vunpack.c.l.b16 %v2629
        %v4877 = vunpack.c.h.b16 %v2629
        %v4878 = vunpack.c.l.b16 %v2630
        %v4879 = vunpack.c.h.b16 %v2630
        %v4880 = vunpack.c.l.b16 %v2631
        %v4881 = vunpack.c.h.b16 %v2631
        %v4882 = vunpack.c.l.b16 %v2632
        %v4883 = vunpack.c.h.b16 %v2632
        %v4884 = vunpack.c.l.b16 %v2633
        %v4885 = vunpack.c.h.b16 %v2633
        %v4886 = vunpack.c.l.b16 %v2634
        %v4887 = vunpack.c.h.b16 %v2634
        %v4888 = vunpack.c.l.b16 %v2635
        %v4889 = vunpack.c.h.b16 %v2635
        %v4890 = vunpack.c.l.b16 %v2636
        %v4891 = vunpack.c.h.b16 %v2636
        %v4892 = vunpack.c.l.b16 %v2637
        %v4893 = vunpack.c.h.b16 %v2637
        %v4894 = vunpack.c.l.b16 %v2638
        %v4895 = vunpack.c.h.b16 %v2638
        %v4896 = vunpack.c.l.b16 %v2639
        %v4897 = vunpack.c.h.b16 %v2639
        %v4898 = vunpack.c.l.b16 %v2640
        %v4899 = vunpack.c.h.b16 %v2640
        %v4900 = vunpack.c.l.b16 %v2641
        %v4901 = vunpack.c.h.b16 %v2641
        %v4902 = vunpack.c.l.b16 %v2642
        %v4903 = vunpack.c.h.b16 %v2642
        %v4904 = vunpack.c.l.b16 %v2643
        %v4905 = vunpack.c.h.b16 %v2643
        %v4906 = vunpack.c.l.b16 %v2644
        %v4907 = vunpack.c.h.b16 %v2644
        %v4908 = vunpack.c.l.b16 %v2645
        %v4909 = vunpack.c.h.b16 %v2645
        %v4910 = vunpack.c.l.b16 %v2646
        %v4911 = vunpack.c.h.b16 %v2646
        %v4912 = vunpack.c.l.b16 %v2647
        %v4913 = vunpack.c.h.b16 %v2647
        %v4914 = vunpack.c.l.b16 %v2648
        %v4915 = vunpack.c.h.b16 %v2648
        %v4916 = vunpack.c.l.b16 %v2649
        %v4917 = vunpack.c.h.b16 %v2649
        %v4918 = vunpack.c.l.b16 %v2650
        %v4919 = vunpack.c.h.b16 %v2650
        %v4920 = vunpack.c.l.b16 %v2651
        %v4921 = vunpack.c.h.b16 %v2651
        %v4922 = vunpack.c.l.b16 %v2652
        %v4923 = vunpack.c.h.b16 %v2652
        %v4924 = vunpack.c.l.b16 %v2653
        %v4925 = vunpack.c.h.b16 %v2653
        %v4926 = vunpack.c.l.b16 %v2654
        %v4927 = vunpack.c.h.b16 %v2654
        %v4928 = vunpack.c.l.b16 %v2655
        %v4929 = vunpack.c.h.b16 %v2655
        %v4930 = vunpack.c.l.b16 %v2656
        %v4931 = vunpack.c.h.b16 %v2656
        %v4932 = vunpack.c.l.b16 %v2657
        %v4933 = vunpack.c.h.b16 %v2657
        %v4934 = vunpack.c.l.b16 %v2658
        %v4935 = vunpack.c.h.b16 %v2658
        %v4936 = vunpack.c.l.b16 %v2659
        %v4937 = vunpack.c.h.b16 %v2659
        %v4938 = vunpack.c.l.b16 %v2660
        %v4939 = vunpack.c.h.b16 %v2660
        %v4940 = vunpack.c.l.b16 %v2661
        %v4941 = vunpack.c.h.b16 %v2661
        %v4942 = vunpack.c.l.b16 %v2662
        %v4943 = vunpack.c.h.b16 %v2662
        %v4944 = vunpack.c.l.b16 %v2663
        %v4945 = vunpack.c.h.b16 %v2663
        %v4946 = vunpack.c.l.b16 %v2664
        %v4947 = vunpack.c.h.b16 %v2664
        %v4948 = vunpack.c.l.b16 %v2665
        %v4949 = vunpack.c.h.b16 %v2665
        %v4950 = vunpack.c.l.b16 %v2666
        %v4951 = vunpack.c.h.b16 %v2666
        %v4952 = vunpack.c.l.b16 %v2667
        %v4953 = vunpack.c.h.b16 %v2667
        %v4954 = vunpack.c.l.b16 %v2668
        %v4955 = vunpack.c.h.b16 %v2668
        %v4956 = vunpack.c.l.b16 %v2669
        %v4957 = vunpack.c.h.b16 %v2669
        %v4958 = vunpack.c.l.b16 %v2670
        %v4959 = vunpack.c.h.b16 %v2670
        %v4960 = vunpack.c.l.b16 %v2671
        %v4961 = vunpack.c.h.b16 %v2671
        %v4962 = vunpack.c.l.b16 %v2672
        %v4963 = vunpack.c.h.b16 %v2672
        %v4964 = vunpack.c.l.b16 %v2673
        %v4965 = vunpack.c.h.b16 %v2673
        %v4966 = vunpack.c.l.b16 %v2674
        %v4967 = vunpack.c.h.b16 %v2674
        %v4968 = vunpack.c.l.b16 %v2675
        %v4969 = vunpack.c.h.b16 %v2675
        %v4970 = vunpack.c.l.b16 %v2676
        %v4971 = vunpack.c.h.b16 %v2676
        %v4972 = vunpack.c.l.b16 %v2677
        %v4973 = vunpack.c.h.b16 %v2677
        %v4974 = vunpack.c.l.b16 %v2678
        %v4975 = vunpack.c.h.b16 %v2678
        %v4976 = vunpack.c.l.b16 %v2679
        %v4977 = vunpack.c.h.b16 %v2679
        %v4978 = vunpack.c.l.b16 %v2680
        %v4979 = vunpack.c.h.b16 %v2680
        %v4980 = vunpack.c.l.b16 %v2681
        %v4981 = vunpack.c.h.b16 %v2681
        %v4982 = vunpack.c.l.b16 %v2682
        %v4983 = vunpack.c.h.b16 %v2682
        %v4984 = vunpack.c.l.b16 %v2683
        %v4985 = vunpack.c.h.b16 %v2683
        %v4986 = vunpack.c.l.b16 %v2684
        %v4987 = vunpack.c.h.b16 %v2684
        %v4988 = vunpack.c.l.b16 %v2685
        %v4989 = vunpack.c.h.b16 %v2685
        %v4990 = vunpack.c.l.b16 %v2686
        %v4991 = vunpack.c.h.b16 %v2686
        %v4992 = vunpack.c.l.b16 %v2687
        %v4993 = vunpack.c.h.b16 %v2687
        %v4994 = vunpack.c.l.b16 %v2688
        %v4995 = vunpack.c.h.b16 %v2688
        %v4996 = vunpack.c.l.b16 %v2689
        %v4997 = vunpack.c.h.b16 %v2689
        %v4998 = vunpack.c.l.b16 %v2690
        %v4999 = vunpack.c.h.b16 %v2690
        %v5000 = vunpack.c.l.b16 %v2691
        %v5001 = vunpack.c.h.b16 %v2691
        %v5002 = vunpack.c.l.b16 %v2692
        %v5003 = vunpack.c.h.b16 %v2692
        %v5004 = vunpack.c.l.b16 %v2693
        %v5005 = vunpack.c.h.b16 %v2693
        %v5006 = vunpack.c.l.b16 %v2694
        %v5007 = vunpack.c.h.b16 %v2694
        %v5008 = vunpack.c.l.b16 %v2695
        %v5009 = vunpack.c.h.b16 %v2695
        %v5010 = vunpack.c.l.b16 %v2696
        %v5011 = vunpack.c.h.b16 %v2696
        %v5012 = vunpack.c.l.b16 %v2697
        %v5013 = vunpack.c.h.b16 %v2697
        %v5014 = vunpack.c.l.b16 %v2698
        %v5015 = vunpack.c.h.b16 %v2698
        %v5016 = vunpack.c.l.b16 %v2699
        %v5017 = vunpack.c.h.b16 %v2699
        %v5018 = vunpack.c.l.b16 %v2700
        %v5019 = vunpack.c.h.b16 %v2700
        %v5020 = vunpack.c.l.b16 %v2701
        %v5021 = vunpack.c.h.b16 %v2701
        %v5022 = vunpack.c.l.b16 %v2702
        %v5023 = vunpack.c.h.b16 %v2702
        %v5024 = vunpack.c.l.b16 %v2703
        %v5025 = vunpack.c.h.b16 %v2703
        %v5026 = vunpack.c.l.b16 %v2704
        %v5027 = vunpack.c.h.b16 %v2704
        %v5028 = vunpack.c.l.b16 %v2705
        %v5029 = vunpack.c.h.b16 %v2705
        %v5030 = vunpack.c.l.b16 %v2706
        %v5031 = vunpack.c.h.b16 %v2706
        %v5032 = vunpack.c.l.b16 %v2707
        %v5033 = vunpack.c.h.b16 %v2707
        %v5034 = vunpack.c.l.b16 %v2708
        %v5035 = vunpack.c.h.b16 %v2708
        %v5036 = vunpack.c.l.b16 %v2709
        %v5037 = vunpack.c.h.b16 %v2709
        %v5038 = vunpack.c.l.b16 %v2710
        %v5039 = vunpack.c.h.b16 %v2710
        %v5040 = vunpack.c.l.b16 %v2711
        %v5041 = vunpack.c.h.b16 %v2711
        %v5042 = vunpack.c.l.b16 %v2712
        %v5043 = vunpack.c.h.b16 %v2712
        %v5044 = vunpack.c.l.b16 %v2713
        %v5045 = vunpack.c.h.b16 %v2713
        %v5046 = vunpack.c.l.b16 %v2714
        %v5047 = vunpack.c.h.b16 %v2714
        %v5048 = vunpack.c.l.b16 %v2715
        %v5049 = vunpack.c.h.b16 %v2715
        %v5050 = vunpack.c.l.b16 %v2716
        %v5051 = vunpack.c.h.b16 %v2716
        %v5052 = vunpack.c.l.b16 %v2717
        %v5053 = vunpack.c.h.b16 %v2717
        %v5054 = vunpack.c.l.b16 %v2718
        %v5055 = vunpack.c.h.b16 %v2718
        %v5056 = vunpack.c.l.b16 %v2719
        %v5057 = vunpack.c.h.b16 %v2719
        %v5058 = vunpack.c.l.b16 %v2720
        %v5059 = vunpack.c.h.b16 %v2720
        %v5060 = vunpack.c.l.b16 %v2721
        %v5061 = vunpack.c.h.b16 %v2721
        %v5062 = vunpack.c.l.b16 %v2722
        %v5063 = vunpack.c.h.b16 %v2722
        %v5064 = vunpack.c.l.b16 %v2723
        %v5065 = vunpack.c.h.b16 %v2723
        %v5066 = vunpack.c.l.b16 %v2724
        %v5067 = vunpack.c.h.b16 %v2724
        %v5068 = vunpack.c.l.b16 %v2725
        %v5069 = vunpack.c.h.b16 %v2725
        %v5070 = vunpack.c.l.b16 %v2726
        %v5071 = vunpack.c.h.b16 %v2726
        %v5072 = vunpack.c.l.b16 %v2727
        %v5073 = vunpack.c.h.b16 %v2727
        %v5074 = vunpack.c.l.b16 %v2728
        %v5075 = vunpack.c.h.b16 %v2728
        %v5076 = vunpack.c.l.b16 %v2729
        %v5077 = vunpack.c.h.b16 %v2729
        %v5078 = vunpack.c.l.b16 %v2730
        %v5079 = vunpack.c.h.b16 %v2730
        %v5080 = vunpack.c.l.b16 %v2731
        %v5081 = vunpack.c.h.b16 %v2731
        %v5082 = vunpack.c.l.b16 %v2732
        %v5083 = vunpack.c.h.b16 %v2732
        %v5084 = vunpack.c.l.b16 %v2733
        %v5085 = vunpack.c.h.b16 %v2733
        %v5086 = vunpack.c.l.b16 %v2734
        %v5087 = vunpack.c.h.b16 %v2734
        %v5088 = vunpack.c.l.b16 %v2735
        %v5089 = vunpack.c.h.b16 %v2735
        %v5090 = vunpack.c.l.b16 %v2736
        %v5091 = vunpack.c.h.b16 %v2736
        %v5092 = vunpack.c.l.b16 %v2737
        %v5093 = vunpack.c.h.b16 %v2737
        %v5094 = vunpack.c.l.b16 %v2738
        %v5095 = vunpack.c.h.b16 %v2738
        %v5096 = vunpack.c.l.b16 %v2739
        %v5097 = vunpack.c.h.b16 %v2739
        %v5098 = vunpack.c.l.b16 %v2740
        %v5099 = vunpack.c.h.b16 %v2740
        %v5100 = vunpack.c.l.b16 %v2741
        %v5101 = vunpack.c.h.b16 %v2741
        %v5102 = vunpack.c.l.b16 %v2742
        %v5103 = vunpack.c.h.b16 %v2742
        %v5104 = vunpack.c.l.b16 %v2743
        %v5105 = vunpack.c.h.b16 %v2743
        %v5106 = vunpack.c.l.b16 %v2744
        %v5107 = vunpack.c.h.b16 %v2744
        %v5108 = vunpack.c.l.b16 %v2745
        %v5109 = vunpack.c.h.b16 %v2745
        %v5110 = vunpack.c.l.b16 %v2746
        %v5111 = vunpack.c.h.b16 %v2746
        %v5112 = vunpack.c.l.b16 %v2747
        %v5113 = vunpack.c.h.b16 %v2747
        %v5114 = vunpack.c.l.b16 %v2748
        %v5115 = vunpack.c.h.b16 %v2748
        %v5116 = vunpack.c.l.b16 %v2749
        %v5117 = vunpack.c.h.b16 %v2749
        %v5118 = vunpack.c.l.b16 %v2750
        %v5119 = vunpack.c.h.b16 %v2750
        %v5120 = vunpack.c.l.b16 %v2751
        %v5121 = vunpack.c.h.b16 %v2751
        %v5122 = vunpack.c.l.b16 %v2752
        %v5123 = vunpack.c.h.b16 %v2752
        %v5124 = vunpack.c.l.b16 %v2753
        %v5125 = vunpack.c.h.b16 %v2753
        %v5126 = vunpack.c.l.b16 %v2754
        %v5127 = vunpack.c.h.b16 %v2754
        %v5128 = vunpack.c.l.b16 %v2755
        %v5129 = vunpack.c.h.b16 %v2755
        %v5130 = vunpack.c.l.b16 %v2756
        %v5131 = vunpack.c.h.b16 %v2756
        %v5132 = vunpack.c.l.b16 %v2757
        %v5133 = vunpack.c.h.b16 %v2757
        %v5134 = vunpack.c.l.b16 %v2758
        %v5135 = vunpack.c.h.b16 %v2758
        %v5136 = vunpack.c.l.b16 %v2759
        %v5137 = vunpack.c.h.b16 %v2759
        %v5138 = vunpack.c.l.b16 %v2760
        %v5139 = vunpack.c.h.b16 %v2760
        %v5140 = vunpack.c.l.b16 %v2761
        %v5141 = vunpack.c.h.b16 %v2761
        %v5142 = vunpack.c.l.b16 %v2762
        %v5143 = vunpack.c.h.b16 %v2762
        %v5144 = vunpack.c.l.b16 %v2763
        %v5145 = vunpack.c.h.b16 %v2763
        %v5146 = vunpack.c.l.b16 %v2764
        %v5147 = vunpack.c.h.b16 %v2764
        %v5148 = vunpack.c.l.b16 %v2765
        %v5149 = vunpack.c.h.b16 %v2765
        %v5150 = vunpack.c.l.b16 %v2766
        %v5151 = vunpack.c.h.b16 %v2766
        %v5152 = vunpack.c.l.b16 %v2767
        %v5153 = vunpack.c.h.b16 %v2767
        %v5154 = vunpack.c.l.b16 %v2768
        %v5155 = vunpack.c.h.b16 %v2768
        %v5156 = vunpack.c.l.b16 %v2769
        %v5157 = vunpack.c.h.b16 %v2769
        %v5158 = vunpack.c.l.b16 %v2770
        %v5159 = vunpack.c.h.b16 %v2770
        %v5160 = vunpack.c.l.b16 %v2771
        %v5161 = vunpack.c.h.b16 %v2771
        %v5162 = vunpack.c.l.b16 %v2772
        %v5163 = vunpack.c.h.b16 %v2772
        %v5164 = vunpack.c.l.b16 %v2773
        %v5165 = vunpack.c.h.b16 %v2773
        %v5166 = vunpack.c.l.b16 %v2774
        %v5167 = vunpack.c.h.b16 %v2774
        %v5168 = vunpack.c.l.b16 %v2775
        %v5169 = vunpack.c.h.b16 %v2775
        %v5170 = vunpack.c.l.b16 %v2776
        %v5171 = vunpack.c.h.b16 %v2776
        %v5172 = vunpack.c.l.b16 %v2777
        %v5173 = vunpack.c.h.b16 %v2777
        %v5174 = vunpack.c.l.b16 %v2778
        %v5175 = vunpack.c.h.b16 %v2778
        %v5176 = vunpack.c.l.b16 %v2779
        %v5177 = vunpack.c.h.b16 %v2779
        %v5178 = vunpack.c.l.b16 %v2780
        %v5179 = vunpack.c.h.b16 %v2780
        %v5180 = vunpack.c.l.b16 %v2781
        %v5181 = vunpack.c.h.b16 %v2781
        %v5182 = vunpack.c.l.b16 %v2782
        %v5183 = vunpack.c.h.b16 %v2782
        %v5184 = vunpack.c.l.b16 %v2783
        %v5185 = vunpack.c.h.b16 %v2783
        %v5186 = vunpack.c.l.b16 %v2784
        %v5187 = vunpack.c.h.b16 %v2784
        %v5188 = vunpack.c.l.b16 %v2785
        %v5189 = vunpack.c.h.b16 %v2785
        %v5190 = vunpack.c.l.b16 %v2786
        %v5191 = vunpack.c.h.b16 %v2786
        %v5192 = vunpack.c.l.b16 %v2787
        %v5193 = vunpack.c.h.b16 %v2787
        %v5194 = vunpack.c.l.b16 %v2788
        %v5195 = vunpack.c.h.b16 %v2788
        %v5196 = vunpack.c.l.b16 %v2789
        %v5197 = vunpack.c.h.b16 %v2789
        %v5198 = vunpack.c.l.b16 %v2790
        %v5199 = vunpack.c.h.b16 %v2790
        %v5200 = vunpack.c.l.b16 %v2791
        %v5201 = vunpack.c.h.b16 %v2791
        %v5202 = vunpack.c.l.b16 %v2792
        %v5203 = vunpack.c.h.b16 %v2792
        %v5204 = vunpack.c.l.b16 %v2793
        %v5205 = vunpack.c.h.b16 %v2793
        %v5206 = vunpack.c.l.b16 %v2794
        %v5207 = vunpack.c.h.b16 %v2794
        %v5208 = vunpack.c.l.b16 %v2795
        %v5209 = vunpack.c.h.b16 %v2795
        %v5210 = vunpack.c.l.b16 %v2796
        %v5211 = vunpack.c.h.b16 %v2796
        %v5212 = vunpack.c.l.b16 %v2797
        %v5213 = vunpack.c.h.b16 %v2797
        %v5214 = vunpack.c.l.b16 %v2798
        %v5215 = vunpack.c.h.b16 %v2798
        %v5216 = vunpack.c.l.b16 %v2799
        %v5217 = vunpack.c.h.b16 %v2799
        %v5218 = vunpack.c.l.b16 %v2800
        %v5219 = vunpack.c.h.b16 %v2800
        %v5220 = vunpack.c.l.b16 %v2801
        %v5221 = vunpack.c.h.b16 %v2801
        %v5222 = vunpack.c.l.b16 %v2802
        %v5223 = vunpack.c.h.b16 %v2802
        %v5224 = vunpack.c.l.b16 %v2803
        %v5225 = vunpack.c.h.b16 %v2803
        %v5226 = vunpack.c.l.b16 %v2804
        %v5227 = vunpack.c.h.b16 %v2804
        %v5228 = vunpack.c.l.b16 %v2805
        %v5229 = vunpack.c.h.b16 %v2805
        %v5230 = vunpack.c.l.b16 %v2806
        %v5231 = vunpack.c.h.b16 %v2806
        %v5232 = vunpack.c.l.b16 %v2807
        %v5233 = vunpack.c.h.b16 %v2807
        %v5234 = vunpack.c.l.b16 %v2808
        %v5235 = vunpack.c.h.b16 %v2808
        %v5236 = vunpack.c.l.b16 %v2809
        %v5237 = vunpack.c.h.b16 %v2809
        %v5238 = vunpack.c.l.b16 %v2810
        %v5239 = vunpack.c.h.b16 %v2810
        %v5240 = vunpack.c.l.b16 %v2811
        %v5241 = vunpack.c.h.b16 %v2811
        %v5242 = vunpack.c.l.b16 %v2812
        %v5243 = vunpack.c.h.b16 %v2812
        %v5244 = vunpack.c.l.b16 %v2813
        %v5245 = vunpack.c.h.b16 %v2813
        %v5246 = vunpack.c.l.b16 %v2814
        %v5247 = vunpack.c.h.b16 %v2814
        %v5248 = vunpack.c.l.b16 %v2815
        %v5249 = vunpack.c.h.b16 %v2815
        %v5250 = vunpack.c.l.b16 %v2816
        %v5251 = vunpack.c.h.b16 %v2816
        %v5252 = vunpack.c.l.b16 %v2817
        %v5253 = vunpack.c.h.b16 %v2817
        %v5254 = vunpack.c.l.b16 %v2818
        %v5255 = vunpack.c.h.b16 %v2818
        %v5256 = vunpack.c.l.b16 %v2819
        %v5257 = vunpack.c.h.b16 %v2819
        %v5258 = vunpack.c.l.b16 %v2820
        %v5259 = vunpack.c.h.b16 %v2820
        %v5260 = vunpack.c.l.b16 %v2821
        %v5261 = vunpack.c.h.b16 %v2821
        %v5262 = vunpack.c.l.b16 %v2822
        %v5263 = vunpack.c.h.b16 %v2822
        %v5264 = vunpack.c.l.b16 %v2823
        %v5265 = vunpack.c.h.b16 %v2823
        %v5266 = vunpack.c.l.b16 %v2824
        %v5267 = vunpack.c.h.b16 %v2824
        %v5268 = vunpack.c.l.b16 %v2825
        %v5269 = vunpack.c.h.b16 %v2825
        %v5270 = vunpack.c.l.b16 %v2826
        %v5271 = vunpack.c.h.b16 %v2826
        %v5272 = vunpack.c.l.b16 %v2827
        %v5273 = vunpack.c.h.b16 %v2827
        %v5274 = vunpack.c.l.b16 %v2828
        %v5275 = vunpack.c.h.b16 %v2828
        %v5276 = vunpack.c.l.b16 %v2829
        %v5277 = vunpack.c.h.b16 %v2829
        %v5278 = vunpack.c.l.b16 %v2830
        %v5279 = vunpack.c.h.b16 %v2830
        %v5280 = vunpack.c.l.b16 %v2831
        %v5281 = vunpack.c.h.b16 %v2831
        %v5282 = vunpack.c.l.b16 %v2832
        %v5283 = vunpack.c.h.b16 %v2832
        %v5284 = vunpack.c.l.b16 %v2833
        %v5285 = vunpack.c.h.b16 %v2833
        %v5286 = vunpack.c.l.b16 %v2834
        %v5287 = vunpack.c.h.b16 %v2834
        %v5288 = vunpack.c.l.b16 %v2835
        %v5289 = vunpack.c.h.b16 %v2835
        %v5290 = vunpack.c.l.b16 %v2836
        %v5291 = vunpack.c.h.b16 %v2836
        %v5292 = vunpack.c.l.b16 %v2837
        %v5293 = vunpack.c.h.b16 %v2837
        %v5294 = vunpack.c.l.b16 %v2838
        %v5295 = vunpack.c.h.b16 %v2838
        %v5296 = vunpack.c.l.b16 %v2839
        %v5297 = vunpack.c.h.b16 %v2839
        %v5298 = vunpack.c.l.b16 %v2840
        %v5299 = vunpack.c.h.b16 %v2840
        %v5300 = vunpack.c.l.b16 %v2841
        %v5301 = vunpack.c.h.b16 %v2841
        %v5302 = vunpack.c.l.b16 %v2842
        %v5303 = vunpack.c.h.b16 %v2842
        %v5304 = vunpack.c.l.b16 %v2843
        %v5305 = vunpack.c.h.b16 %v2843
        %v5306 = vunpack.c.l.b16 %v2844
        %v5307 = vunpack.c.h.b16 %v2844
        %v5308 = vunpack.c.l.b16 %v2845
        %v5309 = vunpack.c.h.b16 %v2845
        %v5310 = vunpack.c.l.b16 %v2846
        %v5311 = vunpack.c.h.b16 %v2846
        %v5312 = vunpack.c.l.b16 %v2847
        %v5313 = vunpack.c.h.b16 %v2847
        %v5314 = vunpack.c.l.b16 %v2848
        %v5315 = vunpack.c.h.b16 %v2848
        %v5316 = vunpack.c.l.b16 %v2849
        %v5317 = vunpack.c.h.b16 %v2849
        %v5318 = vunpack.c.l.b16 %v2850
        %v5319 = vunpack.c.h.b16 %v2850
        %v5320 = vunpack.c.l.b16 %v2851
        %v5321 = vunpack.c.h.b16 %v2851
        %v5322 = vunpack.c.l.b16 %v2852
        %v5323 = vunpack.c.h.b16 %v2852
        %v5324 = vunpack.c.l.b16 %v2853
        %v5325 = vunpack.c.h.b16 %v2853
        %v5326 = vunpack.c.l.b16 %v2854
        %v5327 = vunpack.c.h.b16 %v2854
        %v5328 = vunpack.c.l.b16 %v2855
        %v5329 = vunpack.c.h.b16 %v2855
        %v5330 = vunpack.c.l.b16 %v2856
        %v5331 = vunpack.c.h.b16 %v2856
        %v5332 = vunpack.c.l.b16 %v2857
        %v5333 = vunpack.c.h.b16 %v2857
        %v5334 = vunpack.c.l.b16 %v2858
        %v5335 = vunpack.c.h.b16 %v2858
        %v5336 = vunpack.c.l.b16 %v2859
        %v5337 = vunpack.c.h.b16 %v2859
        %v5338 = vunpack.c.l.b16 %v2860
        %v5339 = vunpack.c.h.b16 %v2860
        %v5340 = vunpack.c.l.b16 %v2861
        %v5341 = vunpack.c.h.b16 %v2861
        %v5342 = vunpack.c.l.b16 %v2862
        %v5343 = vunpack.c.h.b16 %v2862
        %v5344 = vunpack.c.l.b16 %v2863
        %v5345 = vunpack.c.h.b16 %v2863
        %v5346 = vunpack.c.l.b16 %v2864
        %v5347 = vunpack.c.h.b16 %v2864
        %v5348 = vunpack.c.l.b16 %v2865
        %v5349 = vunpack.c.h.b16 %v2865
        %v5350 = vunpack.c.l.b16 %v2866
        %v5351 = vunpack.c.h.b16 %v2866
        %v5352 = vunpack.c.l.b16 %v2867
        %v5353 = vunpack.c.h.b16 %v2867
        %v5354 = vunpack.c.l.b16 %v2868
        %v5355 = vunpack.c.h.b16 %v2868
        %v5356 = vunpack.c.l.b16 %v2869
        %v5357 = vunpack.c.h.b16 %v2869
        %v5358 = vunpack.c.l.b16 %v2870
        %v5359 = vunpack.c.h.b16 %v2870
        %v5360 = vunpack.c.l.b16 %v2871
        %v5361 = vunpack.c.h.b16 %v2871
        %v5362 = vunpack.c.l.b16 %v2872
        %v5363 = vunpack.c.h.b16 %v2872
        %v5364 = vunpack.c.l.b16 %v2873
        %v5365 = vunpack.c.h.b16 %v2873
        %v5366 = vunpack.c.l.b16 %v2874
        %v5367 = vunpack.c.h.b16 %v2874
        %v5368 = vunpack.c.l.b16 %v2875
        %v5369 = vunpack.c.h.b16 %v2875
        %v5370 = vunpack.c.l.b16 %v2876
        %v5371 = vunpack.c.h.b16 %v2876
        %v5372 = vunpack.c.l.b16 %v2877
        %v5373 = vunpack.c.h.b16 %v2877
        %v5374 = vunpack.c.l.b16 %v2878
        %v5375 = vunpack.c.h.b16 %v2878
        %v5376 = vunpack.c.l.b16 %v2879
        %v5377 = vunpack.c.h.b16 %v2879
        %v5378 = vunpack.c.l.b16 %v2880
        %v5379 = vunpack.c.h.b16 %v2880
        %v5380 = vunpack.c.l.b16 %v2881
        %v5381 = vunpack.c.h.b16 %v2881
        %v5382 = vunpack.c.l.b16 %v2882
        %v5383 = vunpack.c.h.b16 %v2882
        %v5384 = vunpack.c.l.b16 %v2883
        %v5385 = vunpack.c.h.b16 %v2883
        %v5386 = vunpack.c.l.b16 %v2884
        %v5387 = vunpack.c.h.b16 %v2884
        %v5388 = vunpack.c.l.b16 %v2885
        %v5389 = vunpack.c.h.b16 %v2885
        %v5390 = vunpack.c.l.b16 %v2886
        %v5391 = vunpack.c.h.b16 %v2886
        %v5392 = vunpack.c.l.b16 %v2887
        %v5393 = vunpack.c.h.b16 %v2887
        %v5394 = vunpack.c.l.b16 %v2888
        %v5395 = vunpack.c.h.b16 %v2888
        %v5396 = vunpack.c.l.b16 %v2889
        %v5397 = vunpack.c.h.b16 %v2889
        %v5398 = vunpack.c.l.b16 %v2890
        %v5399 = vunpack.c.h.b16 %v2890
        %v5400 = vunpack.c.l.b16 %v2891
        %v5401 = vunpack.c.h.b16 %v2891
        %v5402 = vunpack.c.l.b16 %v2892
        %v5403 = vunpack.c.h.b16 %v2892
        %v5404 = vunpack.c.l.b16 %v2893
        %v5405 = vunpack.c.h.b16 %v2893
        %v5406 = vunpack.c.l.b16 %v2894
        %v5407 = vunpack.c.h.b16 %v2894
        %v5408 = vunpack.c.l.b16 %v2895
        %v5409 = vunpack.c.h.b16 %v2895
        %v5410 = vunpack.c.l.b16 %v2896
        %v5411 = vunpack.c.h.b16 %v2896
        %v5412 = vunpack.c.l.b16 %v2897
        %v5413 = vunpack.c.h.b16 %v2897
        %v5414 = vunpack.c.l.b16 %v2898
        %v5415 = vunpack.c.h.b16 %v2898
        %v5416 = vunpack.c.l.b16 %v2899
        %v5417 = vunpack.c.h.b16 %v2899
        %v5418 = vunpack.c.l.b16 %v2900
        %v5419 = vunpack.c.h.b16 %v2900
        %v5420 = vunpack.c.l.b16 %v2901
        %v5421 = vunpack.c.h.b16 %v2901
        %v5422 = vunpack.c.l.b16 %v2902
        %v5423 = vunpack.c.h.b16 %v2902
        %v5424 = vunpack.c.l.b16 %v2903
        %v5425 = vunpack.c.h.b16 %v2903
        %v5426 = vunpack.c.l.b16 %v2904
        %v5427 = vunpack.c.h.b16 %v2904
        %v5428 = vunpack.c.l.b16 %v2905
        %v5429 = vunpack.c.h.b16 %v2905
        %v5430 = vunpack.c.l.b16 %v2906
        %v5431 = vunpack.c.h.b16 %v2906
        %v5432 = vunpack.c.l.b16 %v2907
        %v5433 = vunpack.c.h.b16 %v2907
        %v5434 = vunpack.c.l.b16 %v2908
        %v5435 = vunpack.c.h.b16 %v2908
        %v5436 = vunpack.c.l.b16 %v2909
        %v5437 = vunpack.c.h.b16 %v2909
        %v5438 = vunpack.c.l.b16 %v2910
        %v5439 = vunpack.c.h.b16 %v2910
        %v5440 = vunpack.c.l.b16 %v2911
        %v5441 = vunpack.c.h.b16 %v2911
        %v5442 = vunpack.c.l.b16 %v2912
        %v5443 = vunpack.c.h.b16 %v2912
        %v5444 = vunpack.c.l.b16 %v2913
        %v5445 = vunpack.c.h.b16 %v2913
        %v5446 = vunpack.c.l.b16 %v2914
        %v5447 = vunpack.c.h.b16 %v2914
        %v5448 = vunpack.c.l.b16 %v2915
        %v5449 = vunpack.c.h.b16 %v2915
        %v5450 = vunpack.c.l.b16 %v2916
        %v5451 = vunpack.c.h.b16 %v2916
        %v5452 = vunpack.c.l.b16 %v2917
        %v5453 = vunpack.c.h.b16 %v2917
        %v5454 = vunpack.c.l.b16 %v2918
        %v5455 = vunpack.c.h.b16 %v2918
        %v5456 = vunpack.c.l.b16 %v2919
        %v5457 = vunpack.c.h.b16 %v2919
        %v5458 = vunpack.c.l.b16 %v2920
        %v5459 = vunpack.c.h.b16 %v2920
        %v5460 = vunpack.c.l.b16 %v2921
        %v5461 = vunpack.c.h.b16 %v2921
        %v5462 = vunpack.c.l.b16 %v2922
        %v5463 = vunpack.c.h.b16 %v2922
        %v5464 = vunpack.c.l.b16 %v2923
        %v5465 = vunpack.c.h.b16 %v2923
        %v5466 = vunpack.c.l.b16 %v2924
        %v5467 = vunpack.c.h.b16 %v2924
        %v5468 = vunpack.c.l.b16 %v2925
        %v5469 = vunpack.c.h.b16 %v2925
        %v5470 = vunpack.c.l.b16 %v2926
        %v5471 = vunpack.c.h.b16 %v2926
        %v5472 = vunpack.c.l.b16 %v2927
        %v5473 = vunpack.c.h.b16 %v2927
        %v5474 = vunpack.c.l.b16 %v2928
        %v5475 = vunpack.c.h.b16 %v2928
        %v5476 = vunpack.c.l.b16 %v2929
        %v5477 = vunpack.c.h.b16 %v2929
        %v5478 = vunpack.c.l.b16 %v2930
        %v5479 = vunpack.c.h.b16 %v2930
        %v5480 = vunpack.c.l.b16 %v2931
        %v5481 = vunpack.c.h.b16 %v2931
        %v5482 = vunpack.c.l.b16 %v2932
        %v5483 = vunpack.c.h.b16 %v2932
        %v5484 = vunpack.c.l.b16 %v2933
        %v5485 = vunpack.c.h.b16 %v2933
        %v5486 = vunpack.c.l.b16 %v2934
        %v5487 = vunpack.c.h.b16 %v2934
        %v5488 = vunpack.c.l.b16 %v2935
        %v5489 = vunpack.c.h.b16 %v2935
        %v5490 = vunpack.c.l.b16 %v2936
        %v5491 = vunpack.c.h.b16 %v2936
        %v5492 = vunpack.c.l.b16 %v2937
        %v5493 = vunpack.c.h.b16 %v2937
        %v5494 = vunpack.c.l.b16 %v2938
        %v5495 = vunpack.c.h.b16 %v2938
        %v5496 = vunpack.c.l.b16 %v2939
        %v5497 = vunpack.c.h.b16 %v2939
        %v5498 = vunpack.c.l.b16 %v2940
        %v5499 = vunpack.c.h.b16 %v2940
        %v5500 = vunpack.c.l.b16 %v2941
        %v5501 = vunpack.c.h.b16 %v2941
        %v5502 = vunpack.c.l.b16 %v2942
        %v5503 = vunpack.c.h.b16 %v2942
        %v5504 = vunpack.c.l.b16 %v2943
        %v5505 = vunpack.c.h.b16 %v2943
        %v5506 = vunpack.c.l.b16 %v2944
        %v5507 = vunpack.c.h.b16 %v2944
        %v5508 = vunpack.c.l.b16 %v2945
        %v5509 = vunpack.c.h.b16 %v2945
        %v5510 = vunpack.c.l.b16 %v2946
        %v5511 = vunpack.c.h.b16 %v2946
        %v5512 = vunpack.c.l.b16 %v2947
        %v5513 = vunpack.c.h.b16 %v2947
        %v5514 = vunpack.c.l.b16 %v2948
        %v5515 = vunpack.c.h.b16 %v2948
        %v5516 = vunpack.c.l.b16 %v2949
        %v5517 = vunpack.c.h.b16 %v2949
        %v5518 = vunpack.c.l.b16 %v2950
        %v5519 = vunpack.c.h.b16 %v2950
        %v5520 = vunpack.c.l.b16 %v2951
        %v5521 = vunpack.c.h.b16 %v2951
        %v5522 = vunpack.c.l.b16 %v2952
        %v5523 = vunpack.c.h.b16 %v2952
        %v5524 = vunpack.c.l.b16 %v2953
        %v5525 = vunpack.c.h.b16 %v2953
        %v5526 = vunpack.c.l.b16 %v2954
        %v5527 = vunpack.c.h.b16 %v2954
        %v5528 = vunpack.c.l.b16 %v2955
        %v5529 = vunpack.c.h.b16 %v2955
        %v5530 = vunpack.c.l.b16 %v2956
        %v5531 = vunpack.c.h.b16 %v2956
        %v5532 = vunpack.c.l.b16 %v2957
        %v5533 = vunpack.c.h.b16 %v2957
        %v5534 = vunpack.c.l.b16 %v2958
        %v5535 = vunpack.c.h.b16 %v2958
        %v5536 = vunpack.c.l.b16 %v2959
        %v5537 = vunpack.c.h.b16 %v2959
        %v5538 = vunpack.c.l.b16 %v2960
        %v5539 = vunpack.c.h.b16 %v2960
        %v5540 = vunpack.c.l.b16 %v2961
        %v5541 = vunpack.c.h.b16 %v2961
        %v5542 = vunpack.c.l.b16 %v2962
        %v5543 = vunpack.c.h.b16 %v2962
        %v5544 = vunpack.c.l.b16 %v2963
        %v5545 = vunpack.c.h.b16 %v2963
        %v5546 = vunpack.c.l.b16 %v2964
        %v5547 = vunpack.c.h.b16 %v2964
        %v5548 = vunpack.c.l.b16 %v2965
        %v5549 = vunpack.c.h.b16 %v2965
        %v5550 = vunpack.c.l.b16 %v2966
        %v5551 = vunpack.c.h.b16 %v2966
        %v5552 = vunpack.c.l.b16 %v2967
        %v5553 = vunpack.c.h.b16 %v2967
        %v5554 = vunpack.c.l.b16 %v2968
        %v5555 = vunpack.c.h.b16 %v2968
        %v5556 = vunpack.c.l.b16 %v2969
        %v5557 = vunpack.c.h.b16 %v2969
        %v5558 = vunpack.c.l.b16 %v2970
        %v5559 = vunpack.c.h.b16 %v2970
        %v5560 = vunpack.c.l.b16 %v2971
        %v5561 = vunpack.c.h.b16 %v2971
        %v5562 = vunpack.c.l.b16 %v2972
        %v5563 = vunpack.c.h.b16 %v2972
        %v5564 = vunpack.c.l.b16 %v2973
        %v5565 = vunpack.c.h.b16 %v2973
        %v5566 = vunpack.c.l.b16 %v2974
        %v5567 = vunpack.c.h.b16 %v2974
        %v5568 = vunpack.c.l.b16 %v2975
        %v5569 = vunpack.c.h.b16 %v2975
        %v5570 = vunpack.c.l.b16 %v2976
        %v5571 = vunpack.c.h.b16 %v2976
        %v5572 = vunpack.c.l.b16 %v2977
        %v5573 = vunpack.c.h.b16 %v2977
        %v5574 = vunpack.c.l.b16 %v2978
        %v5575 = vunpack.c.h.b16 %v2978
        %v5576 = vunpack.c.l.b16 %v2979
        %v5577 = vunpack.c.h.b16 %v2979
        %v5578 = vunpack.c.l.b16 %v2980
        %v5579 = vunpack.c.h.b16 %v2980
        %v5580 = vunpack.c.l.b16 %v2981
        %v5581 = vunpack.c.h.b16 %v2981
        %v5582 = vunpack.c.l.b16 %v2982
        %v5583 = vunpack.c.h.b16 %v2982
        %v5584 = vunpack.c.l.b16 %v2983
        %v5585 = vunpack.c.h.b16 %v2983
        %v5586 = vunpack.c.l.b16 %v2984
        %v5587 = vunpack.c.h.b16 %v2984
        %v5588 = vunpack.c.l.b16 %v2985
        %v5589 = vunpack.c.h.b16 %v2985
        %v5590 = vunpack.c.l.b16 %v2986
        %v5591 = vunpack.c.h.b16 %v2986
        %v5592 = vunpack.c.l.b16 %v2987
        %v5593 = vunpack.c.h.b16 %v2987
        %v5594 = vunpack.c.l.b16 %v2988
        %v5595 = vunpack.c.h.b16 %v2988
        %v5596 = vunpack.c.l.b16 %v2989
        %v5597 = vunpack.c.h.b16 %v2989
        %v5598 = vunpack.c.l.b16 %v2990
        %v5599 = vunpack.c.h.b16 %v2990
        %v5600 = vunpack.c.l.b16 %v2991
        %v5601 = vunpack.c.h.b16 %v2991
        %v5602 = vunpack.c.l.b16 %v2992
        %v5603 = vunpack.c.h.b16 %v2992
        %v5604 = vunpack.c.l.b16 %v2993
        %v5605 = vunpack.c.h.b16 %v2993
        %v5606 = vunpack.c.l.b16 %v2994
        %v5607 = vunpack.c.h.b16 %v2994
        %v5608 = vunpack.c.l.b16 %v2995
        %v5609 = vunpack.c.h.b16 %v2995
        %v5610 = vunpack.c.l.b16 %v2996
        %v5611 = vunpack.c.h.b16 %v2996
        %v5612 = vunpack.c.l.b16 %v2997
        %v5613 = vunpack.c.h.b16 %v2997
        %v5614 = vunpack.c.l.b16 %v2998
        %v5615 = vunpack.c.h.b16 %v2998
        %v5616 = vunpack.c.l.b16 %v2999
        %v5617 = vunpack.c.h.b16 %v2999
        %v5618 = vunpack.c.l.b16 %v3000
        %v5619 = vunpack.c.h.b16 %v3000
        %v5620 = vunpack.c.l.b16 %v3001
        %v5621 = vunpack.c.h.b16 %v3001
        %v5622 = vunpack.c.l.b16 %v3002
        %v5623 = vunpack.c.h.b16 %v3002
        %v5624 = vunpack.c.l.b16 %v3003
        %v5625 = vunpack.c.h.b16 %v3003
        %v5626 = vunpack.c.l.b16 %v3004
        %v5627 = vunpack.c.h.b16 %v3004
        %v5628 = vunpack.c.l.b16 %v3005
        %v5629 = vunpack.c.h.b16 %v3005
        %v5630 = vunpack.c.l.b16 %v3006
        %v5631 = vunpack.c.h.b16 %v3006
        %v5632 = vunpack.c.l.b16 %v3007
        %v5633 = vunpack.c.h.b16 %v3007
        %v5634 = vunpack.c.l.b16 %v3008
        %v5635 = vunpack.c.h.b16 %v3008
        %v5636 = vunpack.c.l.b16 %v3009
        %v5637 = vunpack.c.h.b16 %v3009
        %v5638 = vunpack.c.l.b16 %v3010
        %v5639 = vunpack.c.h.b16 %v3010
        %v5640 = vunpack.c.l.b16 %v3011
        %v5641 = vunpack.c.h.b16 %v3011
        %v5642 = vunpack.c.l.b16 %v3012
        %v5643 = vunpack.c.h.b16 %v3012
        %v5644 = vunpack.c.l.b16 %v3013
        %v5645 = vunpack.c.h.b16 %v3013
        %v5646 = vunpack.c.l.b16 %v3014
        %v5647 = vunpack.c.h.b16 %v3014
        %v5648 = vunpack.c.l.b16 %v3015
        %v5649 = vunpack.c.h.b16 %v3015
        %v5650 = vunpack.c.l.b16 %v3016
        %v5651 = vunpack.c.h.b16 %v3016
        %v5652 = vunpack.c.l.b16 %v3017
        %v5653 = vunpack.c.h.b16 %v3017
        %v5654 = vunpack.c.l.b16 %v3018
        %v5655 = vunpack.c.h.b16 %v3018
        %v5656 = vunpack.c.l.b16 %v3019
        %v5657 = vunpack.c.h.b16 %v3019
        %v5658 = vunpack.c.l.b16 %v3020
        %v5659 = vunpack.c.h.b16 %v3020
        %v5660 = vunpack.c.l.b16 %v3021
        %v5661 = vunpack.c.h.b16 %v3021
        %v5662 = vunpack.c.l.b16 %v3022
        %v5663 = vunpack.c.h.b16 %v3022
        %v5664 = vunpack.c.l.b16 %v3023
        %v5665 = vunpack.c.h.b16 %v3023
        %v5666 = vunpack.c.l.b16 %v3024
        %v5667 = vunpack.c.h.b16 %v3024
        %v5668 = vunpack.c.l.b16 %v3025
        %v5669 = vunpack.c.h.b16 %v3025
        %v5670 = vunpack.c.l.b16 %v3026
        %v5671 = vunpack.c.h.b16 %v3026
        %v5672 = vunpack.c.l.b16 %v3027
        %v5673 = vunpack.c.h.b16 %v3027
        %v5674 = vunpack.c.l.b16 %v3028
        %v5675 = vunpack.c.h.b16 %v3028
        %v5676 = vunpack.c.l.b16 %v3029
        %v5677 = vunpack.c.h.b16 %v3029
        %v5678 = vunpack.c.l.b16 %v3030
        %v5679 = vunpack.c.h.b16 %v3030
        %v5680 = vunpack.c.l.b16 %v3031
        %v5681 = vunpack.c.h.b16 %v3031
        %v5682 = vunpack.c.l.b16 %v3032
        %v5683 = vunpack.c.h.b16 %v3032
        %v5684 = vunpack.c.l.b16 %v3033
        %v5685 = vunpack.c.h.b16 %v3033
        %v5686 = vunpack.c.l.b16 %v3034
        %v5687 = vunpack.c.h.b16 %v3034
        %v5688 = vunpack.c.l.b16 %v3035
        %v5689 = vunpack.c.h.b16 %v3035
        %v5690 = vunpack.c.l.b16 %v3036
        %v5691 = vunpack.c.h.b16 %v3036
        %v5692 = vunpack.c.l.b16 %v3037
        %v5693 = vunpack.c.h.b16 %v3037
        %v5694 = vunpack.c.l.b16 %v3038
        %v5695 = vunpack.c.h.b16 %v3038
        %v5696 = vunpack.c.l.b16 %v3039
        %v5697 = vunpack.c.h.b16 %v3039
        %v5698 = vunpack.c.l.b16 %v3040
        %v5699 = vunpack.c.h.b16 %v3040
        %v5700 = vunpack.c.l.b16 %v3041
        %v5701 = vunpack.c.h.b16 %v3041
        %v5702 = vunpack.c.l.b16 %v3042
        %v5703 = vunpack.c.h.b16 %v3042
        %v5704 = vunpack.c.l.b16 %v3043
        %v5705 = vunpack.c.h.b16 %v3043
        %v5706 = vunpack.c.l.b16 %v3044
        %v5707 = vunpack.c.h.b16 %v3044
        %v5708 = vunpack.c.l.b16 %v3045
        %v5709 = vunpack.c.h.b16 %v3045
        %v5710 = vunpack.c.l.b16 %v3046
        %v5711 = vunpack.c.h.b16 %v3046
        %v5712 = vunpack.c.l.b16 %v3047
        %v5713 = vunpack.c.h.b16 %v3047
        %v5714 = vunpack.c.l.b16 %v3048
        %v5715 = vunpack.c.h.b16 %v3048
        %v5716 = vunpack.c.l.b16 %v3049
        %v5717 = vunpack.c.h.b16 %v3049
        %v5718 = vunpack.c.l.b16 %v3050
        %v5719 = vunpack.c.h.b16 %v3050
        %v5720 = vunpack.c.l.b16 %v3051
        %v5721 = vunpack.c.h.b16 %v3051
        %v5722 = vunpack.c.l.b16 %v3052
        %v5723 = vunpack.c.h.b16 %v3052
        %v5724 = vunpack.c.l.b16 %v3053
        %v5725 = vunpack.c.h.b16 %v3053
        %v5726 = vunpack.c.l.b16 %v3054
        %v5727 = vunpack.c.h.b16 %v3054
        %v5728 = vunpack.c.l.b16 %v3055
        %v5729 = vunpack.c.h.b16 %v3055
        %v5730 = vunpack.c.l.b16 %v3056
        %v5731 = vunpack.c.h.b16 %v3056
        %v5732 = vunpack.c.l.b16 %v3057
        %v5733 = vunpack.c.h.b16 %v3057
        %v5734 = vunpack.c.l.b16 %v3058
        %v5735 = vunpack.c.h.b16 %v3058
        %v5736 = vunpack.c.l.b16 %v3059
        %v5737 = vunpack.c.h.b16 %v3059
        %v5738 = vunpack.c.l.b16 %v3060
        %v5739 = vunpack.c.h.b16 %v3060
        %v5740 = vunpack.c.l.b16 %v3061
        %v5741 = vunpack.c.h.b16 %v3061
        %v5742 = vunpack.c.l.b16 %v3062
        %v5743 = vunpack.c.h.b16 %v3062
        %v5744 = vunpack.c.l.b16 %v3063
        %v5745 = vunpack.c.h.b16 %v3063
        %v5746 = vunpack.c.l.b16 %v3064
        %v5747 = vunpack.c.h.b16 %v3064
        %v5748 = vunpack.c.l.b16 %v3065
        %v5749 = vunpack.c.h.b16 %v3065
        %v5750 = vunpack.c.l.b16 %v3066
        %v5751 = vunpack.c.h.b16 %v3066
        %v5752 = vunpack.c.l.b16 %v3067
        %v5753 = vunpack.c.h.b16 %v3067
        %v5754 = vunpack.c.l.b16 %v3068
        %v5755 = vunpack.c.h.b16 %v3068
        %v5756 = vunpack.c.l.b16 %v3069
        %v5757 = vunpack.c.h.b16 %v3069
        %v5758 = vunpack.c.l.b16 %v3070
        %v5759 = vunpack.c.h.b16 %v3070
        %v5760 = vunpack.c.l.b16 %v3071
        %v5761 = vunpack.c.h.b16 %v3071
        %v5762 = vunpack.c.l.b16 %v3072
        %v5763 = vunpack.c.h.b16 %v3072
        %v5764 = vunpack.c.l.b16 %v3073
        %v5765 = vunpack.c.h.b16 %v3073
        %v5766 = vunpack.c.l.b16 %v3074
        %v5767 = vunpack.c.h.b16 %v3074
        %v5768 = vunpack.c.l.b16 %v3075
        %v5769 = vunpack.c.h.b16 %v3075
        %v5770 = vunpack.c.l.b16 %v3076
        %v5771 = vunpack.c.h.b16 %v3076
        %v5772 = vunpack.c.l.b16 %v3077
        %v5773 = vunpack.c.h.b16 %v3077
        %v5774 = vunpack.c.l.b16 %v3078
        %v5775 = vunpack.c.h.b16 %v3078
        %v5776 = vunpack.c.l.b16 %v3079
        %v5777 = vunpack.c.h.b16 %v3079
        %v5778 = vunpack.c.l.b16 %v3080
        %v5779 = vunpack.c.h.b16 %v3080
        %v5780 = vunpack.c.l.b16 %v3081
        %v5781 = vunpack.c.h.b16 %v3081
        %v5782 = vunpack.c.l.b16 %v3082
        %v5783 = vunpack.c.h.b16 %v3082
        %v5784 = vunpack.c.l.b16 %v3083
        %v5785 = vunpack.c.h.b16 %v3083
        %v5786 = vunpack.c.l.b16 %v3084
        %v5787 = vunpack.c.h.b16 %v3084
        %v5788 = vunpack.c.l.b16 %v3085
        %v5789 = vunpack.c.h.b16 %v3085
        %v5790 = vunpack.c.l.b16 %v3086
        %v5791 = vunpack.c.h.b16 %v3086
        %v5792 = vunpack.c.l.b16 %v3087
        %v5793 = vunpack.c.h.b16 %v3087
        %v5794 = vunpack.c.l.b16 %v3088
        %v5795 = vunpack.c.h.b16 %v3088
        %v5796 = vunpack.c.l.b16 %v3089
        %v5797 = vunpack.c.h.b16 %v3089
        %v5798 = vunpack.c.l.b16 %v3090
        %v5799 = vunpack.c.h.b16 %v3090
        %v5800 = vunpack.c.l.b16 %v3091
        %v5801 = vunpack.c.h.b16 %v3091
        %v5802 = vunpack.c.l.b16 %v3092
        %v5803 = vunpack.c.h.b16 %v3092
        %v5804 = vunpack.c.l.b16 %v3093
        %v5805 = vunpack.c.h.b16 %v3093
        %v5806 = vunpack.c.l.b16 %v3094
        %v5807 = vunpack.c.h.b16 %v3094
        %v5808 = vunpack.c.l.b16 %v3095
        %v5809 = vunpack.c.h.b16 %v3095
        %v5810 = vunpack.c.l.b16 %v3096
        %v5811 = vunpack.c.h.b16 %v3096
        %v5812 = vunpack.c.l.b16 %v3097
        %v5813 = vunpack.c.h.b16 %v3097
        %v5814 = vunpack.c.l.b16 %v3098
        %v5815 = vunpack.c.h.b16 %v3098
        %v5816 = vunpack.c.l.b16 %v3099
        %v5817 = vunpack.c.h.b16 %v3099
        %v5818 = vunpack.c.l.b16 %v3100
        %v5819 = vunpack.c.h.b16 %v3100
        %v5820 = vunpack.c.l.b16 %v3101
        %v5821 = vunpack.c.h.b16 %v3101
        %v5822 = vunpack.c.l.b16 %v3102
        %v5823 = vunpack.c.h.b16 %v3102
        %v5824 = vunpack.c.l.b16 %v3103
        %v5825 = vunpack.c.h.b16 %v3103
        %v5826 = vunpack.c.l.b16 %v3104
        %v5827 = vunpack.c.h.b16 %v3104
        %v5828 = vunpack.c.l.b16 %v3105
        %v5829 = vunpack.c.h.b16 %v3105
        %v5830 = vunpack.c.l.b16 %v3106
        %v5831 = vunpack.c.h.b16 %v3106
        %v5832 = vunpack.c.l.b16 %v3107
        %v5833 = vunpack.c.h.b16 %v3107
        %v5834 = vunpack.c.l.b16 %v3108
        %v5835 = vunpack.c.h.b16 %v3108
        %v5836 = vunpack.c.l.b16 %v3109
        %v5837 = vunpack.c.h.b16 %v3109
        %v5838 = vunpack.c.l.b16 %v3110
        %v5839 = vunpack.c.h.b16 %v3110
        %v5840 = vunpack.c.l.b16 %v3111
        %v5841 = vunpack.c.h.b16 %v3111
        %v5842 = vunpack.c.l.b16 %v3112
        %v5843 = vunpack.c.h.b16 %v3112
        %v5844 = vunpack.c.l.b16 %v3113
        %v5845 = vunpack.c.h.b16 %v3113
        %v5846 = vunpack.c.l.b16 %v3114
        %v5847 = vunpack.c.h.b16 %v3114
        %v5848 = vunpack.c.l.b16 %v3115
        %v5849 = vunpack.c.h.b16 %v3115
        %v5850 = vunpack.c.l.b16 %v3116
        %v5851 = vunpack.c.h.b16 %v3116
        %v5852 = vunpack.c.l.b16 %v3117
        %v5853 = vunpack.c.h.b16 %v3117
        %v5854 = vunpack.c.l.b16 %v3118
        %v5855 = vunpack.c.h.b16 %v3118
        %v5856 = vunpack.c.l.b16 %v3119
        %v5857 = vunpack.c.h.b16 %v3119
        %v5858 = vunpack.c.l.b16 %v3120
        %v5859 = vunpack.c.h.b16 %v3120
        %v5860 = vunpack.c.l.b16 %v3121
        %v5861 = vunpack.c.h.b16 %v3121
        %v5862 = vunpack.c.l.b16 %v3122
        %v5863 = vunpack.c.h.b16 %v3122
        %v5864 = vunpack.c.l.b16 %v3123
        %v5865 = vunpack.c.h.b16 %v3123
        %v5866 = vunpack.c.l.b16 %v3124
        %v5867 = vunpack.c.h.b16 %v3124
        %v5868 = vunpack.c.l.b16 %v3125
        %v5869 = vunpack.c.h.b16 %v3125
        %v5870 = vunpack.c.l.b16 %v3126
        %v5871 = vunpack.c.h.b16 %v3126
        %v5872 = vunpack.c.l.b16 %v3127
        %v5873 = vunpack.c.h.b16 %v3127
        %v5874 = vunpack.c.l.b16 %v3128
        %v5875 = vunpack.c.h.b16 %v3128
        %v5876 = vunpack.c.l.b16 %v3129
        %v5877 = vunpack.c.h.b16 %v3129
        %v5878 = vunpack.c.l.b16 %v3130
        %v5879 = vunpack.c.h.b16 %v3130
        %v5880 = vunpack.c.l.b16 %v3131
        %v5881 = vunpack.c.h.b16 %v3131
        %v5882 = vunpack.c.l.b16 %v3132
        %v5883 = vunpack.c.h.b16 %v3132
        %v5884 = vunpack.c.l.b16 %v3133
        %v5885 = vunpack.c.h.b16 %v3133
        %v5886 = vunpack.c.l.b16 %v3134
        %v5887 = vunpack.c.h.b16 %v3134
        %v5888 = vunpack.c.l.b16 %v3135
        %v5889 = vunpack.c.h.b16 %v3135
        %v5890 = vunpack.c.l.b16 %v3136
        %v5891 = vunpack.c.h.b16 %v3136
        %v5892 = vunpack.c.l.b16 %v3137
        %v5893 = vunpack.c.h.b16 %v3137
        %v5894 = vunpack.c.l.b16 %v3138
        %v5895 = vunpack.c.h.b16 %v3138
        %v5896 = vunpack.c.l.b16 %v3139
        %v5897 = vunpack.c.h.b16 %v3139
        %v5898 = vunpack.c.l.b16 %v3140
        %v5899 = vunpack.c.h.b16 %v3140
        %v5900 = vunpack.c.l.b16 %v3141
        %v5901 = vunpack.c.h.b16 %v3141
        %v5902 = vunpack.c.l.b16 %v3142
        %v5903 = vunpack.c.h.b16 %v3142
        %v5904 = vunpack.c.l.b16 %v3143
        %v5905 = vunpack.c.h.b16 %v3143
        %v5906 = vunpack.c.l.b16 %v3144
        %v5907 = vunpack.c.h.b16 %v3144
        %v5908 = vunpack.c.l.b16 %v3145
        %v5909 = vunpack.c.h.b16 %v3145
        %v5910 = vunpack.c.l.b16 %v3146
        %v5911 = vunpack.c.h.b16 %v3146
        %v5912 = vunpack.c.l.b16 %v3147
        %v5913 = vunpack.c.h.b16 %v3147
        %v5914 = vunpack.c.l.b16 %v3148
        %v5915 = vunpack.c.h.b16 %v3148
        %v5916 = vunpack.c.l.b16 %v3149
        %v5917 = vunpack.c.h.b16 %v3149
        %v5918 = vunpack.c.l.b16 %v3150
        %v5919 = vunpack.c.h.b16 %v3150
        %v5920 = vunpack.c.l.b16 %v3151
        %v5921 = vunpack.c.h.b16 %v3151
        %v5922 = vunpack.c.l.b16 %v3152
        %v5923 = vunpack.c.h.b16 %v3152
        %v5924 = vunpack.c.l.b16 %v3153
        %v5925 = vunpack.c.h.b16 %v3153
        %v5926 = vunpack.c.l.b16 %v3154
        %v5927 = vunpack.c.h.b16 %v3154
        %v5928 = vunpack.c.l.b16 %v3155
        %v5929 = vunpack.c.h.b16 %v3155
        %v5930 = vunpack.c.l.b16 %v3156
        %v5931 = vunpack.c.h.b16 %v3156
        %v5932 = vunpack.c.l.b16 %v3157
        %v5933 = vunpack.c.h.b16 %v3157
        %v5934 = vunpack.c.l.b16 %v3158
        %v5935 = vunpack.c.h.b16 %v3158
        %v5936 = vunpack.c.l.b16 %v3159
        %v5937 = vunpack.c.h.b16 %v3159
        %v5938 = vunpack.c.l.b16 %v3160
        %v5939 = vunpack.c.h.b16 %v3160
        %v5940 = vunpack.c.l.b16 %v3161
        %v5941 = vunpack.c.h.b16 %v3161
        %v5942 = vunpack.c.l.b16 %v3162
        %v5943 = vunpack.c.h.b16 %v3162
        %v5944 = vunpack.c.l.b16 %v3163
        %v5945 = vunpack.c.h.b16 %v3163
        %v5946 = vunpack.c.l.b16 %v3164
        %v5947 = vunpack.c.h.b16 %v3164
        %v5948 = vunpack.c.l.b16 %v3165
        %v5949 = vunpack.c.h.b16 %v3165
        %v5950 = vunpack.c.l.b16 %v3166
        %v5951 = vunpack.c.h.b16 %v3166
        %v5952 = vunpack.c.l.b16 %v3167
        %v5953 = vunpack.c.h.b16 %v3167
        %v5954 = vunpack.c.l.b16 %v3168
        %v5955 = vunpack.c.h.b16 %v3168
        %v5956 = vunpack.c.l.b16 %v3169
        %v5957 = vunpack.c.h.b16 %v3169
        %v5958 = vunpack.c.l.b16 %v3170
        %v5959 = vunpack.c.h.b16 %v3170
        %v5960 = vunpack.c.l.b16 %v3171
        %v5961 = vunpack.c.h.b16 %v3171
        %v5962 = vunpack.c.l.b16 %v3172
        %v5963 = vunpack.c.h.b16 %v3172
        %v5964 = vunpack.c.l.b16 %v3173
        %v5965 = vunpack.c.h.b16 %v3173
        %v5966 = vunpack.c.l.b16 %v3174
        %v5967 = vunpack.c.h.b16 %v3174
        %v5968 = vunpack.c.l.b16 %v3175
        %v5969 = vunpack.c.h.b16 %v3175
        %v5970 = vunpack.c.l.b16 %v3176
        %v5971 = vunpack.c.h.b16 %v3176
        %v5972 = vunpack.c.l.b16 %v3177
        %v5973 = vunpack.c.h.b16 %v3177
        %v5974 = vunpack.c.l.b16 %v3178
        %v5975 = vunpack.c.h.b16 %v3178
        %v5976 = vunpack.c.l.b16 %v3179
        %v5977 = vunpack.c.h.b16 %v3179
        %v5978 = vunpack.c.l.b16 %v3180
        %v5979 = vunpack.c.h.b16 %v3180
        %v5980 = vunpack.c.l.b16 %v3181
        %v5981 = vunpack.c.h.b16 %v3181
        %v5982 = vunpack.c.l.b16 %v3182
        %v5983 = vunpack.c.h.b16 %v3182
        %v5984 = vunpack.c.l.b16 %v3183
        %v5985 = vunpack.c.h.b16 %v3183
        %v5986 = vunpack.c.l.b16 %v3184
        %v5987 = vunpack.c.h.b16 %v3184
        %v5988 = vunpack.c.l.b16 %v3185
        %v5989 = vunpack.c.h.b16 %v3185
        %v5990 = vunpack.c.l.b16 %v3186
        %v5991 = vunpack.c.h.b16 %v3186
        %v5992 = vunpack.c.l.b16 %v3187
        %v5993 = vunpack.c.h.b16 %v3187
        %v5994 = vunpack.c.l.b16 %v3188
        %v5995 = vunpack.c.h.b16 %v3188
        %v5996 = vunpack.c.l.b16 %v3189
        %v5997 = vunpack.c.h.b16 %v3189
        %v5998 = vunpack.c.l.b16 %v3190
        %v5999 = vunpack.c.h.b16 %v3190
        %v6000 = vunpack.c.l.b16 %v3191
        %v6001 = vunpack.c.h.b16 %v3191
        %v6002 = vunpack.c.l.b16 %v3192
        %v6003 = vunpack.c.h.b16 %v3192
        %v6004 = vunpack.c.l.b16 %v3193
        %v6005 = vunpack.c.h.b16 %v3193
        %v6006 = vunpack.c.l.b16 %v3194
        %v6007 = vunpack.c.h.b16 %v3194
        %v6008 = vunpack.c.l.b16 %v3195
        %v6009 = vunpack.c.h.b16 %v3195
        %v6010 = vunpack.c.l.b16 %v3196
        %v6011 = vunpack.c.h.b16 %v3196
        %v6012 = vunpack.c.l.b16 %v3197
        %v6013 = vunpack.c.h.b16 %v3197
        %v6014 = vunpack.c.l.b16 %v3198
        %v6015 = vunpack.c.h.b16 %v3198
        %v6016 = vunpack.c.l.b16 %v3199
        %v6017 = vunpack.c.h.b16 %v3199
        %v6018 = vunpack.c.l.b16 %v3200
        %v6019 = vunpack.c.h.b16 %v3200
        %v6020 = vunpack.c.l.b16 %v3201
        %v6021 = vunpack.c.h.b16 %v3201
        %v6022 = vunpack.c.l.b16 %v3202
        %v6023 = vunpack.c.h.b16 %v3202
        %v6024 = vunpack.c.l.b16 %v3203
        %v6025 = vunpack.c.h.b16 %v3203
        %v6026 = vunpack.c.l.b16 %v3204
        %v6027 = vunpack.c.h.b16 %v3204
        %v6028 = vunpack.c.l.b16 %v3205
        %v6029 = vunpack.c.h.b16 %v3205
        %v6030 = vunpack.c.l.b16 %v3206
        %v6031 = vunpack.c.h.b16 %v3206
        %v6032 = vunpack.c.l.b16 %v3207
        %v6033 = vunpack.c.h.b16 %v3207
        %v6034 = vunpack.c.l.b16 %v3208
        %v6035 = vunpack.c.h.b16 %v3208
        %v6036 = vunpack.c.l.b16 %v3209
        %v6037 = vunpack.c.h.b16 %v3209
        %v6038 = vunpack.c.l.b16 %v3210
        %v6039 = vunpack.c.h.b16 %v3210
        %v6040 = vunpack.c.l.b16 %v3211
        %v6041 = vunpack.c.h.b16 %v3211
        %v6042 = vunpack.c.l.b16 %v3212
        %v6043 = vunpack.c.h.b16 %v3212
        %v6044 = vunpack.c.l.b16 %v3213
        %v6045 = vunpack.c.h.b16 %v3213
        %v6046 = vunpack.c.l.b16 %v3214
        %v6047 = vunpack.c.h.b16 %v3214
        %v6048 = vunpack.c.l.b16 %v3215
        %v6049 = vunpack.c.h.b16 %v3215
        %v6050 = vunpack.c.l.b16 %v3216
        %v6051 = vunpack.c.h.b16 %v3216
        %v6052 = vunpack.c.l.b16 %v3217
        %v6053 = vunpack.c.h.b16 %v3217
        %v6054 = vunpack.c.l.b16 %v3218
        %v6055 = vunpack.c.h.b16 %v3218
        %v6056 = vunpack.c.l.b16 %v3219
        %v6057 = vunpack.c.h.b16 %v3219
        %v6058 = vunpack.c.l.b16 %v3220
        %v6059 = vunpack.c.h.b16 %v3220
        %v6060 = vunpack.c.l.b16 %v3221
        %v6061 = vunpack.c.h.b16 %v3221
        %v6062 = vunpack.c.l.b16 %v3222
        %v6063 = vunpack.c.h.b16 %v3222
        %v6064 = vunpack.c.l.b16 %v3223
        %v6065 = vunpack.c.h.b16 %v3223
        %v6066 = vunpack.c.l.b16 %v3224
        %v6067 = vunpack.c.h.b16 %v3224
        %v6068 = vunpack.c.l.b16 %v3225
        %v6069 = vunpack.c.h.b16 %v3225
        %v6070 = vunpack.c.l.b16 %v3226
        %v6071 = vunpack.c.h.b16 %v3226
        %v6072 = vunpack.c.l.b16 %v3227
        %v6073 = vunpack.c.h.b16 %v3227
        %v6074 = vunpack.c.l.b16 %v3228
        %v6075 = vunpack.c.h.b16 %v3228
        %v6076 = vunpack.c.l.b16 %v3229
        %v6077 = vunpack.c.h.b16 %v3229
        %v6078 = vunpack.c.l.b16 %v3230
        %v6079 = vunpack.c.h.b16 %v3230
        %v6080 = vunpack.c.l.b16 %v3231
        %v6081 = vunpack.c.h.b16 %v3231
        %v6082 = vunpack.c.l.b16 %v3232
        %v6083 = vunpack.c.h.b16 %v3232
        %v6084 = vunpack.c.l.b16 %v3233
        %v6085 = vunpack.c.h.b16 %v3233
        %v6086 = vunpack.c.l.b16 %v3234
        %v6087 = vunpack.c.h.b16 %v3234
        %v6088 = vunpack.c.l.b16 %v3235
        %v6089 = vunpack.c.h.b16 %v3235
        %v6090 = vunpack.c.l.b16 %v3236
        %v6091 = vunpack.c.h.b16 %v3236
        %v6092 = vunpack.c.l.b16 %v3237
        %v6093 = vunpack.c.h.b16 %v3237
        %v6094 = vunpack.c.l.b16 %v3238
        %v6095 = vunpack.c.h.b16 %v3238
        %v6096 = vunpack.c.l.b16 %v3239
        %v6097 = vunpack.c.h.b16 %v3239
        %v6098 = vunpack.c.l.b16 %v3240
        %v6099 = vunpack.c.h.b16 %v3240
        %v6100 = vunpack.c.l.b16 %v3241
        %v6101 = vunpack.c.h.b16 %v3241
        %v6102 = vunpack.c.l.b16 %v3242
        %v6103 = vunpack.c.h.b16 %v3242
        %v6104 = vunpack.c.l.b16 %v3243
        %v6105 = vunpack.c.h.b16 %v3243
        %v6106 = vunpack.c.l.b16 %v3244
        %v6107 = vunpack.c.h.b16 %v3244
        %v6108 = vunpack.c.l.b16 %v3245
        %v6109 = vunpack.c.h.b16 %v3245
        %v6110 = vunpack.c.l.b16 %v3246
        %v6111 = vunpack.c.h.b16 %v3246
        %v6112 = vunpack.c.l.b16 %v3247
        %v6113 = vunpack.c.h.b16 %v3247
        %v6114 = vunpack.c.l.b16 %v3248
        %v6115 = vunpack.c.h.b16 %v3248
        %v6116 = vunpack.c.l.b16 %v3249
        %v6117 = vunpack.c.h.b16 %v3249
        %v6118 = vunpack.c.l.b16 %v3250
        %v6119 = vunpack.c.h.b16 %v3250
        %v6120 = vunpack.c.l.b16 %v3251
        %v6121 = vunpack.c.h.b16 %v3251
        %v6122 = vunpack.c.l.b16 %v3252
        %v6123 = vunpack.c.h.b16 %v3252
        %v6124 = vunpack.c.l.b16 %v3253
        %v6125 = vunpack.c.h.b16 %v3253
        %v6126 = vunpack.c.l.b16 %v3254
        %v6127 = vunpack.c.h.b16 %v3254
        %v6128 = vunpack.c.l.b16 %v3255
        %v6129 = vunpack.c.h.b16 %v3255
        %v6130 = vunpack.c.l.b16 %v3256
        %v6131 = vunpack.c.h.b16 %v3256
        %v6132 = vunpack.c.l.b16 %v3257
        %v6133 = vunpack.c.h.b16 %v3257
        %v6134 = vunpack.c.l.b16 %v3258
        %v6135 = vunpack.c.h.b16 %v3258
        %v6136 = vunpack.c.l.b16 %v3259
        %v6137 = vunpack.c.h.b16 %v3259
        %v6138 = vunpack.c.l.b16 %v3260
        %v6139 = vunpack.c.h.b16 %v3260
        %v6140 = vunpack.c.l.b16 %v3261
        %v6141 = vunpack.c.h.b16 %v3261
        %v6142 = vunpack.c.l.b16 %v3262
        %v6143 = vunpack.c.h.b16 %v3262
        %v6144 = vunpack.c.l.b16 %v3263
        %v6145 = vunpack.c.h.b16 %v3263
        %v6146 = vunpack.c.l.b16 %v3264
        %v6147 = vunpack.c.h.b16 %v3264
        %v6148 = vunpack.c.l.b16 %v3265
        %v6149 = vunpack.c.h.b16 %v3265
        %v6150 = vunpack.c.l.b16 %v3266
        %v6151 = vunpack.c.h.b16 %v3266
        %v6152 = vunpack.c.l.b16 %v3267
        %v6153 = vunpack.c.h.b16 %v3267
        %v6154 = vunpack.c.l.b16 %v3268
        %v6155 = vunpack.c.h.b16 %v3268
        %v6156 = vunpack.c.l.b16 %v3269
        %v6157 = vunpack.c.h.b16 %v3269
        %v6158 = vunpack.c.l.b16 %v3270
        %v6159 = vunpack.c.h.b16 %v3270
        %v6160 = vunpack.c.l.b16 %v3271
        %v6161 = vunpack.c.h.b16 %v3271
        %v6162 = vunpack.c.l.b16 %v3272
        %v6163 = vunpack.c.h.b16 %v3272
        %v6164 = vunpack.c.l.b16 %v3273
        %v6165 = vunpack.c.h.b16 %v3273
        %v6166 = vunpack.c.l.b16 %v3274
        %v6167 = vunpack.c.h.b16 %v3274
        %v6168 = vunpack.c.l.b16 %v3275
        %v6169 = vunpack.c.h.b16 %v3275
        %v6170 = vunpack.c.l.b16 %v3276
        %v6171 = vunpack.c.h.b16 %v3276
        %v6172 = vunpack.c.l.b16 %v3277
        %v6173 = vunpack.c.h.b16 %v3277
        %v6174 = vunpack.c.l.b16 %v3278
        %v6175 = vunpack.c.h.b16 %v3278
        %v6176 = vunpack.c.l.b16 %v3279
        %v6177 = vunpack.c.h.b16 %v3279
        %v6178 = vunpack.c.l.b16 %v3280
        %v6179 = vunpack.c.h.b16 %v3280
        %v6180 = vunpack.c.l.b16 %v3281
        %v6181 = vunpack.c.h.b16 %v3281
        %v6182 = vunpack.c.l.b16 %v3282
        %v6183 = vunpack.c.h.b16 %v3282
        %v6184 = vunpack.c.l.b16 %v3283
        %v6185 = vunpack.c.h.b16 %v3283
        %v6186 = vunpack.c.l.b16 %v3284
        %v6187 = vunpack.c.h.b16 %v3284
        %v6188 = vunpack.c.l.b16 %v3285
        %v6189 = vunpack.c.h.b16 %v3285
        %v6190 = vunpack.c.l.b16 %v3286
        %v6191 = vunpack.c.h.b16 %v3286
        %v6192 = vunpack.c.l.b16 %v3287
        %v6193 = vunpack.c.h.b16 %v3287
        %v6194 = vunpack.c.l.b16 %v3288
        %v6195 = vunpack.c.h.b16 %v3288
        %v6196 = vunpack.c.l.b16 %v3289
        %v6197 = vunpack.c.h.b16 %v3289
        %v6198 = vunpack.c.l.b16 %v3290
        %v6199 = vunpack.c.h.b16 %v3290
        %v6200 = vunpack.c.l.b16 %v3291
        %v6201 = vunpack.c.h.b16 %v3291
        %v6202 = vunpack.c.l.b16 %v3292
        %v6203 = vunpack.c.h.b16 %v3292
        %v6204 = vunpack.c.l.b16 %v3293
        %v6205 = vunpack.c.h.b16 %v3293
        %v6206 = vunpack.c.l.b16 %v3294
        %v6207 = vunpack.c.h.b16 %v3294
        %v6208 = vunpack.c.l.b16 %v3295
        %v6209 = vunpack.c.h.b16 %v3295
        %v6210 = vunpack.c.l.b16 %v3296
        %v6211 = vunpack.c.h.b16 %v3296
        %v6212 = vunpack.c.l.b16 %v3297
        %v6213 = vunpack.c.h.b16 %v3297
        %v6214 = vunpack.c.l.b16 %v3298
        %v6215 = vunpack.c.h.b16 %v3298
        %v6216 = vunpack.c.l.b16 %v3299
        %v6217 = vunpack.c.h.b16 %v3299
        %v6218 = vunpack.c.l.b16 %v3300
        %v6219 = vunpack.c.h.b16 %v3300
        %v6220 = vunpack.c.l.b16 %v3301
        %v6221 = vunpack.c.h.b16 %v3301
        %v6222 = vunpack.c.l.b16 %v3302
        %v6223 = vunpack.c.h.b16 %v3302
        %v6224 = vunpack.c.l.b16 %v3303
        %v6225 = vunpack.c.h.b16 %v3303
        %v6226 = vunpack.c.l.b16 %v3304
        %v6227 = vunpack.c.h.b16 %v3304
        %v6228 = vunpack.c.l.b16 %v3305
        %v6229 = vunpack.c.h.b16 %v3305
        %v6230 = vunpack.c.l.b16 %v3306
        %v6231 = vunpack.c.h.b16 %v3306
        %v6232 = vunpack.c.l.b16 %v3307
        %v6233 = vunpack.c.h.b16 %v3307
        %v6234 = vunpack.c.l.b16 %v3308
        %v6235 = vunpack.c.h.b16 %v3308
        %v6236 = vunpack.c.l.b16 %v3309
        %v6237 = vunpack.c.h.b16 %v3309
        %v6238 = vunpack.c.l.b16 %v3310
        %v6239 = vunpack.c.h.b16 %v3310
        %v6240 = vunpack.c.l.b16 %v3311
        %v6241 = vunpack.c.h.b16 %v3311
        %v6242 = vunpack.c.l.b16 %v3312
        %v6243 = vunpack.c.h.b16 %v3312
        %v6244 = vunpack.c.l.b16 %v3313
        %v6245 = vunpack.c.h.b16 %v3313
        %v6246 = vunpack.c.l.b16 %v3314
        %v6247 = vunpack.c.h.b16 %v3314
        %v6248 = vunpack.c.l.b16 %v3315
        %v6249 = vunpack.c.h.b16 %v3315
        %v6250 = vunpack.c.l.b16 %v3316
        %v6251 = vunpack.c.h.b16 %v3316
        %v6252 = vunpack.c.l.b16 %v3317
        %v6253 = vunpack.c.h.b16 %v3317
        %v6254 = vunpack.c.l.b16 %v3318
        %v6255 = vunpack.c.h.b16 %v3318
        %v6256 = vunpack.c.l.b16 %v3319
        %v6257 = vunpack.c.h.b16 %v3319
        %v6258 = vunpack.c.l.b16 %v3320
        %v6259 = vunpack.c.h.b16 %v3320
        %v6260 = vunpack.c.l.b16 %v3321
        %v6261 = vunpack.c.h.b16 %v3321
        %v6262 = vunpack.c.l.b16 %v3322
        %v6263 = vunpack.c.h.b16 %v3322
        %v6264 = vunpack.c.l.b16 %v3323
        %v6265 = vunpack.c.h.b16 %v3323
        %v6266 = vunpack.c.l.b16 %v3324
        %v6267 = vunpack.c.h.b16 %v3324
        %v6268 = vunpack.c.l.b16 %v3325
        %v6269 = vunpack.c.h.b16 %v3325
        %v6270 = vunpack.c.l.b16 %v3326
        %v6271 = vunpack.c.h.b16 %v3326
        %v6272 = vunpack.c.l.b16 %v3327
        %v6273 = vunpack.c.h.b16 %v3327
        %v6274 = vunpack.c.l.b16 %v3328
        %v6275 = vunpack.c.h.b16 %v3328
        %v6276 = vunpack.c.l.b16 %v3329
        %v6277 = vunpack.c.h.b16 %v3329
        %v6278 = vunpack.c.l.b16 %v3330
        %v6279 = vunpack.c.h.b16 %v3330
        %v6280 = vunpack.c.l.b16 %v3331
        %v6281 = vunpack.c.h.b16 %v3331
        %v6282 = vunpack.c.l.b16 %v3332
        %v6283 = vunpack.c.h.b16 %v3332
        %v6284 = vunpack.c.l.b16 %v3333
        %v6285 = vunpack.c.h.b16 %v3333
        %v6286 = vunpack.c.l.b16 %v3334
        %v6287 = vunpack.c.h.b16 %v3334
        %v6288 = vunpack.c.l.b16 %v3335
        %v6289 = vunpack.c.h.b16 %v3335
        %v6290 = vunpack.c.l.b16 %v3336
        %v6291 = vunpack.c.h.b16 %v3336
        %v6292 = vunpack.c.l.b16 %v3337
        %v6293 = vunpack.c.h.b16 %v3337
        %v6294 = vunpack.c.l.b16 %v3338
        %v6295 = vunpack.c.h.b16 %v3338
        %v6296 = vunpack.c.l.b16 %v3339
        %v6297 = vunpack.c.h.b16 %v3339
        %v6298 = vunpack.c.l.b16 %v3340
        %v6299 = vunpack.c.h.b16 %v3340
        %v6300 = vunpack.c.l.b16 %v3341
        %v6301 = vunpack.c.h.b16 %v3341
        %v6302 = vunpack.c.l.b16 %v3342
        %v6303 = vunpack.c.h.b16 %v3342
        %v6304 = vunpack.c.l.b16 %v3343
        %v6305 = vunpack.c.h.b16 %v3343
        %v6306 = vunpack.c.l.b16 %v3344
        %v6307 = vunpack.c.h.b16 %v3344
        %v6308 = vunpack.c.l.b16 %v3345
        %v6309 = vunpack.c.h.b16 %v3345
        %v6310 = vunpack.c.l.b16 %v3346
        %v6311 = vunpack.c.h.b16 %v3346
        %v6312 = vunpack.c.l.b16 %v3347
        %v6313 = vunpack.c.h.b16 %v3347
        %v6314 = vunpack.c.l.b16 %v3348
        %v6315 = vunpack.c.h.b16 %v3348
        %v6316 = vunpack.c.l.b16 %v3349
        %v6317 = vunpack.c.h.b16 %v3349
        %v6318 = vunpack.c.l.b16 %v3350
        %v6319 = vunpack.c.h.b16 %v3350
        %v6320 = vunpack.c.l.b16 %v3351
        %v6321 = vunpack.c.h.b16 %v3351
        %v6322 = vunpack.c.l.b16 %v3352
        %v6323 = vunpack.c.h.b16 %v3352
        %v6324 = vunpack.c.l.b16 %v3353
        %v6325 = vunpack.c.h.b16 %v3353
        %v6326 = vunpack.c.l.b16 %v3354
        %v6327 = vunpack.c.h.b16 %v3354
        %v6328 = vunpack.c.l.b16 %v3355
        %v6329 = vunpack.c.h.b16 %v3355
        %v6330 = vunpack.c.l.b16 %v3356
        %v6331 = vunpack.c.h.b16 %v3356
        %v6332 = vunpack.c.l.b16 %v3357
        %v6333 = vunpack.c.h.b16 %v3357
        %v6334 = vunpack.c.l.b16 %v3358
        %v6335 = vunpack.c.h.b16 %v3358
        %v6336 = vunpack.c.l.b16 %v3359
        %v6337 = vunpack.c.h.b16 %v3359
        %v6338 = vunpack.c.l.b16 %v3360
        %v6339 = vunpack.c.h.b16 %v3360
        %v6340 = vunpack.c.l.b16 %v3361
        %v6341 = vunpack.c.h.b16 %v3361
        %v6342 = vunpack.c.l.b16 %v3362
        %v6343 = vunpack.c.h.b16 %v3362
        %v6344 = vunpack.c.l.b16 %v3363
        %v6345 = vunpack.c.h.b16 %v3363
        %v6346 = vunpack.c.l.b16 %v3364
        %v6347 = vunpack.c.h.b16 %v3364
        %v6348 = vunpack.c.l.b16 %v3365
        %v6349 = vunpack.c.h.b16 %v3365
        %v6350 = vunpack.c.l.b16 %v3366
        %v6351 = vunpack.c.h.b16 %v3366
        %v6352 = vunpack.c.l.b16 %v3367
        %v6353 = vunpack.c.h.b16 %v3367
        %v6354 = vunpack.c.l.b16 %v3368
        %v6355 = vunpack.c.h.b16 %v3368
        %v6356 = vunpack.c.l.b16 %v3369
        %v6357 = vunpack.c.h.b16 %v3369
        %v6358 = vunpack.c.l.b16 %v3370
        %v6359 = vunpack.c.h.b16 %v3370
        %v6360 = vunpack.c.l.b16 %v3371
        %v6361 = vunpack.c.h.b16 %v3371
        %v6362 = vunpack.c.l.b16 %v3372
        %v6363 = vunpack.c.h.b16 %v3372
        %v6364 = vunpack.c.l.b16 %v3373
        %v6365 = vunpack.c.h.b16 %v3373
        %v6366 = vunpack.c.l.b16 %v3374
        %v6367 = vunpack.c.h.b16 %v3374
        %v6368 = vunpack.c.l.b16 %v3375
        %v6369 = vunpack.c.h.b16 %v3375
        %v6370 = vunpack.c.l.b16 %v3376
        %v6371 = vunpack.c.h.b16 %v3376
        %v6372 = vunpack.c.l.b16 %v3377
        %v6373 = vunpack.c.h.b16 %v3377
        %v6374 = vunpack.c.l.b16 %v3378
        %v6375 = vunpack.c.h.b16 %v3378
        %v6376 = vunpack.c.l.b16 %v3379
        %v6377 = vunpack.c.h.b16 %v3379
        %v6378 = vunpack.c.l.b16 %v3380
        %v6379 = vunpack.c.h.b16 %v3380
        %v6380 = vunpack.c.l.b16 %v3381
        %v6381 = vunpack.c.h.b16 %v3381
        %v6382 = vunpack.c.l.b16 %v3382
        %v6383 = vunpack.c.h.b16 %v3382
        %v6384 = vunpack.c.l.b16 %v3383
        %v6385 = vunpack.c.h.b16 %v3383
        %v6386 = vunpack.c.l.b16 %v3384
        %v6387 = vunpack.c.h.b16 %v3384
        %v6388 = vunpack.c.l.b16 %v3385
        %v6389 = vunpack.c.h.b16 %v3385
        %v6390 = vunpack.c.l.b16 %v3386
        %v6391 = vunpack.c.h.b16 %v3386
        %v6392 = vunpack.c.l.b16 %v3387
        %v6393 = vunpack.c.h.b16 %v3387
        %v6394 = vunpack.c.l.b16 %v3388
        %v6395 = vunpack.c.h.b16 %v3388
        %v6396 = vunpack.c.l.b16 %v3389
        %v6397 = vunpack.c.h.b16 %v3389
        %v6398 = vunpack.c.l.b16 %v3390
        %v6399 = vunpack.c.h.b16 %v3390
        %v6400 = vunpack.c.l.b16 %v3391
        %v6401 = vunpack.c.h.b16 %v3391
        %v6402 = vunpack.c.l.b16 %v3392
        %v6403 = vunpack.c.h.b16 %v3392
        %v6404 = vunpack.c.l.b16 %v3393
        %v6405 = vunpack.c.h.b16 %v3393
        %v6406 = vunpack.c.l.b16 %v3394
        %v6407 = vunpack.c.h.b16 %v3394
        %v6408 = vunpack.c.l.b16 %v3395
        %v6409 = vunpack.c.h.b16 %v3395
        %v6410 = vunpack.c.l.b16 %v3396
        %v6411 = vunpack.c.h.b16 %v3396
        %v6412 = vunpack.c.l.b16 %v3397
        %v6413 = vunpack.c.h.b16 %v3397
        %v6414 = vunpack.c.l.b16 %v3398
        %v6415 = vunpack.c.h.b16 %v3398
        %v6416 = vunpack.c.l.b16 %v3399
        %v6417 = vunpack.c.h.b16 %v3399
        %v6418 = vunpack.c.l.b16 %v3400
        %v6419 = vunpack.c.h.b16 %v3400
        %v6420 = vunpack.c.l.b16 %v3401
        %v6421 = vunpack.c.h.b16 %v3401
        %v6422 = vunpack.c.l.b16 %v3402
        %v6423 = vunpack.c.h.b16 %v3402
        %v6424 = vunpack.c.l.b16 %v3403
        %v6425 = vunpack.c.h.b16 %v3403
        %v6426 = vunpack.c.l.b16 %v3404
        %v6427 = vunpack.c.h.b16 %v3404
        %v6428 = vunpack.c.l.b16 %v3405
        %v6429 = vunpack.c.h.b16 %v3405
        %v6430 = vunpack.c.l.b16 %v3406
        %v6431 = vunpack.c.h.b16 %v3406
        %v6432 = vunpack.c.l.b16 %v3407
        %v6433 = vunpack.c.h.b16 %v3407
        %v6434 = vunpack.c.l.b16 %v3408
        %v6435 = vunpack.c.h.b16 %v3408
        %v6436 = vunpack.c.l.b16 %v3409
        %v6437 = vunpack.c.h.b16 %v3409
        %v6438 = vunpack.c.l.b16 %v3410
        %v6439 = vunpack.c.h.b16 %v3410
        %v6440 = vunpack.c.l.b16 %v3411
        %v6441 = vunpack.c.h.b16 %v3411
        %v6442 = vunpack.c.l.b16 %v3412
        %v6443 = vunpack.c.h.b16 %v3412
        %v6444 = vunpack.c.l.b16 %v3413
        %v6445 = vunpack.c.h.b16 %v3413
        %v6446 = vunpack.c.l.b16 %v3414
        %v6447 = vunpack.c.h.b16 %v3414
        %v6448 = vunpack.c.l.b16 %v3415
        %v6449 = vunpack.c.h.b16 %v3415
        %v6450 = vunpack.c.l.b16 %v3416
        %v6451 = vunpack.c.h.b16 %v3416
        %v6452 = vunpack.c.l.b16 %v3417
        %v6453 = vunpack.c.h.b16 %v3417
        %v6454 = vunpack.c.l.b16 %v3418
        %v6455 = vunpack.c.h.b16 %v3418
        %v6456 = vunpack.c.l.b16 %v3419
        %v6457 = vunpack.c.h.b16 %v3419
        %v6458 = vunpack.c.l.b16 %v3420
        %v6459 = vunpack.c.h.b16 %v3420
        %v6460 = vunpack.c.l.b16 %v3421
        %v6461 = vunpack.c.h.b16 %v3421
        %v6462 = vunpack.c.l.b16 %v3422
        %v6463 = vunpack.c.h.b16 %v3422
        %v6464 = vunpack.c.l.b16 %v3423
        %v6465 = vunpack.c.h.b16 %v3423
        %v6466 = vunpack.c.l.b16 %v3424
        %v6467 = vunpack.c.h.b16 %v3424
        %v6468 = vunpack.c.l.b16 %v3425
        %v6469 = vunpack.c.h.b16 %v3425
        %v6470 = vunpack.c.l.b16 %v3426
        %v6471 = vunpack.c.h.b16 %v3426
        %v6472 = vunpack.c.l.b16 %v3427
        %v6473 = vunpack.c.h.b16 %v3427
        %v6474 = vunpack.c.l.b16 %v3428
        %v6475 = vunpack.c.h.b16 %v3428
        %v6476 = vunpack.c.l.b16 %v3429
        %v6477 = vunpack.c.h.b16 %v3429
        %v6478 = vunpack.c.l.b16 %v3430
        %v6479 = vunpack.c.h.b16 %v3430
        %v6480 = vunpack.c.l.b16 %v3431
        %v6481 = vunpack.c.h.b16 %v3431
        %v6482 = vunpack.c.l.b16 %v3432
        %v6483 = vunpack.c.h.b16 %v3432
        %v6484 = vunpack.c.l.b16 %v3433
        %v6485 = vunpack.c.h.b16 %v3433
        %v6486 = vunpack.c.l.b16 %v3434
        %v6487 = vunpack.c.h.b16 %v3434
        %v6488 = vunpack.c.l.b16 %v3435
        %v6489 = vunpack.c.h.b16 %v3435
        %v6490 = vunpack.c.l.b16 %v3436
        %v6491 = vunpack.c.h.b16 %v3436
        %v6492 = vunpack.c.l.b16 %v3437
        %v6493 = vunpack.c.h.b16 %v3437
        %v6494 = vunpack.c.l.b16 %v3438
        %v6495 = vunpack.c.h.b16 %v3438
        %v6496 = vunpack.c.l.b16 %v3439
        %v6497 = vunpack.c.h.b16 %v3439
        %v6498 = vunpack.c.l.b16 %v3440
        %v6499 = vunpack.c.h.b16 %v3440
        %v6500 = vunpack.c.l.b16 %v3441
        %v6501 = vunpack.c.h.b16 %v3441
        %v6502 = vunpack.c.l.b16 %v3442
        %v6503 = vunpack.c.h.b16 %v3442
        %v6504 = vunpack.c.l.b16 %v3443
        %v6505 = vunpack.c.h.b16 %v3443
        %v6506 = vunpack.c.l.b16 %v3444
        %v6507 = vunpack.c.h.b16 %v3444
        %v6508 = vunpack.c.l.b16 %v3445
        %v6509 = vunpack.c.h.b16 %v3445
        %v6510 = vunpack.c.l.b16 %v3446
        %v6511 = vunpack.c.h.b16 %v3446
        %v6512 = vunpack.c.l.b16 %v3447
        %v6513 = vunpack.c.h.b16 %v3447
        %v6514 = vunpack.c.l.b16 %v3448
        %v6515 = vunpack.c.h.b16 %v3448
        %v6516 = vunpack.c.l.b16 %v3449
        %v6517 = vunpack.c.h.b16 %v3449
        %v6518 = vunpack.c.l.b16 %v3450
        %v6519 = vunpack.c.h.b16 %v3450
        %v6520 = vunpack.c.l.b16 %v3451
        %v6521 = vunpack.c.h.b16 %v3451
        %v6522 = vunpack.c.l.b16 %v3452
        %v6523 = vunpack.c.h.b16 %v3452
        %v6524 = vunpack.c.l.b16 %v3453
        %v6525 = vunpack.c.h.b16 %v3453
        %v6526 = vunpack.c.l.b16 %v3454
        %v6527 = vunpack.c.h.b16 %v3454
        %v6528 = vpack.c.b16 %v4488, %v4480
        %v6529 = vpack.c.b16 %v4489, %v4481
        %v6530 = vpack.c.b16 %v4490, %v4482
        %v6531 = vpack.c.b16 %v4491, %v4483
        %v6532 = vpack.c.b16 %v4492, %v4484
        %v6533 = vpack.c.b16 %v4493, %v4485
        %v6534 = vpack.c.b16 %v4494, %v4486
        %v6535 = vpack.c.b16 %v4495, %v4487
        %v6536 = vpack.c.b16 %v4504, %v4496
        %v6537 = vpack.c.b16 %v4505, %v4497
        %v6538 = vpack.c.b16 %v4506, %v4498
        %v6539 = vpack.c.b16 %v4507, %v4499
        %v6540 = vpack.c.b16 %v4508, %v4500
        %v6541 = vpack.c.b16 %v4509, %v4501
        %v6542 = vpack.c.b16 %v4510, %v4502
        %v6543 = vpack.c.b16 %v4511, %v4503
        %v6544 = vpack.c.b16 %v4520, %v4512
        %v6545 = vpack.c.b16 %v4521, %v4513
        %v6546 = vpack.c.b16 %v4522, %v4514
        %v6547 = vpack.c.b16 %v4523, %v4515
        %v6548 = vpack.c.b16 %v4524, %v4516
        %v6549 = vpack.c.b16 %v4525, %v4517
        %v6550 = vpack.c.b16 %v4526, %v4518
        %v6551 = vpack.c.b16 %v4527, %v4519
        %v6552 = vpack.c.b16 %v4536, %v4528
        %v6553 = vpack.c.b16 %v4537, %v4529
        %v6554 = vpack.c.b16 %v4538, %v4530
        %v6555 = vpack.c.b16 %v4539, %v4531
        %v6556 = vpack.c.b16 %v4540, %v4532
        %v6557 = vpack.c.b16 %v4541, %v4533
        %v6558 = vpack.c.b16 %v4542, %v4534
        %v6559 = vpack.c.b16 %v4543, %v4535
        %v6560 = vpack.c.b16 %v4552, %v4544
        %v6561 = vpack.c.b16 %v4553, %v4545
        %v6562 = vpack.c.b16 %v4554, %v4546
        %v6563 = vpack.c.b16 %v4555, %v4547
        %v6564 = vpack.c.b16 %v4556, %v4548
        %v6565 = vpack.c.b16 %v4557, %v4549
        %v6566 = vpack.c.b16 %v4558, %v4550
        %v6567 = vpack.c.b16 %v4559, %v4551
        %v6568 = vpack.c.b16 %v4568, %v4560
        %v6569 = vpack.c.b16 %v4569, %v4561
        %v6570 = vpack.c.b16 %v4570, %v4562
        %v6571 = vpack.c.b16 %v4571, %v4563
        %v6572 = vpack.c.b16 %v4572, %v4564
        %v6573 = vpack.c.b16 %v4573, %v4565
        %v6574 = vpack.c.b16 %v4574, %v4566
        %v6575 = vpack.c.b16 %v4575, %v4567
        %v6576 = vpack.c.b16 %v4584, %v4576
        %v6577 = vpack.c.b16 %v4585, %v4577
        %v6578 = vpack.c.b16 %v4586, %v4578
        %v6579 = vpack.c.b16 %v4587, %v4579
        %v6580 = vpack.c.b16 %v4588, %v4580
        %v6581 = vpack.c.b16 %v4589, %v4581
        %v6582 = vpack.c.b16 %v4590, %v4582
        %v6583 = vpack.c.b16 %v4591, %v4583
        %v6584 = vpack.c.b16 %v4600, %v4592
        %v6585 = vpack.c.b16 %v4601, %v4593
        %v6586 = vpack.c.b16 %v4602, %v4594
        %v6587 = vpack.c.b16 %v4603, %v4595
        %v6588 = vpack.c.b16 %v4604, %v4596
        %v6589 = vpack.c.b16 %v4605, %v4597
        %v6590 = vpack.c.b16 %v4606, %v4598
        %v6591 = vpack.c.b16 %v4607, %v4599
        %v6592 = vpack.c.b16 %v4616, %v4608
        %v6593 = vpack.c.b16 %v4617, %v4609
        %v6594 = vpack.c.b16 %v4618, %v4610
        %v6595 = vpack.c.b16 %v4619, %v4611
        %v6596 = vpack.c.b16 %v4620, %v4612
        %v6597 = vpack.c.b16 %v4621, %v4613
        %v6598 = vpack.c.b16 %v4622, %v4614
        %v6599 = vpack.c.b16 %v4623, %v4615
        %v6600 = vpack.c.b16 %v4632, %v4624
        %v6601 = vpack.c.b16 %v4633, %v4625
        %v6602 = vpack.c.b16 %v4634, %v4626
        %v6603 = vpack.c.b16 %v4635, %v4627
        %v6604 = vpack.c.b16 %v4636, %v4628
        %v6605 = vpack.c.b16 %v4637, %v4629
        %v6606 = vpack.c.b16 %v4638, %v4630
        %v6607 = vpack.c.b16 %v4639, %v4631
        %v6608 = vpack.c.b16 %v4648, %v4640
        %v6609 = vpack.c.b16 %v4649, %v4641
        %v6610 = vpack.c.b16 %v4650, %v4642
        %v6611 = vpack.c.b16 %v4651, %v4643
        %v6612 = vpack.c.b16 %v4652, %v4644
        %v6613 = vpack.c.b16 %v4653, %v4645
        %v6614 = vpack.c.b16 %v4654, %v4646
        %v6615 = vpack.c.b16 %v4655, %v4647
        %v6616 = vpack.c.b16 %v4664, %v4656
        %v6617 = vpack.c.b16 %v4665, %v4657
        %v6618 = vpack.c.b16 %v4666, %v4658
        %v6619 = vpack.c.b16 %v4667, %v4659
        %v6620 = vpack.c.b16 %v4668, %v4660
        %v6621 = vpack.c.b16 %v4669, %v4661
        %v6622 = vpack.c.b16 %v4670, %v4662
        %v6623 = vpack.c.b16 %v4671, %v4663
        %v6624 = vpack.c.b16 %v4680, %v4672
        %v6625 = vpack.c.b16 %v4681, %v4673
        %v6626 = vpack.c.b16 %v4682, %v4674
        %v6627 = vpack.c.b16 %v4683, %v4675
        %v6628 = vpack.c.b16 %v4684, %v4676
        %v6629 = vpack.c.b16 %v4685, %v4677
        %v6630 = vpack.c.b16 %v4686, %v4678
        %v6631 = vpack.c.b16 %v4687, %v4679
        %v6632 = vpack.c.b16 %v4696, %v4688
        %v6633 = vpack.c.b16 %v4697, %v4689
        %v6634 = vpack.c.b16 %v4698, %v4690
        %v6635 = vpack.c.b16 %v4699, %v4691
        %v6636 = vpack.c.b16 %v4700, %v4692
        %v6637 = vpack.c.b16 %v4701, %v4693
        %v6638 = vpack.c.b16 %v4702, %v4694
        %v6639 = vpack.c.b16 %v4703, %v4695
        %v6640 = vpack.c.b16 %v4712, %v4704
        %v6641 = vpack.c.b16 %v4713, %v4705
        %v6642 = vpack.c.b16 %v4714, %v4706
        %v6643 = vpack.c.b16 %v4715, %v4707
        %v6644 = vpack.c.b16 %v4716, %v4708
        %v6645 = vpack.c.b16 %v4717, %v4709
        %v6646 = vpack.c.b16 %v4718, %v4710
        %v6647 = vpack.c.b16 %v4719, %v4711
        %v6648 = vpack.c.b16 %v4728, %v4720
        %v6649 = vpack.c.b16 %v4729, %v4721
        %v6650 = vpack.c.b16 %v4730, %v4722
        %v6651 = vpack.c.b16 %v4731, %v4723
        %v6652 = vpack.c.b16 %v4732, %v4724
        %v6653 = vpack.c.b16 %v4733, %v4725
        %v6654 = vpack.c.b16 %v4734, %v4726
        %v6655 = vpack.c.b16 %v4735, %v4727
        %v6656 = vpack.c.b16 %v4744, %v4736
        %v6657 = vpack.c.b16 %v4745, %v4737
        %v6658 = vpack.c.b16 %v4746, %v4738
        %v6659 = vpack.c.b16 %v4747, %v4739
        %v6660 = vpack.c.b16 %v4748, %v4740
        %v6661 = vpack.c.b16 %v4749, %v4741
        %v6662 = vpack.c.b16 %v4750, %v4742
        %v6663 = vpack.c.b16 %v4751, %v4743
        %v6664 = vpack.c.b16 %v4760, %v4752
        %v6665 = vpack.c.b16 %v4761, %v4753
        %v6666 = vpack.c.b16 %v4762, %v4754
        %v6667 = vpack.c.b16 %v4763, %v4755
        %v6668 = vpack.c.b16 %v4764, %v4756
        %v6669 = vpack.c.b16 %v4765, %v4757
        %v6670 = vpack.c.b16 %v4766, %v4758
        %v6671 = vpack.c.b16 %v4767, %v4759
        %v6672 = vpack.c.b16 %v4776, %v4768
        %v6673 = vpack.c.b16 %v4777, %v4769
        %v6674 = vpack.c.b16 %v4778, %v4770
        %v6675 = vpack.c.b16 %v4779, %v4771
        %v6676 = vpack.c.b16 %v4780, %v4772
        %v6677 = vpack.c.b16 %v4781, %v4773
        %v6678 = vpack.c.b16 %v4782, %v4774
        %v6679 = vpack.c.b16 %v4783, %v4775
        %v6680 = vpack.c.b16 %v4792, %v4784
        %v6681 = vpack.c.b16 %v4793, %v4785
        %v6682 = vpack.c.b16 %v4794, %v4786
        %v6683 = vpack.c.b16 %v4795, %v4787
        %v6684 = vpack.c.b16 %v4796, %v4788
        %v6685 = vpack.c.b16 %v4797, %v4789
        %v6686 = vpack.c.b16 %v4798, %v4790
        %v6687 = vpack.c.b16 %v4799, %v4791
        %v6688 = vpack.c.b16 %v4808, %v4800
        %v6689 = vpack.c.b16 %v4809, %v4801
        %v6690 = vpack.c.b16 %v4810, %v4802
        %v6691 = vpack.c.b16 %v4811, %v4803
        %v6692 = vpack.c.b16 %v4812, %v4804
        %v6693 = vpack.c.b16 %v4813, %v4805
        %v6694 = vpack.c.b16 %v4814, %v4806
        %v6695 = vpack.c.b16 %v4815, %v4807
        %v6696 = vpack.c.b16 %v4824, %v4816
        %v6697 = vpack.c.b16 %v4825, %v4817
        %v6698 = vpack.c.b16 %v4826, %v4818
        %v6699 = vpack.c.b16 %v4827, %v4819
        %v6700 = vpack.c.b16 %v4828, %v4820
        %v6701 = vpack.c.b16 %v4829, %v4821
        %v6702 = vpack.c.b16 %v4830, %v4822
        %v6703 = vpack.c.b16 %v4831, %v4823
        %v6704 = vpack.c.b16 %v4840, %v4832
        %v6705 = vpack.c.b16 %v4841, %v4833
        %v6706 = vpack.c.b16 %v4842, %v4834
        %v6707 = vpack.c.b16 %v4843, %v4835
        %v6708 = vpack.c.b16 %v4844, %v4836
        %v6709 = vpack.c.b16 %v4845, %v4837
        %v6710 = vpack.c.b16 %v4846, %v4838
        %v6711 = vpack.c.b16 %v4847, %v4839
        %v6712 = vpack.c.b16 %v4856, %v4848
        %v6713 = vpack.c.b16 %v4857, %v4849
        %v6714 = vpack.c.b16 %v4858, %v4850
        %v6715 = vpack.c.b16 %v4859, %v4851
        %v6716 = vpack.c.b16 %v4860, %v4852
        %v6717 = vpack.c.b16 %v4861, %v4853
        %v6718 = vpack.c.b16 %v4862, %v4854
        %v6719 = vpack.c.b16 %v4863, %v4855
        %v6720 = vpack.c.b16 %v4872, %v4864
        %v6721 = vpack.c.b16 %v4873, %v4865
        %v6722 = vpack.c.b16 %v4874, %v4866
        %v6723 = vpack.c.b16 %v4875, %v4867
        %v6724 = vpack.c.b16 %v4876, %v4868
        %v6725 = vpack.c.b16 %v4877, %v4869
        %v6726 = vpack.c.b16 %v4878, %v4870
        %v6727 = vpack.c.b16 %v4879, %v4871
        %v6728 = vpack.c.b16 %v4888, %v4880
        %v6729 = vpack.c.b16 %v4889, %v4881
        %v6730 = vpack.c.b16 %v4890, %v4882
        %v6731 = vpack.c.b16 %v4891, %v4883
        %v6732 = vpack.c.b16 %v4892, %v4884
        %v6733 = vpack.c.b16 %v4893, %v4885
        %v6734 = vpack.c.b16 %v4894, %v4886
        %v6735 = vpack.c.b16 %v4895, %v4887
        %v6736 = vpack.c.b16 %v4904, %v4896
        %v6737 = vpack.c.b16 %v4905, %v4897
        %v6738 = vpack.c.b16 %v4906, %v4898
        %v6739 = vpack.c.b16 %v4907, %v4899
        %v6740 = vpack.c.b16 %v4908, %v4900
        %v6741 = vpack.c.b16 %v4909, %v4901
        %v6742 = vpack.c.b16 %v4910, %v4902
        %v6743 = vpack.c.b16 %v4911, %v4903
        %v6744 = vpack.c.b16 %v4920, %v4912
        %v6745 = vpack.c.b16 %v4921, %v4913
        %v6746 = vpack.c.b16 %v4922, %v4914
        %v6747 = vpack.c.b16 %v4923, %v4915
        %v6748 = vpack.c.b16 %v4924, %v4916
        %v6749 = vpack.c.b16 %v4925, %v4917
        %v6750 = vpack.c.b16 %v4926, %v4918
        %v6751 = vpack.c.b16 %v4927, %v4919
        %v6752 = vpack.c.b16 %v4936, %v4928
        %v6753 = vpack.c.b16 %v4937, %v4929
        %v6754 = vpack.c.b16 %v4938, %v4930
        %v6755 = vpack.c.b16 %v4939, %v4931
        %v6756 = vpack.c.b16 %v4940, %v4932
        %v6757 = vpack.c.b16 %v4941, %v4933
        %v6758 = vpack.c.b16 %v4942, %v4934
        %v6759 = vpack.c.b16 %v4943, %v4935
        %v6760 = vpack.c.b16 %v4952, %v4944
        %v6761 = vpack.c.b16 %v4953, %v4945
        %v6762 = vpack.c.b16 %v4954, %v4946
        %v6763 = vpack.c.b16 %v4955, %v4947
        %v6764 = vpack.c.b16 %v4956, %v4948
        %v6765 = vpack.c.b16 %v4957, %v4949
        %v6766 = vpack.c.b16 %v4958, %v4950
        %v6767 = vpack.c.b16 %v4959, %v4951
        %v6768 = vpack.c.b16 %v4968, %v4960
        %v6769 = vpack.c.b16 %v4969, %v4961
        %v6770 = vpack.c.b16 %v4970, %v4962
        %v6771 = vpack.c.b16 %v4971, %v4963
        %v6772 = vpack.c.b16 %v4972, %v4964
        %v6773 = vpack.c.b16 %v4973, %v4965
        %v6774 = vpack.c.b16 %v4974, %v4966
        %v6775 = vpack.c.b16 %v4975, %v4967
        %v6776 = vpack.c.b16 %v4984, %v4976
        %v6777 = vpack.c.b16 %v4985, %v4977
        %v6778 = vpack.c.b16 %v4986, %v4978
        %v6779 = vpack.c.b16 %v4987, %v4979
        %v6780 = vpack.c.b16 %v4988, %v4980
        %v6781 = vpack.c.b16 %v4989, %v4981
        %v6782 = vpack.c.b16 %v4990, %v4982
        %v6783 = vpack.c.b16 %v4991, %v4983
        %v6784 = vpack.c.b16 %v5000, %v4992
        %v6785 = vpack.c.b16 %v5001, %v4993
        %v6786 = vpack.c.b16 %v5002, %v4994
        %v6787 = vpack.c.b16 %v5003, %v4995
        %v6788 = vpack.c.b16 %v5004, %v4996
        %v6789 = vpack.c.b16 %v5005, %v4997
        %v6790 = vpack.c.b16 %v5006, %v4998
        %v6791 = vpack.c.b16 %v5007, %v4999
        %v6792 = vpack.c.b16 %v5016, %v5008
        %v6793 = vpack.c.b16 %v5017, %v5009
        %v6794 = vpack.c.b16 %v5018, %v5010
        %v6795 = vpack.c.b16 %v5019, %v5011
        %v6796 = vpack.c.b16 %v5020, %v5012
        %v6797 = vpack.c.b16 %v5021, %v5013
        %v6798 = vpack.c.b16 %v5022, %v5014
        %v6799 = vpack.c.b16 %v5023, %v5015
        %v6800 = vpack.c.b16 %v5032, %v5024
        %v6801 = vpack.c.b16 %v5033, %v5025
        %v6802 = vpack.c.b16 %v5034, %v5026
        %v6803 = vpack.c.b16 %v5035, %v5027
        %v6804 = vpack.c.b16 %v5036, %v5028
        %v6805 = vpack.c.b16 %v5037, %v5029
        %v6806 = vpack.c.b16 %v5038, %v5030
        %v6807 = vpack.c.b16 %v5039, %v5031
        %v6808 = vpack.c.b16 %v5048, %v5040
        %v6809 = vpack.c.b16 %v5049, %v5041
        %v6810 = vpack.c.b16 %v5050, %v5042
        %v6811 = vpack.c.b16 %v5051, %v5043
        %v6812 = vpack.c.b16 %v5052, %v5044
        %v6813 = vpack.c.b16 %v5053, %v5045
        %v6814 = vpack.c.b16 %v5054, %v5046
        %v6815 = vpack.c.b16 %v5055, %v5047
        %v6816 = vpack.c.b16 %v5064, %v5056
        %v6817 = vpack.c.b16 %v5065, %v5057
        %v6818 = vpack.c.b16 %v5066, %v5058
        %v6819 = vpack.c.b16 %v5067, %v5059
        %v6820 = vpack.c.b16 %v5068, %v5060
        %v6821 = vpack.c.b16 %v5069, %v5061
        %v6822 = vpack.c.b16 %v5070, %v5062
        %v6823 = vpack.c.b16 %v5071, %v5063
        %v6824 = vpack.c.b16 %v5080, %v5072
        %v6825 = vpack.c.b16 %v5081, %v5073
        %v6826 = vpack.c.b16 %v5082, %v5074
        %v6827 = vpack.c.b16 %v5083, %v5075
        %v6828 = vpack.c.b16 %v5084, %v5076
        %v6829 = vpack.c.b16 %v5085, %v5077
        %v6830 = vpack.c.b16 %v5086, %v5078
        %v6831 = vpack.c.b16 %v5087, %v5079
        %v6832 = vpack.c.b16 %v5096, %v5088
        %v6833 = vpack.c.b16 %v5097, %v5089
        %v6834 = vpack.c.b16 %v5098, %v5090
        %v6835 = vpack.c.b16 %v5099, %v5091
        %v6836 = vpack.c.b16 %v5100, %v5092
        %v6837 = vpack.c.b16 %v5101, %v5093
        %v6838 = vpack.c.b16 %v5102, %v5094
        %v6839 = vpack.c.b16 %v5103, %v5095
        %v6840 = vpack.c.b16 %v5112, %v5104
        %v6841 = vpack.c.b16 %v5113, %v5105
        %v6842 = vpack.c.b16 %v5114, %v5106
        %v6843 = vpack.c.b16 %v5115, %v5107
        %v6844 = vpack.c.b16 %v5116, %v5108
        %v6845 = vpack.c.b16 %v5117, %v5109
        %v6846 = vpack.c.b16 %v5118, %v5110
        %v6847 = vpack.c.b16 %v5119, %v5111
        %v6848 = vpack.c.b16 %v5128, %v5120
        %v6849 = vpack.c.b16 %v5129, %v5121
        %v6850 = vpack.c.b16 %v5130, %v5122
        %v6851 = vpack.c.b16 %v5131, %v5123
        %v6852 = vpack.c.b16 %v5132, %v5124
        %v6853 = vpack.c.b16 %v5133, %v5125
        %v6854 = vpack.c.b16 %v5134, %v5126
        %v6855 = vpack.c.b16 %v5135, %v5127
        %v6856 = vpack.c.b16 %v5144, %v5136
        %v6857 = vpack.c.b16 %v5145, %v5137
        %v6858 = vpack.c.b16 %v5146, %v5138
        %v6859 = vpack.c.b16 %v5147, %v5139
        %v6860 = vpack.c.b16 %v5148, %v5140
        %v6861 = vpack.c.b16 %v5149, %v5141
        %v6862 = vpack.c.b16 %v5150, %v5142
        %v6863 = vpack.c.b16 %v5151, %v5143
        %v6864 = vpack.c.b16 %v5160, %v5152
        %v6865 = vpack.c.b16 %v5161, %v5153
        %v6866 = vpack.c.b16 %v5162, %v5154
        %v6867 = vpack.c.b16 %v5163, %v5155
        %v6868 = vpack.c.b16 %v5164, %v5156
        %v6869 = vpack.c.b16 %v5165, %v5157
        %v6870 = vpack.c.b16 %v5166, %v5158
        %v6871 = vpack.c.b16 %v5167, %v5159
        %v6872 = vpack.c.b16 %v5176, %v5168
        %v6873 = vpack.c.b16 %v5177, %v5169
        %v6874 = vpack.c.b16 %v5178, %v5170
        %v6875 = vpack.c.b16 %v5179, %v5171
        %v6876 = vpack.c.b16 %v5180, %v5172
        %v6877 = vpack.c.b16 %v5181, %v5173
        %v6878 = vpack.c.b16 %v5182, %v5174
        %v6879 = vpack.c.b16 %v5183, %v5175
        %v6880 = vpack.c.b16 %v5192, %v5184
        %v6881 = vpack.c.b16 %v5193, %v5185
        %v6882 = vpack.c.b16 %v5194, %v5186
        %v6883 = vpack.c.b16 %v5195, %v5187
        %v6884 = vpack.c.b16 %v5196, %v5188
        %v6885 = vpack.c.b16 %v5197, %v5189
        %v6886 = vpack.c.b16 %v5198, %v5190
        %v6887 = vpack.c.b16 %v5199, %v5191
        %v6888 = vpack.c.b16 %v5208, %v5200
        %v6889 = vpack.c.b16 %v5209, %v5201
        %v6890 = vpack.c.b16 %v5210, %v5202
        %v6891 = vpack.c.b16 %v5211, %v5203
        %v6892 = vpack.c.b16 %v5212, %v5204
        %v6893 = vpack.c.b16 %v5213, %v5205
        %v6894 = vpack.c.b16 %v5214, %v5206
        %v6895 = vpack.c.b16 %v5215, %v5207
        %v6896 = vpack.c.b16 %v5224, %v5216
        %v6897 = vpack.c.b16 %v5225, %v5217
        %v6898 = vpack.c.b16 %v5226, %v5218
        %v6899 = vpack.c.b16 %v5227, %v5219
        %v6900 = vpack.c.b16 %v5228, %v5220
        %v6901 = vpack.c.b16 %v5229, %v5221
        %v6902 = vpack.c.b16 %v5230, %v5222
        %v6903 = vpack.c.b16 %v5231, %v5223
        %v6904 = vpack.c.b16 %v5240, %v5232
        %v6905 = vpack.c.b16 %v5241, %v5233
        %v6906 = vpack.c.b16 %v5242, %v5234
        %v6907 = vpack.c.b16 %v5243, %v5235
        %v6908 = vpack.c.b16 %v5244, %v5236
        %v6909 = vpack.c.b16 %v5245, %v5237
        %v6910 = vpack.c.b16 %v5246, %v5238
        %v6911 = vpack.c.b16 %v5247, %v5239
        %v6912 = vpack.c.b16 %v5256, %v5248
        %v6913 = vpack.c.b16 %v5257, %v5249
        %v6914 = vpack.c.b16 %v5258, %v5250
        %v6915 = vpack.c.b16 %v5259, %v5251
        %v6916 = vpack.c.b16 %v5260, %v5252
        %v6917 = vpack.c.b16 %v5261, %v5253
        %v6918 = vpack.c.b16 %v5262, %v5254
        %v6919 = vpack.c.b16 %v5263, %v5255
        %v6920 = vpack.c.b16 %v5272, %v5264
        %v6921 = vpack.c.b16 %v5273, %v5265
        %v6922 = vpack.c.b16 %v5274, %v5266
        %v6923 = vpack.c.b16 %v5275, %v5267
        %v6924 = vpack.c.b16 %v5276, %v5268
        %v6925 = vpack.c.b16 %v5277, %v5269
        %v6926 = vpack.c.b16 %v5278, %v5270
        %v6927 = vpack.c.b16 %v5279, %v5271
        %v6928 = vpack.c.b16 %v5288, %v5280
        %v6929 = vpack.c.b16 %v5289, %v5281
        %v6930 = vpack.c.b16 %v5290, %v5282
        %v6931 = vpack.c.b16 %v5291, %v5283
        %v6932 = vpack.c.b16 %v5292, %v5284
        %v6933 = vpack.c.b16 %v5293, %v5285
        %v6934 = vpack.c.b16 %v5294, %v5286
        %v6935 = vpack.c.b16 %v5295, %v5287
        %v6936 = vpack.c.b16 %v5304, %v5296
        %v6937 = vpack.c.b16 %v5305, %v5297
        %v6938 = vpack.c.b16 %v5306, %v5298
        %v6939 = vpack.c.b16 %v5307, %v5299
        %v6940 = vpack.c.b16 %v5308, %v5300
        %v6941 = vpack.c.b16 %v5309, %v5301
        %v6942 = vpack.c.b16 %v5310, %v5302
        %v6943 = vpack.c.b16 %v5311, %v5303
        %v6944 = vpack.c.b16 %v5320, %v5312
        %v6945 = vpack.c.b16 %v5321, %v5313
        %v6946 = vpack.c.b16 %v5322, %v5314
        %v6947 = vpack.c.b16 %v5323, %v5315
        %v6948 = vpack.c.b16 %v5324, %v5316
        %v6949 = vpack.c.b16 %v5325, %v5317
        %v6950 = vpack.c.b16 %v5326, %v5318
        %v6951 = vpack.c.b16 %v5327, %v5319
        %v6952 = vpack.c.b16 %v5336, %v5328
        %v6953 = vpack.c.b16 %v5337, %v5329
        %v6954 = vpack.c.b16 %v5338, %v5330
        %v6955 = vpack.c.b16 %v5339, %v5331
        %v6956 = vpack.c.b16 %v5340, %v5332
        %v6957 = vpack.c.b16 %v5341, %v5333
        %v6958 = vpack.c.b16 %v5342, %v5334
        %v6959 = vpack.c.b16 %v5343, %v5335
        %v6960 = vpack.c.b16 %v5352, %v5344
        %v6961 = vpack.c.b16 %v5353, %v5345
        %v6962 = vpack.c.b16 %v5354, %v5346
        %v6963 = vpack.c.b16 %v5355, %v5347
        %v6964 = vpack.c.b16 %v5356, %v5348
        %v6965 = vpack.c.b16 %v5357, %v5349
        %v6966 = vpack.c.b16 %v5358, %v5350
        %v6967 = vpack.c.b16 %v5359, %v5351
        %v6968 = vpack.c.b16 %v5368, %v5360
        %v6969 = vpack.c.b16 %v5369, %v5361
        %v6970 = vpack.c.b16 %v5370, %v5362
        %v6971 = vpack.c.b16 %v5371, %v5363
        %v6972 = vpack.c.b16 %v5372, %v5364
        %v6973 = vpack.c.b16 %v5373, %v5365
        %v6974 = vpack.c.b16 %v5374, %v5366
        %v6975 = vpack.c.b16 %v5375, %v5367
        %v6976 = vpack.c.b16 %v5384, %v5376
        %v6977 = vpack.c.b16 %v5385, %v5377
        %v6978 = vpack.c.b16 %v5386, %v5378
        %v6979 = vpack.c.b16 %v5387, %v5379
        %v6980 = vpack.c.b16 %v5388, %v5380
        %v6981 = vpack.c.b16 %v5389, %v5381
        %v6982 = vpack.c.b16 %v5390, %v5382
        %v6983 = vpack.c.b16 %v5391, %v5383
        %v6984 = vpack.c.b16 %v5400, %v5392
        %v6985 = vpack.c.b16 %v5401, %v5393
        %v6986 = vpack.c.b16 %v5402, %v5394
        %v6987 = vpack.c.b16 %v5403, %v5395
        %v6988 = vpack.c.b16 %v5404, %v5396
        %v6989 = vpack.c.b16 %v5405, %v5397
        %v6990 = vpack.c.b16 %v5406, %v5398
        %v6991 = vpack.c.b16 %v5407, %v5399
        %v6992 = vpack.c.b16 %v5416, %v5408
        %v6993 = vpack.c.b16 %v5417, %v5409
        %v6994 = vpack.c.b16 %v5418, %v5410
        %v6995 = vpack.c.b16 %v5419, %v5411
        %v6996 = vpack.c.b16 %v5420, %v5412
        %v6997 = vpack.c.b16 %v5421, %v5413
        %v6998 = vpack.c.b16 %v5422, %v5414
        %v6999 = vpack.c.b16 %v5423, %v5415
        %v7000 = vpack.c.b16 %v5432, %v5424
        %v7001 = vpack.c.b16 %v5433, %v5425
        %v7002 = vpack.c.b16 %v5434, %v5426
        %v7003 = vpack.c.b16 %v5435, %v5427
        %v7004 = vpack.c.b16 %v5436, %v5428
        %v7005 = vpack.c.b16 %v5437, %v5429
        %v7006 = vpack.c.b16 %v5438, %v5430
        %v7007 = vpack.c.b16 %v5439, %v5431
        %v7008 = vpack.c.b16 %v5448, %v5440
        %v7009 = vpack.c.b16 %v5449, %v5441
        %v7010 = vpack.c.b16 %v5450, %v5442
        %v7011 = vpack.c.b16 %v5451, %v5443
        %v7012 = vpack.c.b16 %v5452, %v5444
        %v7013 = vpack.c.b16 %v5453, %v5445
        %v7014 = vpack.c.b16 %v5454, %v5446
        %v7015 = vpack.c.b16 %v5455, %v5447
        %v7016 = vpack.c.b16 %v5464, %v5456
        %v7017 = vpack.c.b16 %v5465, %v5457
        %v7018 = vpack.c.b16 %v5466, %v5458
        %v7019 = vpack.c.b16 %v5467, %v5459
        %v7020 = vpack.c.b16 %v5468, %v5460
        %v7021 = vpack.c.b16 %v5469, %v5461
        %v7022 = vpack.c.b16 %v5470, %v5462
        %v7023 = vpack.c.b16 %v5471, %v5463
        %v7024 = vpack.c.b16 %v5480, %v5472
        %v7025 = vpack.c.b16 %v5481, %v5473
        %v7026 = vpack.c.b16 %v5482, %v5474
        %v7027 = vpack.c.b16 %v5483, %v5475
        %v7028 = vpack.c.b16 %v5484, %v5476
        %v7029 = vpack.c.b16 %v5485, %v5477
        %v7030 = vpack.c.b16 %v5486, %v5478
        %v7031 = vpack.c.b16 %v5487, %v5479
        %v7032 = vpack.c.b16 %v5496, %v5488
        %v7033 = vpack.c.b16 %v5497, %v5489
        %v7034 = vpack.c.b16 %v5498, %v5490
        %v7035 = vpack.c.b16 %v5499, %v5491
        %v7036 = vpack.c.b16 %v5500, %v5492
        %v7037 = vpack.c.b16 %v5501, %v5493
        %v7038 = vpack.c.b16 %v5502, %v5494
        %v7039 = vpack.c.b16 %v5503, %v5495
        %v7040 = vpack.c.b16 %v5512, %v5504
        %v7041 = vpack.c.b16 %v5513, %v5505
        %v7042 = vpack.c.b16 %v5514, %v5506
        %v7043 = vpack.c.b16 %v5515, %v5507
        %v7044 = vpack.c.b16 %v5516, %v5508
        %v7045 = vpack.c.b16 %v5517, %v5509
        %v7046 = vpack.c.b16 %v5518, %v5510
        %v7047 = vpack.c.b16 %v5519, %v5511
        %v7048 = vpack.c.b16 %v5528, %v5520
        %v7049 = vpack.c.b16 %v5529, %v5521
        %v7050 = vpack.c.b16 %v5530, %v5522
        %v7051 = vpack.c.b16 %v5531, %v5523
        %v7052 = vpack.c.b16 %v5532, %v5524
        %v7053 = vpack.c.b16 %v5533, %v5525
        %v7054 = vpack.c.b16 %v5534, %v5526
        %v7055 = vpack.c.b16 %v5535, %v5527
        %v7056 = vpack.c.b16 %v5544, %v5536
        %v7057 = vpack.c.b16 %v5545, %v5537
        %v7058 = vpack.c.b16 %v5546, %v5538
        %v7059 = vpack.c.b16 %v5547, %v5539
        %v7060 = vpack.c.b16 %v5548, %v5540
        %v7061 = vpack.c.b16 %v5549, %v5541
        %v7062 = vpack.c.b16 %v5550, %v5542
        %v7063 = vpack.c.b16 %v5551, %v5543
        %v7064 = vpack.c.b16 %v5560, %v5552
        %v7065 = vpack.c.b16 %v5561, %v5553
        %v7066 = vpack.c.b16 %v5562, %v5554
        %v7067 = vpack.c.b16 %v5563, %v5555
        %v7068 = vpack.c.b16 %v5564, %v5556
        %v7069 = vpack.c.b16 %v5565, %v5557
        %v7070 = vpack.c.b16 %v5566, %v5558
        %v7071 = vpack.c.b16 %v5567, %v5559
        %v7072 = vpack.c.b16 %v5576, %v5568
        %v7073 = vpack.c.b16 %v5577, %v5569
        %v7074 = vpack.c.b16 %v5578, %v5570
        %v7075 = vpack.c.b16 %v5579, %v5571
        %v7076 = vpack.c.b16 %v5580, %v5572
        %v7077 = vpack.c.b16 %v5581, %v5573
        %v7078 = vpack.c.b16 %v5582, %v5574
        %v7079 = vpack.c.b16 %v5583, %v5575
        %v7080 = vpack.c.b16 %v5592, %v5584
        %v7081 = vpack.c.b16 %v5593, %v5585
        %v7082 = vpack.c.b16 %v5594, %v5586
        %v7083 = vpack.c.b16 %v5595, %v5587
        %v7084 = vpack.c.b16 %v5596, %v5588
        %v7085 = vpack.c.b16 %v5597, %v5589
        %v7086 = vpack.c.b16 %v5598, %v5590
        %v7087 = vpack.c.b16 %v5599, %v5591
        %v7088 = vpack.c.b16 %v5608, %v5600
        %v7089 = vpack.c.b16 %v5609, %v5601
        %v7090 = vpack.c.b16 %v5610, %v5602
        %v7091 = vpack.c.b16 %v5611, %v5603
        %v7092 = vpack.c.b16 %v5612, %v5604
        %v7093 = vpack.c.b16 %v5613, %v5605
        %v7094 = vpack.c.b16 %v5614, %v5606
        %v7095 = vpack.c.b16 %v5615, %v5607
        %v7096 = vpack.c.b16 %v5624, %v5616
        %v7097 = vpack.c.b16 %v5625, %v5617
        %v7098 = vpack.c.b16 %v5626, %v5618
        %v7099 = vpack.c.b16 %v5627, %v5619
        %v7100 = vpack.c.b16 %v5628, %v5620
        %v7101 = vpack.c.b16 %v5629, %v5621
        %v7102 = vpack.c.b16 %v5630, %v5622
        %v7103 = vpack.c.b16 %v5631, %v5623
        %v7104 = vpack.c.b16 %v5640, %v5632
        %v7105 = vpack.c.b16 %v5641, %v5633
        %v7106 = vpack.c.b16 %v5642, %v5634
        %v7107 = vpack.c.b16 %v5643, %v5635
        %v7108 = vpack.c.b16 %v5644, %v5636
        %v7109 = vpack.c.b16 %v5645, %v5637
        %v7110 = vpack.c.b16 %v5646, %v5638
        %v7111 = vpack.c.b16 %v5647, %v5639
        %v7112 = vpack.c.b16 %v5656, %v5648
        %v7113 = vpack.c.b16 %v5657, %v5649
        %v7114 = vpack.c.b16 %v5658, %v5650
        %v7115 = vpack.c.b16 %v5659, %v5651
        %v7116 = vpack.c.b16 %v5660, %v5652
        %v7117 = vpack.c.b16 %v5661, %v5653
        %v7118 = vpack.c.b16 %v5662, %v5654
        %v7119 = vpack.c.b16 %v5663, %v5655
        %v7120 = vpack.c.b16 %v5672, %v5664
        %v7121 = vpack.c.b16 %v5673, %v5665
        %v7122 = vpack.c.b16 %v5674, %v5666
        %v7123 = vpack.c.b16 %v5675, %v5667
        %v7124 = vpack.c.b16 %v5676, %v5668
        %v7125 = vpack.c.b16 %v5677, %v5669
        %v7126 = vpack.c.b16 %v5678, %v5670
        %v7127 = vpack.c.b16 %v5679, %v5671
        %v7128 = vpack.c.b16 %v5688, %v5680
        %v7129 = vpack.c.b16 %v5689, %v5681
        %v7130 = vpack.c.b16 %v5690, %v5682
        %v7131 = vpack.c.b16 %v5691, %v5683
        %v7132 = vpack.c.b16 %v5692, %v5684
        %v7133 = vpack.c.b16 %v5693, %v5685
        %v7134 = vpack.c.b16 %v5694, %v5686
        %v7135 = vpack.c.b16 %v5695, %v5687
        %v7136 = vpack.c.b16 %v5704, %v5696
        %v7137 = vpack.c.b16 %v5705, %v5697
        %v7138 = vpack.c.b16 %v5706, %v5698
        %v7139 = vpack.c.b16 %v5707, %v5699
        %v7140 = vpack.c.b16 %v5708, %v5700
        %v7141 = vpack.c.b16 %v5709, %v5701
        %v7142 = vpack.c.b16 %v5710, %v5702
        %v7143 = vpack.c.b16 %v5711, %v5703
        %v7144 = vpack.c.b16 %v5720, %v5712
        %v7145 = vpack.c.b16 %v5721, %v5713
        %v7146 = vpack.c.b16 %v5722, %v5714
        %v7147 = vpack.c.b16 %v5723, %v5715
        %v7148 = vpack.c.b16 %v5724, %v5716
        %v7149 = vpack.c.b16 %v5725, %v5717
        %v7150 = vpack.c.b16 %v5726, %v5718
        %v7151 = vpack.c.b16 %v5727, %v5719
        %v7152 = vpack.c.b16 %v5736, %v5728
        %v7153 = vpack.c.b16 %v5737, %v5729
        %v7154 = vpack.c.b16 %v5738, %v5730
        %v7155 = vpack.c.b16 %v5739, %v5731
        %v7156 = vpack.c.b16 %v5740, %v5732
        %v7157 = vpack.c.b16 %v5741, %v5733
        %v7158 = vpack.c.b16 %v5742, %v5734
        %v7159 = vpack.c.b16 %v5743, %v5735
        %v7160 = vpack.c.b16 %v5752, %v5744
        %v7161 = vpack.c.b16 %v5753, %v5745
        %v7162 = vpack.c.b16 %v5754, %v5746
        %v7163 = vpack.c.b16 %v5755, %v5747
        %v7164 = vpack.c.b16 %v5756, %v5748
        %v7165 = vpack.c.b16 %v5757, %v5749
        %v7166 = vpack.c.b16 %v5758, %v5750
        %v7167 = vpack.c.b16 %v5759, %v5751
        %v7168 = vpack.c.b16 %v5768, %v5760
        %v7169 = vpack.c.b16 %v5769, %v5761
        %v7170 = vpack.c.b16 %v5770, %v5762
        %v7171 = vpack.c.b16 %v5771, %v5763
        %v7172 = vpack.c.b16 %v5772, %v5764
        %v7173 = vpack.c.b16 %v5773, %v5765
        %v7174 = vpack.c.b16 %v5774, %v5766
        %v7175 = vpack.c.b16 %v5775, %v5767
        %v7176 = vpack.c.b16 %v5784, %v5776
        %v7177 = vpack.c.b16 %v5785, %v5777
        %v7178 = vpack.c.b16 %v5786, %v5778
        %v7179 = vpack.c.b16 %v5787, %v5779
        %v7180 = vpack.c.b16 %v5788, %v5780
        %v7181 = vpack.c.b16 %v5789, %v5781
        %v7182 = vpack.c.b16 %v5790, %v5782
        %v7183 = vpack.c.b16 %v5791, %v5783
        %v7184 = vpack.c.b16 %v5800, %v5792
        %v7185 = vpack.c.b16 %v5801, %v5793
        %v7186 = vpack.c.b16 %v5802, %v5794
        %v7187 = vpack.c.b16 %v5803, %v5795
        %v7188 = vpack.c.b16 %v5804, %v5796
        %v7189 = vpack.c.b16 %v5805, %v5797
        %v7190 = vpack.c.b16 %v5806, %v5798
        %v7191 = vpack.c.b16 %v5807, %v5799
        %v7192 = vpack.c.b16 %v5816, %v5808
        %v7193 = vpack.c.b16 %v5817, %v5809
        %v7194 = vpack.c.b16 %v5818, %v5810
        %v7195 = vpack.c.b16 %v5819, %v5811
        %v7196 = vpack.c.b16 %v5820, %v5812
        %v7197 = vpack.c.b16 %v5821, %v5813
        %v7198 = vpack.c.b16 %v5822, %v5814
        %v7199 = vpack.c.b16 %v5823, %v5815
        %v7200 = vpack.c.b16 %v5832, %v5824
        %v7201 = vpack.c.b16 %v5833, %v5825
        %v7202 = vpack.c.b16 %v5834, %v5826
        %v7203 = vpack.c.b16 %v5835, %v5827
        %v7204 = vpack.c.b16 %v5836, %v5828
        %v7205 = vpack.c.b16 %v5837, %v5829
        %v7206 = vpack.c.b16 %v5838, %v5830
        %v7207 = vpack.c.b16 %v5839, %v5831
        %v7208 = vpack.c.b16 %v5848, %v5840
        %v7209 = vpack.c.b16 %v5849, %v5841
        %v7210 = vpack.c.b16 %v5850, %v5842
        %v7211 = vpack.c.b16 %v5851, %v5843
        %v7212 = vpack.c.b16 %v5852, %v5844
        %v7213 = vpack.c.b16 %v5853, %v5845
        %v7214 = vpack.c.b16 %v5854, %v5846
        %v7215 = vpack.c.b16 %v5855, %v5847
        %v7216 = vpack.c.b16 %v5864, %v5856
        %v7217 = vpack.c.b16 %v5865, %v5857
        %v7218 = vpack.c.b16 %v5866, %v5858
        %v7219 = vpack.c.b16 %v5867, %v5859
        %v7220 = vpack.c.b16 %v5868, %v5860
        %v7221 = vpack.c.b16 %v5869, %v5861
        %v7222 = vpack.c.b16 %v5870, %v5862
        %v7223 = vpack.c.b16 %v5871, %v5863
        %v7224 = vpack.c.b16 %v5880, %v5872
        %v7225 = vpack.c.b16 %v5881, %v5873
        %v7226 = vpack.c.b16 %v5882, %v5874
        %v7227 = vpack.c.b16 %v5883, %v5875
        %v7228 = vpack.c.b16 %v5884, %v5876
        %v7229 = vpack.c.b16 %v5885, %v5877
        %v7230 = vpack.c.b16 %v5886, %v5878
        %v7231 = vpack.c.b16 %v5887, %v5879
        %v7232 = vpack.c.b16 %v5896, %v5888
        %v7233 = vpack.c.b16 %v5897, %v5889
        %v7234 = vpack.c.b16 %v5898, %v5890
        %v7235 = vpack.c.b16 %v5899, %v5891
        %v7236 = vpack.c.b16 %v5900, %v5892
        %v7237 = vpack.c.b16 %v5901, %v5893
        %v7238 = vpack.c.b16 %v5902, %v5894
        %v7239 = vpack.c.b16 %v5903, %v5895
        %v7240 = vpack.c.b16 %v5912, %v5904
        %v7241 = vpack.c.b16 %v5913, %v5905
        %v7242 = vpack.c.b16 %v5914, %v5906
        %v7243 = vpack.c.b16 %v5915, %v5907
        %v7244 = vpack.c.b16 %v5916, %v5908
        %v7245 = vpack.c.b16 %v5917, %v5909
        %v7246 = vpack.c.b16 %v5918, %v5910
        %v7247 = vpack.c.b16 %v5919, %v5911
        %v7248 = vpack.c.b16 %v5928, %v5920
        %v7249 = vpack.c.b16 %v5929, %v5921
        %v7250 = vpack.c.b16 %v5930, %v5922
        %v7251 = vpack.c.b16 %v5931, %v5923
        %v7252 = vpack.c.b16 %v5932, %v5924
        %v7253 = vpack.c.b16 %v5933, %v5925
        %v7254 = vpack.c.b16 %v5934, %v5926
        %v7255 = vpack.c.b16 %v5935, %v5927
        %v7256 = vpack.c.b16 %v5944, %v5936
        %v7257 = vpack.c.b16 %v5945, %v5937
        %v7258 = vpack.c.b16 %v5946, %v5938
        %v7259 = vpack.c.b16 %v5947, %v5939
        %v7260 = vpack.c.b16 %v5948, %v5940
        %v7261 = vpack.c.b16 %v5949, %v5941
        %v7262 = vpack.c.b16 %v5950, %v5942
        %v7263 = vpack.c.b16 %v5951, %v5943
        %v7264 = vpack.c.b16 %v5960, %v5952
        %v7265 = vpack.c.b16 %v5961, %v5953
        %v7266 = vpack.c.b16 %v5962, %v5954
        %v7267 = vpack.c.b16 %v5963, %v5955
        %v7268 = vpack.c.b16 %v5964, %v5956
        %v7269 = vpack.c.b16 %v5965, %v5957
        %v7270 = vpack.c.b16 %v5966, %v5958
        %v7271 = vpack.c.b16 %v5967, %v5959
        %v7272 = vpack.c.b16 %v5976, %v5968
        %v7273 = vpack.c.b16 %v5977, %v5969
        %v7274 = vpack.c.b16 %v5978, %v5970
        %v7275 = vpack.c.b16 %v5979, %v5971
        %v7276 = vpack.c.b16 %v5980, %v5972
        %v7277 = vpack.c.b16 %v5981, %v5973
        %v7278 = vpack.c.b16 %v5982, %v5974
        %v7279 = vpack.c.b16 %v5983, %v5975
        %v7280 = vpack.c.b16 %v5992, %v5984
        %v7281 = vpack.c.b16 %v5993, %v5985
        %v7282 = vpack.c.b16 %v5994, %v5986
        %v7283 = vpack.c.b16 %v5995, %v5987
        %v7284 = vpack.c.b16 %v5996, %v5988
        %v7285 = vpack.c.b16 %v5997, %v5989
        %v7286 = vpack.c.b16 %v5998, %v5990
        %v7287 = vpack.c.b16 %v5999, %v5991
        %v7288 = vpack.c.b16 %v6008, %v6000
        %v7289 = vpack.c.b16 %v6009, %v6001
        %v7290 = vpack.c.b16 %v6010, %v6002
        %v7291 = vpack.c.b16 %v6011, %v6003
        %v7292 = vpack.c.b16 %v6012, %v6004
        %v7293 = vpack.c.b16 %v6013, %v6005
        %v7294 = vpack.c.b16 %v6014, %v6006
        %v7295 = vpack.c.b16 %v6015, %v6007
        %v7296 = vpack.c.b16 %v6024, %v6016
        %v7297 = vpack.c.b16 %v6025, %v6017
        %v7298 = vpack.c.b16 %v6026, %v6018
        %v7299 = vpack.c.b16 %v6027, %v6019
        %v7300 = vpack.c.b16 %v6028, %v6020
        %v7301 = vpack.c.b16 %v6029, %v6021
        %v7302 = vpack.c.b16 %v6030, %v6022
        %v7303 = vpack.c.b16 %v6031, %v6023
        %v7304 = vpack.c.b16 %v6040, %v6032
        %v7305 = vpack.c.b16 %v6041, %v6033
        %v7306 = vpack.c.b16 %v6042, %v6034
        %v7307 = vpack.c.b16 %v6043, %v6035
        %v7308 = vpack.c.b16 %v6044, %v6036
        %v7309 = vpack.c.b16 %v6045, %v6037
        %v7310 = vpack.c.b16 %v6046, %v6038
        %v7311 = vpack.c.b16 %v6047, %v6039
        %v7312 = vpack.c.b16 %v6056, %v6048
        %v7313 = vpack.c.b16 %v6057, %v6049
        %v7314 = vpack.c.b16 %v6058, %v6050
        %v7315 = vpack.c.b16 %v6059, %v6051
        %v7316 = vpack.c.b16 %v6060, %v6052
        %v7317 = vpack.c.b16 %v6061, %v6053
        %v7318 = vpack.c.b16 %v6062, %v6054
        %v7319 = vpack.c.b16 %v6063, %v6055
        %v7320 = vpack.c.b16 %v6072, %v6064
        %v7321 = vpack.c.b16 %v6073, %v6065
        %v7322 = vpack.c.b16 %v6074, %v6066
        %v7323 = vpack.c.b16 %v6075, %v6067
        %v7324 = vpack.c.b16 %v6076, %v6068
        %v7325 = vpack.c.b16 %v6077, %v6069
        %v7326 = vpack.c.b16 %v6078, %v6070
        %v7327 = vpack.c.b16 %v6079, %v6071
        %v7328 = vpack.c.b16 %v6088, %v6080
        %v7329 = vpack.c.b16 %v6089, %v6081
        %v7330 = vpack.c.b16 %v6090, %v6082
        %v7331 = vpack.c.b16 %v6091, %v6083
        %v7332 = vpack.c.b16 %v6092, %v6084
        %v7333 = vpack.c.b16 %v6093, %v6085
        %v7334 = vpack.c.b16 %v6094, %v6086
        %v7335 = vpack.c.b16 %v6095, %v6087
        %v7336 = vpack.c.b16 %v6104, %v6096
        %v7337 = vpack.c.b16 %v6105, %v6097
        %v7338 = vpack.c.b16 %v6106, %v6098
        %v7339 = vpack.c.b16 %v6107, %v6099
        %v7340 = vpack.c.b16 %v6108, %v6100
        %v7341 = vpack.c.b16 %v6109, %v6101
        %v7342 = vpack.c.b16 %v6110, %v6102
        %v7343 = vpack.c.b16 %v6111, %v6103
        %v7344 = vpack.c.b16 %v6120, %v6112
        %v7345 = vpack.c.b16 %v6121, %v6113
        %v7346 = vpack.c.b16 %v6122, %v6114
        %v7347 = vpack.c.b16 %v6123, %v6115
        %v7348 = vpack.c.b16 %v6124, %v6116
        %v7349 = vpack.c.b16 %v6125, %v6117
        %v7350 = vpack.c.b16 %v6126, %v6118
        %v7351 = vpack.c.b16 %v6127, %v6119
        %v7352 = vpack.c.b16 %v6136, %v6128
        %v7353 = vpack.c.b16 %v6137, %v6129
        %v7354 = vpack.c.b16 %v6138, %v6130
        %v7355 = vpack.c.b16 %v6139, %v6131
        %v7356 = vpack.c.b16 %v6140, %v6132
        %v7357 = vpack.c.b16 %v6141, %v6133
        %v7358 = vpack.c.b16 %v6142, %v6134
        %v7359 = vpack.c.b16 %v6143, %v6135
        %v7360 = vpack.c.b16 %v6152, %v6144
        %v7361 = vpack.c.b16 %v6153, %v6145
        %v7362 = vpack.c.b16 %v6154, %v6146
        %v7363 = vpack.c.b16 %v6155, %v6147
        %v7364 = vpack.c.b16 %v6156, %v6148
        %v7365 = vpack.c.b16 %v6157, %v6149
        %v7366 = vpack.c.b16 %v6158, %v6150
        %v7367 = vpack.c.b16 %v6159, %v6151
        %v7368 = vpack.c.b16 %v6168, %v6160
        %v7369 = vpack.c.b16 %v6169, %v6161
        %v7370 = vpack.c.b16 %v6170, %v6162
        %v7371 = vpack.c.b16 %v6171, %v6163
        %v7372 = vpack.c.b16 %v6172, %v6164
        %v7373 = vpack.c.b16 %v6173, %v6165
        %v7374 = vpack.c.b16 %v6174, %v6166
        %v7375 = vpack.c.b16 %v6175, %v6167
        %v7376 = vpack.c.b16 %v6184, %v6176
        %v7377 = vpack.c.b16 %v6185, %v6177
        %v7378 = vpack.c.b16 %v6186, %v6178
        %v7379 = vpack.c.b16 %v6187, %v6179
        %v7380 = vpack.c.b16 %v6188, %v6180
        %v7381 = vpack.c.b16 %v6189, %v6181
        %v7382 = vpack.c.b16 %v6190, %v6182
        %v7383 = vpack.c.b16 %v6191, %v6183
        %v7384 = vpack.c.b16 %v6200, %v6192
        %v7385 = vpack.c.b16 %v6201, %v6193
        %v7386 = vpack.c.b16 %v6202, %v6194
        %v7387 = vpack.c.b16 %v6203, %v6195
        %v7388 = vpack.c.b16 %v6204, %v6196
        %v7389 = vpack.c.b16 %v6205, %v6197
        %v7390 = vpack.c.b16 %v6206, %v6198
        %v7391 = vpack.c.b16 %v6207, %v6199
        %v7392 = vpack.c.b16 %v6216, %v6208
        %v7393 = vpack.c.b16 %v6217, %v6209
        %v7394 = vpack.c.b16 %v6218, %v6210
        %v7395 = vpack.c.b16 %v6219, %v6211
        %v7396 = vpack.c.b16 %v6220, %v6212
        %v7397 = vpack.c.b16 %v6221, %v6213
        %v7398 = vpack.c.b16 %v6222, %v6214
        %v7399 = vpack.c.b16 %v6223, %v6215
        %v7400 = vpack.c.b16 %v6232, %v6224
        %v7401 = vpack.c.b16 %v6233, %v6225
        %v7402 = vpack.c.b16 %v6234, %v6226
        %v7403 = vpack.c.b16 %v6235, %v6227
        %v7404 = vpack.c.b16 %v6236, %v6228
        %v7405 = vpack.c.b16 %v6237, %v6229
        %v7406 = vpack.c.b16 %v6238, %v6230
        %v7407 = vpack.c.b16 %v6239, %v6231
        %v7408 = vpack.c.b16 %v6248, %v6240
        %v7409 = vpack.c.b16 %v6249, %v6241
        %v7410 = vpack.c.b16 %v6250, %v6242
        %v7411 = vpack.c.b16 %v6251, %v6243
        %v7412 = vpack.c.b16 %v6252, %v6244
        %v7413 = vpack.c.b16 %v6253, %v6245
        %v7414 = vpack.c.b16 %v6254, %v6246
        %v7415 = vpack.c.b16 %v6255, %v6247
        %v7416 = vpack.c.b16 %v6264, %v6256
        %v7417 = vpack.c.b16 %v6265, %v6257
        %v7418 = vpack.c.b16 %v6266, %v6258
        %v7419 = vpack.c.b16 %v6267, %v6259
        %v7420 = vpack.c.b16 %v6268, %v6260
        %v7421 = vpack.c.b16 %v6269, %v6261
        %v7422 = vpack.c.b16 %v6270, %v6262
        %v7423 = vpack.c.b16 %v6271, %v6263
        %v7424 = vpack.c.b16 %v6280, %v6272
        %v7425 = vpack.c.b16 %v6281, %v6273
        %v7426 = vpack.c.b16 %v6282, %v6274
        %v7427 = vpack.c.b16 %v6283, %v6275
        %v7428 = vpack.c.b16 %v6284, %v6276
        %v7429 = vpack.c.b16 %v6285, %v6277
        %v7430 = vpack.c.b16 %v6286, %v6278
        %v7431 = vpack.c.b16 %v6287, %v6279
        %v7432 = vpack.c.b16 %v6296, %v6288
        %v7433 = vpack.c.b16 %v6297, %v6289
        %v7434 = vpack.c.b16 %v6298, %v6290
        %v7435 = vpack.c.b16 %v6299, %v6291
        %v7436 = vpack.c.b16 %v6300, %v6292
        %v7437 = vpack.c.b16 %v6301, %v6293
        %v7438 = vpack.c.b16 %v6302, %v6294
        %v7439 = vpack.c.b16 %v6303, %v6295
        %v7440 = vpack.c.b16 %v6312, %v6304
        %v7441 = vpack.c.b16 %v6313, %v6305
        %v7442 = vpack.c.b16 %v6314, %v6306
        %v7443 = vpack.c.b16 %v6315, %v6307
        %v7444 = vpack.c.b16 %v6316, %v6308
        %v7445 = vpack.c.b16 %v6317, %v6309
        %v7446 = vpack.c.b16 %v6318, %v6310
        %v7447 = vpack.c.b16 %v6319, %v6311
        %v7448 = vpack.c.b16 %v6328, %v6320
        %v7449 = vpack.c.b16 %v6329, %v6321
        %v7450 = vpack.c.b16 %v6330, %v6322
        %v7451 = vpack.c.b16 %v6331, %v6323
        %v7452 = vpack.c.b16 %v6332, %v6324
        %v7453 = vpack.c.b16 %v6333, %v6325
        %v7454 = vpack.c.b16 %v6334, %v6326
        %v7455 = vpack.c.b16 %v6335, %v6327
        %v7456 = vpack.c.b16 %v6344, %v6336
        %v7457 = vpack.c.b16 %v6345, %v6337
        %v7458 = vpack.c.b16 %v6346, %v6338
        %v7459 = vpack.c.b16 %v6347, %v6339
        %v7460 = vpack.c.b16 %v6348, %v6340
        %v7461 = vpack.c.b16 %v6349, %v6341
        %v7462 = vpack.c.b16 %v6350, %v6342
        %v7463 = vpack.c.b16 %v6351, %v6343
        %v7464 = vpack.c.b16 %v6360, %v6352
        %v7465 = vpack.c.b16 %v6361, %v6353
        %v7466 = vpack.c.b16 %v6362, %v6354
        %v7467 = vpack.c.b16 %v6363, %v6355
        %v7468 = vpack.c.b16 %v6364, %v6356
        %v7469 = vpack.c.b16 %v6365, %v6357
        %v7470 = vpack.c.b16 %v6366, %v6358
        %v7471 = vpack.c.b16 %v6367, %v6359
        %v7472 = vpack.c.b16 %v6376, %v6368
        %v7473 = vpack.c.b16 %v6377, %v6369
        %v7474 = vpack.c.b16 %v6378, %v6370
        %v7475 = vpack.c.b16 %v6379, %v6371
        %v7476 = vpack.c.b16 %v6380, %v6372
        %v7477 = vpack.c.b16 %v6381, %v6373
        %v7478 = vpack.c.b16 %v6382, %v6374
        %v7479 = vpack.c.b16 %v6383, %v6375
        %v7480 = vpack.c.b16 %v6392, %v6384
        %v7481 = vpack.c.b16 %v6393, %v6385
        %v7482 = vpack.c.b16 %v6394, %v6386
        %v7483 = vpack.c.b16 %v6395, %v6387
        %v7484 = vpack.c.b16 %v6396, %v6388
        %v7485 = vpack.c.b16 %v6397, %v6389
        %v7486 = vpack.c.b16 %v6398, %v6390
        %v7487 = vpack.c.b16 %v6399, %v6391
        %v7488 = vpack.c.b16 %v6408, %v6400
        %v7489 = vpack.c.b16 %v6409, %v6401
        %v7490 = vpack.c.b16 %v6410, %v6402
        %v7491 = vpack.c.b16 %v6411, %v6403
        %v7492 = vpack.c.b16 %v6412, %v6404
        %v7493 = vpack.c.b16 %v6413, %v6405
        %v7494 = vpack.c.b16 %v6414, %v6406
        %v7495 = vpack.c.b16 %v6415, %v6407
        %v7496 = vpack.c.b16 %v6424, %v6416
        %v7497 = vpack.c.b16 %v6425, %v6417
        %v7498 = vpack.c.b16 %v6426, %v6418
        %v7499 = vpack.c.b16 %v6427, %v6419
        %v7500 = vpack.c.b16 %v6428, %v6420
        %v7501 = vpack.c.b16 %v6429, %v6421
        %v7502 = vpack.c.b16 %v6430, %v6422
        %v7503 = vpack.c.b16 %v6431, %v6423
        %v7504 = vpack.c.b16 %v6440, %v6432
        %v7505 = vpack.c.b16 %v6441, %v6433
        %v7506 = vpack.c.b16 %v6442, %v6434
        %v7507 = vpack.c.b16 %v6443, %v6435
        %v7508 = vpack.c.b16 %v6444, %v6436
        %v7509 = vpack.c.b16 %v6445, %v6437
        %v7510 = vpack.c.b16 %v6446, %v6438
        %v7511 = vpack.c.b16 %v6447, %v6439
        %v7512 = vpack.c.b16 %v6456, %v6448
        %v7513 = vpack.c.b16 %v6457, %v6449
        %v7514 = vpack.c.b16 %v6458, %v6450
        %v7515 = vpack.c.b16 %v6459, %v6451
        %v7516 = vpack.c.b16 %v6460, %v6452
        %v7517 = vpack.c.b16 %v6461, %v6453
        %v7518 = vpack.c.b16 %v6462, %v6454
        %v7519 = vpack.c.b16 %v6463, %v6455
        %v7520 = vpack.c.b16 %v6472, %v6464
        %v7521 = vpack.c.b16 %v6473, %v6465
        %v7522 = vpack.c.b16 %v6474, %v6466
        %v7523 = vpack.c.b16 %v6475, %v6467
        %v7524 = vpack.c.b16 %v6476, %v6468
        %v7525 = vpack.c.b16 %v6477, %v6469
        %v7526 = vpack.c.b16 %v6478, %v6470
        %v7527 = vpack.c.b16 %v6479, %v6471
        %v7528 = vpack.c.b16 %v6488, %v6480
        %v7529 = vpack.c.b16 %v6489, %v6481
        %v7530 = vpack.c.b16 %v6490, %v6482
        %v7531 = vpack.c.b16 %v6491, %v6483
        %v7532 = vpack.c.b16 %v6492, %v6484
        %v7533 = vpack.c.b16 %v6493, %v6485
        %v7534 = vpack.c.b16 %v6494, %v6486
        %v7535 = vpack.c.b16 %v6495, %v6487
        %v7536 = vpack.c.b16 %v6504, %v6496
        %v7537 = vpack.c.b16 %v6505, %v6497
        %v7538 = vpack.c.b16 %v6506, %v6498
        %v7539 = vpack.c.b16 %v6507, %v6499
        %v7540 = vpack.c.b16 %v6508, %v6500
        %v7541 = vpack.c.b16 %v6509, %v6501
        %v7542 = vpack.c.b16 %v6510, %v6502
        %v7543 = vpack.c.b16 %v6511, %v6503
        %v7544 = vpack.c.b16 %v6520, %v6512
        %v7545 = vpack.c.b16 %v6521, %v6513
        %v7546 = vpack.c.b16 %v6522, %v6514
        %v7547 = vpack.c.b16 %v6523, %v6515
        %v7548 = vpack.c.b16 %v6524, %v6516
        %v7549 = vpack.c.b16 %v6525, %v6517
        %v7550 = vpack.c.b16 %v6526, %v6518
        %v7551 = vpack.c.b16 %v6527, %v6519
        %v8577 = vlaneseq
        %v8578 = vshrl.u32 %v8577, 7
        %v8579 = vsub.s32 0, %v8578
        %v8580 = vrot.slane %v3455, %v8579
        %v8581 = vlaneseq
        %v8582 = vshrl.u32 %v8581, 7
        %v8583 = vsub.s32 1, %v8582
        %v8584 = vrot.slane %v3455, %v8583
        %v8585 = vlaneseq
        %v8586 = vshrl.u32 %v8585, 7
        %v8587 = vsub.s32 2, %v8586
        %v8588 = vrot.slane %v3455, %v8587
        %v8589 = vlaneseq
        %v8590 = vshrl.u32 %v8589, 7
        %v8591 = vsub.s32 3, %v8590
        %v8592 = vrot.slane %v3455, %v8591
        %v8593 = vlaneseq
        %v8594 = vshrl.u32 %v8593, 7
        %v8595 = vsub.s32 4, %v8594
        %v8596 = vrot.slane %v3455, %v8595
        %v8597 = vlaneseq
        %v8598 = vshrl.u32 %v8597, 7
        %v8599 = vsub.s32 5, %v8598
        %v8600 = vrot.slane %v3455, %v8599
        %v8601 = vlaneseq
        %v8602 = vshrl.u32 %v8601, 7
        %v8603 = vsub.s32 6, %v8602
        %v8604 = vrot.slane %v3455, %v8603
        %v8605 = vlaneseq
        %v8606 = vshrl.u32 %v8605, 7
        %v8607 = vsub.s32 7, %v8606
        %v8608 = vrot.slane %v3455, %v8607
        %8617 = vmatprep.subr.bf16.mxu0 %v6529
        %8618 = vmatpush1.bf16.msra.mxu0 %v6528
        %8619 = vmatprep.subr.bf16.mxu0 %v6537
        %8620 = vmatpush1.bf16.msra.mxu0 %v6536
        %8621 = vmatprep.subr.bf16.mxu0 %v6545
        %8622 = vmatpush1.bf16.msra.mxu0 %v6544
        %8623 = vmatprep.subr.bf16.mxu0 %v6553
        %8624 = vmatpush1.bf16.msra.mxu0 %v6552
        %8625 = vmatprep.subr.bf16.mxu0 %v6561
        %8626 = vmatpush1.bf16.msra.mxu0 %v6560
        %8627 = vmatprep.subr.bf16.mxu0 %v6569
        %8628 = vmatpush1.bf16.msra.mxu0 %v6568
        %8629 = vmatprep.subr.bf16.mxu0 %v6577
        %8630 = vmatpush1.bf16.msra.mxu0 %v6576
        %8631 = vmatprep.subr.bf16.mxu0 %v6585
        %8632 = vmatpush1.bf16.msra.mxu0 %v6584
        %8633 = vmatprep.subr.bf16.mxu0 %v6593
        %8634 = vmatpush1.bf16.msra.mxu0 %v6592
        %8635 = vmatprep.subr.bf16.mxu0 %v6601
        %8636 = vmatpush1.bf16.msra.mxu0 %v6600
        %8637 = vmatprep.subr.bf16.mxu0 %v6609
        %8638 = vmatpush1.bf16.msra.mxu0 %v6608
        %8639 = vmatprep.subr.bf16.mxu0 %v6617
        %8640 = vmatpush1.bf16.msra.mxu0 %v6616
        %8641 = vmatprep.subr.bf16.mxu0 %v6625
        %8642 = vmatpush1.bf16.msra.mxu0 %v6624
        %8643 = vmatprep.subr.bf16.mxu0 %v6633
        %8644 = vmatpush1.bf16.msra.mxu0 %v6632
        %8645 = vmatprep.subr.bf16.mxu0 %v6641
        %8646 = vmatpush1.bf16.msra.mxu0 %v6640
        %8647 = vmatprep.subr.bf16.mxu0 %v6649
        %8648 = vmatpush1.bf16.msra.mxu0 %v6648
        %8649 = vmatprep.mubr.bf16.mxu0 %v2416
        %8650 = vmatmul.mubr.bf16.gmra.mrb[0].mxu0 %v2415
        %v8651 = vpop.f32.mrb[0].mxu0
        %v8652 = vadd.f32 %v8580, %v8651
        %v8653 = vpop.f32.mrb[0].mxu0
        %v8654 = vadd.f32 %v8584, %v8653
        %v8655 = vpop.f32.mrb[0].mxu0
        %v8656 = vpop.f32.mrb[0].mxu0
        %8657 = vdwg.mxu0
        %8658 = vmatprep.subr.bf16.mxu0 %v6657
        %8659 = vmatpush1.bf16.msra.mxu0 %v6656
        %8660 = vmatprep.subr.bf16.mxu0 %v6665
        %8661 = vmatpush1.bf16.msra.mxu0 %v6664
        %8662 = vmatprep.subr.bf16.mxu0 %v6673
        %8663 = vmatpush1.bf16.msra.mxu0 %v6672
        %8664 = vmatprep.subr.bf16.mxu0 %v6681
        %8665 = vmatpush1.bf16.msra.mxu0 %v6680
        %8666 = vmatprep.subr.bf16.mxu0 %v6689
        %8667 = vmatpush1.bf16.msra.mxu0 %v6688
        %8668 = vmatprep.subr.bf16.mxu0 %v6697
        %8669 = vmatpush1.bf16.msra.mxu0 %v6696
        %8670 = vmatprep.subr.bf16.mxu0 %v6705
        %8671 = vmatpush1.bf16.msra.mxu0 %v6704
        %8672 = vmatprep.subr.bf16.mxu0 %v6713
        %8673 = vmatpush1.bf16.msra.mxu0 %v6712
        %8674 = vmatprep.subr.bf16.mxu0 %v6721
        %8675 = vmatpush1.bf16.msra.mxu0 %v6720
        %8676 = vmatprep.subr.bf16.mxu0 %v6729
        %8677 = vmatpush1.bf16.msra.mxu0 %v6728
        %8678 = vmatprep.subr.bf16.mxu0 %v6737
        %8679 = vmatpush1.bf16.msra.mxu0 %v6736
        %8680 = vmatprep.subr.bf16.mxu0 %v6745
        %8681 = vmatpush1.bf16.msra.mxu0 %v6744
        %8682 = vmatprep.subr.bf16.mxu0 %v6753
        %8683 = vmatpush1.bf16.msra.mxu0 %v6752
        %8684 = vmatprep.subr.bf16.mxu0 %v6761
        %8685 = vmatpush1.bf16.msra.mxu0 %v6760
        %8686 = vmatprep.subr.bf16.mxu0 %v6769
        %8687 = vmatpush1.bf16.msra.mxu0 %v6768
        %8688 = vmatprep.subr.bf16.mxu0 %v6777
        %8689 = vmatpush1.bf16.msra.mxu0 %v6776
        %8690 = vmatprep.mubr.bf16.mxu0 %v2418
        %8691 = vmatmul.mubr.bf16.gmra.mrb[0].mxu0 %v2417
        %v8692 = vpop.f32.mrb[0].mxu0
        %v8693 = vadd.f32 %v8652, %v8692
        %v8694 = vpop.f32.mrb[0].mxu0
        %v8695 = vadd.f32 %v8654, %v8694
        %v8696 = vpop.f32.mrb[0].mxu0
        %v8697 = vpop.f32.mrb[0].mxu0
        %8698 = vdwg.mxu0
        %8699 = vmatprep.subr.bf16.mxu0 %v6785
        %8700 = vmatpush1.bf16.msra.mxu0 %v6784
        %8701 = vmatprep.subr.bf16.mxu0 %v6793
        %8702 = vmatpush1.bf16.msra.mxu0 %v6792
        %8703 = vmatprep.subr.bf16.mxu0 %v6801
        %8704 = vmatpush1.bf16.msra.mxu0 %v6800
        %8705 = vmatprep.subr.bf16.mxu0 %v6809
        %8706 = vmatpush1.bf16.msra.mxu0 %v6808
        %8707 = vmatprep.subr.bf16.mxu0 %v6817
        %8708 = vmatpush1.bf16.msra.mxu0 %v6816
        %8709 = vmatprep.subr.bf16.mxu0 %v6825
        %8710 = vmatpush1.bf16.msra.mxu0 %v6824
        %8711 = vmatprep.subr.bf16.mxu0 %v6833
        %8712 = vmatpush1.bf16.msra.mxu0 %v6832
        %8713 = vmatprep.subr.bf16.mxu0 %v6841
        %8714 = vmatpush1.bf16.msra.mxu0 %v6840
        %8715 = vmatprep.subr.bf16.mxu0 %v6849
        %8716 = vmatpush1.bf16.msra.mxu0 %v6848
        %8717 = vmatprep.subr.bf16.mxu0 %v6857
        %8718 = vmatpush1.bf16.msra.mxu0 %v6856
        %8719 = vmatprep.subr.bf16.mxu0 %v6865
        %8720 = vmatpush1.bf16.msra.mxu0 %v6864
        %8721 = vmatprep.subr.bf16.mxu0 %v6873
        %8722 = vmatpush1.bf16.msra.mxu0 %v6872
        %8723 = vmatprep.subr.bf16.mxu0 %v6881
        %8724 = vmatpush1.bf16.msra.mxu0 %v6880
        %8725 = vmatprep.subr.bf16.mxu0 %v6889
        %8726 = vmatpush1.bf16.msra.mxu0 %v6888
        %8727 = vmatprep.subr.bf16.mxu0 %v6897
        %8728 = vmatpush1.bf16.msra.mxu0 %v6896
        %8729 = vmatprep.subr.bf16.mxu0 %v6905
        %8730 = vmatpush1.bf16.msra.mxu0 %v6904
        %8731 = vmatprep.mubr.bf16.mxu0 %v2420
        %8732 = vmatmul.mubr.bf16.gmra.mrb[0].mxu0 %v2419
        %v8733 = vpop.f32.mrb[0].mxu0
        %v8734 = vadd.f32 %v8693, %v8733
        %v8735 = vpop.f32.mrb[0].mxu0
        %v8736 = vadd.f32 %v8695, %v8735
        %v8737 = vpop.f32.mrb[0].mxu0
        %v8738 = vpop.f32.mrb[0].mxu0
        %8739 = vdwg.mxu0
        %8740 = vmatprep.subr.bf16.mxu0 %v6913
        %8741 = vmatpush1.bf16.msra.mxu0 %v6912
        %8742 = vmatprep.subr.bf16.mxu0 %v6921
        %8743 = vmatpush1.bf16.msra.mxu0 %v6920
        %8744 = vmatprep.subr.bf16.mxu0 %v6929
        %8745 = vmatpush1.bf16.msra.mxu0 %v6928
        %8746 = vmatprep.subr.bf16.mxu0 %v6937
        %8747 = vmatpush1.bf16.msra.mxu0 %v6936
        %8748 = vmatprep.subr.bf16.mxu0 %v6945
        %8749 = vmatpush1.bf16.msra.mxu0 %v6944
        %8750 = vmatprep.subr.bf16.mxu0 %v6953
        %8751 = vmatpush1.bf16.msra.mxu0 %v6952
        %8752 = vmatprep.subr.bf16.mxu0 %v6961
        %8753 = vmatpush1.bf16.msra.mxu0 %v6960
        %8754 = vmatprep.subr.bf16.mxu0 %v6969
        %8755 = vmatpush1.bf16.msra.mxu0 %v6968
        %8756 = vmatprep.subr.bf16.mxu0 %v6977
        %8757 = vmatpush1.bf16.msra.mxu0 %v6976
        %8758 = vmatprep.subr.bf16.mxu0 %v6985
        %8759 = vmatpush1.bf16.msra.mxu0 %v6984
        %8760 = vmatprep.subr.bf16.mxu0 %v6993
        %8761 = vmatpush1.bf16.msra.mxu0 %v6992
        %8762 = vmatprep.subr.bf16.mxu0 %v7001
        %8763 = vmatpush1.bf16.msra.mxu0 %v7000
        %8764 = vmatprep.subr.bf16.mxu0 %v7009
        %8765 = vmatpush1.bf16.msra.mxu0 %v7008
        %8766 = vmatprep.subr.bf16.mxu0 %v7017
        %8767 = vmatpush1.bf16.msra.mxu0 %v7016
        %8768 = vmatprep.subr.bf16.mxu0 %v7025
        %8769 = vmatpush1.bf16.msra.mxu0 %v7024
        %8770 = vmatprep.subr.bf16.mxu0 %v7033
        %8771 = vmatpush1.bf16.msra.mxu0 %v7032
        %8772 = vmatprep.mubr.bf16.mxu0 %v2422
        %8773 = vmatmul.mubr.bf16.gmra.mrb[0].mxu0 %v2421
        %v8774 = vpop.f32.mrb[0].mxu0
        %v8775 = vadd.f32 %v8734, %v8774
        %v8776 = vpop.f32.mrb[0].mxu0
        %v8777 = vadd.f32 %v8736, %v8776
        %v8778 = vpop.f32.mrb[0].mxu0
        %v8779 = vpop.f32.mrb[0].mxu0
        %8780 = vdwg.mxu0
        %8781 = vmatprep.subr.bf16.mxu0 %v7041
        %8782 = vmatpush1.bf16.msra.mxu0 %v7040
        %8783 = vmatprep.subr.bf16.mxu0 %v7049
        %8784 = vmatpush1.bf16.msra.mxu0 %v7048
        %8785 = vmatprep.subr.bf16.mxu0 %v7057
        %8786 = vmatpush1.bf16.msra.mxu0 %v7056
        %8787 = vmatprep.subr.bf16.mxu0 %v7065
        %8788 = vmatpush1.bf16.msra.mxu0 %v7064
        %8789 = vmatprep.subr.bf16.mxu0 %v7073
        %8790 = vmatpush1.bf16.msra.mxu0 %v7072
        %8791 = vmatprep.subr.bf16.mxu0 %v7081
        %8792 = vmatpush1.bf16.msra.mxu0 %v7080
        %8793 = vmatprep.subr.bf16.mxu0 %v7089
        %8794 = vmatpush1.bf16.msra.mxu0 %v7088
        %8795 = vmatprep.subr.bf16.mxu0 %v7097
        %8796 = vmatpush1.bf16.msra.mxu0 %v7096
        %8797 = vmatprep.subr.bf16.mxu0 %v7105
        %8798 = vmatpush1.bf16.msra.mxu0 %v7104
        %8799 = vmatprep.subr.bf16.mxu0 %v7113
        %8800 = vmatpush1.bf16.msra.mxu0 %v7112
        %8801 = vmatprep.subr.bf16.mxu0 %v7121
        %8802 = vmatpush1.bf16.msra.mxu0 %v7120
        %8803 = vmatprep.subr.bf16.mxu0 %v7129
        %8804 = vmatpush1.bf16.msra.mxu0 %v7128
        %8805 = vmatprep.subr.bf16.mxu0 %v7137
        %8806 = vmatpush1.bf16.msra.mxu0 %v7136
        %8807 = vmatprep.subr.bf16.mxu0 %v7145
        %8808 = vmatpush1.bf16.msra.mxu0 %v7144
        %8809 = vmatprep.subr.bf16.mxu0 %v7153
        %8810 = vmatpush1.bf16.msra.mxu0 %v7152
        %8811 = vmatprep.subr.bf16.mxu0 %v7161
        %8812 = vmatpush1.bf16.msra.mxu0 %v7160
        %8813 = vmatprep.mubr.bf16.mxu0 %v2424
        %8814 = vmatmul.mubr.bf16.gmra.mrb[0].mxu0 %v2423
        %v8815 = vpop.f32.mrb[0].mxu0
        %v8816 = vadd.f32 %v8775, %v8815
        %v8817 = vpop.f32.mrb[0].mxu0
        %v8818 = vadd.f32 %v8777, %v8817
        %v8819 = vpop.f32.mrb[0].mxu0
        %v8820 = vpop.f32.mrb[0].mxu0
        %8821 = vdwg.mxu0
        %8822 = vmatprep.subr.bf16.mxu0 %v7169
        %8823 = vmatpush1.bf16.msra.mxu0 %v7168
        %8824 = vmatprep.subr.bf16.mxu0 %v7177
        %8825 = vmatpush1.bf16.msra.mxu0 %v7176
        %8826 = vmatprep.subr.bf16.mxu0 %v7185
        %8827 = vmatpush1.bf16.msra.mxu0 %v7184
        %8828 = vmatprep.subr.bf16.mxu0 %v7193
        %8829 = vmatpush1.bf16.msra.mxu0 %v7192
        %8830 = vmatprep.subr.bf16.mxu0 %v7201
        %8831 = vmatpush1.bf16.msra.mxu0 %v7200
        %8832 = vmatprep.subr.bf16.mxu0 %v7209
        %8833 = vmatpush1.bf16.msra.mxu0 %v7208
        %8834 = vmatprep.subr.bf16.mxu0 %v7217
        %8835 = vmatpush1.bf16.msra.mxu0 %v7216
        %8836 = vmatprep.subr.bf16.mxu0 %v7225
        %8837 = vmatpush1.bf16.msra.mxu0 %v7224
        %8838 = vmatprep.subr.bf16.mxu0 %v7233
        %8839 = vmatpush1.bf16.msra.mxu0 %v7232
        %8840 = vmatprep.subr.bf16.mxu0 %v7241
        %8841 = vmatpush1.bf16.msra.mxu0 %v7240
        %8842 = vmatprep.subr.bf16.mxu0 %v7249
        %8843 = vmatpush1.bf16.msra.mxu0 %v7248
        %8844 = vmatprep.subr.bf16.mxu0 %v7257
        %8845 = vmatpush1.bf16.msra.mxu0 %v7256
        %8846 = vmatprep.subr.bf16.mxu0 %v7265
        %8847 = vmatpush1.bf16.msra.mxu0 %v7264
        %8848 = vmatprep.subr.bf16.mxu0 %v7273
        %8849 = vmatpush1.bf16.msra.mxu0 %v7272
        %8850 = vmatprep.subr.bf16.mxu0 %v7281
        %8851 = vmatpush1.bf16.msra.mxu0 %v7280
        %8852 = vmatprep.subr.bf16.mxu0 %v7289
        %8853 = vmatpush1.bf16.msra.mxu0 %v7288
        %8854 = vmatprep.mubr.bf16.mxu0 %v2426
        %8855 = vmatmul.mubr.bf16.gmra.mrb[0].mxu0 %v2425
        %v8856 = vpop.f32.mrb[0].mxu0
        %v8857 = vadd.f32 %v8816, %v8856
        %v8858 = vpop.f32.mrb[0].mxu0
        %v8859 = vadd.f32 %v8818, %v8858
        %v8860 = vpop.f32.mrb[0].mxu0
        %v8861 = vpop.f32.mrb[0].mxu0
        %8862 = vdwg.mxu0
        %8863 = vmatprep.subr.bf16.mxu0 %v7297
        %8864 = vmatpush1.bf16.msra.mxu0 %v7296
        %8865 = vmatprep.subr.bf16.mxu0 %v7305
        %8866 = vmatpush1.bf16.msra.mxu0 %v7304
        %8867 = vmatprep.subr.bf16.mxu0 %v7313
        %8868 = vmatpush1.bf16.msra.mxu0 %v7312
        %8869 = vmatprep.subr.bf16.mxu0 %v7321
        %8870 = vmatpush1.bf16.msra.mxu0 %v7320
        %8871 = vmatprep.subr.bf16.mxu0 %v7329
        %8872 = vmatpush1.bf16.msra.mxu0 %v7328
        %8873 = vmatprep.subr.bf16.mxu0 %v7337
        %8874 = vmatpush1.bf16.msra.mxu0 %v7336
        %8875 = vmatprep.subr.bf16.mxu0 %v7345
        %8876 = vmatpush1.bf16.msra.mxu0 %v7344
        %8877 = vmatprep.subr.bf16.mxu0 %v7353
        %8878 = vmatpush1.bf16.msra.mxu0 %v7352
        %8879 = vmatprep.subr.bf16.mxu0 %v7361
        %8880 = vmatpush1.bf16.msra.mxu0 %v7360
        %8881 = vmatprep.subr.bf16.mxu0 %v7369
        %8882 = vmatpush1.bf16.msra.mxu0 %v7368
        %8883 = vmatprep.subr.bf16.mxu0 %v7377
        %8884 = vmatpush1.bf16.msra.mxu0 %v7376
        %8885 = vmatprep.subr.bf16.mxu0 %v7385
        %8886 = vmatpush1.bf16.msra.mxu0 %v7384
        %8887 = vmatprep.subr.bf16.mxu0 %v7393
        %8888 = vmatpush1.bf16.msra.mxu0 %v7392
        %8889 = vmatprep.subr.bf16.mxu0 %v7401
        %8890 = vmatpush1.bf16.msra.mxu0 %v7400
        %8891 = vmatprep.subr.bf16.mxu0 %v7409
        %8892 = vmatpush1.bf16.msra.mxu0 %v7408
        %8893 = vmatprep.subr.bf16.mxu0 %v7417
        %8894 = vmatpush1.bf16.msra.mxu0 %v7416
        %8895 = vmatprep.mubr.bf16.mxu0 %v2428
        %8896 = vmatmul.mubr.bf16.gmra.mrb[0].mxu0 %v2427
        %v8897 = vpop.f32.mrb[0].mxu0
        %v8898 = vadd.f32 %v8857, %v8897
        %v8899 = vpop.f32.mrb[0].mxu0
        %v8900 = vadd.f32 %v8859, %v8899
        %v8901 = vpop.f32.mrb[0].mxu0
        %v8902 = vpop.f32.mrb[0].mxu0
        %8903 = vdwg.mxu0
        %8904 = vmatprep.subr.bf16.mxu0 %v7425
        %8905 = vmatpush1.bf16.msra.mxu0 %v7424
        %8906 = vmatprep.subr.bf16.mxu0 %v7433
        %8907 = vmatpush1.bf16.msra.mxu0 %v7432
        %8908 = vmatprep.subr.bf16.mxu0 %v7441
        %8909 = vmatpush1.bf16.msra.mxu0 %v7440
        %8910 = vmatprep.subr.bf16.mxu0 %v7449
        %8911 = vmatpush1.bf16.msra.mxu0 %v7448
        %8912 = vmatprep.subr.bf16.mxu0 %v7457
        %8913 = vmatpush1.bf16.msra.mxu0 %v7456
        %8914 = vmatprep.subr.bf16.mxu0 %v7465
        %8915 = vmatpush1.bf16.msra.mxu0 %v7464
        %8916 = vmatprep.subr.bf16.mxu0 %v7473
        %8917 = vmatpush1.bf16.msra.mxu0 %v7472
        %8918 = vmatprep.subr.bf16.mxu0 %v7481
        %8919 = vmatpush1.bf16.msra.mxu0 %v7480
        %8920 = vmatprep.subr.bf16.mxu0 %v7489
        %8921 = vmatpush1.bf16.msra.mxu0 %v7488
        %8922 = vmatprep.subr.bf16.mxu0 %v7497
        %8923 = vmatpush1.bf16.msra.mxu0 %v7496
        %8924 = vmatprep.subr.bf16.mxu0 %v7505
        %8925 = vmatpush1.bf16.msra.mxu0 %v7504
        %8926 = vmatprep.subr.bf16.mxu0 %v7513
        %8927 = vmatpush1.bf16.msra.mxu0 %v7512
        %8928 = vmatprep.subr.bf16.mxu0 %v7521
        %8929 = vmatpush1.bf16.msra.mxu0 %v7520
        %8930 = vmatprep.subr.bf16.mxu0 %v7529
        %8931 = vmatpush1.bf16.msra.mxu0 %v7528
        %8932 = vmatprep.subr.bf16.mxu0 %v7537
        %8933 = vmatpush1.bf16.msra.mxu0 %v7536
        %8934 = vmatprep.subr.bf16.mxu0 %v7545
        %8935 = vmatpush1.bf16.msra.mxu0 %v7544
        %8936 = vmatprep.mubr.bf16.mxu0 %v2430
        %8937 = vmatmul.mubr.bf16.gmra.mrb[0].mxu0 %v2429
        %v8938 = vpop.f32.mrb[0].mxu0
        %v8939 = vadd.f32 %v8898, %v8938
        %v8940 = vpop.f32.mrb[0].mxu0
        %v8941 = vadd.f32 %v8900, %v8940
        %v8942 = vpop.f32.mrb[0].mxu0
        %v8943 = vpop.f32.mrb[0].mxu0
        %8944 = vdwg.mxu0
        %8945 = vmatprep.subr.bf16.mxu0 %v6531
        %8946 = vmatpush1.bf16.msra.mxu0 %v6530
        %8947 = vmatprep.subr.bf16.mxu0 %v6539
        %8948 = vmatpush1.bf16.msra.mxu0 %v6538
        %8949 = vmatprep.subr.bf16.mxu0 %v6547
        %8950 = vmatpush1.bf16.msra.mxu0 %v6546
        %8951 = vmatprep.subr.bf16.mxu0 %v6555
        %8952 = vmatpush1.bf16.msra.mxu0 %v6554
        %8953 = vmatprep.subr.bf16.mxu0 %v6563
        %8954 = vmatpush1.bf16.msra.mxu0 %v6562
        %8955 = vmatprep.subr.bf16.mxu0 %v6571
        %8956 = vmatpush1.bf16.msra.mxu0 %v6570
        %8957 = vmatprep.subr.bf16.mxu0 %v6579
        %8958 = vmatpush1.bf16.msra.mxu0 %v6578
        %8959 = vmatprep.subr.bf16.mxu0 %v6587
        %8960 = vmatpush1.bf16.msra.mxu0 %v6586
        %8961 = vmatprep.subr.bf16.mxu0 %v6595
        %8962 = vmatpush1.bf16.msra.mxu0 %v6594
        %8963 = vmatprep.subr.bf16.mxu0 %v6603
        %8964 = vmatpush1.bf16.msra.mxu0 %v6602
        %8965 = vmatprep.subr.bf16.mxu0 %v6611
        %8966 = vmatpush1.bf16.msra.mxu0 %v6610
        %8967 = vmatprep.subr.bf16.mxu0 %v6619
        %8968 = vmatpush1.bf16.msra.mxu0 %v6618
        %8969 = vmatprep.subr.bf16.mxu0 %v6627
        %8970 = vmatpush1.bf16.msra.mxu0 %v6626
        %8971 = vmatprep.subr.bf16.mxu0 %v6635
        %8972 = vmatpush1.bf16.msra.mxu0 %v6634
        %8973 = vmatprep.subr.bf16.mxu0 %v6643
        %8974 = vmatpush1.bf16.msra.mxu0 %v6642
        %8975 = vmatprep.subr.bf16.mxu0 %v6651
        %8976 = vmatpush1.bf16.msra.mxu0 %v6650
        %8977 = vmatprep.mubr.bf16.mxu0 %v2416
        %8978 = vmatmul.mubr.bf16.gmra.mrb[0].mxu0 %v2415
        %v8979 = vpop.f32.mrb[0].mxu0
        %v8980 = vadd.f32 %v8588, %v8979
        %v8981 = vpop.f32.mrb[0].mxu0
        %v8982 = vadd.f32 %v8592, %v8981
        %v8983 = vpop.f32.mrb[0].mxu0
        %v8984 = vpop.f32.mrb[0].mxu0
        %8985 = vdwg.mxu0
        %8986 = vmatprep.subr.bf16.mxu0 %v6659
        %8987 = vmatpush1.bf16.msra.mxu0 %v6658
        %8988 = vmatprep.subr.bf16.mxu0 %v6667
        %8989 = vmatpush1.bf16.msra.mxu0 %v6666
        %8990 = vmatprep.subr.bf16.mxu0 %v6675
        %8991 = vmatpush1.bf16.msra.mxu0 %v6674
        %8992 = vmatprep.subr.bf16.mxu0 %v6683
        %8993 = vmatpush1.bf16.msra.mxu0 %v6682
        %8994 = vmatprep.subr.bf16.mxu0 %v6691
        %8995 = vmatpush1.bf16.msra.mxu0 %v6690
        %8996 = vmatprep.subr.bf16.mxu0 %v6699
        %8997 = vmatpush1.bf16.msra.mxu0 %v6698
        %8998 = vmatprep.subr.bf16.mxu0 %v6707
        %8999 = vmatpush1.bf16.msra.mxu0 %v6706
        %9000 = vmatprep.subr.bf16.mxu0 %v6715
        %9001 = vmatpush1.bf16.msra.mxu0 %v6714
        %9002 = vmatprep.subr.bf16.mxu0 %v6723
        %9003 = vmatpush1.bf16.msra.mxu0 %v6722
        %9004 = vmatprep.subr.bf16.mxu0 %v6731
        %9005 = vmatpush1.bf16.msra.mxu0 %v6730
        %9006 = vmatprep.subr.bf16.mxu0 %v6739
        %9007 = vmatpush1.bf16.msra.mxu0 %v6738
        %9008 = vmatprep.subr.bf16.mxu0 %v6747
        %9009 = vmatpush1.bf16.msra.mxu0 %v6746
        %9010 = vmatprep.subr.bf16.mxu0 %v6755
        %9011 = vmatpush1.bf16.msra.mxu0 %v6754
        %9012 = vmatprep.subr.bf16.mxu0 %v6763
        %9013 = vmatpush1.bf16.msra.mxu0 %v6762
        %9014 = vmatprep.subr.bf16.mxu0 %v6771
        %9015 = vmatpush1.bf16.msra.mxu0 %v6770
        %9016 = vmatprep.subr.bf16.mxu0 %v6779
        %9017 = vmatpush1.bf16.msra.mxu0 %v6778
        %9018 = vmatprep.mubr.bf16.mxu0 %v2418
        %9019 = vmatmul.mubr.bf16.gmra.mrb[0].mxu0 %v2417
        %v9020 = vpop.f32.mrb[0].mxu0
        %v9021 = vadd.f32 %v8980, %v9020
        %v9022 = vpop.f32.mrb[0].mxu0
        %v9023 = vadd.f32 %v8982, %v9022
        %v9024 = vpop.f32.mrb[0].mxu0
        %v9025 = vpop.f32.mrb[0].mxu0
        %9026 = vdwg.mxu0
        %9027 = vmatprep.subr.bf16.mxu0 %v6787
        %9028 = vmatpush1.bf16.msra.mxu0 %v6786
        %9029 = vmatprep.subr.bf16.mxu0 %v6795
        %9030 = vmatpush1.bf16.msra.mxu0 %v6794
        %9031 = vmatprep.subr.bf16.mxu0 %v6803
        %9032 = vmatpush1.bf16.msra.mxu0 %v6802
        %9033 = vmatprep.subr.bf16.mxu0 %v6811
        %9034 = vmatpush1.bf16.msra.mxu0 %v6810
        %9035 = vmatprep.subr.bf16.mxu0 %v6819
        %9036 = vmatpush1.bf16.msra.mxu0 %v6818
        %9037 = vmatprep.subr.bf16.mxu0 %v6827
        %9038 = vmatpush1.bf16.msra.mxu0 %v6826
        %9039 = vmatprep.subr.bf16.mxu0 %v6835
        %9040 = vmatpush1.bf16.msra.mxu0 %v6834
        %9041 = vmatprep.subr.bf16.mxu0 %v6843
        %9042 = vmatpush1.bf16.msra.mxu0 %v6842
        %9043 = vmatprep.subr.bf16.mxu0 %v6851
        %9044 = vmatpush1.bf16.msra.mxu0 %v6850
        %9045 = vmatprep.subr.bf16.mxu0 %v6859
        %9046 = vmatpush1.bf16.msra.mxu0 %v6858
        %9047 = vmatprep.subr.bf16.mxu0 %v6867
        %9048 = vmatpush1.bf16.msra.mxu0 %v6866
        %9049 = vmatprep.subr.bf16.mxu0 %v6875
        %9050 = vmatpush1.bf16.msra.mxu0 %v6874
        %9051 = vmatprep.subr.bf16.mxu0 %v6883
        %9052 = vmatpush1.bf16.msra.mxu0 %v6882
        %9053 = vmatprep.subr.bf16.mxu0 %v6891
        %9054 = vmatpush1.bf16.msra.mxu0 %v6890
        %9055 = vmatprep.subr.bf16.mxu0 %v6899
        %9056 = vmatpush1.bf16.msra.mxu0 %v6898
        %9057 = vmatprep.subr.bf16.mxu0 %v6907
        %9058 = vmatpush1.bf16.msra.mxu0 %v6906
        %9059 = vmatprep.mubr.bf16.mxu0 %v2420
        %9060 = vmatmul.mubr.bf16.gmra.mrb[0].mxu0 %v2419
        %v9061 = vpop.f32.mrb[0].mxu0
        %v9062 = vadd.f32 %v9021, %v9061
        %v9063 = vpop.f32.mrb[0].mxu0
        %v9064 = vadd.f32 %v9023, %v9063
        %v9065 = vpop.f32.mrb[0].mxu0
        %v9066 = vpop.f32.mrb[0].mxu0
        %9067 = vdwg.mxu0
        %9068 = vmatprep.subr.bf16.mxu0 %v6915
        %9069 = vmatpush1.bf16.msra.mxu0 %v6914
        %9070 = vmatprep.subr.bf16.mxu0 %v6923
        %9071 = vmatpush1.bf16.msra.mxu0 %v6922
        %9072 = vmatprep.subr.bf16.mxu0 %v6931
        %9073 = vmatpush1.bf16.msra.mxu0 %v6930
        %9074 = vmatprep.subr.bf16.mxu0 %v6939
        %9075 = vmatpush1.bf16.msra.mxu0 %v6938
        %9076 = vmatprep.subr.bf16.mxu0 %v6947
        %9077 = vmatpush1.bf16.msra.mxu0 %v6946
        %9078 = vmatprep.subr.bf16.mxu0 %v6955
        %9079 = vmatpush1.bf16.msra.mxu0 %v6954
        %9080 = vmatprep.subr.bf16.mxu0 %v6963
        %9081 = vmatpush1.bf16.msra.mxu0 %v6962
        %9082 = vmatprep.subr.bf16.mxu0 %v6971
        %9083 = vmatpush1.bf16.msra.mxu0 %v6970
        %9084 = vmatprep.subr.bf16.mxu0 %v6979
        %9085 = vmatpush1.bf16.msra.mxu0 %v6978
        %9086 = vmatprep.subr.bf16.mxu0 %v6987
        %9087 = vmatpush1.bf16.msra.mxu0 %v6986
        %9088 = vmatprep.subr.bf16.mxu0 %v6995
        %9089 = vmatpush1.bf16.msra.mxu0 %v6994
        %9090 = vmatprep.subr.bf16.mxu0 %v7003
        %9091 = vmatpush1.bf16.msra.mxu0 %v7002
        %9092 = vmatprep.subr.bf16.mxu0 %v7011
        %9093 = vmatpush1.bf16.msra.mxu0 %v7010
        %9094 = vmatprep.subr.bf16.mxu0 %v7019
        %9095 = vmatpush1.bf16.msra.mxu0 %v7018
        %9096 = vmatprep.subr.bf16.mxu0 %v7027
        %9097 = vmatpush1.bf16.msra.mxu0 %v7026
        %9098 = vmatprep.subr.bf16.mxu0 %v7035
        %9099 = vmatpush1.bf16.msra.mxu0 %v7034
        %9100 = vmatprep.mubr.bf16.mxu0 %v2422
        %9101 = vmatmul.mubr.bf16.gmra.mrb[0].mxu0 %v2421
        %v9102 = vpop.f32.mrb[0].mxu0
        %v9103 = vadd.f32 %v9062, %v9102
        %v9104 = vpop.f32.mrb[0].mxu0
        %v9105 = vadd.f32 %v9064, %v9104
        %v9106 = vpop.f32.mrb[0].mxu0
        %v9107 = vpop.f32.mrb[0].mxu0
        %9108 = vdwg.mxu0
        %9109 = vmatprep.subr.bf16.mxu0 %v7043
        %9110 = vmatpush1.bf16.msra.mxu0 %v7042
        %9111 = vmatprep.subr.bf16.mxu0 %v7051
        %9112 = vmatpush1.bf16.msra.mxu0 %v7050
        %9113 = vmatprep.subr.bf16.mxu0 %v7059
        %9114 = vmatpush1.bf16.msra.mxu0 %v7058
        %9115 = vmatprep.subr.bf16.mxu0 %v7067
        %9116 = vmatpush1.bf16.msra.mxu0 %v7066
        %9117 = vmatprep.subr.bf16.mxu0 %v7075
        %9118 = vmatpush1.bf16.msra.mxu0 %v7074
        %9119 = vmatprep.subr.bf16.mxu0 %v7083
        %9120 = vmatpush1.bf16.msra.mxu0 %v7082
        %9121 = vmatprep.subr.bf16.mxu0 %v7091
        %9122 = vmatpush1.bf16.msra.mxu0 %v7090
        %9123 = vmatprep.subr.bf16.mxu0 %v7099
        %9124 = vmatpush1.bf16.msra.mxu0 %v7098
        %9125 = vmatprep.subr.bf16.mxu0 %v7107
        %9126 = vmatpush1.bf16.msra.mxu0 %v7106
        %9127 = vmatprep.subr.bf16.mxu0 %v7115
        %9128 = vmatpush1.bf16.msra.mxu0 %v7114
        %9129 = vmatprep.subr.bf16.mxu0 %v7123
        %9130 = vmatpush1.bf16.msra.mxu0 %v7122
        %9131 = vmatprep.subr.bf16.mxu0 %v7131
        %9132 = vmatpush1.bf16.msra.mxu0 %v7130
        %9133 = vmatprep.subr.bf16.mxu0 %v7139
        %9134 = vmatpush1.bf16.msra.mxu0 %v7138
        %9135 = vmatprep.subr.bf16.mxu0 %v7147
        %9136 = vmatpush1.bf16.msra.mxu0 %v7146
        %9137 = vmatprep.subr.bf16.mxu0 %v7155
        %9138 = vmatpush1.bf16.msra.mxu0 %v7154
        %9139 = vmatprep.subr.bf16.mxu0 %v7163
        %9140 = vmatpush1.bf16.msra.mxu0 %v7162
        %9141 = vmatprep.mubr.bf16.mxu0 %v2424
        %9142 = vmatmul.mubr.bf16.gmra.mrb[0].mxu0 %v2423
        %v9143 = vpop.f32.mrb[0].mxu0
        %v9144 = vadd.f32 %v9103, %v9143
        %v9145 = vpop.f32.mrb[0].mxu0
        %v9146 = vadd.f32 %v9105, %v9145
        %v9147 = vpop.f32.mrb[0].mxu0
        %v9148 = vpop.f32.mrb[0].mxu0
        %9149 = vdwg.mxu0
        %9150 = vmatprep.subr.bf16.mxu0 %v7171
        %9151 = vmatpush1.bf16.msra.mxu0 %v7170
        %9152 = vmatprep.subr.bf16.mxu0 %v7179
        %9153 = vmatpush1.bf16.msra.mxu0 %v7178
        %9154 = vmatprep.subr.bf16.mxu0 %v7187
        %9155 = vmatpush1.bf16.msra.mxu0 %v7186
        %9156 = vmatprep.subr.bf16.mxu0 %v7195
        %9157 = vmatpush1.bf16.msra.mxu0 %v7194
        %9158 = vmatprep.subr.bf16.mxu0 %v7203
        %9159 = vmatpush1.bf16.msra.mxu0 %v7202
        %9160 = vmatprep.subr.bf16.mxu0 %v7211
        %9161 = vmatpush1.bf16.msra.mxu0 %v7210
        %9162 = vmatprep.subr.bf16.mxu0 %v7219
        %9163 = vmatpush1.bf16.msra.mxu0 %v7218
        %9164 = vmatprep.subr.bf16.mxu0 %v7227
        %9165 = vmatpush1.bf16.msra.mxu0 %v7226
        %9166 = vmatprep.subr.bf16.mxu0 %v7235
        %9167 = vmatpush1.bf16.msra.mxu0 %v7234
        %9168 = vmatprep.subr.bf16.mxu0 %v7243
        %9169 = vmatpush1.bf16.msra.mxu0 %v7242
        %9170 = vmatprep.subr.bf16.mxu0 %v7251
        %9171 = vmatpush1.bf16.msra.mxu0 %v7250
        %9172 = vmatprep.subr.bf16.mxu0 %v7259
        %9173 = vmatpush1.bf16.msra.mxu0 %v7258
        %9174 = vmatprep.subr.bf16.mxu0 %v7267
        %9175 = vmatpush1.bf16.msra.mxu0 %v7266
        %9176 = vmatprep.subr.bf16.mxu0 %v7275
        %9177 = vmatpush1.bf16.msra.mxu0 %v7274
        %9178 = vmatprep.subr.bf16.mxu0 %v7283
        %9179 = vmatpush1.bf16.msra.mxu0 %v7282
        %9180 = vmatprep.subr.bf16.mxu0 %v7291
        %9181 = vmatpush1.bf16.msra.mxu0 %v7290
        %9182 = vmatprep.mubr.bf16.mxu0 %v2426
        %9183 = vmatmul.mubr.bf16.gmra.mrb[0].mxu0 %v2425
        %v9184 = vpop.f32.mrb[0].mxu0
        %v9185 = vadd.f32 %v9144, %v9184
        %v9186 = vpop.f32.mrb[0].mxu0
        %v9187 = vadd.f32 %v9146, %v9186
        %v9188 = vpop.f32.mrb[0].mxu0
        %v9189 = vpop.f32.mrb[0].mxu0
        %9190 = vdwg.mxu0
        %9191 = vmatprep.subr.bf16.mxu0 %v7299
        %9192 = vmatpush1.bf16.msra.mxu0 %v7298
        %9193 = vmatprep.subr.bf16.mxu0 %v7307
        %9194 = vmatpush1.bf16.msra.mxu0 %v7306
        %9195 = vmatprep.subr.bf16.mxu0 %v7315
        %9196 = vmatpush1.bf16.msra.mxu0 %v7314
        %9197 = vmatprep.subr.bf16.mxu0 %v7323
        %9198 = vmatpush1.bf16.msra.mxu0 %v7322
        %9199 = vmatprep.subr.bf16.mxu0 %v7331
        %9200 = vmatpush1.bf16.msra.mxu0 %v7330
        %9201 = vmatprep.subr.bf16.mxu0 %v7339
        %9202 = vmatpush1.bf16.msra.mxu0 %v7338
        %9203 = vmatprep.subr.bf16.mxu0 %v7347
        %9204 = vmatpush1.bf16.msra.mxu0 %v7346
        %9205 = vmatprep.subr.bf16.mxu0 %v7355
        %9206 = vmatpush1.bf16.msra.mxu0 %v7354
        %9207 = vmatprep.subr.bf16.mxu0 %v7363
        %9208 = vmatpush1.bf16.msra.mxu0 %v7362
        %9209 = vmatprep.subr.bf16.mxu0 %v7371
        %9210 = vmatpush1.bf16.msra.mxu0 %v7370
        %9211 = vmatprep.subr.bf16.mxu0 %v7379
        %9212 = vmatpush1.bf16.msra.mxu0 %v7378
        %9213 = vmatprep.subr.bf16.mxu0 %v7387
        %9214 = vmatpush1.bf16.msra.mxu0 %v7386
        %9215 = vmatprep.subr.bf16.mxu0 %v7395
        %9216 = vmatpush1.bf16.msra.mxu0 %v7394
        %9217 = vmatprep.subr.bf16.mxu0 %v7403
        %9218 = vmatpush1.bf16.msra.mxu0 %v7402
        %9219 = vmatprep.subr.bf16.mxu0 %v7411
        %9220 = vmatpush1.bf16.msra.mxu0 %v7410
        %9221 = vmatprep.subr.bf16.mxu0 %v7419
        %9222 = vmatpush1.bf16.msra.mxu0 %v7418
        %9223 = vmatprep.mubr.bf16.mxu0 %v2428
        %9224 = vmatmul.mubr.bf16.gmra.mrb[0].mxu0 %v2427
        %v9225 = vpop.f32.mrb[0].mxu0
        %v9226 = vadd.f32 %v9185, %v9225
        %v9227 = vpop.f32.mrb[0].mxu0
        %v9228 = vadd.f32 %v9187, %v9227
        %v9229 = vpop.f32.mrb[0].mxu0
        %v9230 = vpop.f32.mrb[0].mxu0
        %9231 = vdwg.mxu0
        %9232 = vmatprep.subr.bf16.mxu0 %v7427
        %9233 = vmatpush1.bf16.msra.mxu0 %v7426
        %9234 = vmatprep.subr.bf16.mxu0 %v7435
        %9235 = vmatpush1.bf16.msra.mxu0 %v7434
        %9236 = vmatprep.subr.bf16.mxu0 %v7443
        %9237 = vmatpush1.bf16.msra.mxu0 %v7442
        %9238 = vmatprep.subr.bf16.mxu0 %v7451
        %9239 = vmatpush1.bf16.msra.mxu0 %v7450
        %9240 = vmatprep.subr.bf16.mxu0 %v7459
        %9241 = vmatpush1.bf16.msra.mxu0 %v7458
        %9242 = vmatprep.subr.bf16.mxu0 %v7467
        %9243 = vmatpush1.bf16.msra.mxu0 %v7466
        %9244 = vmatprep.subr.bf16.mxu0 %v7475
        %9245 = vmatpush1.bf16.msra.mxu0 %v7474
        %9246 = vmatprep.subr.bf16.mxu0 %v7483
        %9247 = vmatpush1.bf16.msra.mxu0 %v7482
        %9248 = vmatprep.subr.bf16.mxu0 %v7491
        %9249 = vmatpush1.bf16.msra.mxu0 %v7490
        %9250 = vmatprep.subr.bf16.mxu0 %v7499
        %9251 = vmatpush1.bf16.msra.mxu0 %v7498
        %9252 = vmatprep.subr.bf16.mxu0 %v7507
        %9253 = vmatpush1.bf16.msra.mxu0 %v7506
        %9254 = vmatprep.subr.bf16.mxu0 %v7515
        %9255 = vmatpush1.bf16.msra.mxu0 %v7514
        %9256 = vmatprep.subr.bf16.mxu0 %v7523
        %9257 = vmatpush1.bf16.msra.mxu0 %v7522
        %9258 = vmatprep.subr.bf16.mxu0 %v7531
        %9259 = vmatpush1.bf16.msra.mxu0 %v7530
        %9260 = vmatprep.subr.bf16.mxu0 %v7539
        %9261 = vmatpush1.bf16.msra.mxu0 %v7538
        %9262 = vmatprep.subr.bf16.mxu0 %v7547
        %9263 = vmatpush1.bf16.msra.mxu0 %v7546
        %9264 = vmatprep.mubr.bf16.mxu0 %v2430
        %9265 = vmatmul.mubr.bf16.gmra.mrb[0].mxu0 %v2429
        %v9266 = vpop.f32.mrb[0].mxu0
        %v9267 = vadd.f32 %v9226, %v9266
        %v9268 = vpop.f32.mrb[0].mxu0
        %v9269 = vadd.f32 %v9228, %v9268
        %v9270 = vpop.f32.mrb[0].mxu0
        %v9271 = vpop.f32.mrb[0].mxu0
        %9272 = vdwg.mxu0
        %9273 = vmatprep.subr.bf16.mxu0 %v6533
        %9274 = vmatpush1.bf16.msra.mxu0 %v6532
        %9275 = vmatprep.subr.bf16.mxu0 %v6541
        %9276 = vmatpush1.bf16.msra.mxu0 %v6540
        %9277 = vmatprep.subr.bf16.mxu0 %v6549
        %9278 = vmatpush1.bf16.msra.mxu0 %v6548
        %9279 = vmatprep.subr.bf16.mxu0 %v6557
        %9280 = vmatpush1.bf16.msra.mxu0 %v6556
        %9281 = vmatprep.subr.bf16.mxu0 %v6565
        %9282 = vmatpush1.bf16.msra.mxu0 %v6564
        %9283 = vmatprep.subr.bf16.mxu0 %v6573
        %9284 = vmatpush1.bf16.msra.mxu0 %v6572
        %9285 = vmatprep.subr.bf16.mxu0 %v6581
        %9286 = vmatpush1.bf16.msra.mxu0 %v6580
        %9287 = vmatprep.subr.bf16.mxu0 %v6589
        %9288 = vmatpush1.bf16.msra.mxu0 %v6588
        %9289 = vmatprep.subr.bf16.mxu0 %v6597
        %9290 = vmatpush1.bf16.msra.mxu0 %v6596
        %9291 = vmatprep.subr.bf16.mxu0 %v6605
        %9292 = vmatpush1.bf16.msra.mxu0 %v6604
        %9293 = vmatprep.subr.bf16.mxu0 %v6613
        %9294 = vmatpush1.bf16.msra.mxu0 %v6612
        %9295 = vmatprep.subr.bf16.mxu0 %v6621
        %9296 = vmatpush1.bf16.msra.mxu0 %v6620
        %9297 = vmatprep.subr.bf16.mxu0 %v6629
        %9298 = vmatpush1.bf16.msra.mxu0 %v6628
        %9299 = vmatprep.subr.bf16.mxu0 %v6637
        %9300 = vmatpush1.bf16.msra.mxu0 %v6636
        %9301 = vmatprep.subr.bf16.mxu0 %v6645
        %9302 = vmatpush1.bf16.msra.mxu0 %v6644
        %9303 = vmatprep.subr.bf16.mxu0 %v6653
        %9304 = vmatpush1.bf16.msra.mxu0 %v6652
        %9305 = vmatprep.mubr.bf16.mxu0 %v2416
        %9306 = vmatmul.mubr.bf16.gmra.mrb[0].mxu0 %v2415
        %v9307 = vpop.f32.mrb[0].mxu0
        %v9308 = vadd.f32 %v8596, %v9307
        %v9309 = vpop.f32.mrb[0].mxu0
        %v9310 = vadd.f32 %v8600, %v9309
        %v9311 = vpop.f32.mrb[0].mxu0
        %v9312 = vpop.f32.mrb[0].mxu0
        %9313 = vdwg.mxu0
        %9314 = vmatprep.subr.bf16.mxu0 %v6661
        %9315 = vmatpush1.bf16.msra.mxu0 %v6660
        %9316 = vmatprep.subr.bf16.mxu0 %v6669
        %9317 = vmatpush1.bf16.msra.mxu0 %v6668
        %9318 = vmatprep.subr.bf16.mxu0 %v6677
        %9319 = vmatpush1.bf16.msra.mxu0 %v6676
        %9320 = vmatprep.subr.bf16.mxu0 %v6685
        %9321 = vmatpush1.bf16.msra.mxu0 %v6684
        %9322 = vmatprep.subr.bf16.mxu0 %v6693
        %9323 = vmatpush1.bf16.msra.mxu0 %v6692
        %9324 = vmatprep.subr.bf16.mxu0 %v6701
        %9325 = vmatpush1.bf16.msra.mxu0 %v6700
        %9326 = vmatprep.subr.bf16.mxu0 %v6709
        %9327 = vmatpush1.bf16.msra.mxu0 %v6708
        %9328 = vmatprep.subr.bf16.mxu0 %v6717
        %9329 = vmatpush1.bf16.msra.mxu0 %v6716
        %9330 = vmatprep.subr.bf16.mxu0 %v6725
        %9331 = vmatpush1.bf16.msra.mxu0 %v6724
        %9332 = vmatprep.subr.bf16.mxu0 %v6733
        %9333 = vmatpush1.bf16.msra.mxu0 %v6732
        %9334 = vmatprep.subr.bf16.mxu0 %v6741
        %9335 = vmatpush1.bf16.msra.mxu0 %v6740
        %9336 = vmatprep.subr.bf16.mxu0 %v6749
        %9337 = vmatpush1.bf16.msra.mxu0 %v6748
        %9338 = vmatprep.subr.bf16.mxu0 %v6757
        %9339 = vmatpush1.bf16.msra.mxu0 %v6756
        %9340 = vmatprep.subr.bf16.mxu0 %v6765
        %9341 = vmatpush1.bf16.msra.mxu0 %v6764
        %9342 = vmatprep.subr.bf16.mxu0 %v6773
        %9343 = vmatpush1.bf16.msra.mxu0 %v6772
        %9344 = vmatprep.subr.bf16.mxu0 %v6781
        %9345 = vmatpush1.bf16.msra.mxu0 %v6780
        %9346 = vmatprep.mubr.bf16.mxu0 %v2418
        %9347 = vmatmul.mubr.bf16.gmra.mrb[0].mxu0 %v2417
        %v9348 = vpop.f32.mrb[0].mxu0
        %v9349 = vadd.f32 %v9308, %v9348
        %v9350 = vpop.f32.mrb[0].mxu0
        %v9351 = vadd.f32 %v9310, %v9350
        %v9352 = vpop.f32.mrb[0].mxu0
        %v9353 = vpop.f32.mrb[0].mxu0
        %9354 = vdwg.mxu0
        %9355 = vmatprep.subr.bf16.mxu0 %v6789
        %9356 = vmatpush1.bf16.msra.mxu0 %v6788
        %9357 = vmatprep.subr.bf16.mxu0 %v6797
        %9358 = vmatpush1.bf16.msra.mxu0 %v6796
        %9359 = vmatprep.subr.bf16.mxu0 %v6805
        %9360 = vmatpush1.bf16.msra.mxu0 %v6804
        %9361 = vmatprep.subr.bf16.mxu0 %v6813
        %9362 = vmatpush1.bf16.msra.mxu0 %v6812
        %9363 = vmatprep.subr.bf16.mxu0 %v6821
        %9364 = vmatpush1.bf16.msra.mxu0 %v6820
        %9365 = vmatprep.subr.bf16.mxu0 %v6829
        %9366 = vmatpush1.bf16.msra.mxu0 %v6828
        %9367 = vmatprep.subr.bf16.mxu0 %v6837
        %9368 = vmatpush1.bf16.msra.mxu0 %v6836
        %9369 = vmatprep.subr.bf16.mxu0 %v6845
        %9370 = vmatpush1.bf16.msra.mxu0 %v6844
        %9371 = vmatprep.subr.bf16.mxu0 %v6853
        %9372 = vmatpush1.bf16.msra.mxu0 %v6852
        %9373 = vmatprep.subr.bf16.mxu0 %v6861
        %9374 = vmatpush1.bf16.msra.mxu0 %v6860
        %9375 = vmatprep.subr.bf16.mxu0 %v6869
        %9376 = vmatpush1.bf16.msra.mxu0 %v6868
        %9377 = vmatprep.subr.bf16.mxu0 %v6877
        %9378 = vmatpush1.bf16.msra.mxu0 %v6876
        %9379 = vmatprep.subr.bf16.mxu0 %v6885
        %9380 = vmatpush1.bf16.msra.mxu0 %v6884
        %9381 = vmatprep.subr.bf16.mxu0 %v6893
        %9382 = vmatpush1.bf16.msra.mxu0 %v6892
        %9383 = vmatprep.subr.bf16.mxu0 %v6901
        %9384 = vmatpush1.bf16.msra.mxu0 %v6900
        %9385 = vmatprep.subr.bf16.mxu0 %v6909
        %9386 = vmatpush1.bf16.msra.mxu0 %v6908
        %9387 = vmatprep.mubr.bf16.mxu0 %v2420
        %9388 = vmatmul.mubr.bf16.gmra.mrb[0].mxu0 %v2419
        %v9389 = vpop.f32.mrb[0].mxu0
        %v9390 = vadd.f32 %v9349, %v9389
        %v9391 = vpop.f32.mrb[0].mxu0
        %v9392 = vadd.f32 %v9351, %v9391
        %v9393 = vpop.f32.mrb[0].mxu0
        %v9394 = vpop.f32.mrb[0].mxu0
        %9395 = vdwg.mxu0
        %9396 = vmatprep.subr.bf16.mxu0 %v6917
        %9397 = vmatpush1.bf16.msra.mxu0 %v6916
        %9398 = vmatprep.subr.bf16.mxu0 %v6925
        %9399 = vmatpush1.bf16.msra.mxu0 %v6924
        %9400 = vmatprep.subr.bf16.mxu0 %v6933
        %9401 = vmatpush1.bf16.msra.mxu0 %v6932
        %9402 = vmatprep.subr.bf16.mxu0 %v6941
        %9403 = vmatpush1.bf16.msra.mxu0 %v6940
        %9404 = vmatprep.subr.bf16.mxu0 %v6949
        %9405 = vmatpush1.bf16.msra.mxu0 %v6948
        %9406 = vmatprep.subr.bf16.mxu0 %v6957
        %9407 = vmatpush1.bf16.msra.mxu0 %v6956
        %9408 = vmatprep.subr.bf16.mxu0 %v6965
        %9409 = vmatpush1.bf16.msra.mxu0 %v6964
        %9410 = vmatprep.subr.bf16.mxu0 %v6973
        %9411 = vmatpush1.bf16.msra.mxu0 %v6972
        %9412 = vmatprep.subr.bf16.mxu0 %v6981
        %9413 = vmatpush1.bf16.msra.mxu0 %v6980
        %9414 = vmatprep.subr.bf16.mxu0 %v6989
        %9415 = vmatpush1.bf16.msra.mxu0 %v6988
        %9416 = vmatprep.subr.bf16.mxu0 %v6997
        %9417 = vmatpush1.bf16.msra.mxu0 %v6996
        %9418 = vmatprep.subr.bf16.mxu0 %v7005
        %9419 = vmatpush1.bf16.msra.mxu0 %v7004
        %9420 = vmatprep.subr.bf16.mxu0 %v7013
        %9421 = vmatpush1.bf16.msra.mxu0 %v7012
        %9422 = vmatprep.subr.bf16.mxu0 %v7021
        %9423 = vmatpush1.bf16.msra.mxu0 %v7020
        %9424 = vmatprep.subr.bf16.mxu0 %v7029
        %9425 = vmatpush1.bf16.msra.mxu0 %v7028
        %9426 = vmatprep.subr.bf16.mxu0 %v7037
        %9427 = vmatpush1.bf16.msra.mxu0 %v7036
        %9428 = vmatprep.mubr.bf16.mxu0 %v2422
        %9429 = vmatmul.mubr.bf16.gmra.mrb[0].mxu0 %v2421
        %v9430 = vpop.f32.mrb[0].mxu0
        %v9431 = vadd.f32 %v9390, %v9430
        %v9432 = vpop.f32.mrb[0].mxu0
        %v9433 = vadd.f32 %v9392, %v9432
        %v9434 = vpop.f32.mrb[0].mxu0
        %v9435 = vpop.f32.mrb[0].mxu0
        %9436 = vdwg.mxu0
        %9437 = vmatprep.subr.bf16.mxu0 %v7045
        %9438 = vmatpush1.bf16.msra.mxu0 %v7044
        %9439 = vmatprep.subr.bf16.mxu0 %v7053
        %9440 = vmatpush1.bf16.msra.mxu0 %v7052
        %9441 = vmatprep.subr.bf16.mxu0 %v7061
        %9442 = vmatpush1.bf16.msra.mxu0 %v7060
        %9443 = vmatprep.subr.bf16.mxu0 %v7069
        %9444 = vmatpush1.bf16.msra.mxu0 %v7068
        %9445 = vmatprep.subr.bf16.mxu0 %v7077
        %9446 = vmatpush1.bf16.msra.mxu0 %v7076
        %9447 = vmatprep.subr.bf16.mxu0 %v7085
        %9448 = vmatpush1.bf16.msra.mxu0 %v7084
        %9449 = vmatprep.subr.bf16.mxu0 %v7093
        %9450 = vmatpush1.bf16.msra.mxu0 %v7092
        %9451 = vmatprep.subr.bf16.mxu0 %v7101
        %9452 = vmatpush1.bf16.msra.mxu0 %v7100
        %9453 = vmatprep.subr.bf16.mxu0 %v7109
        %9454 = vmatpush1.bf16.msra.mxu0 %v7108
        %9455 = vmatprep.subr.bf16.mxu0 %v7117
        %9456 = vmatpush1.bf16.msra.mxu0 %v7116
        %9457 = vmatprep.subr.bf16.mxu0 %v7125
        %9458 = vmatpush1.bf16.msra.mxu0 %v7124
        %9459 = vmatprep.subr.bf16.mxu0 %v7133
        %9460 = vmatpush1.bf16.msra.mxu0 %v7132
        %9461 = vmatprep.subr.bf16.mxu0 %v7141
        %9462 = vmatpush1.bf16.msra.mxu0 %v7140
        %9463 = vmatprep.subr.bf16.mxu0 %v7149
        %9464 = vmatpush1.bf16.msra.mxu0 %v7148
        %9465 = vmatprep.subr.bf16.mxu0 %v7157
        %9466 = vmatpush1.bf16.msra.mxu0 %v7156
        %9467 = vmatprep.subr.bf16.mxu0 %v7165
        %9468 = vmatpush1.bf16.msra.mxu0 %v7164
        %9469 = vmatprep.mubr.bf16.mxu0 %v2424
        %9470 = vmatmul.mubr.bf16.gmra.mrb[0].mxu0 %v2423
        %v9471 = vpop.f32.mrb[0].mxu0
        %v9472 = vadd.f32 %v9431, %v9471
        %v9473 = vpop.f32.mrb[0].mxu0
        %v9474 = vadd.f32 %v9433, %v9473
        %v9475 = vpop.f32.mrb[0].mxu0
        %v9476 = vpop.f32.mrb[0].mxu0
        %9477 = vdwg.mxu0
        %9478 = vmatprep.subr.bf16.mxu0 %v7173
        %9479 = vmatpush1.bf16.msra.mxu0 %v7172
        %9480 = vmatprep.subr.bf16.mxu0 %v7181
        %9481 = vmatpush1.bf16.msra.mxu0 %v7180
        %9482 = vmatprep.subr.bf16.mxu0 %v7189
        %9483 = vmatpush1.bf16.msra.mxu0 %v7188
        %9484 = vmatprep.subr.bf16.mxu0 %v7197
        %9485 = vmatpush1.bf16.msra.mxu0 %v7196
        %9486 = vmatprep.subr.bf16.mxu0 %v7205
        %9487 = vmatpush1.bf16.msra.mxu0 %v7204
        %9488 = vmatprep.subr.bf16.mxu0 %v7213
        %9489 = vmatpush1.bf16.msra.mxu0 %v7212
        %9490 = vmatprep.subr.bf16.mxu0 %v7221
        %9491 = vmatpush1.bf16.msra.mxu0 %v7220
        %9492 = vmatprep.subr.bf16.mxu0 %v7229
        %9493 = vmatpush1.bf16.msra.mxu0 %v7228
        %9494 = vmatprep.subr.bf16.mxu0 %v7237
        %9495 = vmatpush1.bf16.msra.mxu0 %v7236
        %9496 = vmatprep.subr.bf16.mxu0 %v7245
        %9497 = vmatpush1.bf16.msra.mxu0 %v7244
        %9498 = vmatprep.subr.bf16.mxu0 %v7253
        %9499 = vmatpush1.bf16.msra.mxu0 %v7252
        %9500 = vmatprep.subr.bf16.mxu0 %v7261
        %9501 = vmatpush1.bf16.msra.mxu0 %v7260
        %9502 = vmatprep.subr.bf16.mxu0 %v7269
        %9503 = vmatpush1.bf16.msra.mxu0 %v7268
        %9504 = vmatprep.subr.bf16.mxu0 %v7277
        %9505 = vmatpush1.bf16.msra.mxu0 %v7276
        %9506 = vmatprep.subr.bf16.mxu0 %v7285
        %9507 = vmatpush1.bf16.msra.mxu0 %v7284
        %9508 = vmatprep.subr.bf16.mxu0 %v7293
        %9509 = vmatpush1.bf16.msra.mxu0 %v7292
        %9510 = vmatprep.mubr.bf16.mxu0 %v2426
        %9511 = vmatmul.mubr.bf16.gmra.mrb[0].mxu0 %v2425
        %v9512 = vpop.f32.mrb[0].mxu0
        %v9513 = vadd.f32 %v9472, %v9512
        %v9514 = vpop.f32.mrb[0].mxu0
        %v9515 = vadd.f32 %v9474, %v9514
        %v9516 = vpop.f32.mrb[0].mxu0
        %v9517 = vpop.f32.mrb[0].mxu0
        %9518 = vdwg.mxu0
        %9519 = vmatprep.subr.bf16.mxu0 %v7301
        %9520 = vmatpush1.bf16.msra.mxu0 %v7300
        %9521 = vmatprep.subr.bf16.mxu0 %v7309
        %9522 = vmatpush1.bf16.msra.mxu0 %v7308
        %9523 = vmatprep.subr.bf16.mxu0 %v7317
        %9524 = vmatpush1.bf16.msra.mxu0 %v7316
        %9525 = vmatprep.subr.bf16.mxu0 %v7325
        %9526 = vmatpush1.bf16.msra.mxu0 %v7324
        %9527 = vmatprep.subr.bf16.mxu0 %v7333
        %9528 = vmatpush1.bf16.msra.mxu0 %v7332
        %9529 = vmatprep.subr.bf16.mxu0 %v7341
        %9530 = vmatpush1.bf16.msra.mxu0 %v7340
        %9531 = vmatprep.subr.bf16.mxu0 %v7349
        %9532 = vmatpush1.bf16.msra.mxu0 %v7348
        %9533 = vmatprep.subr.bf16.mxu0 %v7357
        %9534 = vmatpush1.bf16.msra.mxu0 %v7356
        %9535 = vmatprep.subr.bf16.mxu0 %v7365
        %9536 = vmatpush1.bf16.msra.mxu0 %v7364
        %9537 = vmatprep.subr.bf16.mxu0 %v7373
        %9538 = vmatpush1.bf16.msra.mxu0 %v7372
        %9539 = vmatprep.subr.bf16.mxu0 %v7381
        %9540 = vmatpush1.bf16.msra.mxu0 %v7380
        %9541 = vmatprep.subr.bf16.mxu0 %v7389
        %9542 = vmatpush1.bf16.msra.mxu0 %v7388
        %9543 = vmatprep.subr.bf16.mxu0 %v7397
        %9544 = vmatpush1.bf16.msra.mxu0 %v7396
        %9545 = vmatprep.subr.bf16.mxu0 %v7405
        %9546 = vmatpush1.bf16.msra.mxu0 %v7404
        %9547 = vmatprep.subr.bf16.mxu0 %v7413
        %9548 = vmatpush1.bf16.msra.mxu0 %v7412
        %9549 = vmatprep.subr.bf16.mxu0 %v7421
        %9550 = vmatpush1.bf16.msra.mxu0 %v7420
        %9551 = vmatprep.mubr.bf16.mxu0 %v2428
        %9552 = vmatmul.mubr.bf16.gmra.mrb[0].mxu0 %v2427
        %v9553 = vpop.f32.mrb[0].mxu0
        %v9554 = vadd.f32 %v9513, %v9553
        %v9555 = vpop.f32.mrb[0].mxu0
        %v9556 = vadd.f32 %v9515, %v9555
        %v9557 = vpop.f32.mrb[0].mxu0
        %v9558 = vpop.f32.mrb[0].mxu0
        %9559 = vdwg.mxu0
        %9560 = vmatprep.subr.bf16.mxu0 %v7429
        %9561 = vmatpush1.bf16.msra.mxu0 %v7428
        %9562 = vmatprep.subr.bf16.mxu0 %v7437
        %9563 = vmatpush1.bf16.msra.mxu0 %v7436
        %9564 = vmatprep.subr.bf16.mxu0 %v7445
        %9565 = vmatpush1.bf16.msra.mxu0 %v7444
        %9566 = vmatprep.subr.bf16.mxu0 %v7453
        %9567 = vmatpush1.bf16.msra.mxu0 %v7452
        %9568 = vmatprep.subr.bf16.mxu0 %v7461
        %9569 = vmatpush1.bf16.msra.mxu0 %v7460
        %9570 = vmatprep.subr.bf16.mxu0 %v7469
        %9571 = vmatpush1.bf16.msra.mxu0 %v7468
        %9572 = vmatprep.subr.bf16.mxu0 %v7477
        %9573 = vmatpush1.bf16.msra.mxu0 %v7476
        %9574 = vmatprep.subr.bf16.mxu0 %v7485
        %9575 = vmatpush1.bf16.msra.mxu0 %v7484
        %9576 = vmatprep.subr.bf16.mxu0 %v7493
        %9577 = vmatpush1.bf16.msra.mxu0 %v7492
        %9578 = vmatprep.subr.bf16.mxu0 %v7501
        %9579 = vmatpush1.bf16.msra.mxu0 %v7500
        %9580 = vmatprep.subr.bf16.mxu0 %v7509
        %9581 = vmatpush1.bf16.msra.mxu0 %v7508
        %9582 = vmatprep.subr.bf16.mxu0 %v7517
        %9583 = vmatpush1.bf16.msra.mxu0 %v7516
        %9584 = vmatprep.subr.bf16.mxu0 %v7525
        %9585 = vmatpush1.bf16.msra.mxu0 %v7524
        %9586 = vmatprep.subr.bf16.mxu0 %v7533
        %9587 = vmatpush1.bf16.msra.mxu0 %v7532
        %9588 = vmatprep.subr.bf16.mxu0 %v7541
        %9589 = vmatpush1.bf16.msra.mxu0 %v7540
        %9590 = vmatprep.subr.bf16.mxu0 %v7549
        %9591 = vmatpush1.bf16.msra.mxu0 %v7548
        %9592 = vmatprep.mubr.bf16.mxu0 %v2430
        %9593 = vmatmul.mubr.bf16.gmra.mrb[0].mxu0 %v2429
        %v9594 = vpop.f32.mrb[0].mxu0
        %v9595 = vadd.f32 %v9554, %v9594
        %v9596 = vpop.f32.mrb[0].mxu0
        %v9597 = vadd.f32 %v9556, %v9596
        %v9598 = vpop.f32.mrb[0].mxu0
        %v9599 = vpop.f32.mrb[0].mxu0
        %9600 = vdwg.mxu0
        %9601 = vmatprep.subr.bf16.mxu0 %v6535
        %9602 = vmatpush1.bf16.msra.mxu0 %v6534
        %9603 = vmatprep.subr.bf16.mxu0 %v6543
        %9604 = vmatpush1.bf16.msra.mxu0 %v6542
        %9605 = vmatprep.subr.bf16.mxu0 %v6551
        %9606 = vmatpush1.bf16.msra.mxu0 %v6550
        %9607 = vmatprep.subr.bf16.mxu0 %v6559
        %9608 = vmatpush1.bf16.msra.mxu0 %v6558
        %9609 = vmatprep.subr.bf16.mxu0 %v6567
        %9610 = vmatpush1.bf16.msra.mxu0 %v6566
        %9611 = vmatprep.subr.bf16.mxu0 %v6575
        %9612 = vmatpush1.bf16.msra.mxu0 %v6574
        %9613 = vmatprep.subr.bf16.mxu0 %v6583
        %9614 = vmatpush1.bf16.msra.mxu0 %v6582
        %9615 = vmatprep.subr.bf16.mxu0 %v6591
        %9616 = vmatpush1.bf16.msra.mxu0 %v6590
        %9617 = vmatprep.subr.bf16.mxu0 %v6599
        %9618 = vmatpush1.bf16.msra.mxu0 %v6598
        %9619 = vmatprep.subr.bf16.mxu0 %v6607
        %9620 = vmatpush1.bf16.msra.mxu0 %v6606
        %9621 = vmatprep.subr.bf16.mxu0 %v6615
        %9622 = vmatpush1.bf16.msra.mxu0 %v6614
        %9623 = vmatprep.subr.bf16.mxu0 %v6623
        %9624 = vmatpush1.bf16.msra.mxu0 %v6622
        %9625 = vmatprep.subr.bf16.mxu0 %v6631
        %9626 = vmatpush1.bf16.msra.mxu0 %v6630
        %9627 = vmatprep.subr.bf16.mxu0 %v6639
        %9628 = vmatpush1.bf16.msra.mxu0 %v6638
        %9629 = vmatprep.subr.bf16.mxu0 %v6647
        %9630 = vmatpush1.bf16.msra.mxu0 %v6646
        %9631 = vmatprep.subr.bf16.mxu0 %v6655
        %9632 = vmatpush1.bf16.msra.mxu0 %v6654
        %9633 = vmatprep.mubr.bf16.mxu0 %v2416
        %9634 = vmatmul.mubr.bf16.gmra.mrb[0].mxu0 %v2415
        %v9635 = vpop.f32.mrb[0].mxu0
        %v9636 = vadd.f32 %v8604, %v9635
        %v9637 = vpop.f32.mrb[0].mxu0
        %v9638 = vadd.f32 %v8608, %v9637
        %v9639 = vpop.f32.mrb[0].mxu0
        %v9640 = vpop.f32.mrb[0].mxu0
        %9641 = vdwg.mxu0
        %9642 = vmatprep.subr.bf16.mxu0 %v6663
        %9643 = vmatpush1.bf16.msra.mxu0 %v6662
        %9644 = vmatprep.subr.bf16.mxu0 %v6671
        %9645 = vmatpush1.bf16.msra.mxu0 %v6670
        %9646 = vmatprep.subr.bf16.mxu0 %v6679
        %9647 = vmatpush1.bf16.msra.mxu0 %v6678
        %9648 = vmatprep.subr.bf16.mxu0 %v6687
        %9649 = vmatpush1.bf16.msra.mxu0 %v6686
        %9650 = vmatprep.subr.bf16.mxu0 %v6695
        %9651 = vmatpush1.bf16.msra.mxu0 %v6694
        %9652 = vmatprep.subr.bf16.mxu0 %v6703
        %9653 = vmatpush1.bf16.msra.mxu0 %v6702
        %9654 = vmatprep.subr.bf16.mxu0 %v6711
        %9655 = vmatpush1.bf16.msra.mxu0 %v6710
        %9656 = vmatprep.subr.bf16.mxu0 %v6719
        %9657 = vmatpush1.bf16.msra.mxu0 %v6718
        %9658 = vmatprep.subr.bf16.mxu0 %v6727
        %9659 = vmatpush1.bf16.msra.mxu0 %v6726
        %9660 = vmatprep.subr.bf16.mxu0 %v6735
        %9661 = vmatpush1.bf16.msra.mxu0 %v6734
        %9662 = vmatprep.subr.bf16.mxu0 %v6743
        %9663 = vmatpush1.bf16.msra.mxu0 %v6742
        %9664 = vmatprep.subr.bf16.mxu0 %v6751
        %9665 = vmatpush1.bf16.msra.mxu0 %v6750
        %9666 = vmatprep.subr.bf16.mxu0 %v6759
        %9667 = vmatpush1.bf16.msra.mxu0 %v6758
        %9668 = vmatprep.subr.bf16.mxu0 %v6767
        %9669 = vmatpush1.bf16.msra.mxu0 %v6766
        %9670 = vmatprep.subr.bf16.mxu0 %v6775
        %9671 = vmatpush1.bf16.msra.mxu0 %v6774
        %9672 = vmatprep.subr.bf16.mxu0 %v6783
        %9673 = vmatpush1.bf16.msra.mxu0 %v6782
        %9674 = vmatprep.mubr.bf16.mxu0 %v2418
        %9675 = vmatmul.mubr.bf16.gmra.mrb[0].mxu0 %v2417
        %v9676 = vpop.f32.mrb[0].mxu0
        %v9677 = vadd.f32 %v9636, %v9676
        %v9678 = vpop.f32.mrb[0].mxu0
        %v9679 = vadd.f32 %v9638, %v9678
        %v9680 = vpop.f32.mrb[0].mxu0
        %v9681 = vpop.f32.mrb[0].mxu0
        %9682 = vdwg.mxu0
        %9683 = vmatprep.subr.bf16.mxu0 %v6791
        %9684 = vmatpush1.bf16.msra.mxu0 %v6790
        %9685 = vmatprep.subr.bf16.mxu0 %v6799
        %9686 = vmatpush1.bf16.msra.mxu0 %v6798
        %9687 = vmatprep.subr.bf16.mxu0 %v6807
        %9688 = vmatpush1.bf16.msra.mxu0 %v6806
        %9689 = vmatprep.subr.bf16.mxu0 %v6815
        %9690 = vmatpush1.bf16.msra.mxu0 %v6814
        %9691 = vmatprep.subr.bf16.mxu0 %v6823
        %9692 = vmatpush1.bf16.msra.mxu0 %v6822
        %9693 = vmatprep.subr.bf16.mxu0 %v6831
        %9694 = vmatpush1.bf16.msra.mxu0 %v6830
        %9695 = vmatprep.subr.bf16.mxu0 %v6839
        %9696 = vmatpush1.bf16.msra.mxu0 %v6838
        %9697 = vmatprep.subr.bf16.mxu0 %v6847
        %9698 = vmatpush1.bf16.msra.mxu0 %v6846
        %9699 = vmatprep.subr.bf16.mxu0 %v6855
        %9700 = vmatpush1.bf16.msra.mxu0 %v6854
        %9701 = vmatprep.subr.bf16.mxu0 %v6863
        %9702 = vmatpush1.bf16.msra.mxu0 %v6862
        %9703 = vmatprep.subr.bf16.mxu0 %v6871
        %9704 = vmatpush1.bf16.msra.mxu0 %v6870
        %9705 = vmatprep.subr.bf16.mxu0 %v6879
        %9706 = vmatpush1.bf16.msra.mxu0 %v6878
        %9707 = vmatprep.subr.bf16.mxu0 %v6887
        %9708 = vmatpush1.bf16.msra.mxu0 %v6886
        %9709 = vmatprep.subr.bf16.mxu0 %v6895
        %9710 = vmatpush1.bf16.msra.mxu0 %v6894
        %9711 = vmatprep.subr.bf16.mxu0 %v6903
        %9712 = vmatpush1.bf16.msra.mxu0 %v6902
        %9713 = vmatprep.subr.bf16.mxu0 %v6911
        %9714 = vmatpush1.bf16.msra.mxu0 %v6910
        %9715 = vmatprep.mubr.bf16.mxu0 %v2420
        %9716 = vmatmul.mubr.bf16.gmra.mrb[0].mxu0 %v2419
        %v9717 = vpop.f32.mrb[0].mxu0
        %v9718 = vadd.f32 %v9677, %v9717
        %v9719 = vpop.f32.mrb[0].mxu0
        %v9720 = vadd.f32 %v9679, %v9719
        %v9721 = vpop.f32.mrb[0].mxu0
        %v9722 = vpop.f32.mrb[0].mxu0
        %9723 = vdwg.mxu0
        %9724 = vmatprep.subr.bf16.mxu0 %v6919
        %9725 = vmatpush1.bf16.msra.mxu0 %v6918
        %9726 = vmatprep.subr.bf16.mxu0 %v6927
        %9727 = vmatpush1.bf16.msra.mxu0 %v6926
        %9728 = vmatprep.subr.bf16.mxu0 %v6935
        %9729 = vmatpush1.bf16.msra.mxu0 %v6934
        %9730 = vmatprep.subr.bf16.mxu0 %v6943
        %9731 = vmatpush1.bf16.msra.mxu0 %v6942
        %9732 = vmatprep.subr.bf16.mxu0 %v6951
        %9733 = vmatpush1.bf16.msra.mxu0 %v6950
        %9734 = vmatprep.subr.bf16.mxu0 %v6959
        %9735 = vmatpush1.bf16.msra.mxu0 %v6958
        %9736 = vmatprep.subr.bf16.mxu0 %v6967
        %9737 = vmatpush1.bf16.msra.mxu0 %v6966
        %9738 = vmatprep.subr.bf16.mxu0 %v6975
        %9739 = vmatpush1.bf16.msra.mxu0 %v6974
        %9740 = vmatprep.subr.bf16.mxu0 %v6983
        %9741 = vmatpush1.bf16.msra.mxu0 %v6982
        %9742 = vmatprep.subr.bf16.mxu0 %v6991
        %9743 = vmatpush1.bf16.msra.mxu0 %v6990
        %9744 = vmatprep.subr.bf16.mxu0 %v6999
        %9745 = vmatpush1.bf16.msra.mxu0 %v6998
        %9746 = vmatprep.subr.bf16.mxu0 %v7007
        %9747 = vmatpush1.bf16.msra.mxu0 %v7006
        %9748 = vmatprep.subr.bf16.mxu0 %v7015
        %9749 = vmatpush1.bf16.msra.mxu0 %v7014
        %9750 = vmatprep.subr.bf16.mxu0 %v7023
        %9751 = vmatpush1.bf16.msra.mxu0 %v7022
        %9752 = vmatprep.subr.bf16.mxu0 %v7031
        %9753 = vmatpush1.bf16.msra.mxu0 %v7030
        %9754 = vmatprep.subr.bf16.mxu0 %v7039
        %9755 = vmatpush1.bf16.msra.mxu0 %v7038
        %9756 = vmatprep.mubr.bf16.mxu0 %v2422
        %9757 = vmatmul.mubr.bf16.gmra.mrb[0].mxu0 %v2421
        %v9758 = vpop.f32.mrb[0].mxu0
        %v9759 = vadd.f32 %v9718, %v9758
        %v9760 = vpop.f32.mrb[0].mxu0
        %v9761 = vadd.f32 %v9720, %v9760
        %v9762 = vpop.f32.mrb[0].mxu0
        %v9763 = vpop.f32.mrb[0].mxu0
        %9764 = vdwg.mxu0
        %9765 = vmatprep.subr.bf16.mxu0 %v7047
        %9766 = vmatpush1.bf16.msra.mxu0 %v7046
        %9767 = vmatprep.subr.bf16.mxu0 %v7055
        %9768 = vmatpush1.bf16.msra.mxu0 %v7054
        %9769 = vmatprep.subr.bf16.mxu0 %v7063
        %9770 = vmatpush1.bf16.msra.mxu0 %v7062
        %9771 = vmatprep.subr.bf16.mxu0 %v7071
        %9772 = vmatpush1.bf16.msra.mxu0 %v7070
        %9773 = vmatprep.subr.bf16.mxu0 %v7079
        %9774 = vmatpush1.bf16.msra.mxu0 %v7078
        %9775 = vmatprep.subr.bf16.mxu0 %v7087
        %9776 = vmatpush1.bf16.msra.mxu0 %v7086
        %9777 = vmatprep.subr.bf16.mxu0 %v7095
        %9778 = vmatpush1.bf16.msra.mxu0 %v7094
        %9779 = vmatprep.subr.bf16.mxu0 %v7103
        %9780 = vmatpush1.bf16.msra.mxu0 %v7102
        %9781 = vmatprep.subr.bf16.mxu0 %v7111
        %9782 = vmatpush1.bf16.msra.mxu0 %v7110
        %9783 = vmatprep.subr.bf16.mxu0 %v7119
        %9784 = vmatpush1.bf16.msra.mxu0 %v7118
        %9785 = vmatprep.subr.bf16.mxu0 %v7127
        %9786 = vmatpush1.bf16.msra.mxu0 %v7126
        %9787 = vmatprep.subr.bf16.mxu0 %v7135
        %9788 = vmatpush1.bf16.msra.mxu0 %v7134
        %9789 = vmatprep.subr.bf16.mxu0 %v7143
        %9790 = vmatpush1.bf16.msra.mxu0 %v7142
        %9791 = vmatprep.subr.bf16.mxu0 %v7151
        %9792 = vmatpush1.bf16.msra.mxu0 %v7150
        %9793 = vmatprep.subr.bf16.mxu0 %v7159
        %9794 = vmatpush1.bf16.msra.mxu0 %v7158
        %9795 = vmatprep.subr.bf16.mxu0 %v7167
        %9796 = vmatpush1.bf16.msra.mxu0 %v7166
        %9797 = vmatprep.mubr.bf16.mxu0 %v2424
        %9798 = vmatmul.mubr.bf16.gmra.mrb[0].mxu0 %v2423
        %v9799 = vpop.f32.mrb[0].mxu0
        %v9800 = vadd.f32 %v9759, %v9799
        %v9801 = vpop.f32.mrb[0].mxu0
        %v9802 = vadd.f32 %v9761, %v9801
        %v9803 = vpop.f32.mrb[0].mxu0
        %v9804 = vpop.f32.mrb[0].mxu0
        %9805 = vdwg.mxu0
        %9806 = vmatprep.subr.bf16.mxu0 %v7175
        %9807 = vmatpush1.bf16.msra.mxu0 %v7174
        %9808 = vmatprep.subr.bf16.mxu0 %v7183
        %9809 = vmatpush1.bf16.msra.mxu0 %v7182
        %9810 = vmatprep.subr.bf16.mxu0 %v7191
        %9811 = vmatpush1.bf16.msra.mxu0 %v7190
        %9812 = vmatprep.subr.bf16.mxu0 %v7199
        %9813 = vmatpush1.bf16.msra.mxu0 %v7198
        %9814 = vmatprep.subr.bf16.mxu0 %v7207
        %9815 = vmatpush1.bf16.msra.mxu0 %v7206
        %9816 = vmatprep.subr.bf16.mxu0 %v7215
        %9817 = vmatpush1.bf16.msra.mxu0 %v7214
        %9818 = vmatprep.subr.bf16.mxu0 %v7223
        %9819 = vmatpush1.bf16.msra.mxu0 %v7222
        %9820 = vmatprep.subr.bf16.mxu0 %v7231
        %9821 = vmatpush1.bf16.msra.mxu0 %v7230
        %9822 = vmatprep.subr.bf16.mxu0 %v7239
        %9823 = vmatpush1.bf16.msra.mxu0 %v7238
        %9824 = vmatprep.subr.bf16.mxu0 %v7247
        %9825 = vmatpush1.bf16.msra.mxu0 %v7246
        %9826 = vmatprep.subr.bf16.mxu0 %v7255
        %9827 = vmatpush1.bf16.msra.mxu0 %v7254
        %9828 = vmatprep.subr.bf16.mxu0 %v7263
        %9829 = vmatpush1.bf16.msra.mxu0 %v7262
        %9830 = vmatprep.subr.bf16.mxu0 %v7271
        %9831 = vmatpush1.bf16.msra.mxu0 %v7270
        %9832 = vmatprep.subr.bf16.mxu0 %v7279
        %9833 = vmatpush1.bf16.msra.mxu0 %v7278
        %9834 = vmatprep.subr.bf16.mxu0 %v7287
        %9835 = vmatpush1.bf16.msra.mxu0 %v7286
        %9836 = vmatprep.subr.bf16.mxu0 %v7295
        %9837 = vmatpush1.bf16.msra.mxu0 %v7294
        %9838 = vmatprep.mubr.bf16.mxu0 %v2426
        %9839 = vmatmul.mubr.bf16.gmra.mrb[0].mxu0 %v2425
        %v9840 = vpop.f32.mrb[0].mxu0
        %v9841 = vadd.f32 %v9800, %v9840
        %v9842 = vpop.f32.mrb[0].mxu0
        %v9843 = vadd.f32 %v9802, %v9842
        %v9844 = vpop.f32.mrb[0].mxu0
        %v9845 = vpop.f32.mrb[0].mxu0
        %9846 = vdwg.mxu0
        %9847 = vmatprep.subr.bf16.mxu0 %v7303
        %9848 = vmatpush1.bf16.msra.mxu0 %v7302
        %9849 = vmatprep.subr.bf16.mxu0 %v7311
        %9850 = vmatpush1.bf16.msra.mxu0 %v7310
        %9851 = vmatprep.subr.bf16.mxu0 %v7319
        %9852 = vmatpush1.bf16.msra.mxu0 %v7318
        %9853 = vmatprep.subr.bf16.mxu0 %v7327
        %9854 = vmatpush1.bf16.msra.mxu0 %v7326
        %9855 = vmatprep.subr.bf16.mxu0 %v7335
        %9856 = vmatpush1.bf16.msra.mxu0 %v7334
        %9857 = vmatprep.subr.bf16.mxu0 %v7343
        %9858 = vmatpush1.bf16.msra.mxu0 %v7342
        %9859 = vmatprep.subr.bf16.mxu0 %v7351
        %9860 = vmatpush1.bf16.msra.mxu0 %v7350
        %9861 = vmatprep.subr.bf16.mxu0 %v7359
        %9862 = vmatpush1.bf16.msra.mxu0 %v7358
        %9863 = vmatprep.subr.bf16.mxu0 %v7367
        %9864 = vmatpush1.bf16.msra.mxu0 %v7366
        %9865 = vmatprep.subr.bf16.mxu0 %v7375
        %9866 = vmatpush1.bf16.msra.mxu0 %v7374
        %9867 = vmatprep.subr.bf16.mxu0 %v7383
        %9868 = vmatpush1.bf16.msra.mxu0 %v7382
        %9869 = vmatprep.subr.bf16.mxu0 %v7391
        %9870 = vmatpush1.bf16.msra.mxu0 %v7390
        %9871 = vmatprep.subr.bf16.mxu0 %v7399
        %9872 = vmatpush1.bf16.msra.mxu0 %v7398
        %9873 = vmatprep.subr.bf16.mxu0 %v7407
        %9874 = vmatpush1.bf16.msra.mxu0 %v7406
        %9875 = vmatprep.subr.bf16.mxu0 %v7415
        %9876 = vmatpush1.bf16.msra.mxu0 %v7414
        %9877 = vmatprep.subr.bf16.mxu0 %v7423
        %9878 = vmatpush1.bf16.msra.mxu0 %v7422
        %9879 = vmatprep.mubr.bf16.mxu0 %v2428
        %9880 = vmatmul.mubr.bf16.gmra.mrb[0].mxu0 %v2427
        %v9881 = vpop.f32.mrb[0].mxu0
        %v9882 = vadd.f32 %v9841, %v9881
        %v9883 = vpop.f32.mrb[0].mxu0
        %v9884 = vadd.f32 %v9843, %v9883
        %v9885 = vpop.f32.mrb[0].mxu0
        %v9886 = vpop.f32.mrb[0].mxu0
        %9887 = vdwg.mxu0
        %9888 = vmatprep.subr.bf16.mxu0 %v7431
        %9889 = vmatpush1.bf16.msra.mxu0 %v7430
        %9890 = vmatprep.subr.bf16.mxu0 %v7439
        %9891 = vmatpush1.bf16.msra.mxu0 %v7438
        %9892 = vmatprep.subr.bf16.mxu0 %v7447
        %9893 = vmatpush1.bf16.msra.mxu0 %v7446
        %9894 = vmatprep.subr.bf16.mxu0 %v7455
        %9895 = vmatpush1.bf16.msra.mxu0 %v7454
        %9896 = vmatprep.subr.bf16.mxu0 %v7463
        %9897 = vmatpush1.bf16.msra.mxu0 %v7462
        %9898 = vmatprep.subr.bf16.mxu0 %v7471
        %9899 = vmatpush1.bf16.msra.mxu0 %v7470
        %9900 = vmatprep.subr.bf16.mxu0 %v7479
        %9901 = vmatpush1.bf16.msra.mxu0 %v7478
        %9902 = vmatprep.subr.bf16.mxu0 %v7487
        %9903 = vmatpush1.bf16.msra.mxu0 %v7486
        %9904 = vmatprep.subr.bf16.mxu0 %v7495
        %9905 = vmatpush1.bf16.msra.mxu0 %v7494
        %9906 = vmatprep.subr.bf16.mxu0 %v7503
        %9907 = vmatpush1.bf16.msra.mxu0 %v7502
        %9908 = vmatprep.subr.bf16.mxu0 %v7511
        %9909 = vmatpush1.bf16.msra.mxu0 %v7510
        %9910 = vmatprep.subr.bf16.mxu0 %v7519
        %9911 = vmatpush1.bf16.msra.mxu0 %v7518
        %9912 = vmatprep.subr.bf16.mxu0 %v7527
        %9913 = vmatpush1.bf16.msra.mxu0 %v7526
        %9914 = vmatprep.subr.bf16.mxu0 %v7535
        %9915 = vmatpush1.bf16.msra.mxu0 %v7534
        %9916 = vmatprep.subr.bf16.mxu0 %v7543
        %9917 = vmatpush1.bf16.msra.mxu0 %v7542
        %9918 = vmatprep.subr.bf16.mxu0 %v7551
        %9919 = vmatpush1.bf16.msra.mxu0 %v7550
        %9920 = vmatprep.mubr.bf16.mxu0 %v2430
        %9921 = vmatmul.mubr.bf16.gmra.mrb[0].mxu0 %v2429
        %v9922 = vpop.f32.mrb[0].mxu0
        %v9923 = vadd.f32 %v9882, %v9922
        %v9924 = vpop.f32.mrb[0].mxu0
        %v9925 = vadd.f32 %v9884, %v9924
        %v9926 = vpop.f32.mrb[0].mxu0
        %v9927 = vpop.f32.mrb[0].mxu0
        %9928 = vdwg.mxu0
        %v9929 = vtanh.pop %v8939
        %v9930 = vtanh.pop %v8941
        %v9931 = vtanh.pop %v9267
        %v9932 = vtanh.pop %v9269
        %v9933 = vtanh.pop %v9595
        %v9934 = vtanh.pop %v9597
        %v9935 = vtanh.pop %v9923
        %v9936 = vtanh.pop %v9925
        %v9937 = vpack.c.bf16 %v9929, %v9929
        %v9938 = vpack.c.bf16 %v9930, %v9930
        %v9939 = vpack.c.bf16 %v9931, %v9931
        %v9940 = vpack.c.bf16 %v9932, %v9932
        %v9941 = vpack.c.bf16 %v9933, %v9933
        %v9942 = vpack.c.bf16 %v9934, %v9934
        %v9943 = vpack.c.bf16 %v9935, %v9935
        %v9944 = vpack.c.bf16 %v9936, %v9936
        %v9945 = vld [vmem:[#allocation10] sm:$0xff]
        %v9946 = vld [vmem:[#allocation10 + $0x8] sm:$0xff]
        %v9947 = vld [vmem:[#allocation10 + $0x10] sm:$0xff]
        %v9948 = vld [vmem:[#allocation10 + $0x18] sm:$0xff]
        %v9949 = vld [vmem:[#allocation10 + $0x20] sm:$0xff]
        %v9950 = vld [vmem:[#allocation10 + $0x28] sm:$0xff]
        %v9951 = vld [vmem:[#allocation10 + $0x30] sm:$0xff]
        %v9952 = vld [vmem:[#allocation10 + $0x38] sm:$0xff]
        %v9953 = vld [vmem:[#allocation10 + $0x40] sm:$0xff]
        %v9954 = vld [vmem:[#allocation10 + $0x48] sm:$0xff]
        %v9955 = vld [vmem:[#allocation10 + $0x50] sm:$0xff]
        %v9956 = vld [vmem:[#allocation10 + $0x58] sm:$0xff]
        %v9957 = vld [vmem:[#allocation10 + $0x60] sm:$0xff]
        %v9958 = vld [vmem:[#allocation10 + $0x68] sm:$0xff]
        %v9959 = vld [vmem:[#allocation10 + $0x70] sm:$0xff]
        %v9960 = vld [vmem:[#allocation10 + $0x78] sm:$0xff]
        %v9961 = vld [vmem:[#allocation10 + $0x80] sm:$0xff]
        %v9962 = vld [vmem:[#allocation10 + $0x88] sm:$0xff]
        %v9963 = vld [vmem:[#allocation10 + $0x90] sm:$0xff]
        %v9964 = vld [vmem:[#allocation10 + $0x98] sm:$0xff]
        %v9965 = vld [vmem:[#allocation10 + $0xa0] sm:$0xff]
        %v9966 = vld [vmem:[#allocation10 + $0xa8] sm:$0xff]
        %v9967 = vld [vmem:[#allocation10 + $0xb0] sm:$0xff]
        %v9968 = vld [vmem:[#allocation10 + $0xb8] sm:$0xff]
        %v9969 = vld [vmem:[#allocation10 + $0xc0] sm:$0xff]
        %v9970 = vld [vmem:[#allocation10 + $0xc8] sm:$0xff]
        %v9971 = vld [vmem:[#allocation10 + $0xd0] sm:$0xff]
        %v9972 = vld [vmem:[#allocation10 + $0xd8] sm:$0xff]
        %v9973 = vld [vmem:[#allocation10 + $0xe0] sm:$0xff]
        %v9974 = vld [vmem:[#allocation10 + $0xe8] sm:$0xff]
        %v9975 = vld [vmem:[#allocation10 + $0xf0] sm:$0xff]
        %v9976 = vld [vmem:[#allocation10 + $0xf8] sm:$0xff]
        %v9977 = vld [vmem:[#allocation10 + $0x100] sm:$0xff]
        %v9978 = vld [vmem:[#allocation10 + $0x108] sm:$0xff]
        %v9979 = vld [vmem:[#allocation10 + $0x110] sm:$0xff]
        %v9980 = vld [vmem:[#allocation10 + $0x118] sm:$0xff]
        %v9981 = vld [vmem:[#allocation10 + $0x120] sm:$0xff]
        %v9982 = vld [vmem:[#allocation10 + $0x128] sm:$0xff]
        %v9983 = vld [vmem:[#allocation10 + $0x130] sm:$0xff]
        %v9984 = vld [vmem:[#allocation10 + $0x138] sm:$0xff]
        %v9985 = vld [vmem:[#allocation10 + $0x140] sm:$0xff]
        %v9986 = vld [vmem:[#allocation10 + $0x148] sm:$0xff]
        %v9987 = vld [vmem:[#allocation10 + $0x150] sm:$0xff]
        %v9988 = vld [vmem:[#allocation10 + $0x158] sm:$0xff]
        %v9989 = vld [vmem:[#allocation10 + $0x160] sm:$0xff]
        %v9990 = vld [vmem:[#allocation10 + $0x168] sm:$0xff]
        %v9991 = vld [vmem:[#allocation10 + $0x170] sm:$0xff]
        %v9992 = vld [vmem:[#allocation10 + $0x178] sm:$0xff]
        %v9993 = vld [vmem:[#allocation10 + $0x180] sm:$0xff]
        %v9994 = vld [vmem:[#allocation10 + $0x188] sm:$0xff]
        %v9995 = vld [vmem:[#allocation10 + $0x190] sm:$0xff]
        %v9996 = vld [vmem:[#allocation10 + $0x198] sm:$0xff]
        %v9997 = vld [vmem:[#allocation10 + $0x1a0] sm:$0xff]
        %v9998 = vld [vmem:[#allocation10 + $0x1a8] sm:$0xff]
        %v9999 = vld [vmem:[#allocation10 + $0x1b0] sm:$0xff]
        %v10000 = vld [vmem:[#allocation10 + $0x1b8] sm:$0xff]
        %v10001 = vld [vmem:[#allocation10 + $0x1c0] sm:$0xff]
        %v10002 = vld [vmem:[#allocation10 + $0x1c8] sm:$0xff]
        %v10003 = vld [vmem:[#allocation10 + $0x1d0] sm:$0xff]
        %v10004 = vld [vmem:[#allocation10 + $0x1d8] sm:$0xff]
        %v10005 = vld [vmem:[#allocation10 + $0x1e0] sm:$0xff]
        %v10006 = vld [vmem:[#allocation10 + $0x1e8] sm:$0xff]
        %v10007 = vld [vmem:[#allocation10 + $0x1f0] sm:$0xff]
        %v10008 = vld [vmem:[#allocation10 + $0x1f8] sm:$0xff]
        %v10009 = vld [vmem:[#allocation10 + $0x200] sm:$0xff]
        %v10010 = vld [vmem:[#allocation10 + $0x208] sm:$0xff]
        %v10011 = vld [vmem:[#allocation10 + $0x210] sm:$0xff]
        %v10012 = vld [vmem:[#allocation10 + $0x218] sm:$0xff]
        %v10013 = vld [vmem:[#allocation10 + $0x220] sm:$0xff]
        %v10014 = vld [vmem:[#allocation10 + $0x228] sm:$0xff]
        %v10015 = vld [vmem:[#allocation10 + $0x230] sm:$0xff]
        %v10016 = vld [vmem:[#allocation10 + $0x238] sm:$0xff]
        %v10017 = vld [vmem:[#allocation10 + $0x240] sm:$0xff]
        %v10018 = vld [vmem:[#allocation10 + $0x248] sm:$0xff]
        %v10019 = vld [vmem:[#allocation10 + $0x250] sm:$0xff]
        %v10020 = vld [vmem:[#allocation10 + $0x258] sm:$0xff]
        %v10021 = vld [vmem:[#allocation10 + $0x260] sm:$0xff]
        %v10022 = vld [vmem:[#allocation10 + $0x268] sm:$0xff]
        %v10023 = vld [vmem:[#allocation10 + $0x270] sm:$0xff]
        %v10024 = vld [vmem:[#allocation10 + $0x278] sm:$0xff]
        %v10025 = vld [vmem:[#allocation10 + $0x280] sm:$0xff]
        %v10026 = vld [vmem:[#allocation10 + $0x288] sm:$0xff]
        %v10027 = vld [vmem:[#allocation10 + $0x290] sm:$0xff]
        %v10028 = vld [vmem:[#allocation10 + $0x298] sm:$0xff]
        %v10029 = vld [vmem:[#allocation10 + $0x2a0] sm:$0xff]
        %v10030 = vld [vmem:[#allocation10 + $0x2a8] sm:$0xff]
        %v10031 = vld [vmem:[#allocation10 + $0x2b0] sm:$0xff]
        %v10032 = vld [vmem:[#allocation10 + $0x2b8] sm:$0xff]
        %v10033 = vld [vmem:[#allocation10 + $0x2c0] sm:$0xff]
        %v10034 = vld [vmem:[#allocation10 + $0x2c8] sm:$0xff]
        %v10035 = vld [vmem:[#allocation10 + $0x2d0] sm:$0xff]
        %v10036 = vld [vmem:[#allocation10 + $0x2d8] sm:$0xff]
        %v10037 = vld [vmem:[#allocation10 + $0x2e0] sm:$0xff]
        %v10038 = vld [vmem:[#allocation10 + $0x2e8] sm:$0xff]
        %v10039 = vld [vmem:[#allocation10 + $0x2f0] sm:$0xff]
        %v10040 = vld [vmem:[#allocation10 + $0x2f8] sm:$0xff]
        %v10041 = vld [vmem:[#allocation10 + $0x300] sm:$0xff]
        %v10042 = vld [vmem:[#allocation10 + $0x308] sm:$0xff]
        %v10043 = vld [vmem:[#allocation10 + $0x310] sm:$0xff]
        %v10044 = vld [vmem:[#allocation10 + $0x318] sm:$0xff]
        %v10045 = vld [vmem:[#allocation10 + $0x320] sm:$0xff]
        %v10046 = vld [vmem:[#allocation10 + $0x328] sm:$0xff]
        %v10047 = vld [vmem:[#allocation10 + $0x330] sm:$0xff]
        %v10048 = vld [vmem:[#allocation10 + $0x338] sm:$0xff]
        %v10049 = vld [vmem:[#allocation10 + $0x340] sm:$0xff]
        %v10050 = vld [vmem:[#allocation10 + $0x348] sm:$0xff]
        %v10051 = vld [vmem:[#allocation10 + $0x350] sm:$0xff]
        %v10052 = vld [vmem:[#allocation10 + $0x358] sm:$0xff]
        %v10053 = vld [vmem:[#allocation10 + $0x360] sm:$0xff]
        %v10054 = vld [vmem:[#allocation10 + $0x368] sm:$0xff]
        %v10055 = vld [vmem:[#allocation10 + $0x370] sm:$0xff]
        %v10056 = vld [vmem:[#allocation10 + $0x378] sm:$0xff]
        %v10057 = vld [vmem:[#allocation10 + $0x380] sm:$0xff]
        %v10058 = vld [vmem:[#allocation10 + $0x388] sm:$0xff]
        %v10059 = vld [vmem:[#allocation10 + $0x390] sm:$0xff]
        %v10060 = vld [vmem:[#allocation10 + $0x398] sm:$0xff]
        %v10061 = vld [vmem:[#allocation10 + $0x3a0] sm:$0xff]
        %v10062 = vld [vmem:[#allocation10 + $0x3a8] sm:$0xff]
        %v10063 = vld [vmem:[#allocation10 + $0x3b0] sm:$0xff]
        %v10064 = vld [vmem:[#allocation10 + $0x3b8] sm:$0xff]
        %v10065 = vld [vmem:[#allocation10 + $0x3c0] sm:$0xff]
        %v10066 = vld [vmem:[#allocation10 + $0x3c8] sm:$0xff]
        %v10067 = vld [vmem:[#allocation10 + $0x3d0] sm:$0xff]
        %v10068 = vld [vmem:[#allocation10 + $0x3d8] sm:$0xff]
        %v10069 = vld [vmem:[#allocation10 + $0x3e0] sm:$0xff]
        %v10070 = vld [vmem:[#allocation10 + $0x3e8] sm:$0xff]
        %v10071 = vld [vmem:[#allocation10 + $0x3f0] sm:$0xff]
        %v10072 = vld [vmem:[#allocation10 + $0x3f8] sm:$0xff]
        %v10073 = vld [vmem:[#allocation10 + $0x400] sm:$0xff]
        %v10074 = vld [vmem:[#allocation10 + $0x408] sm:$0xff]
        %v10075 = vld [vmem:[#allocation10 + $0x410] sm:$0xff]
        %v10076 = vld [vmem:[#allocation10 + $0x418] sm:$0xff]
        %v10077 = vld [vmem:[#allocation10 + $0x420] sm:$0xff]
        %v10078 = vld [vmem:[#allocation10 + $0x428] sm:$0xff]
        %v10079 = vld [vmem:[#allocation10 + $0x430] sm:$0xff]
        %v10080 = vld [vmem:[#allocation10 + $0x438] sm:$0xff]
        %v10081 = vld [vmem:[#allocation10 + $0x440] sm:$0xff]
        %v10082 = vld [vmem:[#allocation10 + $0x448] sm:$0xff]
        %v10083 = vld [vmem:[#allocation10 + $0x450] sm:$0xff]
        %v10084 = vld [vmem:[#allocation10 + $0x458] sm:$0xff]
        %v10085 = vld [vmem:[#allocation10 + $0x460] sm:$0xff]
        %v10086 = vld [vmem:[#allocation10 + $0x468] sm:$0xff]
        %v10087 = vld [vmem:[#allocation10 + $0x470] sm:$0xff]
        %v10088 = vld [vmem:[#allocation10 + $0x478] sm:$0xff]
        %v10089 = vld [vmem:[#allocation10 + $0x480] sm:$0xff]
        %v10090 = vld [vmem:[#allocation10 + $0x488] sm:$0xff]
        %v10091 = vld [vmem:[#allocation10 + $0x490] sm:$0xff]
        %v10092 = vld [vmem:[#allocation10 + $0x498] sm:$0xff]
        %v10093 = vld [vmem:[#allocation10 + $0x4a0] sm:$0xff]
        %v10094 = vld [vmem:[#allocation10 + $0x4a8] sm:$0xff]
        %v10095 = vld [vmem:[#allocation10 + $0x4b0] sm:$0xff]
        %v10096 = vld [vmem:[#allocation10 + $0x4b8] sm:$0xff]
        %v10097 = vld [vmem:[#allocation10 + $0x4c0] sm:$0xff]
        %v10098 = vld [vmem:[#allocation10 + $0x4c8] sm:$0xff]
        %v10099 = vld [vmem:[#allocation10 + $0x4d0] sm:$0xff]
        %v10100 = vld [vmem:[#allocation10 + $0x4d8] sm:$0xff]
        %v10101 = vld [vmem:[#allocation10 + $0x4e0] sm:$0xff]
        %v10102 = vld [vmem:[#allocation10 + $0x4e8] sm:$0xff]
        %v10103 = vld [vmem:[#allocation10 + $0x4f0] sm:$0xff]
        %v10104 = vld [vmem:[#allocation10 + $0x4f8] sm:$0xff]
        %v10105 = vld [vmem:[#allocation10 + $0x500] sm:$0xff]
        %v10106 = vld [vmem:[#allocation10 + $0x508] sm:$0xff]
        %v10107 = vld [vmem:[#allocation10 + $0x510] sm:$0xff]
        %v10108 = vld [vmem:[#allocation10 + $0x518] sm:$0xff]
        %v10109 = vld [vmem:[#allocation10 + $0x520] sm:$0xff]
        %v10110 = vld [vmem:[#allocation10 + $0x528] sm:$0xff]
        %v10111 = vld [vmem:[#allocation10 + $0x530] sm:$0xff]
        %v10112 = vld [vmem:[#allocation10 + $0x538] sm:$0xff]
        %v10113 = vld [vmem:[#allocation10 + $0x540] sm:$0xff]
        %v10114 = vld [vmem:[#allocation10 + $0x548] sm:$0xff]
        %v10115 = vld [vmem:[#allocation10 + $0x550] sm:$0xff]
        %v10116 = vld [vmem:[#allocation10 + $0x558] sm:$0xff]
        %v10117 = vld [vmem:[#allocation10 + $0x560] sm:$0xff]
        %v10118 = vld [vmem:[#allocation10 + $0x568] sm:$0xff]
        %v10119 = vld [vmem:[#allocation10 + $0x570] sm:$0xff]
        %v10120 = vld [vmem:[#allocation10 + $0x578] sm:$0xff]
        %v10121 = vld [vmem:[#allocation10 + $0x580] sm:$0xff]
        %v10122 = vld [vmem:[#allocation10 + $0x588] sm:$0xff]
        %v10123 = vld [vmem:[#allocation10 + $0x590] sm:$0xff]
        %v10124 = vld [vmem:[#allocation10 + $0x598] sm:$0xff]
        %v10125 = vld [vmem:[#allocation10 + $0x5a0] sm:$0xff]
        %v10126 = vld [vmem:[#allocation10 + $0x5a8] sm:$0xff]
        %v10127 = vld [vmem:[#allocation10 + $0x5b0] sm:$0xff]
        %v10128 = vld [vmem:[#allocation10 + $0x5b8] sm:$0xff]
        %v10129 = vld [vmem:[#allocation10 + $0x5c0] sm:$0xff]
        %v10130 = vld [vmem:[#allocation10 + $0x5c8] sm:$0xff]
        %v10131 = vld [vmem:[#allocation10 + $0x5d0] sm:$0xff]
        %v10132 = vld [vmem:[#allocation10 + $0x5d8] sm:$0xff]
        %v10133 = vld [vmem:[#allocation10 + $0x5e0] sm:$0xff]
        %v10134 = vld [vmem:[#allocation10 + $0x5e8] sm:$0xff]
        %v10135 = vld [vmem:[#allocation10 + $0x5f0] sm:$0xff]
        %v10136 = vld [vmem:[#allocation10 + $0x5f8] sm:$0xff]
        %v10137 = vld [vmem:[#allocation10 + $0x600] sm:$0xff]
        %v10138 = vld [vmem:[#allocation10 + $0x608] sm:$0xff]
        %v10139 = vld [vmem:[#allocation10 + $0x610] sm:$0xff]
        %v10140 = vld [vmem:[#allocation10 + $0x618] sm:$0xff]
        %v10141 = vld [vmem:[#allocation10 + $0x620] sm:$0xff]
        %v10142 = vld [vmem:[#allocation10 + $0x628] sm:$0xff]
        %v10143 = vld [vmem:[#allocation10 + $0x630] sm:$0xff]
        %v10144 = vld [vmem:[#allocation10 + $0x638] sm:$0xff]
        %v10145 = vld [vmem:[#allocation10 + $0x640] sm:$0xff]
        %v10146 = vld [vmem:[#allocation10 + $0x648] sm:$0xff]
        %v10147 = vld [vmem:[#allocation10 + $0x650] sm:$0xff]
        %v10148 = vld [vmem:[#allocation10 + $0x658] sm:$0xff]
        %v10149 = vld [vmem:[#allocation10 + $0x660] sm:$0xff]
        %v10150 = vld [vmem:[#allocation10 + $0x668] sm:$0xff]
        %v10151 = vld [vmem:[#allocation10 + $0x670] sm:$0xff]
        %v10152 = vld [vmem:[#allocation10 + $0x678] sm:$0xff]
        %v10153 = vld [vmem:[#allocation10 + $0x680] sm:$0xff]
        %v10154 = vld [vmem:[#allocation10 + $0x688] sm:$0xff]
        %v10155 = vld [vmem:[#allocation10 + $0x690] sm:$0xff]
        %v10156 = vld [vmem:[#allocation10 + $0x698] sm:$0xff]
        %v10157 = vld [vmem:[#allocation10 + $0x6a0] sm:$0xff]
        %v10158 = vld [vmem:[#allocation10 + $0x6a8] sm:$0xff]
        %v10159 = vld [vmem:[#allocation10 + $0x6b0] sm:$0xff]
        %v10160 = vld [vmem:[#allocation10 + $0x6b8] sm:$0xff]
        %v10161 = vld [vmem:[#allocation10 + $0x6c0] sm:$0xff]
        %v10162 = vld [vmem:[#allocation10 + $0x6c8] sm:$0xff]
        %v10163 = vld [vmem:[#allocation10 + $0x6d0] sm:$0xff]
        %v10164 = vld [vmem:[#allocation10 + $0x6d8] sm:$0xff]
        %v10165 = vld [vmem:[#allocation10 + $0x6e0] sm:$0xff]
        %v10166 = vld [vmem:[#allocation10 + $0x6e8] sm:$0xff]
        %v10167 = vld [vmem:[#allocation10 + $0x6f0] sm:$0xff]
        %v10168 = vld [vmem:[#allocation10 + $0x6f8] sm:$0xff]
        %v10169 = vld [vmem:[#allocation10 + $0x700] sm:$0xff]
        %v10170 = vld [vmem:[#allocation10 + $0x708] sm:$0xff]
        %v10171 = vld [vmem:[#allocation10 + $0x710] sm:$0xff]
        %v10172 = vld [vmem:[#allocation10 + $0x718] sm:$0xff]
        %v10173 = vld [vmem:[#allocation10 + $0x720] sm:$0xff]
        %v10174 = vld [vmem:[#allocation10 + $0x728] sm:$0xff]
        %v10175 = vld [vmem:[#allocation10 + $0x730] sm:$0xff]
        %v10176 = vld [vmem:[#allocation10 + $0x738] sm:$0xff]
        %v10177 = vld [vmem:[#allocation10 + $0x740] sm:$0xff]
        %v10178 = vld [vmem:[#allocation10 + $0x748] sm:$0xff]
        %v10179 = vld [vmem:[#allocation10 + $0x750] sm:$0xff]
        %v10180 = vld [vmem:[#allocation10 + $0x758] sm:$0xff]
        %v10181 = vld [vmem:[#allocation10 + $0x760] sm:$0xff]
        %v10182 = vld [vmem:[#allocation10 + $0x768] sm:$0xff]
        %v10183 = vld [vmem:[#allocation10 + $0x770] sm:$0xff]
        %v10184 = vld [vmem:[#allocation10 + $0x778] sm:$0xff]
        %v10185 = vld [vmem:[#allocation10 + $0x780] sm:$0xff]
        %v10186 = vld [vmem:[#allocation10 + $0x788] sm:$0xff]
        %v10187 = vld [vmem:[#allocation10 + $0x790] sm:$0xff]
        %v10188 = vld [vmem:[#allocation10 + $0x798] sm:$0xff]
        %v10189 = vld [vmem:[#allocation10 + $0x7a0] sm:$0xff]
        %v10190 = vld [vmem:[#allocation10 + $0x7a8] sm:$0xff]
        %v10191 = vld [vmem:[#allocation10 + $0x7b0] sm:$0xff]
        %v10192 = vld [vmem:[#allocation10 + $0x7b8] sm:$0xff]
        %v10193 = vld [vmem:[#allocation10 + $0x7c0] sm:$0xff]
        %v10194 = vld [vmem:[#allocation10 + $0x7c8] sm:$0xff]
        %v10195 = vld [vmem:[#allocation10 + $0x7d0] sm:$0xff]
        %v10196 = vld [vmem:[#allocation10 + $0x7d8] sm:$0xff]
        %v10197 = vld [vmem:[#allocation10 + $0x7e0] sm:$0xff]
        %v10198 = vld [vmem:[#allocation10 + $0x7e8] sm:$0xff]
        %v10199 = vld [vmem:[#allocation10 + $0x7f0] sm:$0xff]
        %v10200 = vld [vmem:[#allocation10 + $0x7f8] sm:$0xff]
        %v10201 = vld [vmem:[#allocation11] sm:$0xf]
        %v10458 = vunpack.c.l.b16 %v9945
        %v10459 = vunpack.c.h.b16 %v9945
        %v10460 = vunpack.c.l.b16 %v9946
        %v10461 = vunpack.c.h.b16 %v9946
        %v10462 = vunpack.c.l.b16 %v9947
        %v10463 = vunpack.c.h.b16 %v9947
        %v10464 = vunpack.c.l.b16 %v9948
        %v10465 = vunpack.c.h.b16 %v9948
        %v10466 = vunpack.c.l.b16 %v9949
        %v10467 = vunpack.c.h.b16 %v9949
        %v10468 = vunpack.c.l.b16 %v9950
        %v10469 = vunpack.c.h.b16 %v9950
        %v10470 = vunpack.c.l.b16 %v9951
        %v10471 = vunpack.c.h.b16 %v9951
        %v10472 = vunpack.c.l.b16 %v9952
        %v10473 = vunpack.c.h.b16 %v9952
        %v10474 = vunpack.c.l.b16 %v9953
        %v10475 = vunpack.c.h.b16 %v9953
        %v10476 = vunpack.c.l.b16 %v9954
        %v10477 = vunpack.c.h.b16 %v9954
        %v10478 = vunpack.c.l.b16 %v9955
        %v10479 = vunpack.c.h.b16 %v9955
        %v10480 = vunpack.c.l.b16 %v9956
        %v10481 = vunpack.c.h.b16 %v9956
        %v10482 = vunpack.c.l.b16 %v9957
        %v10483 = vunpack.c.h.b16 %v9957
        %v10484 = vunpack.c.l.b16 %v9958
        %v10485 = vunpack.c.h.b16 %v9958
        %v10486 = vunpack.c.l.b16 %v9959
        %v10487 = vunpack.c.h.b16 %v9959
        %v10488 = vunpack.c.l.b16 %v9960
        %v10489 = vunpack.c.h.b16 %v9960
        %v10490 = vunpack.c.l.b16 %v9961
        %v10491 = vunpack.c.h.b16 %v9961
        %v10492 = vunpack.c.l.b16 %v9962
        %v10493 = vunpack.c.h.b16 %v9962
        %v10494 = vunpack.c.l.b16 %v9963
        %v10495 = vunpack.c.h.b16 %v9963
        %v10496 = vunpack.c.l.b16 %v9964
        %v10497 = vunpack.c.h.b16 %v9964
        %v10498 = vunpack.c.l.b16 %v9965
        %v10499 = vunpack.c.h.b16 %v9965
        %v10500 = vunpack.c.l.b16 %v9966
        %v10501 = vunpack.c.h.b16 %v9966
        %v10502 = vunpack.c.l.b16 %v9967
        %v10503 = vunpack.c.h.b16 %v9967
        %v10504 = vunpack.c.l.b16 %v9968
        %v10505 = vunpack.c.h.b16 %v9968
        %v10506 = vunpack.c.l.b16 %v9969
        %v10507 = vunpack.c.h.b16 %v9969
        %v10508 = vunpack.c.l.b16 %v9970
        %v10509 = vunpack.c.h.b16 %v9970
        %v10510 = vunpack.c.l.b16 %v9971
        %v10511 = vunpack.c.h.b16 %v9971
        %v10512 = vunpack.c.l.b16 %v9972
        %v10513 = vunpack.c.h.b16 %v9972
        %v10514 = vunpack.c.l.b16 %v9973
        %v10515 = vunpack.c.h.b16 %v9973
        %v10516 = vunpack.c.l.b16 %v9974
        %v10517 = vunpack.c.h.b16 %v9974
        %v10518 = vunpack.c.l.b16 %v9975
        %v10519 = vunpack.c.h.b16 %v9975
        %v10520 = vunpack.c.l.b16 %v9976
        %v10521 = vunpack.c.h.b16 %v9976
        %v10522 = vunpack.c.l.b16 %v9977
        %v10523 = vunpack.c.h.b16 %v9977
        %v10524 = vunpack.c.l.b16 %v9978
        %v10525 = vunpack.c.h.b16 %v9978
        %v10526 = vunpack.c.l.b16 %v9979
        %v10527 = vunpack.c.h.b16 %v9979
        %v10528 = vunpack.c.l.b16 %v9980
        %v10529 = vunpack.c.h.b16 %v9980
        %v10530 = vunpack.c.l.b16 %v9981
        %v10531 = vunpack.c.h.b16 %v9981
        %v10532 = vunpack.c.l.b16 %v9982
        %v10533 = vunpack.c.h.b16 %v9982
        %v10534 = vunpack.c.l.b16 %v9983
        %v10535 = vunpack.c.h.b16 %v9983
        %v10536 = vunpack.c.l.b16 %v9984
        %v10537 = vunpack.c.h.b16 %v9984
        %v10538 = vunpack.c.l.b16 %v9985
        %v10539 = vunpack.c.h.b16 %v9985
        %v10540 = vunpack.c.l.b16 %v9986
        %v10541 = vunpack.c.h.b16 %v9986
        %v10542 = vunpack.c.l.b16 %v9987
        %v10543 = vunpack.c.h.b16 %v9987
        %v10544 = vunpack.c.l.b16 %v9988
        %v10545 = vunpack.c.h.b16 %v9988
        %v10546 = vunpack.c.l.b16 %v9989
        %v10547 = vunpack.c.h.b16 %v9989
        %v10548 = vunpack.c.l.b16 %v9990
        %v10549 = vunpack.c.h.b16 %v9990
        %v10550 = vunpack.c.l.b16 %v9991
        %v10551 = vunpack.c.h.b16 %v9991
        %v10552 = vunpack.c.l.b16 %v9992
        %v10553 = vunpack.c.h.b16 %v9992
        %v10554 = vunpack.c.l.b16 %v9993
        %v10555 = vunpack.c.h.b16 %v9993
        %v10556 = vunpack.c.l.b16 %v9994
        %v10557 = vunpack.c.h.b16 %v9994
        %v10558 = vunpack.c.l.b16 %v9995
        %v10559 = vunpack.c.h.b16 %v9995
        %v10560 = vunpack.c.l.b16 %v9996
        %v10561 = vunpack.c.h.b16 %v9996
        %v10562 = vunpack.c.l.b16 %v9997
        %v10563 = vunpack.c.h.b16 %v9997
        %v10564 = vunpack.c.l.b16 %v9998
        %v10565 = vunpack.c.h.b16 %v9998
        %v10566 = vunpack.c.l.b16 %v9999
        %v10567 = vunpack.c.h.b16 %v9999
        %v10568 = vunpack.c.l.b16 %v10000
        %v10569 = vunpack.c.h.b16 %v10000
        %v10570 = vunpack.c.l.b16 %v10001
        %v10571 = vunpack.c.h.b16 %v10001
        %v10572 = vunpack.c.l.b16 %v10002
        %v10573 = vunpack.c.h.b16 %v10002
        %v10574 = vunpack.c.l.b16 %v10003
        %v10575 = vunpack.c.h.b16 %v10003
        %v10576 = vunpack.c.l.b16 %v10004
        %v10577 = vunpack.c.h.b16 %v10004
        %v10578 = vunpack.c.l.b16 %v10005
        %v10579 = vunpack.c.h.b16 %v10005
        %v10580 = vunpack.c.l.b16 %v10006
        %v10581 = vunpack.c.h.b16 %v10006
        %v10582 = vunpack.c.l.b16 %v10007
        %v10583 = vunpack.c.h.b16 %v10007
        %v10584 = vunpack.c.l.b16 %v10008
        %v10585 = vunpack.c.h.b16 %v10008
        %v10586 = vunpack.c.l.b16 %v10009
        %v10587 = vunpack.c.h.b16 %v10009
        %v10588 = vunpack.c.l.b16 %v10010
        %v10589 = vunpack.c.h.b16 %v10010
        %v10590 = vunpack.c.l.b16 %v10011
        %v10591 = vunpack.c.h.b16 %v10011
        %v10592 = vunpack.c.l.b16 %v10012
        %v10593 = vunpack.c.h.b16 %v10012
        %v10594 = vunpack.c.l.b16 %v10013
        %v10595 = vunpack.c.h.b16 %v10013
        %v10596 = vunpack.c.l.b16 %v10014
        %v10597 = vunpack.c.h.b16 %v10014
        %v10598 = vunpack.c.l.b16 %v10015
        %v10599 = vunpack.c.h.b16 %v10015
        %v10600 = vunpack.c.l.b16 %v10016
        %v10601 = vunpack.c.h.b16 %v10016
        %v10602 = vunpack.c.l.b16 %v10017
        %v10603 = vunpack.c.h.b16 %v10017
        %v10604 = vunpack.c.l.b16 %v10018
        %v10605 = vunpack.c.h.b16 %v10018
        %v10606 = vunpack.c.l.b16 %v10019
        %v10607 = vunpack.c.h.b16 %v10019
        %v10608 = vunpack.c.l.b16 %v10020
        %v10609 = vunpack.c.h.b16 %v10020
        %v10610 = vunpack.c.l.b16 %v10021
        %v10611 = vunpack.c.h.b16 %v10021
        %v10612 = vunpack.c.l.b16 %v10022
        %v10613 = vunpack.c.h.b16 %v10022
        %v10614 = vunpack.c.l.b16 %v10023
        %v10615 = vunpack.c.h.b16 %v10023
        %v10616 = vunpack.c.l.b16 %v10024
        %v10617 = vunpack.c.h.b16 %v10024
        %v10618 = vunpack.c.l.b16 %v10025
        %v10619 = vunpack.c.h.b16 %v10025
        %v10620 = vunpack.c.l.b16 %v10026
        %v10621 = vunpack.c.h.b16 %v10026
        %v10622 = vunpack.c.l.b16 %v10027
        %v10623 = vunpack.c.h.b16 %v10027
        %v10624 = vunpack.c.l.b16 %v10028
        %v10625 = vunpack.c.h.b16 %v10028
        %v10626 = vunpack.c.l.b16 %v10029
        %v10627 = vunpack.c.h.b16 %v10029
        %v10628 = vunpack.c.l.b16 %v10030
        %v10629 = vunpack.c.h.b16 %v10030
        %v10630 = vunpack.c.l.b16 %v10031
        %v10631 = vunpack.c.h.b16 %v10031
        %v10632 = vunpack.c.l.b16 %v10032
        %v10633 = vunpack.c.h.b16 %v10032
        %v10634 = vunpack.c.l.b16 %v10033
        %v10635 = vunpack.c.h.b16 %v10033
        %v10636 = vunpack.c.l.b16 %v10034
        %v10637 = vunpack.c.h.b16 %v10034
        %v10638 = vunpack.c.l.b16 %v10035
        %v10639 = vunpack.c.h.b16 %v10035
        %v10640 = vunpack.c.l.b16 %v10036
        %v10641 = vunpack.c.h.b16 %v10036
        %v10642 = vunpack.c.l.b16 %v10037
        %v10643 = vunpack.c.h.b16 %v10037
        %v10644 = vunpack.c.l.b16 %v10038
        %v10645 = vunpack.c.h.b16 %v10038
        %v10646 = vunpack.c.l.b16 %v10039
        %v10647 = vunpack.c.h.b16 %v10039
        %v10648 = vunpack.c.l.b16 %v10040
        %v10649 = vunpack.c.h.b16 %v10040
        %v10650 = vunpack.c.l.b16 %v10041
        %v10651 = vunpack.c.h.b16 %v10041
        %v10652 = vunpack.c.l.b16 %v10042
        %v10653 = vunpack.c.h.b16 %v10042
        %v10654 = vunpack.c.l.b16 %v10043
        %v10655 = vunpack.c.h.b16 %v10043
        %v10656 = vunpack.c.l.b16 %v10044
        %v10657 = vunpack.c.h.b16 %v10044
        %v10658 = vunpack.c.l.b16 %v10045
        %v10659 = vunpack.c.h.b16 %v10045
        %v10660 = vunpack.c.l.b16 %v10046
        %v10661 = vunpack.c.h.b16 %v10046
        %v10662 = vunpack.c.l.b16 %v10047
        %v10663 = vunpack.c.h.b16 %v10047
        %v10664 = vunpack.c.l.b16 %v10048
        %v10665 = vunpack.c.h.b16 %v10048
        %v10666 = vunpack.c.l.b16 %v10049
        %v10667 = vunpack.c.h.b16 %v10049
        %v10668 = vunpack.c.l.b16 %v10050
        %v10669 = vunpack.c.h.b16 %v10050
        %v10670 = vunpack.c.l.b16 %v10051
        %v10671 = vunpack.c.h.b16 %v10051
        %v10672 = vunpack.c.l.b16 %v10052
        %v10673 = vunpack.c.h.b16 %v10052
        %v10674 = vunpack.c.l.b16 %v10053
        %v10675 = vunpack.c.h.b16 %v10053
        %v10676 = vunpack.c.l.b16 %v10054
        %v10677 = vunpack.c.h.b16 %v10054
        %v10678 = vunpack.c.l.b16 %v10055
        %v10679 = vunpack.c.h.b16 %v10055
        %v10680 = vunpack.c.l.b16 %v10056
        %v10681 = vunpack.c.h.b16 %v10056
        %v10682 = vunpack.c.l.b16 %v10057
        %v10683 = vunpack.c.h.b16 %v10057
        %v10684 = vunpack.c.l.b16 %v10058
        %v10685 = vunpack.c.h.b16 %v10058
        %v10686 = vunpack.c.l.b16 %v10059
        %v10687 = vunpack.c.h.b16 %v10059
        %v10688 = vunpack.c.l.b16 %v10060
        %v10689 = vunpack.c.h.b16 %v10060
        %v10690 = vunpack.c.l.b16 %v10061
        %v10691 = vunpack.c.h.b16 %v10061
        %v10692 = vunpack.c.l.b16 %v10062
        %v10693 = vunpack.c.h.b16 %v10062
        %v10694 = vunpack.c.l.b16 %v10063
        %v10695 = vunpack.c.h.b16 %v10063
        %v10696 = vunpack.c.l.b16 %v10064
        %v10697 = vunpack.c.h.b16 %v10064
        %v10698 = vunpack.c.l.b16 %v10065
        %v10699 = vunpack.c.h.b16 %v10065
        %v10700 = vunpack.c.l.b16 %v10066
        %v10701 = vunpack.c.h.b16 %v10066
        %v10702 = vunpack.c.l.b16 %v10067
        %v10703 = vunpack.c.h.b16 %v10067
        %v10704 = vunpack.c.l.b16 %v10068
        %v10705 = vunpack.c.h.b16 %v10068
        %v10706 = vunpack.c.l.b16 %v10069
        %v10707 = vunpack.c.h.b16 %v10069
        %v10708 = vunpack.c.l.b16 %v10070
        %v10709 = vunpack.c.h.b16 %v10070
        %v10710 = vunpack.c.l.b16 %v10071
        %v10711 = vunpack.c.h.b16 %v10071
        %v10712 = vunpack.c.l.b16 %v10072
        %v10713 = vunpack.c.h.b16 %v10072
        %v10714 = vunpack.c.l.b16 %v10073
        %v10715 = vunpack.c.h.b16 %v10073
        %v10716 = vunpack.c.l.b16 %v10074
        %v10717 = vunpack.c.h.b16 %v10074
        %v10718 = vunpack.c.l.b16 %v10075
        %v10719 = vunpack.c.h.b16 %v10075
        %v10720 = vunpack.c.l.b16 %v10076
        %v10721 = vunpack.c.h.b16 %v10076
        %v10722 = vunpack.c.l.b16 %v10077
        %v10723 = vunpack.c.h.b16 %v10077
        %v10724 = vunpack.c.l.b16 %v10078
        %v10725 = vunpack.c.h.b16 %v10078
        %v10726 = vunpack.c.l.b16 %v10079
        %v10727 = vunpack.c.h.b16 %v10079
        %v10728 = vunpack.c.l.b16 %v10080
        %v10729 = vunpack.c.h.b16 %v10080
        %v10730 = vunpack.c.l.b16 %v10081
        %v10731 = vunpack.c.h.b16 %v10081
        %v10732 = vunpack.c.l.b16 %v10082
        %v10733 = vunpack.c.h.b16 %v10082
        %v10734 = vunpack.c.l.b16 %v10083
        %v10735 = vunpack.c.h.b16 %v10083
        %v10736 = vunpack.c.l.b16 %v10084
        %v10737 = vunpack.c.h.b16 %v10084
        %v10738 = vunpack.c.l.b16 %v10085
        %v10739 = vunpack.c.h.b16 %v10085
        %v10740 = vunpack.c.l.b16 %v10086
        %v10741 = vunpack.c.h.b16 %v10086
        %v10742 = vunpack.c.l.b16 %v10087
        %v10743 = vunpack.c.h.b16 %v10087
        %v10744 = vunpack.c.l.b16 %v10088
        %v10745 = vunpack.c.h.b16 %v10088
        %v10746 = vunpack.c.l.b16 %v10089
        %v10747 = vunpack.c.h.b16 %v10089
        %v10748 = vunpack.c.l.b16 %v10090
        %v10749 = vunpack.c.h.b16 %v10090
        %v10750 = vunpack.c.l.b16 %v10091
        %v10751 = vunpack.c.h.b16 %v10091
        %v10752 = vunpack.c.l.b16 %v10092
        %v10753 = vunpack.c.h.b16 %v10092
        %v10754 = vunpack.c.l.b16 %v10093
        %v10755 = vunpack.c.h.b16 %v10093
        %v10756 = vunpack.c.l.b16 %v10094
        %v10757 = vunpack.c.h.b16 %v10094
        %v10758 = vunpack.c.l.b16 %v10095
        %v10759 = vunpack.c.h.b16 %v10095
        %v10760 = vunpack.c.l.b16 %v10096
        %v10761 = vunpack.c.h.b16 %v10096
        %v10762 = vunpack.c.l.b16 %v10097
        %v10763 = vunpack.c.h.b16 %v10097
        %v10764 = vunpack.c.l.b16 %v10098
        %v10765 = vunpack.c.h.b16 %v10098
        %v10766 = vunpack.c.l.b16 %v10099
        %v10767 = vunpack.c.h.b16 %v10099
        %v10768 = vunpack.c.l.b16 %v10100
        %v10769 = vunpack.c.h.b16 %v10100
        %v10770 = vunpack.c.l.b16 %v10101
        %v10771 = vunpack.c.h.b16 %v10101
        %v10772 = vunpack.c.l.b16 %v10102
        %v10773 = vunpack.c.h.b16 %v10102
        %v10774 = vunpack.c.l.b16 %v10103
        %v10775 = vunpack.c.h.b16 %v10103
        %v10776 = vunpack.c.l.b16 %v10104
        %v10777 = vunpack.c.h.b16 %v10104
        %v10778 = vunpack.c.l.b16 %v10105
        %v10779 = vunpack.c.h.b16 %v10105
        %v10780 = vunpack.c.l.b16 %v10106
        %v10781 = vunpack.c.h.b16 %v10106
        %v10782 = vunpack.c.l.b16 %v10107
        %v10783 = vunpack.c.h.b16 %v10107
        %v10784 = vunpack.c.l.b16 %v10108
        %v10785 = vunpack.c.h.b16 %v10108
        %v10786 = vunpack.c.l.b16 %v10109
        %v10787 = vunpack.c.h.b16 %v10109
        %v10788 = vunpack.c.l.b16 %v10110
        %v10789 = vunpack.c.h.b16 %v10110
        %v10790 = vunpack.c.l.b16 %v10111
        %v10791 = vunpack.c.h.b16 %v10111
        %v10792 = vunpack.c.l.b16 %v10112
        %v10793 = vunpack.c.h.b16 %v10112
        %v10794 = vunpack.c.l.b16 %v10113
        %v10795 = vunpack.c.h.b16 %v10113
        %v10796 = vunpack.c.l.b16 %v10114
        %v10797 = vunpack.c.h.b16 %v10114
        %v10798 = vunpack.c.l.b16 %v10115
        %v10799 = vunpack.c.h.b16 %v10115
        %v10800 = vunpack.c.l.b16 %v10116
        %v10801 = vunpack.c.h.b16 %v10116
        %v10802 = vunpack.c.l.b16 %v10117
        %v10803 = vunpack.c.h.b16 %v10117
        %v10804 = vunpack.c.l.b16 %v10118
        %v10805 = vunpack.c.h.b16 %v10118
        %v10806 = vunpack.c.l.b16 %v10119
        %v10807 = vunpack.c.h.b16 %v10119
        %v10808 = vunpack.c.l.b16 %v10120
        %v10809 = vunpack.c.h.b16 %v10120
        %v10810 = vunpack.c.l.b16 %v10121
        %v10811 = vunpack.c.h.b16 %v10121
        %v10812 = vunpack.c.l.b16 %v10122
        %v10813 = vunpack.c.h.b16 %v10122
        %v10814 = vunpack.c.l.b16 %v10123
        %v10815 = vunpack.c.h.b16 %v10123
        %v10816 = vunpack.c.l.b16 %v10124
        %v10817 = vunpack.c.h.b16 %v10124
        %v10818 = vunpack.c.l.b16 %v10125
        %v10819 = vunpack.c.h.b16 %v10125
        %v10820 = vunpack.c.l.b16 %v10126
        %v10821 = vunpack.c.h.b16 %v10126
        %v10822 = vunpack.c.l.b16 %v10127
        %v10823 = vunpack.c.h.b16 %v10127
        %v10824 = vunpack.c.l.b16 %v10128
        %v10825 = vunpack.c.h.b16 %v10128
        %v10826 = vunpack.c.l.b16 %v10129
        %v10827 = vunpack.c.h.b16 %v10129
        %v10828 = vunpack.c.l.b16 %v10130
        %v10829 = vunpack.c.h.b16 %v10130
        %v10830 = vunpack.c.l.b16 %v10131
        %v10831 = vunpack.c.h.b16 %v10131
        %v10832 = vunpack.c.l.b16 %v10132
        %v10833 = vunpack.c.h.b16 %v10132
        %v10834 = vunpack.c.l.b16 %v10133
        %v10835 = vunpack.c.h.b16 %v10133
        %v10836 = vunpack.c.l.b16 %v10134
        %v10837 = vunpack.c.h.b16 %v10134
        %v10838 = vunpack.c.l.b16 %v10135
        %v10839 = vunpack.c.h.b16 %v10135
        %v10840 = vunpack.c.l.b16 %v10136
        %v10841 = vunpack.c.h.b16 %v10136
        %v10842 = vunpack.c.l.b16 %v10137
        %v10843 = vunpack.c.h.b16 %v10137
        %v10844 = vunpack.c.l.b16 %v10138
        %v10845 = vunpack.c.h.b16 %v10138
        %v10846 = vunpack.c.l.b16 %v10139
        %v10847 = vunpack.c.h.b16 %v10139
        %v10848 = vunpack.c.l.b16 %v10140
        %v10849 = vunpack.c.h.b16 %v10140
        %v10850 = vunpack.c.l.b16 %v10141
        %v10851 = vunpack.c.h.b16 %v10141
        %v10852 = vunpack.c.l.b16 %v10142
        %v10853 = vunpack.c.h.b16 %v10142
        %v10854 = vunpack.c.l.b16 %v10143
        %v10855 = vunpack.c.h.b16 %v10143
        %v10856 = vunpack.c.l.b16 %v10144
        %v10857 = vunpack.c.h.b16 %v10144
        %v10858 = vunpack.c.l.b16 %v10145
        %v10859 = vunpack.c.h.b16 %v10145
        %v10860 = vunpack.c.l.b16 %v10146
        %v10861 = vunpack.c.h.b16 %v10146
        %v10862 = vunpack.c.l.b16 %v10147
        %v10863 = vunpack.c.h.b16 %v10147
        %v10864 = vunpack.c.l.b16 %v10148
        %v10865 = vunpack.c.h.b16 %v10148
        %v10866 = vunpack.c.l.b16 %v10149
        %v10867 = vunpack.c.h.b16 %v10149
        %v10868 = vunpack.c.l.b16 %v10150
        %v10869 = vunpack.c.h.b16 %v10150
        %v10870 = vunpack.c.l.b16 %v10151
        %v10871 = vunpack.c.h.b16 %v10151
        %v10872 = vunpack.c.l.b16 %v10152
        %v10873 = vunpack.c.h.b16 %v10152
        %v10874 = vunpack.c.l.b16 %v10153
        %v10875 = vunpack.c.h.b16 %v10153
        %v10876 = vunpack.c.l.b16 %v10154
        %v10877 = vunpack.c.h.b16 %v10154
        %v10878 = vunpack.c.l.b16 %v10155
        %v10879 = vunpack.c.h.b16 %v10155
        %v10880 = vunpack.c.l.b16 %v10156
        %v10881 = vunpack.c.h.b16 %v10156
        %v10882 = vunpack.c.l.b16 %v10157
        %v10883 = vunpack.c.h.b16 %v10157
        %v10884 = vunpack.c.l.b16 %v10158
        %v10885 = vunpack.c.h.b16 %v10158
        %v10886 = vunpack.c.l.b16 %v10159
        %v10887 = vunpack.c.h.b16 %v10159
        %v10888 = vunpack.c.l.b16 %v10160
        %v10889 = vunpack.c.h.b16 %v10160
        %v10890 = vunpack.c.l.b16 %v10161
        %v10891 = vunpack.c.h.b16 %v10161
        %v10892 = vunpack.c.l.b16 %v10162
        %v10893 = vunpack.c.h.b16 %v10162
        %v10894 = vunpack.c.l.b16 %v10163
        %v10895 = vunpack.c.h.b16 %v10163
        %v10896 = vunpack.c.l.b16 %v10164
        %v10897 = vunpack.c.h.b16 %v10164
        %v10898 = vunpack.c.l.b16 %v10165
        %v10899 = vunpack.c.h.b16 %v10165
        %v10900 = vunpack.c.l.b16 %v10166
        %v10901 = vunpack.c.h.b16 %v10166
        %v10902 = vunpack.c.l.b16 %v10167
        %v10903 = vunpack.c.h.b16 %v10167
        %v10904 = vunpack.c.l.b16 %v10168
        %v10905 = vunpack.c.h.b16 %v10168
        %v10906 = vunpack.c.l.b16 %v10169
        %v10907 = vunpack.c.h.b16 %v10169
        %v10908 = vunpack.c.l.b16 %v10170
        %v10909 = vunpack.c.h.b16 %v10170
        %v10910 = vunpack.c.l.b16 %v10171
        %v10911 = vunpack.c.h.b16 %v10171
        %v10912 = vunpack.c.l.b16 %v10172
        %v10913 = vunpack.c.h.b16 %v10172
        %v10914 = vunpack.c.l.b16 %v10173
        %v10915 = vunpack.c.h.b16 %v10173
        %v10916 = vunpack.c.l.b16 %v10174
        %v10917 = vunpack.c.h.b16 %v10174
        %v10918 = vunpack.c.l.b16 %v10175
        %v10919 = vunpack.c.h.b16 %v10175
        %v10920 = vunpack.c.l.b16 %v10176
        %v10921 = vunpack.c.h.b16 %v10176
        %v10922 = vunpack.c.l.b16 %v10177
        %v10923 = vunpack.c.h.b16 %v10177
        %v10924 = vunpack.c.l.b16 %v10178
        %v10925 = vunpack.c.h.b16 %v10178
        %v10926 = vunpack.c.l.b16 %v10179
        %v10927 = vunpack.c.h.b16 %v10179
        %v10928 = vunpack.c.l.b16 %v10180
        %v10929 = vunpack.c.h.b16 %v10180
        %v10930 = vunpack.c.l.b16 %v10181
        %v10931 = vunpack.c.h.b16 %v10181
        %v10932 = vunpack.c.l.b16 %v10182
        %v10933 = vunpack.c.h.b16 %v10182
        %v10934 = vunpack.c.l.b16 %v10183
        %v10935 = vunpack.c.h.b16 %v10183
        %v10936 = vunpack.c.l.b16 %v10184
        %v10937 = vunpack.c.h.b16 %v10184
        %v10938 = vunpack.c.l.b16 %v10185
        %v10939 = vunpack.c.h.b16 %v10185
        %v10940 = vunpack.c.l.b16 %v10186
        %v10941 = vunpack.c.h.b16 %v10186
        %v10942 = vunpack.c.l.b16 %v10187
        %v10943 = vunpack.c.h.b16 %v10187
        %v10944 = vunpack.c.l.b16 %v10188
        %v10945 = vunpack.c.h.b16 %v10188
        %v10946 = vunpack.c.l.b16 %v10189
        %v10947 = vunpack.c.h.b16 %v10189
        %v10948 = vunpack.c.l.b16 %v10190
        %v10949 = vunpack.c.h.b16 %v10190
        %v10950 = vunpack.c.l.b16 %v10191
        %v10951 = vunpack.c.h.b16 %v10191
        %v10952 = vunpack.c.l.b16 %v10192
        %v10953 = vunpack.c.h.b16 %v10192
        %v10954 = vunpack.c.l.b16 %v10193
        %v10955 = vunpack.c.h.b16 %v10193
        %v10956 = vunpack.c.l.b16 %v10194
        %v10957 = vunpack.c.h.b16 %v10194
        %v10958 = vunpack.c.l.b16 %v10195
        %v10959 = vunpack.c.h.b16 %v10195
        %v10960 = vunpack.c.l.b16 %v10196
        %v10961 = vunpack.c.h.b16 %v10196
        %v10962 = vunpack.c.l.b16 %v10197
        %v10963 = vunpack.c.h.b16 %v10197
        %v10964 = vunpack.c.l.b16 %v10198
        %v10965 = vunpack.c.h.b16 %v10198
        %v10966 = vunpack.c.l.b16 %v10199
        %v10967 = vunpack.c.h.b16 %v10199
        %v10968 = vunpack.c.l.b16 %v10200
        %v10969 = vunpack.c.h.b16 %v10200
        %v10970 = vpack.c.b16 %v10462, %v10458
        %v10971 = vpack.c.b16 %v10463, %v10459
        %v10972 = vpack.c.b16 %v10464, %v10460
        %v10973 = vpack.c.b16 %v10465, %v10461
        %v10974 = vpack.c.b16 %v10470, %v10466
        %v10975 = vpack.c.b16 %v10471, %v10467
        %v10976 = vpack.c.b16 %v10472, %v10468
        %v10977 = vpack.c.b16 %v10473, %v10469
        %v10978 = vpack.c.b16 %v10478, %v10474
        %v10979 = vpack.c.b16 %v10479, %v10475
        %v10980 = vpack.c.b16 %v10480, %v10476
        %v10981 = vpack.c.b16 %v10481, %v10477
        %v10982 = vpack.c.b16 %v10486, %v10482
        %v10983 = vpack.c.b16 %v10487, %v10483
        %v10984 = vpack.c.b16 %v10488, %v10484
        %v10985 = vpack.c.b16 %v10489, %v10485
        %v10986 = vpack.c.b16 %v10494, %v10490
        %v10987 = vpack.c.b16 %v10495, %v10491
        %v10988 = vpack.c.b16 %v10496, %v10492
        %v10989 = vpack.c.b16 %v10497, %v10493
        %v10990 = vpack.c.b16 %v10502, %v10498
        %v10991 = vpack.c.b16 %v10503, %v10499
        %v10992 = vpack.c.b16 %v10504, %v10500
        %v10993 = vpack.c.b16 %v10505, %v10501
        %v10994 = vpack.c.b16 %v10510, %v10506
        %v10995 = vpack.c.b16 %v10511, %v10507
        %v10996 = vpack.c.b16 %v10512, %v10508
        %v10997 = vpack.c.b16 %v10513, %v10509
        %v10998 = vpack.c.b16 %v10518, %v10514
        %v10999 = vpack.c.b16 %v10519, %v10515
        %v11000 = vpack.c.b16 %v10520, %v10516
        %v11001 = vpack.c.b16 %v10521, %v10517
        %v11002 = vpack.c.b16 %v10526, %v10522
        %v11003 = vpack.c.b16 %v10527, %v10523
        %v11004 = vpack.c.b16 %v10528, %v10524
        %v11005 = vpack.c.b16 %v10529, %v10525
        %v11006 = vpack.c.b16 %v10534, %v10530
        %v11007 = vpack.c.b16 %v10535, %v10531
        %v11008 = vpack.c.b16 %v10536, %v10532
        %v11009 = vpack.c.b16 %v10537, %v10533
        %v11010 = vpack.c.b16 %v10542, %v10538
        %v11011 = vpack.c.b16 %v10543, %v10539
        %v11012 = vpack.c.b16 %v10544, %v10540
        %v11013 = vpack.c.b16 %v10545, %v10541
        %v11014 = vpack.c.b16 %v10550, %v10546
        %v11015 = vpack.c.b16 %v10551, %v10547
        %v11016 = vpack.c.b16 %v10552, %v10548
        %v11017 = vpack.c.b16 %v10553, %v10549
        %v11018 = vpack.c.b16 %v10558, %v10554
        %v11019 = vpack.c.b16 %v10559, %v10555
        %v11020 = vpack.c.b16 %v10560, %v10556
        %v11021 = vpack.c.b16 %v10561, %v10557
        %v11022 = vpack.c.b16 %v10566, %v10562
        %v11023 = vpack.c.b16 %v10567, %v10563
        %v11024 = vpack.c.b16 %v10568, %v10564
        %v11025 = vpack.c.b16 %v10569, %v10565
        %v11026 = vpack.c.b16 %v10574, %v10570
        %v11027 = vpack.c.b16 %v10575, %v10571
        %v11028 = vpack.c.b16 %v10576, %v10572
        %v11029 = vpack.c.b16 %v10577, %v10573
        %v11030 = vpack.c.b16 %v10582, %v10578
        %v11031 = vpack.c.b16 %v10583, %v10579
        %v11032 = vpack.c.b16 %v10584, %v10580
        %v11033 = vpack.c.b16 %v10585, %v10581
        %v11034 = vpack.c.b16 %v10590, %v10586
        %v11035 = vpack.c.b16 %v10591, %v10587
        %v11036 = vpack.c.b16 %v10592, %v10588
        %v11037 = vpack.c.b16 %v10593, %v10589
        %v11038 = vpack.c.b16 %v10598, %v10594
        %v11039 = vpack.c.b16 %v10599, %v10595
        %v11040 = vpack.c.b16 %v10600, %v10596
        %v11041 = vpack.c.b16 %v10601, %v10597
        %v11042 = vpack.c.b16 %v10606, %v10602
        %v11043 = vpack.c.b16 %v10607, %v10603
        %v11044 = vpack.c.b16 %v10608, %v10604
        %v11045 = vpack.c.b16 %v10609, %v10605
        %v11046 = vpack.c.b16 %v10614, %v10610
        %v11047 = vpack.c.b16 %v10615, %v10611
        %v11048 = vpack.c.b16 %v10616, %v10612
        %v11049 = vpack.c.b16 %v10617, %v10613
        %v11050 = vpack.c.b16 %v10622, %v10618
        %v11051 = vpack.c.b16 %v10623, %v10619
        %v11052 = vpack.c.b16 %v10624, %v10620
        %v11053 = vpack.c.b16 %v10625, %v10621
        %v11054 = vpack.c.b16 %v10630, %v10626
        %v11055 = vpack.c.b16 %v10631, %v10627
        %v11056 = vpack.c.b16 %v10632, %v10628
        %v11057 = vpack.c.b16 %v10633, %v10629
        %v11058 = vpack.c.b16 %v10638, %v10634
        %v11059 = vpack.c.b16 %v10639, %v10635
        %v11060 = vpack.c.b16 %v10640, %v10636
        %v11061 = vpack.c.b16 %v10641, %v10637
        %v11062 = vpack.c.b16 %v10646, %v10642
        %v11063 = vpack.c.b16 %v10647, %v10643
        %v11064 = vpack.c.b16 %v10648, %v10644
        %v11065 = vpack.c.b16 %v10649, %v10645
        %v11066 = vpack.c.b16 %v10654, %v10650
        %v11067 = vpack.c.b16 %v10655, %v10651
        %v11068 = vpack.c.b16 %v10656, %v10652
        %v11069 = vpack.c.b16 %v10657, %v10653
        %v11070 = vpack.c.b16 %v10662, %v10658
        %v11071 = vpack.c.b16 %v10663, %v10659
        %v11072 = vpack.c.b16 %v10664, %v10660
        %v11073 = vpack.c.b16 %v10665, %v10661
        %v11074 = vpack.c.b16 %v10670, %v10666
        %v11075 = vpack.c.b16 %v10671, %v10667
        %v11076 = vpack.c.b16 %v10672, %v10668
        %v11077 = vpack.c.b16 %v10673, %v10669
        %v11078 = vpack.c.b16 %v10678, %v10674
        %v11079 = vpack.c.b16 %v10679, %v10675
        %v11080 = vpack.c.b16 %v10680, %v10676
        %v11081 = vpack.c.b16 %v10681, %v10677
        %v11082 = vpack.c.b16 %v10686, %v10682
        %v11083 = vpack.c.b16 %v10687, %v10683
        %v11084 = vpack.c.b16 %v10688, %v10684
        %v11085 = vpack.c.b16 %v10689, %v10685
        %v11086 = vpack.c.b16 %v10694, %v10690
        %v11087 = vpack.c.b16 %v10695, %v10691
        %v11088 = vpack.c.b16 %v10696, %v10692
        %v11089 = vpack.c.b16 %v10697, %v10693
        %v11090 = vpack.c.b16 %v10702, %v10698
        %v11091 = vpack.c.b16 %v10703, %v10699
        %v11092 = vpack.c.b16 %v10704, %v10700
        %v11093 = vpack.c.b16 %v10705, %v10701
        %v11094 = vpack.c.b16 %v10710, %v10706
        %v11095 = vpack.c.b16 %v10711, %v10707
        %v11096 = vpack.c.b16 %v10712, %v10708
        %v11097 = vpack.c.b16 %v10713, %v10709
        %v11098 = vpack.c.b16 %v10718, %v10714
        %v11099 = vpack.c.b16 %v10719, %v10715
        %v11100 = vpack.c.b16 %v10720, %v10716
        %v11101 = vpack.c.b16 %v10721, %v10717
        %v11102 = vpack.c.b16 %v10726, %v10722
        %v11103 = vpack.c.b16 %v10727, %v10723
        %v11104 = vpack.c.b16 %v10728, %v10724
        %v11105 = vpack.c.b16 %v10729, %v10725
        %v11106 = vpack.c.b16 %v10734, %v10730
        %v11107 = vpack.c.b16 %v10735, %v10731
        %v11108 = vpack.c.b16 %v10736, %v10732
        %v11109 = vpack.c.b16 %v10737, %v10733
        %v11110 = vpack.c.b16 %v10742, %v10738
        %v11111 = vpack.c.b16 %v10743, %v10739
        %v11112 = vpack.c.b16 %v10744, %v10740
        %v11113 = vpack.c.b16 %v10745, %v10741
        %v11114 = vpack.c.b16 %v10750, %v10746
        %v11115 = vpack.c.b16 %v10751, %v10747
        %v11116 = vpack.c.b16 %v10752, %v10748
        %v11117 = vpack.c.b16 %v10753, %v10749
        %v11118 = vpack.c.b16 %v10758, %v10754
        %v11119 = vpack.c.b16 %v10759, %v10755
        %v11120 = vpack.c.b16 %v10760, %v10756
        %v11121 = vpack.c.b16 %v10761, %v10757
        %v11122 = vpack.c.b16 %v10766, %v10762
        %v11123 = vpack.c.b16 %v10767, %v10763
        %v11124 = vpack.c.b16 %v10768, %v10764
        %v11125 = vpack.c.b16 %v10769, %v10765
        %v11126 = vpack.c.b16 %v10774, %v10770
        %v11127 = vpack.c.b16 %v10775, %v10771
        %v11128 = vpack.c.b16 %v10776, %v10772
        %v11129 = vpack.c.b16 %v10777, %v10773
        %v11130 = vpack.c.b16 %v10782, %v10778
        %v11131 = vpack.c.b16 %v10783, %v10779
        %v11132 = vpack.c.b16 %v10784, %v10780
        %v11133 = vpack.c.b16 %v10785, %v10781
        %v11134 = vpack.c.b16 %v10790, %v10786
        %v11135 = vpack.c.b16 %v10791, %v10787
        %v11136 = vpack.c.b16 %v10792, %v10788
        %v11137 = vpack.c.b16 %v10793, %v10789
        %v11138 = vpack.c.b16 %v10798, %v10794
        %v11139 = vpack.c.b16 %v10799, %v10795
        %v11140 = vpack.c.b16 %v10800, %v10796
        %v11141 = vpack.c.b16 %v10801, %v10797
        %v11142 = vpack.c.b16 %v10806, %v10802
        %v11143 = vpack.c.b16 %v10807, %v10803
        %v11144 = vpack.c.b16 %v10808, %v10804
        %v11145 = vpack.c.b16 %v10809, %v10805
        %v11146 = vpack.c.b16 %v10814, %v10810
        %v11147 = vpack.c.b16 %v10815, %v10811
        %v11148 = vpack.c.b16 %v10816, %v10812
        %v11149 = vpack.c.b16 %v10817, %v10813
        %v11150 = vpack.c.b16 %v10822, %v10818
        %v11151 = vpack.c.b16 %v10823, %v10819
        %v11152 = vpack.c.b16 %v10824, %v10820
        %v11153 = vpack.c.b16 %v10825, %v10821
        %v11154 = vpack.c.b16 %v10830, %v10826
        %v11155 = vpack.c.b16 %v10831, %v10827
        %v11156 = vpack.c.b16 %v10832, %v10828
        %v11157 = vpack.c.b16 %v10833, %v10829
        %v11158 = vpack.c.b16 %v10838, %v10834
        %v11159 = vpack.c.b16 %v10839, %v10835
        %v11160 = vpack.c.b16 %v10840, %v10836
        %v11161 = vpack.c.b16 %v10841, %v10837
        %v11162 = vpack.c.b16 %v10846, %v10842
        %v11163 = vpack.c.b16 %v10847, %v10843
        %v11164 = vpack.c.b16 %v10848, %v10844
        %v11165 = vpack.c.b16 %v10849, %v10845
        %v11166 = vpack.c.b16 %v10854, %v10850
        %v11167 = vpack.c.b16 %v10855, %v10851
        %v11168 = vpack.c.b16 %v10856, %v10852
        %v11169 = vpack.c.b16 %v10857, %v10853
        %v11170 = vpack.c.b16 %v10862, %v10858
        %v11171 = vpack.c.b16 %v10863, %v10859
        %v11172 = vpack.c.b16 %v10864, %v10860
        %v11173 = vpack.c.b16 %v10865, %v10861
        %v11174 = vpack.c.b16 %v10870, %v10866
        %v11175 = vpack.c.b16 %v10871, %v10867
        %v11176 = vpack.c.b16 %v10872, %v10868
        %v11177 = vpack.c.b16 %v10873, %v10869
        %v11178 = vpack.c.b16 %v10878, %v10874
        %v11179 = vpack.c.b16 %v10879, %v10875
        %v11180 = vpack.c.b16 %v10880, %v10876
        %v11181 = vpack.c.b16 %v10881, %v10877
        %v11182 = vpack.c.b16 %v10886, %v10882
        %v11183 = vpack.c.b16 %v10887, %v10883
        %v11184 = vpack.c.b16 %v10888, %v10884
        %v11185 = vpack.c.b16 %v10889, %v10885
        %v11186 = vpack.c.b16 %v10894, %v10890
        %v11187 = vpack.c.b16 %v10895, %v10891
        %v11188 = vpack.c.b16 %v10896, %v10892
        %v11189 = vpack.c.b16 %v10897, %v10893
        %v11190 = vpack.c.b16 %v10902, %v10898
        %v11191 = vpack.c.b16 %v10903, %v10899
        %v11192 = vpack.c.b16 %v10904, %v10900
        %v11193 = vpack.c.b16 %v10905, %v10901
        %v11194 = vpack.c.b16 %v10910, %v10906
        %v11195 = vpack.c.b16 %v10911, %v10907
        %v11196 = vpack.c.b16 %v10912, %v10908
        %v11197 = vpack.c.b16 %v10913, %v10909
        %v11198 = vpack.c.b16 %v10918, %v10914
        %v11199 = vpack.c.b16 %v10919, %v10915
        %v11200 = vpack.c.b16 %v10920, %v10916
        %v11201 = vpack.c.b16 %v10921, %v10917
        %v11202 = vpack.c.b16 %v10926, %v10922
        %v11203 = vpack.c.b16 %v10927, %v10923
        %v11204 = vpack.c.b16 %v10928, %v10924
        %v11205 = vpack.c.b16 %v10929, %v10925
        %v11206 = vpack.c.b16 %v10934, %v10930
        %v11207 = vpack.c.b16 %v10935, %v10931
        %v11208 = vpack.c.b16 %v10936, %v10932
        %v11209 = vpack.c.b16 %v10937, %v10933
        %v11210 = vpack.c.b16 %v10942, %v10938
        %v11211 = vpack.c.b16 %v10943, %v10939
        %v11212 = vpack.c.b16 %v10944, %v10940
        %v11213 = vpack.c.b16 %v10945, %v10941
        %v11214 = vpack.c.b16 %v10950, %v10946
        %v11215 = vpack.c.b16 %v10951, %v10947
        %v11216 = vpack.c.b16 %v10952, %v10948
        %v11217 = vpack.c.b16 %v10953, %v10949
        %v11218 = vpack.c.b16 %v10958, %v10954
        %v11219 = vpack.c.b16 %v10959, %v10955
        %v11220 = vpack.c.b16 %v10960, %v10956
        %v11221 = vpack.c.b16 %v10961, %v10957
        %v11222 = vpack.c.b16 %v10966, %v10962
        %v11223 = vpack.c.b16 %v10967, %v10963
        %v11224 = vpack.c.b16 %v10968, %v10964
        %v11225 = vpack.c.b16 %v10969, %v10965
        %v11483 = vlaneseq
        %v11484 = vshrl.u32 %v11483, 7
        %v11485 = vsub.s32 0, %v11484
        %v11486 = vrot.slane %v10201, %v11485
        %v11487 = vlaneseq
        %v11488 = vshrl.u32 %v11487, 7
        %v11489 = vsub.s32 1, %v11488
        %v11490 = vrot.slane %v10201, %v11489
        %v11491 = vlaneseq
        %v11492 = vshrl.u32 %v11491, 7
        %v11493 = vsub.s32 2, %v11492
        %v11494 = vrot.slane %v10201, %v11493
        %v11495 = vlaneseq
        %v11496 = vshrl.u32 %v11495, 7
        %v11497 = vsub.s32 3, %v11496
        %v11498 = vrot.slane %v10201, %v11497
        %11503 = vmatprep.subr.bf16.mxu0 %v10971
        %11504 = vmatpush1.bf16.msra.mxu0 %v10970
        %11505 = vmatprep.subr.bf16.mxu0 %v10975
        %11506 = vmatpush1.bf16.msra.mxu0 %v10974
        %11507 = vmatprep.subr.bf16.mxu0 %v10979
        %11508 = vmatpush1.bf16.msra.mxu0 %v10978
        %11509 = vmatprep.subr.bf16.mxu0 %v10983
        %11510 = vmatpush1.bf16.msra.mxu0 %v10982
        %11511 = vmatprep.subr.bf16.mxu0 %v10987
        %11512 = vmatpush1.bf16.msra.mxu0 %v10986
        %11513 = vmatprep.subr.bf16.mxu0 %v10991
        %11514 = vmatpush1.bf16.msra.mxu0 %v10990
        %11515 = vmatprep.subr.bf16.mxu0 %v10995
        %11516 = vmatpush1.bf16.msra.mxu0 %v10994
        %11517 = vmatprep.subr.bf16.mxu0 %v10999
        %11518 = vmatpush1.bf16.msra.mxu0 %v10998
        %11519 = vmatprep.subr.bf16.mxu0 %v11003
        %11520 = vmatpush1.bf16.msra.mxu0 %v11002
        %11521 = vmatprep.subr.bf16.mxu0 %v11007
        %11522 = vmatpush1.bf16.msra.mxu0 %v11006
        %11523 = vmatprep.subr.bf16.mxu0 %v11011
        %11524 = vmatpush1.bf16.msra.mxu0 %v11010
        %11525 = vmatprep.subr.bf16.mxu0 %v11015
        %11526 = vmatpush1.bf16.msra.mxu0 %v11014
        %11527 = vmatprep.subr.bf16.mxu0 %v11019
        %11528 = vmatpush1.bf16.msra.mxu0 %v11018
        %11529 = vmatprep.subr.bf16.mxu0 %v11023
        %11530 = vmatpush1.bf16.msra.mxu0 %v11022
        %11531 = vmatprep.subr.bf16.mxu0 %v11027
        %11532 = vmatpush1.bf16.msra.mxu0 %v11026
        %11533 = vmatprep.subr.bf16.mxu0 %v11031
        %11534 = vmatpush1.bf16.msra.mxu0 %v11030
        %11535 = vmatprep.mubr.bf16.mxu0 %v9938
        %11536 = vmatmul.mubr.bf16.gmra.mrb[0].mxu0 %v9937
        %v11537 = vpop.f32.mrb[0].mxu0
        %v11538 = vadd.f32 %v11486, %v11537
        %v11539 = vpop.f32.mrb[0].mxu0
        %v11540 = vadd.f32 %v11490, %v11539
        %v11541 = vpop.f32.mrb[0].mxu0
        %v11542 = vpop.f32.mrb[0].mxu0
        %11543 = vdwg.mxu0
        %11544 = vmatprep.subr.bf16.mxu0 %v11035
        %11545 = vmatpush1.bf16.msra.mxu0 %v11034
        %11546 = vmatprep.subr.bf16.mxu0 %v11039
        %11547 = vmatpush1.bf16.msra.mxu0 %v11038
        %11548 = vmatprep.subr.bf16.mxu0 %v11043
        %11549 = vmatpush1.bf16.msra.mxu0 %v11042
        %11550 = vmatprep.subr.bf16.mxu0 %v11047
        %11551 = vmatpush1.bf16.msra.mxu0 %v11046
        %11552 = vmatprep.subr.bf16.mxu0 %v11051
        %11553 = vmatpush1.bf16.msra.mxu0 %v11050
        %11554 = vmatprep.subr.bf16.mxu0 %v11055
        %11555 = vmatpush1.bf16.msra.mxu0 %v11054
        %11556 = vmatprep.subr.bf16.mxu0 %v11059
        %11557 = vmatpush1.bf16.msra.mxu0 %v11058
        %11558 = vmatprep.subr.bf16.mxu0 %v11063
        %11559 = vmatpush1.bf16.msra.mxu0 %v11062
        %11560 = vmatprep.subr.bf16.mxu0 %v11067
        %11561 = vmatpush1.bf16.msra.mxu0 %v11066
        %11562 = vmatprep.subr.bf16.mxu0 %v11071
        %11563 = vmatpush1.bf16.msra.mxu0 %v11070
        %11564 = vmatprep.subr.bf16.mxu0 %v11075
        %11565 = vmatpush1.bf16.msra.mxu0 %v11074
        %11566 = vmatprep.subr.bf16.mxu0 %v11079
        %11567 = vmatpush1.bf16.msra.mxu0 %v11078
        %11568 = vmatprep.subr.bf16.mxu0 %v11083
        %11569 = vmatpush1.bf16.msra.mxu0 %v11082
        %11570 = vmatprep.subr.bf16.mxu0 %v11087
        %11571 = vmatpush1.bf16.msra.mxu0 %v11086
        %11572 = vmatprep.subr.bf16.mxu0 %v11091
        %11573 = vmatpush1.bf16.msra.mxu0 %v11090
        %11574 = vmatprep.subr.bf16.mxu0 %v11095
        %11575 = vmatpush1.bf16.msra.mxu0 %v11094
        %11576 = vmatprep.mubr.bf16.mxu0 %v9940
        %11577 = vmatmul.mubr.bf16.gmra.mrb[0].mxu0 %v9939
        %v11578 = vpop.f32.mrb[0].mxu0
        %v11579 = vadd.f32 %v11538, %v11578
        %v11580 = vpop.f32.mrb[0].mxu0
        %v11581 = vadd.f32 %v11540, %v11580
        %v11582 = vpop.f32.mrb[0].mxu0
        %v11583 = vpop.f32.mrb[0].mxu0
        %11584 = vdwg.mxu0
        %11585 = vmatprep.subr.bf16.mxu0 %v11099
        %11586 = vmatpush1.bf16.msra.mxu0 %v11098
        %11587 = vmatprep.subr.bf16.mxu0 %v11103
        %11588 = vmatpush1.bf16.msra.mxu0 %v11102
        %11589 = vmatprep.subr.bf16.mxu0 %v11107
        %11590 = vmatpush1.bf16.msra.mxu0 %v11106
        %11591 = vmatprep.subr.bf16.mxu0 %v11111
        %11592 = vmatpush1.bf16.msra.mxu0 %v11110
        %11593 = vmatprep.subr.bf16.mxu0 %v11115
        %11594 = vmatpush1.bf16.msra.mxu0 %v11114
        %11595 = vmatprep.subr.bf16.mxu0 %v11119
        %11596 = vmatpush1.bf16.msra.mxu0 %v11118
        %11597 = vmatprep.subr.bf16.mxu0 %v11123
        %11598 = vmatpush1.bf16.msra.mxu0 %v11122
        %11599 = vmatprep.subr.bf16.mxu0 %v11127
        %11600 = vmatpush1.bf16.msra.mxu0 %v11126
        %11601 = vmatprep.subr.bf16.mxu0 %v11131
        %11602 = vmatpush1.bf16.msra.mxu0 %v11130
        %11603 = vmatprep.subr.bf16.mxu0 %v11135
        %11604 = vmatpush1.bf16.msra.mxu0 %v11134
        %11605 = vmatprep.subr.bf16.mxu0 %v11139
        %11606 = vmatpush1.bf16.msra.mxu0 %v11138
        %11607 = vmatprep.subr.bf16.mxu0 %v11143
        %11608 = vmatpush1.bf16.msra.mxu0 %v11142
        %11609 = vmatprep.subr.bf16.mxu0 %v11147
        %11610 = vmatpush1.bf16.msra.mxu0 %v11146
        %11611 = vmatprep.subr.bf16.mxu0 %v11151
        %11612 = vmatpush1.bf16.msra.mxu0 %v11150
        %11613 = vmatprep.subr.bf16.mxu0 %v11155
        %11614 = vmatpush1.bf16.msra.mxu0 %v11154
        %11615 = vmatprep.subr.bf16.mxu0 %v11159
        %11616 = vmatpush1.bf16.msra.mxu0 %v11158
        %11617 = vmatprep.mubr.bf16.mxu0 %v9942
        %11618 = vmatmul.mubr.bf16.gmra.mrb[0].mxu0 %v9941
        %v11619 = vpop.f32.mrb[0].mxu0
        %v11620 = vadd.f32 %v11579, %v11619
        %v11621 = vpop.f32.mrb[0].mxu0
        %v11622 = vadd.f32 %v11581, %v11621
        %v11623 = vpop.f32.mrb[0].mxu0
        %v11624 = vpop.f32.mrb[0].mxu0
        %11625 = vdwg.mxu0
        %11626 = vmatprep.subr.bf16.mxu0 %v11163
        %11627 = vmatpush1.bf16.msra.mxu0 %v11162
        %11628 = vmatprep.subr.bf16.mxu0 %v11167
        %11629 = vmatpush1.bf16.msra.mxu0 %v11166
        %11630 = vmatprep.subr.bf16.mxu0 %v11171
        %11631 = vmatpush1.bf16.msra.mxu0 %v11170
        %11632 = vmatprep.subr.bf16.mxu0 %v11175
        %11633 = vmatpush1.bf16.msra.mxu0 %v11174
        %11634 = vmatprep.subr.bf16.mxu0 %v11179
        %11635 = vmatpush1.bf16.msra.mxu0 %v11178
        %11636 = vmatprep.subr.bf16.mxu0 %v11183
        %11637 = vmatpush1.bf16.msra.mxu0 %v11182
        %11638 = vmatprep.subr.bf16.mxu0 %v11187
        %11639 = vmatpush1.bf16.msra.mxu0 %v11186
        %11640 = vmatprep.subr.bf16.mxu0 %v11191
        %11641 = vmatpush1.bf16.msra.mxu0 %v11190
        %11642 = vmatprep.subr.bf16.mxu0 %v11195
        %11643 = vmatpush1.bf16.msra.mxu0 %v11194
        %11644 = vmatprep.subr.bf16.mxu0 %v11199
        %11645 = vmatpush1.bf16.msra.mxu0 %v11198
        %11646 = vmatprep.subr.bf16.mxu0 %v11203
        %11647 = vmatpush1.bf16.msra.mxu0 %v11202
        %11648 = vmatprep.subr.bf16.mxu0 %v11207
        %11649 = vmatpush1.bf16.msra.mxu0 %v11206
        %11650 = vmatprep.subr.bf16.mxu0 %v11211
        %11651 = vmatpush1.bf16.msra.mxu0 %v11210
        %11652 = vmatprep.subr.bf16.mxu0 %v11215
        %11653 = vmatpush1.bf16.msra.mxu0 %v11214
        %11654 = vmatprep.subr.bf16.mxu0 %v11219
        %11655 = vmatpush1.bf16.msra.mxu0 %v11218
        %11656 = vmatprep.subr.bf16.mxu0 %v11223
        %11657 = vmatpush1.bf16.msra.mxu0 %v11222
        %11658 = vmatprep.mubr.bf16.mxu0 %v9944
        %11659 = vmatmul.mubr.bf16.gmra.mrb[0].mxu0 %v9943
        %v11660 = vpop.f32.mrb[0].mxu0
        %v11661 = vadd.f32 %v11620, %v11660
        %v11662 = vpop.f32.mrb[0].mxu0
        %v11663 = vadd.f32 %v11622, %v11662
        %v11664 = vpop.f32.mrb[0].mxu0
        %v11665 = vpop.f32.mrb[0].mxu0
        %11666 = vdwg.mxu0
        %11667 = vmatprep.subr.bf16.mxu0 %v10973
        %11668 = vmatpush1.bf16.msra.mxu0 %v10972
        %11669 = vmatprep.subr.bf16.mxu0 %v10977
        %11670 = vmatpush1.bf16.msra.mxu0 %v10976
        %11671 = vmatprep.subr.bf16.mxu0 %v10981
        %11672 = vmatpush1.bf16.msra.mxu0 %v10980
        %11673 = vmatprep.subr.bf16.mxu0 %v10985
        %11674 = vmatpush1.bf16.msra.mxu0 %v10984
        %11675 = vmatprep.subr.bf16.mxu0 %v10989
        %11676 = vmatpush1.bf16.msra.mxu0 %v10988
        %11677 = vmatprep.subr.bf16.mxu0 %v10993
        %11678 = vmatpush1.bf16.msra.mxu0 %v10992
        %11679 = vmatprep.subr.bf16.mxu0 %v10997
        %11680 = vmatpush1.bf16.msra.mxu0 %v10996
        %11681 = vmatprep.subr.bf16.mxu0 %v11001
        %11682 = vmatpush1.bf16.msra.mxu0 %v11000
        %11683 = vmatprep.subr.bf16.mxu0 %v11005
        %11684 = vmatpush1.bf16.msra.mxu0 %v11004
        %11685 = vmatprep.subr.bf16.mxu0 %v11009
        %11686 = vmatpush1.bf16.msra.mxu0 %v11008
        %11687 = vmatprep.subr.bf16.mxu0 %v11013
        %11688 = vmatpush1.bf16.msra.mxu0 %v11012
        %11689 = vmatprep.subr.bf16.mxu0 %v11017
        %11690 = vmatpush1.bf16.msra.mxu0 %v11016
        %11691 = vmatprep.subr.bf16.mxu0 %v11021
        %11692 = vmatpush1.bf16.msra.mxu0 %v11020
        %11693 = vmatprep.subr.bf16.mxu0 %v11025
        %11694 = vmatpush1.bf16.msra.mxu0 %v11024
        %11695 = vmatprep.subr.bf16.mxu0 %v11029
        %11696 = vmatpush1.bf16.msra.mxu0 %v11028
        %11697 = vmatprep.subr.bf16.mxu0 %v11033
        %11698 = vmatpush1.bf16.msra.mxu0 %v11032
        %11699 = vmatprep.mubr.bf16.mxu0 %v9938
        %11700 = vmatmul.mubr.bf16.gmra.mrb[0].mxu0 %v9937
        %v11701 = vpop.f32.mrb[0].mxu0
        %v11702 = vadd.f32 %v11494, %v11701
        %v11703 = vpop.f32.mrb[0].mxu0
        %v11704 = vadd.f32 %v11498, %v11703
        %v11705 = vpop.f32.mrb[0].mxu0
        %v11706 = vpop.f32.mrb[0].mxu0
        %11707 = vdwg.mxu0
        %11708 = vmatprep.subr.bf16.mxu0 %v11037
        %11709 = vmatpush1.bf16.msra.mxu0 %v11036
        %11710 = vmatprep.subr.bf16.mxu0 %v11041
        %11711 = vmatpush1.bf16.msra.mxu0 %v11040
        %11712 = vmatprep.subr.bf16.mxu0 %v11045
        %11713 = vmatpush1.bf16.msra.mxu0 %v11044
        %11714 = vmatprep.subr.bf16.mxu0 %v11049
        %11715 = vmatpush1.bf16.msra.mxu0 %v11048
        %11716 = vmatprep.subr.bf16.mxu0 %v11053
        %11717 = vmatpush1.bf16.msra.mxu0 %v11052
        %11718 = vmatprep.subr.bf16.mxu0 %v11057
        %11719 = vmatpush1.bf16.msra.mxu0 %v11056
        %11720 = vmatprep.subr.bf16.mxu0 %v11061
        %11721 = vmatpush1.bf16.msra.mxu0 %v11060
        %11722 = vmatprep.subr.bf16.mxu0 %v11065
        %11723 = vmatpush1.bf16.msra.mxu0 %v11064
        %11724 = vmatprep.subr.bf16.mxu0 %v11069
        %11725 = vmatpush1.bf16.msra.mxu0 %v11068
        %11726 = vmatprep.subr.bf16.mxu0 %v11073
        %11727 = vmatpush1.bf16.msra.mxu0 %v11072
        %11728 = vmatprep.subr.bf16.mxu0 %v11077
        %11729 = vmatpush1.bf16.msra.mxu0 %v11076
        %11730 = vmatprep.subr.bf16.mxu0 %v11081
        %11731 = vmatpush1.bf16.msra.mxu0 %v11080
        %11732 = vmatprep.subr.bf16.mxu0 %v11085
        %11733 = vmatpush1.bf16.msra.mxu0 %v11084
        %11734 = vmatprep.subr.bf16.mxu0 %v11089
        %11735 = vmatpush1.bf16.msra.mxu0 %v11088
        %11736 = vmatprep.subr.bf16.mxu0 %v11093
        %11737 = vmatpush1.bf16.msra.mxu0 %v11092
        %11738 = vmatprep.subr.bf16.mxu0 %v11097
        %11739 = vmatpush1.bf16.msra.mxu0 %v11096
        %11740 = vmatprep.mubr.bf16.mxu0 %v9940
        %11741 = vmatmul.mubr.bf16.gmra.mrb[0].mxu0 %v9939
        %v11742 = vpop.f32.mrb[0].mxu0
        %v11743 = vadd.f32 %v11702, %v11742
        %v11744 = vpop.f32.mrb[0].mxu0
        %v11745 = vadd.f32 %v11704, %v11744
        %v11746 = vpop.f32.mrb[0].mxu0
        %v11747 = vpop.f32.mrb[0].mxu0
        %11748 = vdwg.mxu0
        %11749 = vmatprep.subr.bf16.mxu0 %v11101
        %11750 = vmatpush1.bf16.msra.mxu0 %v11100
        %11751 = vmatprep.subr.bf16.mxu0 %v11105
        %11752 = vmatpush1.bf16.msra.mxu0 %v11104
        %11753 = vmatprep.subr.bf16.mxu0 %v11109
        %11754 = vmatpush1.bf16.msra.mxu0 %v11108
        %11755 = vmatprep.subr.bf16.mxu0 %v11113
        %11756 = vmatpush1.bf16.msra.mxu0 %v11112
        %11757 = vmatprep.subr.bf16.mxu0 %v11117
        %11758 = vmatpush1.bf16.msra.mxu0 %v11116
        %11759 = vmatprep.subr.bf16.mxu0 %v11121
        %11760 = vmatpush1.bf16.msra.mxu0 %v11120
        %11761 = vmatprep.subr.bf16.mxu0 %v11125
        %11762 = vmatpush1.bf16.msra.mxu0 %v11124
        %11763 = vmatprep.subr.bf16.mxu0 %v11129
        %11764 = vmatpush1.bf16.msra.mxu0 %v11128
        %11765 = vmatprep.subr.bf16.mxu0 %v11133
        %11766 = vmatpush1.bf16.msra.mxu0 %v11132
        %11767 = vmatprep.subr.bf16.mxu0 %v11137
        %11768 = vmatpush1.bf16.msra.mxu0 %v11136
        %11769 = vmatprep.subr.bf16.mxu0 %v11141
        %11770 = vmatpush1.bf16.msra.mxu0 %v11140
        %11771 = vmatprep.subr.bf16.mxu0 %v11145
        %11772 = vmatpush1.bf16.msra.mxu0 %v11144
        %11773 = vmatprep.subr.bf16.mxu0 %v11149
        %11774 = vmatpush1.bf16.msra.mxu0 %v11148
        %11775 = vmatprep.subr.bf16.mxu0 %v11153
        %11776 = vmatpush1.bf16.msra.mxu0 %v11152
        %11777 = vmatprep.subr.bf16.mxu0 %v11157
        %11778 = vmatpush1.bf16.msra.mxu0 %v11156
        %11779 = vmatprep.subr.bf16.mxu0 %v11161
        %11780 = vmatpush1.bf16.msra.mxu0 %v11160
        %11781 = vmatprep.mubr.bf16.mxu0 %v9942
        %11782 = vmatmul.mubr.bf16.gmra.mrb[0].mxu0 %v9941
        %v11783 = vpop.f32.mrb[0].mxu0
        %v11784 = vadd.f32 %v11743, %v11783
        %v11785 = vpop.f32.mrb[0].mxu0
        %v11786 = vadd.f32 %v11745, %v11785
        %v11787 = vpop.f32.mrb[0].mxu0
        %v11788 = vpop.f32.mrb[0].mxu0
        %11789 = vdwg.mxu0
        %11790 = vmatprep.subr.bf16.mxu0 %v11165
        %11791 = vmatpush1.bf16.msra.mxu0 %v11164
        %11792 = vmatprep.subr.bf16.mxu0 %v11169
        %11793 = vmatpush1.bf16.msra.mxu0 %v11168
        %11794 = vmatprep.subr.bf16.mxu0 %v11173
        %11795 = vmatpush1.bf16.msra.mxu0 %v11172
        %11796 = vmatprep.subr.bf16.mxu0 %v11177
        %11797 = vmatpush1.bf16.msra.mxu0 %v11176
        %11798 = vmatprep.subr.bf16.mxu0 %v11181
        %11799 = vmatpush1.bf16.msra.mxu0 %v11180
        %11800 = vmatprep.subr.bf16.mxu0 %v11185
        %11801 = vmatpush1.bf16.msra.mxu0 %v11184
        %11802 = vmatprep.subr.bf16.mxu0 %v11189
        %11803 = vmatpush1.bf16.msra.mxu0 %v11188
        %11804 = vmatprep.subr.bf16.mxu0 %v11193
        %11805 = vmatpush1.bf16.msra.mxu0 %v11192
        %11806 = vmatprep.subr.bf16.mxu0 %v11197
        %11807 = vmatpush1.bf16.msra.mxu0 %v11196
        %11808 = vmatprep.subr.bf16.mxu0 %v11201
        %11809 = vmatpush1.bf16.msra.mxu0 %v11200
        %11810 = vmatprep.subr.bf16.mxu0 %v11205
        %11811 = vmatpush1.bf16.msra.mxu0 %v11204
        %11812 = vmatprep.subr.bf16.mxu0 %v11209
        %11813 = vmatpush1.bf16.msra.mxu0 %v11208
        %11814 = vmatprep.subr.bf16.mxu0 %v11213
        %11815 = vmatpush1.bf16.msra.mxu0 %v11212
        %11816 = vmatprep.subr.bf16.mxu0 %v11217
        %11817 = vmatpush1.bf16.msra.mxu0 %v11216
        %11818 = vmatprep.subr.bf16.mxu0 %v11221
        %11819 = vmatpush1.bf16.msra.mxu0 %v11220
        %11820 = vmatprep.subr.bf16.mxu0 %v11225
        %11821 = vmatpush1.bf16.msra.mxu0 %v11224
        %11822 = vmatprep.mubr.bf16.mxu0 %v9944
        %11823 = vmatmul.mubr.bf16.gmra.mrb[0].mxu0 %v9943
        %v11824 = vpop.f32.mrb[0].mxu0
        %v11825 = vadd.f32 %v11784, %v11824
        %v11826 = vpop.f32.mrb[0].mxu0
        %v11827 = vadd.f32 %v11786, %v11826
        %v11828 = vpop.f32.mrb[0].mxu0
        %v11829 = vpop.f32.mrb[0].mxu0
        %11830 = vdwg.mxu0
        %v11831 = vtanh.pop %v11661
        %v11832 = vtanh.pop %v11663
        %v11833 = vtanh.pop %v11825
        %v11834 = vtanh.pop %v11827
        %v11835 = vpack.c.bf16 %v11831, %v11831
        %v11836 = vpack.c.bf16 %v11832, %v11832
        %v11837 = vpack.c.bf16 %v11833, %v11833
        %v11838 = vpack.c.bf16 %v11834, %v11834
        %v11839 = vld [vmem:[#allocation13] sm:$0xff]
        %v11840 = vld [vmem:[#allocation13 + $0x8] sm:$0xff]
        %v11841 = vld [vmem:[#allocation13 + $0x10] sm:$0xff]
        %v11842 = vld [vmem:[#allocation13 + $0x18] sm:$0xff]
        %v11843 = vld [vmem:[#allocation13 + $0x20] sm:$0xff]
        %v11844 = vld [vmem:[#allocation13 + $0x28] sm:$0xff]
        %v11845 = vld [vmem:[#allocation13 + $0x30] sm:$0xff]
        %v11846 = vld [vmem:[#allocation13 + $0x38] sm:$0xff]
        %v11847 = vld [vmem:[#allocation13 + $0x40] sm:$0xff]
        %v11848 = vld [vmem:[#allocation13 + $0x48] sm:$0xff]
        %v11849 = vld [vmem:[#allocation13 + $0x50] sm:$0xff]
        %v11850 = vld [vmem:[#allocation13 + $0x58] sm:$0xff]
        %v11851 = vld [vmem:[#allocation13 + $0x60] sm:$0xff]
        %v11852 = vld [vmem:[#allocation13 + $0x68] sm:$0xff]
        %v11853 = vld [vmem:[#allocation13 + $0x70] sm:$0xff]
        %v11854 = vld [vmem:[#allocation13 + $0x78] sm:$0xff]
        %v11855 = vld [vmem:[#allocation13 + $0x80] sm:$0xff]
        %v11856 = vld [vmem:[#allocation13 + $0x88] sm:$0xff]
        %v11857 = vld [vmem:[#allocation13 + $0x90] sm:$0xff]
        %v11858 = vld [vmem:[#allocation13 + $0x98] sm:$0xff]
        %v11859 = vld [vmem:[#allocation13 + $0xa0] sm:$0xff]
        %v11860 = vld [vmem:[#allocation13 + $0xa8] sm:$0xff]
        %v11861 = vld [vmem:[#allocation13 + $0xb0] sm:$0xff]
        %v11862 = vld [vmem:[#allocation13 + $0xb8] sm:$0xff]
        %v11863 = vld [vmem:[#allocation13 + $0xc0] sm:$0xff]
        %v11864 = vld [vmem:[#allocation13 + $0xc8] sm:$0xff]
        %v11865 = vld [vmem:[#allocation13 + $0xd0] sm:$0xff]
        %v11866 = vld [vmem:[#allocation13 + $0xd8] sm:$0xff]
        %v11867 = vld [vmem:[#allocation13 + $0xe0] sm:$0xff]
        %v11868 = vld [vmem:[#allocation13 + $0xe8] sm:$0xff]
        %v11869 = vld [vmem:[#allocation13 + $0xf0] sm:$0xff]
        %v11870 = vld [vmem:[#allocation13 + $0xf8] sm:$0xff]
        %v11871 = vld [vmem:[#allocation13 + $0x100] sm:$0xff]
        %v11872 = vld [vmem:[#allocation13 + $0x108] sm:$0xff]
        %v11873 = vld [vmem:[#allocation13 + $0x110] sm:$0xff]
        %v11874 = vld [vmem:[#allocation13 + $0x118] sm:$0xff]
        %v11875 = vld [vmem:[#allocation13 + $0x120] sm:$0xff]
        %v11876 = vld [vmem:[#allocation13 + $0x128] sm:$0xff]
        %v11877 = vld [vmem:[#allocation13 + $0x130] sm:$0xff]
        %v11878 = vld [vmem:[#allocation13 + $0x138] sm:$0xff]
        %v11879 = vld [vmem:[#allocation13 + $0x140] sm:$0xff]
        %v11880 = vld [vmem:[#allocation13 + $0x148] sm:$0xff]
        %v11881 = vld [vmem:[#allocation13 + $0x150] sm:$0xff]
        %v11882 = vld [vmem:[#allocation13 + $0x158] sm:$0xff]
        %v11883 = vld [vmem:[#allocation13 + $0x160] sm:$0xff]
        %v11884 = vld [vmem:[#allocation13 + $0x168] sm:$0xff]
        %v11885 = vld [vmem:[#allocation13 + $0x170] sm:$0xff]
        %v11886 = vld [vmem:[#allocation13 + $0x178] sm:$0xff]
        %v11887 = vld [vmem:[#allocation13 + $0x180] sm:$0xff]
        %v11888 = vld [vmem:[#allocation13 + $0x188] sm:$0xff]
        %v11889 = vld [vmem:[#allocation13 + $0x190] sm:$0xff]
        %v11890 = vld [vmem:[#allocation13 + $0x198] sm:$0xff]
        %v11891 = vld [vmem:[#allocation13 + $0x1a0] sm:$0xff]
        %v11892 = vld [vmem:[#allocation13 + $0x1a8] sm:$0xff]
        %v11893 = vld [vmem:[#allocation13 + $0x1b0] sm:$0xff]
        %v11894 = vld [vmem:[#allocation13 + $0x1b8] sm:$0xff]
        %v11895 = vld [vmem:[#allocation13 + $0x1c0] sm:$0xff]
        %v11896 = vld [vmem:[#allocation13 + $0x1c8] sm:$0xff]
        %v11897 = vld [vmem:[#allocation13 + $0x1d0] sm:$0xff]
        %v11898 = vld [vmem:[#allocation13 + $0x1d8] sm:$0xff]
        %v11899 = vld [vmem:[#allocation13 + $0x1e0] sm:$0xff]
        %v11900 = vld [vmem:[#allocation13 + $0x1e8] sm:$0xff]
        %v11901 = vld [vmem:[#allocation13 + $0x1f0] sm:$0xff]
        %v11902 = vld [vmem:[#allocation13 + $0x1f8] sm:$0xff]
        %v11903 = vld [vmem:[#allocation14] sm:$0x3]
        %v11968 = vunpack.c.l.b16 %v11839
        %v11969 = vunpack.c.h.b16 %v11839
        %v11970 = vunpack.c.l.b16 %v11840
        %v11971 = vunpack.c.h.b16 %v11840
        %v11972 = vunpack.c.l.b16 %v11841
        %v11973 = vunpack.c.h.b16 %v11841
        %v11974 = vunpack.c.l.b16 %v11842
        %v11975 = vunpack.c.h.b16 %v11842
        %v11976 = vunpack.c.l.b16 %v11843
        %v11977 = vunpack.c.h.b16 %v11843
        %v11978 = vunpack.c.l.b16 %v11844
        %v11979 = vunpack.c.h.b16 %v11844
        %v11980 = vunpack.c.l.b16 %v11845
        %v11981 = vunpack.c.h.b16 %v11845
        %v11982 = vunpack.c.l.b16 %v11846
        %v11983 = vunpack.c.h.b16 %v11846
        %v11984 = vunpack.c.l.b16 %v11847
        %v11985 = vunpack.c.h.b16 %v11847
        %v11986 = vunpack.c.l.b16 %v11848
        %v11987 = vunpack.c.h.b16 %v11848
        %v11988 = vunpack.c.l.b16 %v11849
        %v11989 = vunpack.c.h.b16 %v11849
        %v11990 = vunpack.c.l.b16 %v11850
        %v11991 = vunpack.c.h.b16 %v11850
        %v11992 = vunpack.c.l.b16 %v11851
        %v11993 = vunpack.c.h.b16 %v11851
        %v11994 = vunpack.c.l.b16 %v11852
        %v11995 = vunpack.c.h.b16 %v11852
        %v11996 = vunpack.c.l.b16 %v11853
        %v11997 = vunpack.c.h.b16 %v11853
        %v11998 = vunpack.c.l.b16 %v11854
        %v11999 = vunpack.c.h.b16 %v11854
        %v12000 = vunpack.c.l.b16 %v11855
        %v12001 = vunpack.c.h.b16 %v11855
        %v12002 = vunpack.c.l.b16 %v11856
        %v12003 = vunpack.c.h.b16 %v11856
        %v12004 = vunpack.c.l.b16 %v11857
        %v12005 = vunpack.c.h.b16 %v11857
        %v12006 = vunpack.c.l.b16 %v11858
        %v12007 = vunpack.c.h.b16 %v11858
        %v12008 = vunpack.c.l.b16 %v11859
        %v12009 = vunpack.c.h.b16 %v11859
        %v12010 = vunpack.c.l.b16 %v11860
        %v12011 = vunpack.c.h.b16 %v11860
        %v12012 = vunpack.c.l.b16 %v11861
        %v12013 = vunpack.c.h.b16 %v11861
        %v12014 = vunpack.c.l.b16 %v11862
        %v12015 = vunpack.c.h.b16 %v11862
        %v12016 = vunpack.c.l.b16 %v11863
        %v12017 = vunpack.c.h.b16 %v11863
        %v12018 = vunpack.c.l.b16 %v11864
        %v12019 = vunpack.c.h.b16 %v11864
        %v12020 = vunpack.c.l.b16 %v11865
        %v12021 = vunpack.c.h.b16 %v11865
        %v12022 = vunpack.c.l.b16 %v11866
        %v12023 = vunpack.c.h.b16 %v11866
        %v12024 = vunpack.c.l.b16 %v11867
        %v12025 = vunpack.c.h.b16 %v11867
        %v12026 = vunpack.c.l.b16 %v11868
        %v12027 = vunpack.c.h.b16 %v11868
        %v12028 = vunpack.c.l.b16 %v11869
        %v12029 = vunpack.c.h.b16 %v11869
        %v12030 = vunpack.c.l.b16 %v11870
        %v12031 = vunpack.c.h.b16 %v11870
        %v12032 = vunpack.c.l.b16 %v11871
        %v12033 = vunpack.c.h.b16 %v11871
        %v12034 = vunpack.c.l.b16 %v11872
        %v12035 = vunpack.c.h.b16 %v11872
        %v12036 = vunpack.c.l.b16 %v11873
        %v12037 = vunpack.c.h.b16 %v11873
        %v12038 = vunpack.c.l.b16 %v11874
        %v12039 = vunpack.c.h.b16 %v11874
        %v12040 = vunpack.c.l.b16 %v11875
        %v12041 = vunpack.c.h.b16 %v11875
        %v12042 = vunpack.c.l.b16 %v11876
        %v12043 = vunpack.c.h.b16 %v11876
        %v12044 = vunpack.c.l.b16 %v11877
        %v12045 = vunpack.c.h.b16 %v11877
        %v12046 = vunpack.c.l.b16 %v11878
        %v12047 = vunpack.c.h.b16 %v11878
        %v12048 = vunpack.c.l.b16 %v11879
        %v12049 = vunpack.c.h.b16 %v11879
        %v12050 = vunpack.c.l.b16 %v11880
        %v12051 = vunpack.c.h.b16 %v11880
        %v12052 = vunpack.c.l.b16 %v11881
        %v12053 = vunpack.c.h.b16 %v11881
        %v12054 = vunpack.c.l.b16 %v11882
        %v12055 = vunpack.c.h.b16 %v11882
        %v12056 = vunpack.c.l.b16 %v11883
        %v12057 = vunpack.c.h.b16 %v11883
        %v12058 = vunpack.c.l.b16 %v11884
        %v12059 = vunpack.c.h.b16 %v11884
        %v12060 = vunpack.c.l.b16 %v11885
        %v12061 = vunpack.c.h.b16 %v11885
        %v12062 = vunpack.c.l.b16 %v11886
        %v12063 = vunpack.c.h.b16 %v11886
        %v12064 = vunpack.c.l.b16 %v11887
        %v12065 = vunpack.c.h.b16 %v11887
        %v12066 = vunpack.c.l.b16 %v11888
        %v12067 = vunpack.c.h.b16 %v11888
        %v12068 = vunpack.c.l.b16 %v11889
        %v12069 = vunpack.c.h.b16 %v11889
        %v12070 = vunpack.c.l.b16 %v11890
        %v12071 = vunpack.c.h.b16 %v11890
        %v12072 = vunpack.c.l.b16 %v11891
        %v12073 = vunpack.c.h.b16 %v11891
        %v12074 = vunpack.c.l.b16 %v11892
        %v12075 = vunpack.c.h.b16 %v11892
        %v12076 = vunpack.c.l.b16 %v11893
        %v12077 = vunpack.c.h.b16 %v11893
        %v12078 = vunpack.c.l.b16 %v11894
        %v12079 = vunpack.c.h.b16 %v11894
        %v12080 = vunpack.c.l.b16 %v11895
        %v12081 = vunpack.c.h.b16 %v11895
        %v12082 = vunpack.c.l.b16 %v11896
        %v12083 = vunpack.c.h.b16 %v11896
        %v12084 = vunpack.c.l.b16 %v11897
        %v12085 = vunpack.c.h.b16 %v11897
        %v12086 = vunpack.c.l.b16 %v11898
        %v12087 = vunpack.c.h.b16 %v11898
        %v12088 = vunpack.c.l.b16 %v11899
        %v12089 = vunpack.c.h.b16 %v11899
        %v12090 = vunpack.c.l.b16 %v11900
        %v12091 = vunpack.c.h.b16 %v11900
        %v12092 = vunpack.c.l.b16 %v11901
        %v12093 = vunpack.c.h.b16 %v11901
        %v12094 = vunpack.c.l.b16 %v11902
        %v12095 = vunpack.c.h.b16 %v11902
        %v12096 = vpack.c.b16 %v11970, %v11968
        %v12097 = vpack.c.b16 %v11971, %v11969
        %v12098 = vpack.c.b16 %v11974, %v11972
        %v12099 = vpack.c.b16 %v11975, %v11973
        %v12100 = vpack.c.b16 %v11978, %v11976
        %v12101 = vpack.c.b16 %v11979, %v11977
        %v12102 = vpack.c.b16 %v11982, %v11980
        %v12103 = vpack.c.b16 %v11983, %v11981
        %v12104 = vpack.c.b16 %v11986, %v11984
        %v12105 = vpack.c.b16 %v11987, %v11985
        %v12106 = vpack.c.b16 %v11990, %v11988
        %v12107 = vpack.c.b16 %v11991, %v11989
        %v12108 = vpack.c.b16 %v11994, %v11992
        %v12109 = vpack.c.b16 %v11995, %v11993
        %v12110 = vpack.c.b16 %v11998, %v11996
        %v12111 = vpack.c.b16 %v11999, %v11997
        %v12112 = vpack.c.b16 %v12002, %v12000
        %v12113 = vpack.c.b16 %v12003, %v12001
        %v12114 = vpack.c.b16 %v12006, %v12004
        %v12115 = vpack.c.b16 %v12007, %v12005
        %v12116 = vpack.c.b16 %v12010, %v12008
        %v12117 = vpack.c.b16 %v12011, %v12009
        %v12118 = vpack.c.b16 %v12014, %v12012
        %v12119 = vpack.c.b16 %v12015, %v12013
        %v12120 = vpack.c.b16 %v12018, %v12016
        %v12121 = vpack.c.b16 %v12019, %v12017
        %v12122 = vpack.c.b16 %v12022, %v12020
        %v12123 = vpack.c.b16 %v12023, %v12021
        %v12124 = vpack.c.b16 %v12026, %v12024
        %v12125 = vpack.c.b16 %v12027, %v12025
        %v12126 = vpack.c.b16 %v12030, %v12028
        %v12127 = vpack.c.b16 %v12031, %v12029
        %v12128 = vpack.c.b16 %v12034, %v12032
        %v12129 = vpack.c.b16 %v12035, %v12033
        %v12130 = vpack.c.b16 %v12038, %v12036
        %v12131 = vpack.c.b16 %v12039, %v12037
        %v12132 = vpack.c.b16 %v12042, %v12040
        %v12133 = vpack.c.b16 %v12043, %v12041
        %v12134 = vpack.c.b16 %v12046, %v12044
        %v12135 = vpack.c.b16 %v12047, %v12045
        %v12136 = vpack.c.b16 %v12050, %v12048
        %v12137 = vpack.c.b16 %v12051, %v12049
        %v12138 = vpack.c.b16 %v12054, %v12052
        %v12139 = vpack.c.b16 %v12055, %v12053
        %v12140 = vpack.c.b16 %v12058, %v12056
        %v12141 = vpack.c.b16 %v12059, %v12057
        %v12142 = vpack.c.b16 %v12062, %v12060
        %v12143 = vpack.c.b16 %v12063, %v12061
        %v12144 = vpack.c.b16 %v12066, %v12064
        %v12145 = vpack.c.b16 %v12067, %v12065
        %v12146 = vpack.c.b16 %v12070, %v12068
        %v12147 = vpack.c.b16 %v12071, %v12069
        %v12148 = vpack.c.b16 %v12074, %v12072
        %v12149 = vpack.c.b16 %v12075, %v12073
        %v12150 = vpack.c.b16 %v12078, %v12076
        %v12151 = vpack.c.b16 %v12079, %v12077
        %v12152 = vpack.c.b16 %v12082, %v12080
        %v12153 = vpack.c.b16 %v12083, %v12081
        %v12154 = vpack.c.b16 %v12086, %v12084
        %v12155 = vpack.c.b16 %v12087, %v12085
        %v12156 = vpack.c.b16 %v12090, %v12088
        %v12157 = vpack.c.b16 %v12091, %v12089
        %v12158 = vpack.c.b16 %v12094, %v12092
        %v12159 = vpack.c.b16 %v12095, %v12093
        %v12225 = vlaneseq
        %v12226 = vshrl.u32 %v12225, 7
        %v12227 = vsub.s32 0, %v12226
        %v12228 = vrot.slane %v11903, %v12227
        %v12229 = vlaneseq
        %v12230 = vshrl.u32 %v12229, 7
        %v12231 = vsub.s32 1, %v12230
        %v12232 = vrot.slane %v11903, %v12231
        %12235 = vmatprep.subr.bf16.mxu0 %v12097
        %12236 = vmatpush1.bf16.msra.mxu0 %v12096
        %12237 = vmatprep.subr.bf16.mxu0 %v12099
        %12238 = vmatpush1.bf16.msra.mxu0 %v12098
        %12239 = vmatprep.subr.bf16.mxu0 %v12101
        %12240 = vmatpush1.bf16.msra.mxu0 %v12100
        %12241 = vmatprep.subr.bf16.mxu0 %v12103
        %12242 = vmatpush1.bf16.msra.mxu0 %v12102
        %12243 = vmatprep.subr.bf16.mxu0 %v12105
        %12244 = vmatpush1.bf16.msra.mxu0 %v12104
        %12245 = vmatprep.subr.bf16.mxu0 %v12107
        %12246 = vmatpush1.bf16.msra.mxu0 %v12106
        %12247 = vmatprep.subr.bf16.mxu0 %v12109
        %12248 = vmatpush1.bf16.msra.mxu0 %v12108
        %12249 = vmatprep.subr.bf16.mxu0 %v12111
        %12250 = vmatpush1.bf16.msra.mxu0 %v12110
        %12251 = vmatprep.subr.bf16.mxu0 %v12113
        %12252 = vmatpush1.bf16.msra.mxu0 %v12112
        %12253 = vmatprep.subr.bf16.mxu0 %v12115
        %12254 = vmatpush1.bf16.msra.mxu0 %v12114
        %12255 = vmatprep.subr.bf16.mxu0 %v12117
        %12256 = vmatpush1.bf16.msra.mxu0 %v12116
        %12257 = vmatprep.subr.bf16.mxu0 %v12119
        %12258 = vmatpush1.bf16.msra.mxu0 %v12118
        %12259 = vmatprep.subr.bf16.mxu0 %v12121
        %12260 = vmatpush1.bf16.msra.mxu0 %v12120
        %12261 = vmatprep.subr.bf16.mxu0 %v12123
        %12262 = vmatpush1.bf16.msra.mxu0 %v12122
        %12263 = vmatprep.subr.bf16.mxu0 %v12125
        %12264 = vmatpush1.bf16.msra.mxu0 %v12124
        %12265 = vmatprep.subr.bf16.mxu0 %v12127
        %12266 = vmatpush1.bf16.msra.mxu0 %v12126
        %12267 = vmatprep.mubr.bf16.mxu0 %v11836
        %12268 = vmatmul.mubr.bf16.gmra.mrb[0].mxu0 %v11835
        %v12269 = vpop.f32.mrb[0].mxu0
        %v12270 = vadd.f32 %v12228, %v12269
        %v12271 = vpop.f32.mrb[0].mxu0
        %v12272 = vadd.f32 %v12232, %v12271
        %v12273 = vpop.f32.mrb[0].mxu0
        %v12274 = vpop.f32.mrb[0].mxu0
        %12275 = vdwg.mxu0
        %12276 = vmatprep.subr.bf16.mxu0 %v12129
        %12277 = vmatpush1.bf16.msra.mxu0 %v12128
        %12278 = vmatprep.subr.bf16.mxu0 %v12131
        %12279 = vmatpush1.bf16.msra.mxu0 %v12130
        %12280 = vmatprep.subr.bf16.mxu0 %v12133
        %12281 = vmatpush1.bf16.msra.mxu0 %v12132
        %12282 = vmatprep.subr.bf16.mxu0 %v12135
        %12283 = vmatpush1.bf16.msra.mxu0 %v12134
        %12284 = vmatprep.subr.bf16.mxu0 %v12137
        %12285 = vmatpush1.bf16.msra.mxu0 %v12136
        %12286 = vmatprep.subr.bf16.mxu0 %v12139
        %12287 = vmatpush1.bf16.msra.mxu0 %v12138
        %12288 = vmatprep.subr.bf16.mxu0 %v12141
        %12289 = vmatpush1.bf16.msra.mxu0 %v12140
        %12290 = vmatprep.subr.bf16.mxu0 %v12143
        %12291 = vmatpush1.bf16.msra.mxu0 %v12142
        %12292 = vmatprep.subr.bf16.mxu0 %v12145
        %12293 = vmatpush1.bf16.msra.mxu0 %v12144
        %12294 = vmatprep.subr.bf16.mxu0 %v12147
        %12295 = vmatpush1.bf16.msra.mxu0 %v12146
        %12296 = vmatprep.subr.bf16.mxu0 %v12149
        %12297 = vmatpush1.bf16.msra.mxu0 %v12148
        %12298 = vmatprep.subr.bf16.mxu0 %v12151
        %12299 = vmatpush1.bf16.msra.mxu0 %v12150
        %12300 = vmatprep.subr.bf16.mxu0 %v12153
        %12301 = vmatpush1.bf16.msra.mxu0 %v12152
        %12302 = vmatprep.subr.bf16.mxu0 %v12155
        %12303 = vmatpush1.bf16.msra.mxu0 %v12154
        %12304 = vmatprep.subr.bf16.mxu0 %v12157
        %12305 = vmatpush1.bf16.msra.mxu0 %v12156
        %12306 = vmatprep.subr.bf16.mxu0 %v12159
        %12307 = vmatpush1.bf16.msra.mxu0 %v12158
        %12308 = vmatprep.mubr.bf16.mxu0 %v11838
        %12309 = vmatmul.mubr.bf16.gmra.mrb[0].mxu0 %v11837
        %v12310 = vpop.f32.mrb[0].mxu0
        %v12311 = vadd.f32 %v12270, %v12310
        %v12312 = vpop.f32.mrb[0].mxu0
        %v12313 = vadd.f32 %v12272, %v12312
        %v12314 = vpop.f32.mrb[0].mxu0
        %v12315 = vpop.f32.mrb[0].mxu0
        %12316 = vdwg.mxu0
        %v12317 = vtanh.pop %v12311
        %v12318 = vtanh.pop %v12313
        %v12319 = vpack.c.bf16 %v12317, %v12317
        %v12320 = vpack.c.bf16 %v12318, %v12318
        %v12321 = vld [vmem:[%s12] sm:$0xf]
        %v12322 = vld [vmem:[%s12 + $0x4] sm:$0xf]
        %v12323 = vld [vmem:[%s12 + $0x8] sm:$0xf]
        %v12324 = vld [vmem:[%s12 + $0xc] sm:$0xf]
        %v12325 = vld [vmem:[%s12 + $0x10] sm:$0xf]
        %v12326 = vld [vmem:[%s12 + $0x14] sm:$0xf]
        %v12327 = vld [vmem:[%s12 + $0x18] sm:$0xf]
        %v12328 = vld [vmem:[%s12 + $0x1c] sm:$0xf]
        %v12329 = vld [vmem:[%s12 + $0x20] sm:$0xf]
        %v12330 = vld [vmem:[%s12 + $0x24] sm:$0xf]
        %v12331 = vld [vmem:[%s12 + $0x28] sm:$0xf]
        %v12332 = vld [vmem:[%s12 + $0x2c] sm:$0xf]
        %v12333 = vld [vmem:[%s12 + $0x30] sm:$0xf]
        %v12334 = vld [vmem:[%s12 + $0x34] sm:$0xf]
        %v12335 = vld [vmem:[%s12 + $0x38] sm:$0xf]
        %v12336 = vld [vmem:[%s12 + $0x3c] sm:$0xf]
        %v12337 = vld [vmem:[%s12 + $0x40] sm:$0xf]
        %v12338 = vld [vmem:[%s12 + $0x44] sm:$0xf]
        %v12339 = vld [vmem:[%s12 + $0x48] sm:$0xf]
        %v12340 = vld [vmem:[%s12 + $0x4c] sm:$0xf]
        %v12341 = vld [vmem:[%s12 + $0x50] sm:$0xf]
        %v12342 = vld [vmem:[%s12 + $0x54] sm:$0xf]
        %v12343 = vld [vmem:[%s12 + $0x58] sm:$0xf]
        %v12344 = vld [vmem:[%s12 + $0x5c] sm:$0xf]
        %v12345 = vld [vmem:[%s12 + $0x60] sm:$0xf]
        %v12346 = vld [vmem:[%s12 + $0x64] sm:$0xf]
        %v12347 = vld [vmem:[%s12 + $0x68] sm:$0xf]
        %v12348 = vld [vmem:[%s12 + $0x6c] sm:$0xf]
        %v12349 = vld [vmem:[%s12 + $0x70] sm:$0xf]
        %v12350 = vld [vmem:[%s12 + $0x74] sm:$0xf]
        %v12351 = vld [vmem:[%s12 + $0x78] sm:$0xf]
        %v12352 = vld [vmem:[%s12 + $0x7c] sm:$0xf]
        %v12353 = vld [vmem:[#allocation16] sm:$0x1]
        %v12386 = vunpack.c.l.b16 %v12321
        %v12387 = vunpack.c.l.b16 %v12322
        %v12388 = vunpack.c.l.b16 %v12323
        %v12389 = vunpack.c.l.b16 %v12324
        %v12390 = vunpack.c.l.b16 %v12325
        %v12391 = vunpack.c.l.b16 %v12326
        %v12392 = vunpack.c.l.b16 %v12327
        %v12393 = vunpack.c.l.b16 %v12328
        %v12394 = vunpack.c.l.b16 %v12329
        %v12395 = vunpack.c.l.b16 %v12330
        %v12396 = vunpack.c.l.b16 %v12331
        %v12397 = vunpack.c.l.b16 %v12332
        %v12398 = vunpack.c.l.b16 %v12333
        %v12399 = vunpack.c.l.b16 %v12334
        %v12400 = vunpack.c.l.b16 %v12335
        %v12401 = vunpack.c.l.b16 %v12336
        %v12402 = vunpack.c.l.b16 %v12337
        %v12403 = vunpack.c.l.b16 %v12338
        %v12404 = vunpack.c.l.b16 %v12339
        %v12405 = vunpack.c.l.b16 %v12340
        %v12406 = vunpack.c.l.b16 %v12341
        %v12407 = vunpack.c.l.b16 %v12342
        %v12408 = vunpack.c.l.b16 %v12343
        %v12409 = vunpack.c.l.b16 %v12344
        %v12410 = vunpack.c.l.b16 %v12345
        %v12411 = vunpack.c.l.b16 %v12346
        %v12412 = vunpack.c.l.b16 %v12347
        %v12413 = vunpack.c.l.b16 %v12348
        %v12414 = vunpack.c.l.b16 %v12349
        %v12415 = vunpack.c.l.b16 %v12350
        %v12416 = vunpack.c.l.b16 %v12351
        %v12417 = vunpack.c.l.b16 %v12352
        %v12418 = vpack.c.b16 %v12387, %v12386
        %v12419 = vpack.c.b16 %v12389, %v12388
        %v12420 = vpack.c.b16 %v12391, %v12390
        %v12421 = vpack.c.b16 %v12393, %v12392
        %v12422 = vpack.c.b16 %v12395, %v12394
        %v12423 = vpack.c.b16 %v12397, %v12396
        %v12424 = vpack.c.b16 %v12399, %v12398
        %v12425 = vpack.c.b16 %v12401, %v12400
        %v12426 = vpack.c.b16 %v12403, %v12402
        %v12427 = vpack.c.b16 %v12405, %v12404
        %v12428 = vpack.c.b16 %v12407, %v12406
        %v12429 = vpack.c.b16 %v12409, %v12408
        %v12430 = vpack.c.b16 %v12411, %v12410
        %v12431 = vpack.c.b16 %v12413, %v12412
        %v12432 = vpack.c.b16 %v12415, %v12414
        %v12433 = vpack.c.b16 %v12417, %v12416
        %12450 = vmatprep.subr.bf16.mxu0 0
        %12451 = vmatpush1.bf16.msra.mxu0 %v12418
        %12452 = vmatprep.subr.bf16.mxu0 0
        %12453 = vmatpush1.bf16.msra.mxu0 %v12419
        %12454 = vmatprep.subr.bf16.mxu0 0
        %12455 = vmatpush1.bf16.msra.mxu0 %v12420
        %12456 = vmatprep.subr.bf16.mxu0 0
        %12457 = vmatpush1.bf16.msra.mxu0 %v12421
        %12458 = vmatprep.subr.bf16.mxu0 0
        %12459 = vmatpush1.bf16.msra.mxu0 %v12422
        %12460 = vmatprep.subr.bf16.mxu0 0
        %12461 = vmatpush1.bf16.msra.mxu0 %v12423
        %12462 = vmatprep.subr.bf16.mxu0 0
        %12463 = vmatpush1.bf16.msra.mxu0 %v12424
        %12464 = vmatprep.subr.bf16.mxu0 0
        %12465 = vmatpush1.bf16.msra.mxu0 %v12425
        %12466 = vmatprep.subr.bf16.mxu0 0
        %12467 = vmatpush1.bf16.msra.mxu0 %v12426
        %12468 = vmatprep.subr.bf16.mxu0 0
        %12469 = vmatpush1.bf16.msra.mxu0 %v12427
        %12470 = vmatprep.subr.bf16.mxu0 0
        %12471 = vmatpush1.bf16.msra.mxu0 %v12428
        %12472 = vmatprep.subr.bf16.mxu0 0
        %12473 = vmatpush1.bf16.msra.mxu0 %v12429
        %12474 = vmatprep.subr.bf16.mxu0 0
        %12475 = vmatpush1.bf16.msra.mxu0 %v12430
        %12476 = vmatprep.subr.bf16.mxu0 0
        %12477 = vmatpush1.bf16.msra.mxu0 %v12431
        %12478 = vmatprep.subr.bf16.mxu0 0
        %12479 = vmatpush1.bf16.msra.mxu0 %v12432
        %12480 = vmatprep.subr.bf16.mxu0 0
        %12481 = vmatpush1.bf16.msra.mxu0 %v12433
        %12482 = vmatprep.mubr.bf16.mxu0 %v12320
        %12483 = vmatmul.mubr.bf16.gmra.mrb[0].mxu0 %v12319
        %v12484 = vpop.f32.mrb[0].mxu0
        %v12485 = vadd.f32 %v12353, %v12484
        %v12486 = vpop.f32.mrb[0].mxu0
        %v12487 = vpop.f32.mrb[0].mxu0
        %v12488 = vpop.f32.mrb[0].mxu0
        %12489 = vdwg.mxu0
        %v12490 = vld [vmem:[%s626] sm:$0x1]
        %12492 = vset.pattern.permute.xlu0 0
        %12493 = vperm.xlu0 %12492, %v12490
        %v12494 = vpop.permute.xlu0 %12493
        %v12496 = vlaneseq
        %v12497 = vshrl.u32 %v12496, 7
        %v12498 = vsub.s32 0, %v12497
        %v12499 = vrot.slane %v12494, %v12498
        %v12500 = vmul.f32 %v12499, %v12485
        %vm12501 = vcmask 24576
        %12502 = vst.msk [vmem:[%s618] sm:$0x1] %vm12501, %v12500
        %s12503 = sand.u32 %s367, 1
        %s12504 = scalar_lea.sflag [#allocation4], %s12503
        %s12505 = sand.u32 %s367, 1
        %s12506 = scalar_lea.vmem [#allocation17], %s12505
        // Predicated region
        $region117: #{iwnet_forward.1} parent=79 // pred_check
          %p12507 = pneg %p377
        $region118: #{iwnet_forward.1} parent=79 // pred_check_branch
          %12509 = sbr.rel (%p12507) target = $region120
        $region119: #{iwnet_forward.1} parent=79 // pred_region
          %s12511 = ssub.s32 16, 16
          %12512 = vsyncadd %s12504, %s12511
          %s12513 = smul.addr %s34, 16
          %s12514 = scalar_lea.hbm %s15, %s12513
          %s12516 = sshll.u32 %s12506, 4
          %s12517 = int_to_ptr.vmem [resolvable:$true] %s12516
          %12519 = dma.vmem_to_hbm [thread:$0]  %s12517, 16, %s12514, %s12504
        $region120: #{iwnet_forward.1} parent=79 // pred_fallthru
          _
      $region80: #{iwnet_forward.1} parent=5 // pred_fallthru
        _
      %p12520 = scmp.le.s32.totalorder 2, %s29
      // Predicated region
      $region121: #{iwnet_forward.1} parent=5 // pred_check
        %p12521 = pneg %p12520
      $region122: #{iwnet_forward.1} parent=5 // pred_check_branch
        %12523 = sbr.rel (%p12521) target = $region124
      $region123: #{iwnet_forward.1} parent=5 // pred_region
        %s12524 = ssub.s32 %s29, 2
        // Predicated region
        $region125: #{iwnet_forward.1} parent=123 // pred_check
          %p12525 = pneg %p383
        $region126: #{iwnet_forward.1} parent=123 // pred_check_branch
          %12527 = sbr.rel (%p12525) target = $region128
        $region127: #{iwnet_forward.1} parent=123 // pred_region
          %s12528 = sand.u32 %s368, 1
          %s12529 = scalar_lea.sflag [#allocation4], %s12528
          %s12530 = sand.u32 %s368, 1
          %s12531 = scalar_lea.vmem [#allocation17], %s12530
          %12532 = dma.done %s12529, 16
        $region128: #{iwnet_forward.1} parent=123 // pred_fallthru
          _
      $region124: #{iwnet_forward.1} parent=5 // pred_fallthru
        _
    $region6: #{iwnet_forward.1} parent=1 // loop_footer
      %s33 = sadd.s32 1, %s29
    $region7: #{iwnet_forward.1} parent=1 // loop_footer_branch
      %28 = sbr.rel target = $region3
    $region8: #{iwnet_forward.1} parent=1 // loop_exit
      _
    %12533 = vsyncpa [#allocation3], 1
    %s12534 = scalar_lea.sflag [#allocation3], 1
    %12535 = vsyncpa %s12534, 1
    %12536 = vsyncpa [#allocation6], 1
    %12537 = vsyncpa [#allocation9], 1
    %12538 = vsyncpa [#allocation12], 1
    %12539 = vsyncpa [#allocation15], 1
    %12540 = vsyncpa [#allocation4], 1
    %s12541 = scalar_lea.sflag [#allocation4], 1
    %12542 = vsyncpa %s12541, 1

</llo_original>
